<compile_context>
chip_gen: v5e
topology: v5e:2x2
jax: 0.10.0
libtpu: 0.0.40
codegen_flags: <defaults>
</compile_context>

<pallas_src>
import functools

import jax
import jax.numpy as jnp
from jax.experimental import pallas as pl
from jax.experimental.pallas import tpu as pltpu

BN_EPS = 1e-5
CP = 128  # padded channel count (lane-dense, MXU-aligned)


# ----------------------------------------------------------------------------
# Pallas kernels
# ----------------------------------------------------------------------------
def _conv3x3_kernel(x_ref, w_ref, scale_ref, shift_ref, o_ref, *,
                    W, HW, act, use_affine):
    """3x3 reflect-padded conv for one image.

    x_ref : (1, (H+2)*W, 3*C) bf16  -- dx-unrolled, H-padded rows
    w_ref : (3, 3*C, Cout)    bf16  -- one K-slab per dy tap
    scale_ref/shift_ref : (1, Cout) f32 (fused BatchNorm affine)
    o_ref : (1, H*W, Cout)
    """
    y = jnp.dot(x_ref[0, 0:HW, :], w_ref[0],
                preferred_element_type=jnp.float32)
    for dy in (1, 2):
        y = y + jnp.dot(x_ref[0, dy * W:dy * W + HW, :], w_ref[dy],
                        preferred_element_type=jnp.float32)
    if use_affine:
        y = y * scale_ref[...] + shift_ref[...]
    if act:
        y = jnp.maximum(y, 0.0)
    o_ref[0] = y.astype(o_ref.dtype)


def _max4_kernel(a_ref, b_ref, c_ref, d_ref, o_ref):
    o_ref[...] = jnp.maximum(
        jnp.maximum(a_ref[...], b_ref[...]),
        jnp.maximum(c_ref[...], d_ref[...]),
    )


def _matmul_kernel(x_ref, w_ref, o_ref):
    o_ref[...] = jnp.dot(x_ref[...], w_ref[...],
                         preferred_element_type=jnp.float32).astype(o_ref.dtype)


def _matmul_bias_kernel(x_ref, w_ref, b_ref, o_ref):
    y = jnp.dot(x_ref[...], w_ref[...], preferred_element_type=jnp.float32)
    o_ref[...] = (y + b_ref[...]).astype(o_ref.dtype)


def _dual_matmul_kernel(a_ref, b_ref, wa_ref, wb_ref, o_ref):
    # out = a @ wa + b @ wb   (== concat([a, b], -1) @ [wa; wb], no concat in HBM)
    y = jnp.dot(a_ref[...], wa_ref[...], preferred_element_type=jnp.float32)
    y = y + jnp.dot(b_ref[...], wb_ref[...], preferred_element_type=jnp.float32)
    o_ref[...] = y.astype(o_ref.dtype)


# ----------------------------------------------------------------------------
# pallas_call wrappers
# ----------------------------------------------------------------------------
_PARALLEL1 = pltpu.CompilerParams(dimension_semantics=("parallel",))


def _m_tile(M):
    return 256 if (M >= 512 and M % 256 == 0) else M


def _dx_unroll(x):
    """(B, H, W, C) -> (B, (H+2)*W, 3*C): reflect pad + stack the 3 dx windows."""
    B, H, W, C = x.shape
    xp = jnp.pad(x, ((0, 0), (1, 1), (1, 1), (0, 0)), mode="reflect")
    cols = jnp.concatenate([xp[:, :, dx:dx + W, :] for dx in range(3)], axis=-1)
    return cols.reshape(B, (H + 2) * W, 3 * C)


def conv3x3(x, w3, scale, shift, *, act, use_affine=True):
    """Fused 3x3 conv (+BN affine, +ReLU); x NHWC bf16 with C=CP."""
    B, H, W, C = x.shape
    Cout = w3.shape[-1]
    HW = H * W
    cols = _dx_unroll(x)                                   # (B, (H+2)*W, 3*C)
    kern = functools.partial(_conv3x3_kernel, W=W, HW=HW, act=act,
                             use_affine=use_affine)
    y = pl.pallas_call(
        kern,
        out_shape=jax.ShapeDtypeStruct((B, HW, Cout), x.dtype),
        grid=(B,),
        in_specs=[
            pl.BlockSpec((1, (H + 2) * W, 3 * C), lambda b: (b, 0, 0)),
            pl.BlockSpec((3, 3 * C, Cout), lambda b: (0, 0, 0)),
            pl.BlockSpec((1, Cout), lambda b: (0, 0)),
            pl.BlockSpec((1, Cout), lambda b: (0, 0)),
        ],
        out_specs=pl.BlockSpec((1, HW, Cout), lambda b: (b, 0, 0)),
        compiler_params=_PARALLEL1,
    )(cols, w3, scale, shift)
    return y.reshape(B, H, W, Cout)


def maxpool2(x):
    """MaxPool2d(2) on NHWC; max-of-4-taps in Pallas (C=128 -> lane-dense)."""
    a = x[:, 0::2, 0::2, :]
    b = x[:, 0::2, 1::2, :]
    c = x[:, 1::2, 0::2, :]
    d = x[:, 1::2, 1::2, :]
    B, Hh, Wh, C = a.shape
    spec = pl.BlockSpec((1, Hh, Wh, C), lambda i: (i, 0, 0, 0))
    return pl.pallas_call(
        _max4_kernel,
        out_shape=jax.ShapeDtypeStruct((B, Hh, Wh, C), x.dtype),
        grid=(B,),
        in_specs=[spec, spec, spec, spec],
        out_specs=spec,
        compiler_params=_PARALLEL1,
    )(a, b, c, d)


def matmul(x, w, out_dtype=None):
    M, K = x.shape
    _, N = w.shape
    tm = _m_tile(M)
    return pl.pallas_call(
        _matmul_kernel,
        out_shape=jax.ShapeDtypeStruct((M, N), out_dtype or x.dtype),
        grid=(M // tm,),
        in_specs=[pl.BlockSpec((tm, K), lambda i: (i, 0)),
                  pl.BlockSpec((K, N), lambda i: (0, 0))],
        out_specs=pl.BlockSpec((tm, N), lambda i: (i, 0)),
        compiler_params=_PARALLEL1,
    )(x, w)


def matmul_bias(x, w, b):
    M, K = x.shape
    _, N = w.shape
    tm = _m_tile(M)
    return pl.pallas_call(
        _matmul_bias_kernel,
        out_shape=jax.ShapeDtypeStruct((M, N), x.dtype),
        grid=(M // tm,),
        in_specs=[pl.BlockSpec((tm, K), lambda i: (i, 0)),
                  pl.BlockSpec((K, N), lambda i: (0, 0)),
                  pl.BlockSpec((1, N), lambda i: (0, 0))],
        out_specs=pl.BlockSpec((tm, N), lambda i: (i, 0)),
        compiler_params=_PARALLEL1,
    )(x, w, b)


def dual_matmul(a, b, wa, wb):
    M, K = a.shape
    _, N = wa.shape
    tm = _m_tile(M)
    return pl.pallas_call(
        _dual_matmul_kernel,
        out_shape=jax.ShapeDtypeStruct((M, N), a.dtype),
        grid=(M // tm,),
        in_specs=[pl.BlockSpec((tm, K), lambda i: (i, 0)),
                  pl.BlockSpec((tm, K), lambda i: (i, 0)),
                  pl.BlockSpec((K, N), lambda i: (0, 0)),
                  pl.BlockSpec((K, N), lambda i: (0, 0))],
        out_specs=pl.BlockSpec((tm, N), lambda i: (i, 0)),
        compiler_params=_PARALLEL1,
    )(a, b, wa, wb)


# ----------------------------------------------------------------------------
# Parameter init (deterministic, synthetic; real channel counts embedded into
# zero-padded CP=128 lanes so padded channels stay exactly zero end to end)
# ----------------------------------------------------------------------------
def _bn_affine(key, n):
    k1, k2, k3, k4 = jax.random.split(key, 4)
    gamma = 1.0 + 0.1 * jax.random.normal(k1, (n,), jnp.float32)
    beta = 0.1 * jax.random.normal(k2, (n,), jnp.float32)
    mean = 0.1 * jax.random.normal(k3, (n,), jnp.float32)
    var = jax.random.uniform(k4, (n,), jnp.float32, minval=0.5, maxval=1.5)
    scale = gamma / jnp.sqrt(var + BN_EPS)
    shift = beta - mean * scale
    scale_p = jnp.ones((CP,), jnp.float32).at[:n].set(scale)   # pad: identity
    shift_p = jnp.zeros((CP,), jnp.float32).at[:n].set(shift)
    return scale_p.reshape(1, CP), shift_p.reshape(1, CP)


def _conv3x3_w(key, cin, cout):
    # (dy, dx, cin, cout) -> (3, 3*CP, CP); K order (dx, cin) matches _dx_unroll.
    w = 0.1 * jax.random.normal(key, (3, 3, cin, cout), jnp.float32)
    wp = jnp.zeros((3, 3, CP, CP), jnp.float32).at[:, :, :cin, :cout].set(w)
    return wp.reshape(3, 3 * CP, CP).astype(jnp.bfloat16)


def _conv1x1_w(key, cin, cout):
    w = 0.1 * jax.random.normal(key, (cin, cout), jnp.float32)
    wp = jnp.zeros((CP, CP), jnp.float32).at[:cin, :cout].set(w)
    return wp.astype(jnp.bfloat16)


def _up_params(key):
    k1, k2, k3 = jax.random.split(key, 3)
    # ConvTranspose2d(50, 50, k=2, s=2, bias=True).  Synthetic weights generated
    # directly in (cin, dy, dx, cout) order; a real PyTorch checkpoint
    # ((cin, cout, kH, kW)) would need a permute.
    wt = 0.1 * jax.random.normal(k1, (50, 2, 2, 50), jnp.float32)
    bt = 0.1 * jax.random.normal(k2, (50,), jnp.float32)
    wt_p = jnp.zeros((CP, 2, 2, CP), jnp.float32).at[:50, :, :, :50].set(wt)
    bt_p = jnp.zeros((CP,), jnp.float32).at[:50].set(bt)
    # 1x1 conv on cat([x2, x1_up]) (100 -> 50, no bias), split into halves.
    w1 = 0.1 * jax.random.normal(k3, (100, 50), jnp.float32)
    wa = jnp.zeros((CP, CP), jnp.float32).at[:50, :50].set(w1[:50])
    wb = jnp.zeros((CP, CP), jnp.float32).at[:50, :50].set(w1[50:])
    return {
        "up_w": wt_p.reshape(CP, 4 * CP).astype(jnp.bfloat16),
        "up_b4": jnp.tile(bt_p, 4).reshape(1, 4 * CP),   # f32 bias per (dy, dx)
        "wa": wa.astype(jnp.bfloat16),
        "wb": wb.astype(jnp.bfloat16),
    }


def init_params(key, n_channels):
    keys = iter(jax.random.split(key, 32))

    def doubleconv(cin, mid, cout):
        return {
            "w1": _conv3x3_w(next(keys), cin, mid),
            "bn1": _bn_affine(next(keys), mid),
            "w2": _conv3x3_w(next(keys), mid, cout),
            "bn2": _bn_affine(next(keys), cout),
        }

    return {
        # inc: plain Conv2d(n_ch, 50, 3x3, no bias) -- no BN / no activation.
        "inc_w": _conv3x3_w(next(keys), n_channels, 50),
        "ident": (jnp.ones((1, CP), jnp.float32),
                  jnp.zeros((1, CP), jnp.float32)),
        # Down2 -> DoubleConv(50, 50, mid_channels=100), activation='relu'.
        "down1": doubleconv(50, 100, 50),
        "down2": doubleconv(50, 100, 50),
        "up3": _up_params(next(keys)),
        "up4": _up_params(next(keys)),
        "outc_w": _conv1x1_w(next(keys), 50, n_channels),
    }


# ----------------------------------------------------------------------------
# Forward pass
# ----------------------------------------------------------------------------
def double_conv(x, d):
    x = conv3x3(x, d["w1"], *d["bn1"], act=True)
    # Dropout(0.2): inference mode -> identity.
    x = conv3x3(x, d["w2"], *d["bn2"], act=True)
    return x


def down_block(x, d):
    return double_conv(maxpool2(x), d)


def up_block(x1, x2, d):
    # ConvTranspose2d(k=2, s=2, bias): matmul to 4*CP lanes, then pixel-shuffle.
    B, Hl, Wl, C = x1.shape
    y = matmul_bias(x1.reshape(B * Hl * Wl, C), d["up_w"], d["up_b4"])
    y = y.reshape(B, Hl, Wl, 2, 2, CP).transpose(0, 1, 3, 2, 4, 5)
    y = y.reshape(B, 2 * Hl, 2 * Wl, CP)
    dh = x2.shape[1] - y.shape[1]
    dw = x2.shape[2] - y.shape[2]
    if dh or dw:  # F.pad with zeros; no-op for even spatial sizes
        y = jnp.pad(y, ((0, 0), (dh // 2, dh - dh // 2),
                        (dw // 2, dw - dw // 2), (0, 0)))
    # torch.cat([x2, x1_up], C) followed by the 1x1 conv, without the concat.
    B2, H2, W2, _ = x2.shape
    M = B2 * H2 * W2
    out = dual_matmul(x2.reshape(M, CP), y.reshape(M, CP), d["wa"], d["wb"])
    return out.reshape(B2, H2, W2, CP)


def unet9_logsigmoid_forward(params, x_nchw, *, n_channels):
    # NOTE: despite the class name, the reference graph applies no LogSigmoid
    # anywhere (Down2 hardcodes ReLU, and outc has no trailing activation).
    x = jnp.transpose(x_nchw, (0, 2, 3, 1)).astype(jnp.bfloat16)   # NCHW -> NHWC
    B, H, W, _ = x.shape
    xpadc = jnp.zeros((B, H, W, CP), jnp.bfloat16).at[..., :n_channels].set(x)

    x1 = conv3x3(xpadc, params["inc_w"], *params["ident"],
                 act=False, use_affine=False)                      # inc
    x2 = down_block(x1, params["down1"])                           # down1
    x3 = down_block(x2, params["down2"])                           # down2
    y = up_block(x3, x2, params["up3"])                            # up3
    y = up_block(y, x1, params["up4"])                             # up4
    out = matmul(y.reshape(B * H * W, CP), params["outc_w"],
                 out_dtype=jnp.float32)                            # outc (1x1)
    out = out.reshape(B, H, W, CP)[..., :n_channels]
    return jnp.transpose(out, (0, 3, 1, 2))                        # NHWC -> NCHW


if __name__ == "__main__":
    key = jax.random.PRNGKey(0)
    kx, kp = jax.random.split(key)
    B, C, H, W = 2, 4, 16, 16  # n_channels = 4
    x = jax.random.normal(kx, (B, C, H, W), jnp.float32)
    params = init_params(kp, C)

    fwd = jax.jit(functools.partial(unet9_logsigmoid_forward, n_channels=C))
    out = fwd(params, x)
    jax.block_until_ready(out)
    assert out.shape == (B, C, H, W), out.shape
    assert bool(jnp.all(jnp.isfinite(out)))
    print("KERNEL_OK")
</pallas_src>

<mosaic_0001>
module attributes {stable_mosaic.version = 11 : i64} {
  func.func @_conv3x3_kernel(%arg0: i32, %arg1: memref<1x288x384xbf16, #tpu.memory_space<vmem>>, %arg2: memref<3x384x128xbf16, #tpu.memory_space<vmem>>, %arg3: memref<1x128xf32, #tpu.memory_space<vmem>>, %arg4: memref<1x128xf32, #tpu.memory_space<vmem>>, %arg5: memref<1x256x128xbf16, #tpu.memory_space<vmem>>) attributes {dimension_semantics = [#tpu.dimension_semantics<parallel>], iteration_bounds = array<i64: 2>, scalar_prefetch = 0 : i64, scratch_operands = 0 : i64, tpu.core_type = #tpu.core_type<tc>, window_params = [{transform_indices = @transform_0, window_bounds = array<i64: 1, 288, 384>}, {pipeline_mode = #tpu.pipeline_mode<synchronous>, transform_indices = @transform_1, window_bounds = array<i64: 3, 384, 128>}, {pipeline_mode = #tpu.pipeline_mode<synchronous>, transform_indices = @transform_2, window_bounds = array<i64: 1, 128>}, {pipeline_mode = #tpu.pipeline_mode<synchronous>, transform_indices = @transform_3, window_bounds = array<i64: 1, 128>}, {transform_indices = @transform_4, window_bounds = array<i64: 1, 256, 128>}]} {
    %c0 = arith.constant 0 : index
    %c0_0 = arith.constant 0 : index
    %c0_1 = arith.constant 0 : index
    %0 = vector.load %arg1[%c0, %c0_0, %c0_1] : memref<1x288x384xbf16, #tpu.memory_space<vmem>>, vector<1x256x384xbf16>
    %1 = vector.shape_cast %0 : vector<1x256x384xbf16> to vector<256x384xbf16>
    %c0_2 = arith.constant 0 : index
    %c0_3 = arith.constant 0 : index
    %c0_4 = arith.constant 0 : index
    %2 = vector.load %arg2[%c0_2, %c0_3, %c0_4] : memref<3x384x128xbf16, #tpu.memory_space<vmem>>, vector<1x384x128xbf16>
    %3 = vector.shape_cast %2 : vector<1x384x128xbf16> to vector<384x128xbf16>
    %cst = arith.constant dense<0.000000e+00> : vector<256x128xf32>
    %4 = tpu.matmul %1, %3, %cst {dimension_numbers = #tpu.dot_dimension_numbers<[1], [0], [0], [1], [0, 0, 1, 1], [], []>} : vector<256x384xbf16>, vector<384x128xbf16>, vector<256x128xf32> -> vector<256x128xf32>
    %c0_5 = arith.constant 0 : index
    %c16 = arith.constant 16 : index
    %c0_6 = arith.constant 0 : index
    %5 = vector.load %arg1[%c0_5, %c16, %c0_6] : memref<1x288x384xbf16, #tpu.memory_space<vmem>>, vector<1x256x384xbf16>
    %6 = vector.shape_cast %5 : vector<1x256x384xbf16> to vector<256x384xbf16>
    %c1 = arith.constant 1 : index
    %c0_7 = arith.constant 0 : index
    %c0_8 = arith.constant 0 : index
    %7 = vector.load %arg2[%c1, %c0_7, %c0_8] : memref<3x384x128xbf16, #tpu.memory_space<vmem>>, vector<1x384x128xbf16>
    %8 = vector.shape_cast %7 : vector<1x384x128xbf16> to vector<384x128xbf16>
    %cst_9 = arith.constant dense<0.000000e+00> : vector<256x128xf32>
    %9 = tpu.matmul %6, %8, %cst_9 {dimension_numbers = #tpu.dot_dimension_numbers<[1], [0], [0], [1], [0, 0, 1, 1], [], []>} : vector<256x384xbf16>, vector<384x128xbf16>, vector<256x128xf32> -> vector<256x128xf32>
    %10 = arith.addf %4, %9 : vector<256x128xf32>
    %c0_10 = arith.constant 0 : index
    %c32 = arith.constant 32 : index
    %c0_11 = arith.constant 0 : index
    %11 = vector.load %arg1[%c0_10, %c32, %c0_11] : memref<1x288x384xbf16, #tpu.memory_space<vmem>>, vector<1x256x384xbf16>
    %12 = vector.shape_cast %11 : vector<1x256x384xbf16> to vector<256x384xbf16>
    %c2 = arith.constant 2 : index
    %c0_12 = arith.constant 0 : index
    %c0_13 = arith.constant 0 : index
    %13 = vector.load %arg2[%c2, %c0_12, %c0_13] : memref<3x384x128xbf16, #tpu.memory_space<vmem>>, vector<1x384x128xbf16>
    %14 = vector.shape_cast %13 : vector<1x384x128xbf16> to vector<384x128xbf16>
    %cst_14 = arith.constant dense<0.000000e+00> : vector<256x128xf32>
    %15 = tpu.matmul %12, %14, %cst_14 {dimension_numbers = #tpu.dot_dimension_numbers<[1], [0], [0], [1], [0, 0, 1, 1], [], []>} : vector<256x384xbf16>, vector<384x128xbf16>, vector<256x128xf32> -> vector<256x128xf32>
    %16 = arith.addf %10, %15 : vector<256x128xf32>
    %17 = arith.truncf %16 : vector<256x128xf32> to vector<256x128xbf16>
    %c0_15 = arith.constant 0 : index
    %c0_16 = arith.constant 0 : index
    %c0_17 = arith.constant 0 : index
    %18 = vector.load %arg5[%c0_15, %c0_16, %c0_17] : memref<1x256x128xbf16, #tpu.memory_space<vmem>>, vector<1x256x128xbf16>
    %19 = vector.shape_cast %18 : vector<1x256x128xbf16> to vector<256x128xbf16>
    %20 = vector.shape_cast %17 : vector<256x128xbf16> to vector<1x256x128xbf16>
    tpu.vector_store %arg5[%c0_15, %c0_16, %c0_17], %20 {strides = array<i32>} : memref<1x256x128xbf16, #tpu.memory_space<vmem>>, vector<1x256x128xbf16>,
    return
  }
  func.func @transform_0(%arg0: i32) -> (i32, i32, i32) {
    %c0_i32 = arith.constant 0 : i32
    %c0_i32_0 = arith.constant 0 : i32
    %c0_i32_1 = arith.constant 0 : i32
    return %arg0, %c0_i32, %c0_i32_0 : i32, i32, i32
  }
  func.func @transform_1(%arg0: i32) -> (i32, i32, i32) {
    %c0_i32 = arith.constant 0 : i32
    %c0_i32_0 = arith.constant 0 : i32
    %c0_i32_1 = arith.constant 0 : i32
    %c0_i32_2 = arith.constant 0 : i32
    return %c0_i32, %c0_i32_0, %c0_i32_1 : i32, i32, i32
  }
  func.func @transform_2(%arg0: i32) -> (i32, i32) {
    %c0_i32 = arith.constant 0 : i32
    %c0_i32_0 = arith.constant 0 : i32
    %c0_i32_1 = arith.constant 0 : i32
    return %c0_i32, %c0_i32_0 : i32, i32
  }
  func.func @transform_3(%arg0: i32) -> (i32, i32) {
    %c0_i32 = arith.constant 0 : i32
    %c0_i32_0 = arith.constant 0 : i32
    %c0_i32_1 = arith.constant 0 : i32
    return %c0_i32, %c0_i32_0 : i32, i32
  }
  func.func @transform_4(%arg0: i32) -> (i32, i32, i32) {
    %c0_i32 = arith.constant 0 : i32
    %c0_i32_0 = arith.constant 0 : i32
    %c0_i32_1 = arith.constant 0 : i32
    return %arg0, %c0_i32, %c0_i32_0 : i32, i32, i32
  }
}

module attributes {stable_mosaic.version = 11 : i64} {
  func.func @_max4_kernel(%arg0: i32, %arg1: memref<1x8x8x128xbf16, #tpu.memory_space<vmem>>, %arg2: memref<1x8x8x128xbf16, #tpu.memory_space<vmem>>, %arg3: memref<1x8x8x128xbf16, #tpu.memory_space<vmem>>, %arg4: memref<1x8x8x128xbf16, #tpu.memory_space<vmem>>, %arg5: memref<1x8x8x128xbf16, #tpu.memory_space<vmem>>) attributes {dimension_semantics = [#tpu.dimension_semantics<parallel>], iteration_bounds = array<i64: 2>, scalar_prefetch = 0 : i64, scratch_operands = 0 : i64, tpu.core_type = #tpu.core_type<tc>, window_params = [{transform_indices = @transform_0, window_bounds = array<i64: 1, 8, 8, 128>}, {transform_indices = @transform_1, window_bounds = array<i64: 1, 8, 8, 128>}, {transform_indices = @transform_2, window_bounds = array<i64: 1, 8, 8, 128>}, {transform_indices = @transform_3, window_bounds = array<i64: 1, 8, 8, 128>}, {transform_indices = @transform_4, window_bounds = array<i64: 1, 8, 8, 128>}]} {
    %c0 = arith.constant 0 : index
    %c0_0 = arith.constant 0 : index
    %c0_1 = arith.constant 0 : index
    %c0_2 = arith.constant 0 : index
    %0 = vector.load %arg1[%c0, %c0_0, %c0_1, %c0_2] : memref<1x8x8x128xbf16, #tpu.memory_space<vmem>>, vector<1x8x8x128xbf16>
    %c0_3 = arith.constant 0 : index
    %c0_4 = arith.constant 0 : index
    %c0_5 = arith.constant 0 : index
    %c0_6 = arith.constant 0 : index
    %1 = vector.load %arg2[%c0_3, %c0_4, %c0_5, %c0_6] : memref<1x8x8x128xbf16, #tpu.memory_space<vmem>>, vector<1x8x8x128xbf16>
    %2 = arith.maximumf %0, %1 : vector<1x8x8x128xbf16>
    %c0_7 = arith.constant 0 : index
    %c0_8 = arith.constant 0 : index
    %c0_9 = arith.constant 0 : index
    %c0_10 = arith.constant 0 : index
    %3 = vector.load %arg3[%c0_7, %c0_8, %c0_9, %c0_10] : memref<1x8x8x128xbf16, #tpu.memory_space<vmem>>, vector<1x8x8x128xbf16>
    %c0_11 = arith.constant 0 : index
    %c0_12 = arith.constant 0 : index
    %c0_13 = arith.constant 0 : index
    %c0_14 = arith.constant 0 : index
    %4 = vector.load %arg4[%c0_11, %c0_12, %c0_13, %c0_14] : memref<1x8x8x128xbf16, #tpu.memory_space<vmem>>, vector<1x8x8x128xbf16>
    %5 = arith.maximumf %3, %4 : vector<1x8x8x128xbf16>
    %6 = arith.maximumf %2, %5 : vector<1x8x8x128xbf16>
    %c0_15 = arith.constant 0 : index
    %c0_16 = arith.constant 0 : index
    %c0_17 = arith.constant 0 : index
    %c0_18 = arith.constant 0 : index
    %7 = vector.load %arg5[%c0_15, %c0_16, %c0_17, %c0_18] : memref<1x8x8x128xbf16, #tpu.memory_space<vmem>>, vector<1x8x8x128xbf16>
    tpu.vector_store %arg5[%c0_15, %c0_16, %c0_17, %c0_18], %6 {strides = array<i32>} : memref<1x8x8x128xbf16, #tpu.memory_space<vmem>>, vector<1x8x8x128xbf16>,
    return
  }
  func.func @transform_0(%arg0: i32) -> (i32, i32, i32, i32) {
    %c0_i32 = arith.constant 0 : i32
    %c0_i32_0 = arith.constant 0 : i32
    %c0_i32_1 = arith.constant 0 : i32
    %c0_i32_2 = arith.constant 0 : i32
    return %arg0, %c0_i32, %c0_i32_0, %c0_i32_1 : i32, i32, i32, i32
  }
  func.func @transform_1(%arg0: i32) -> (i32, i32, i32, i32) {
    %c0_i32 = arith.constant 0 : i32
    %c0_i32_0 = arith.constant 0 : i32
    %c0_i32_1 = arith.constant 0 : i32
    %c0_i32_2 = arith.constant 0 : i32
    return %arg0, %c0_i32, %c0_i32_0, %c0_i32_1 : i32, i32, i32, i32
  }
  func.func @transform_2(%arg0: i32) -> (i32, i32, i32, i32) {
    %c0_i32 = arith.constant 0 : i32
    %c0_i32_0 = arith.constant 0 : i32
    %c0_i32_1 = arith.constant 0 : i32
    %c0_i32_2 = arith.constant 0 : i32
    return %arg0, %c0_i32, %c0_i32_0, %c0_i32_1 : i32, i32, i32, i32
  }
  func.func @transform_3(%arg0: i32) -> (i32, i32, i32, i32) {
    %c0_i32 = arith.constant 0 : i32
    %c0_i32_0 = arith.constant 0 : i32
    %c0_i32_1 = arith.constant 0 : i32
    %c0_i32_2 = arith.constant 0 : i32
    return %arg0, %c0_i32, %c0_i32_0, %c0_i32_1 : i32, i32, i32, i32
  }
  func.func @transform_4(%arg0: i32) -> (i32, i32, i32, i32) {
    %c0_i32 = arith.constant 0 : i32
    %c0_i32_0 = arith.constant 0 : i32
    %c0_i32_1 = arith.constant 0 : i32
    %c0_i32_2 = arith.constant 0 : i32
    return %arg0, %c0_i32, %c0_i32_0, %c0_i32_1 : i32, i32, i32, i32
  }
}

module attributes {stable_mosaic.version = 11 : i64} {
  func.func @_conv3x3_kernel(%arg0: i32, %arg1: memref<1x80x384xbf16, #tpu.memory_space<vmem>>, %arg2: memref<3x384x128xbf16, #tpu.memory_space<vmem>>, %arg3: memref<1x128xf32, #tpu.memory_space<vmem>>, %arg4: memref<1x128xf32, #tpu.memory_space<vmem>>, %arg5: memref<1x64x128xbf16, #tpu.memory_space<vmem>>) attributes {dimension_semantics = [#tpu.dimension_semantics<parallel>], iteration_bounds = array<i64: 2>, scalar_prefetch = 0 : i64, scratch_operands = 0 : i64, tpu.core_type = #tpu.core_type<tc>, window_params = [{transform_indices = @transform_0, window_bounds = array<i64: 1, 80, 384>}, {pipeline_mode = #tpu.pipeline_mode<synchronous>, transform_indices = @transform_1, window_bounds = array<i64: 3, 384, 128>}, {pipeline_mode = #tpu.pipeline_mode<synchronous>, transform_indices = @transform_2, window_bounds = array<i64: 1, 128>}, {pipeline_mode = #tpu.pipeline_mode<synchronous>, transform_indices = @transform_3, window_bounds = array<i64: 1, 128>}, {transform_indices = @transform_4, window_bounds = array<i64: 1, 64, 128>}]} {
    %c0 = arith.constant 0 : index
    %c0_0 = arith.constant 0 : index
    %c0_1 = arith.constant 0 : index
    %0 = vector.load %arg1[%c0, %c0_0, %c0_1] : memref<1x80x384xbf16, #tpu.memory_space<vmem>>, vector<1x64x384xbf16>
    %1 = vector.shape_cast %0 : vector<1x64x384xbf16> to vector<64x384xbf16>
    %c0_2 = arith.constant 0 : index
    %c0_3 = arith.constant 0 : index
    %c0_4 = arith.constant 0 : index
    %2 = vector.load %arg2[%c0_2, %c0_3, %c0_4] : memref<3x384x128xbf16, #tpu.memory_space<vmem>>, vector<1x384x128xbf16>
    %3 = vector.shape_cast %2 : vector<1x384x128xbf16> to vector<384x128xbf16>
    %cst = arith.constant dense<0.000000e+00> : vector<64x128xf32>
    %4 = tpu.matmul %1, %3, %cst {dimension_numbers = #tpu.dot_dimension_numbers<[1], [0], [0], [1], [0, 0, 1, 1], [], []>} : vector<64x384xbf16>, vector<384x128xbf16>, vector<64x128xf32> -> vector<64x128xf32>
    %c0_5 = arith.constant 0 : index
    %c8 = arith.constant 8 : index
    %c0_6 = arith.constant 0 : index
    %5 = vector.load %arg1[%c0_5, %c8, %c0_6] : memref<1x80x384xbf16, #tpu.memory_space<vmem>>, vector<1x64x384xbf16>
    %6 = vector.shape_cast %5 : vector<1x64x384xbf16> to vector<64x384xbf16>
    %c1 = arith.constant 1 : index
    %c0_7 = arith.constant 0 : index
    %c0_8 = arith.constant 0 : index
    %7 = vector.load %arg2[%c1, %c0_7, %c0_8] : memref<3x384x128xbf16, #tpu.memory_space<vmem>>, vector<1x384x128xbf16>
    %8 = vector.shape_cast %7 : vector<1x384x128xbf16> to vector<384x128xbf16>
    %cst_9 = arith.constant dense<0.000000e+00> : vector<64x128xf32>
    %9 = tpu.matmul %6, %8, %cst_9 {dimension_numbers = #tpu.dot_dimension_numbers<[1], [0], [0], [1], [0, 0, 1, 1], [], []>} : vector<64x384xbf16>, vector<384x128xbf16>, vector<64x128xf32> -> vector<64x128xf32>
    %10 = arith.addf %4, %9 : vector<64x128xf32>
    %c0_10 = arith.constant 0 : index
    %c16 = arith.constant 16 : index
    %c0_11 = arith.constant 0 : index
    %11 = vector.load %arg1[%c0_10, %c16, %c0_11] : memref<1x80x384xbf16, #tpu.memory_space<vmem>>, vector<1x64x384xbf16>
    %12 = vector.shape_cast %11 : vector<1x64x384xbf16> to vector<64x384xbf16>
    %c2 = arith.constant 2 : index
    %c0_12 = arith.constant 0 : index
    %c0_13 = arith.constant 0 : index
    %13 = vector.load %arg2[%c2, %c0_12, %c0_13] : memref<3x384x128xbf16, #tpu.memory_space<vmem>>, vector<1x384x128xbf16>
    %14 = vector.shape_cast %13 : vector<1x384x128xbf16> to vector<384x128xbf16>
    %cst_14 = arith.constant dense<0.000000e+00> : vector<64x128xf32>
    %15 = tpu.matmul %12, %14, %cst_14 {dimension_numbers = #tpu.dot_dimension_numbers<[1], [0], [0], [1], [0, 0, 1, 1], [], []>} : vector<64x384xbf16>, vector<384x128xbf16>, vector<64x128xf32> -> vector<64x128xf32>
    %16 = arith.addf %10, %15 : vector<64x128xf32>
    %c0_15 = arith.constant 0 : index
    %c0_16 = arith.constant 0 : index
    %17 = vector.load %arg3[%c0_15, %c0_16] : memref<1x128xf32, #tpu.memory_space<vmem>>, vector<1x128xf32>
    %18 = vector.broadcast %17 : vector<1x128xf32> to vector<64x128xf32>
    %19 = arith.mulf %16, %18 : vector<64x128xf32>
    %c0_17 = arith.constant 0 : index
    %c0_18 = arith.constant 0 : index
    %20 = vector.load %arg4[%c0_17, %c0_18] : memref<1x128xf32, #tpu.memory_space<vmem>>, vector<1x128xf32>
    %21 = vector.broadcast %20 : vector<1x128xf32> to vector<64x128xf32>
    %22 = arith.addf %19, %21 : vector<64x128xf32>
    %cst_19 = arith.constant 0.000000e+00 : f32
    %23 = vector.broadcast %cst_19 : f32 to vector<64x128xf32>
    %24 = arith.maximumf %22, %23 : vector<64x128xf32>
    %25 = arith.truncf %24 : vector<64x128xf32> to vector<64x128xbf16>
    %c0_20 = arith.constant 0 : index
    %c0_21 = arith.constant 0 : index
    %c0_22 = arith.constant 0 : index
    %26 = vector.load %arg5[%c0_20, %c0_21, %c0_22] : memref<1x64x128xbf16, #tpu.memory_space<vmem>>, vector<1x64x128xbf16>
    %27 = vector.shape_cast %26 : vector<1x64x128xbf16> to vector<64x128xbf16>
    %28 = vector.shape_cast %25 : vector<64x128xbf16> to vector<1x64x128xbf16>
    tpu.vector_store %arg5[%c0_20, %c0_21, %c0_22], %28 {strides = array<i32>} : memref<1x64x128xbf16, #tpu.memory_space<vmem>>, vector<1x64x128xbf16>,
    return
  }
  func.func @transform_0(%arg0: i32) -> (i32, i32, i32) {
    %c0_i32 = arith.constant 0 : i32
    %c0_i32_0 = arith.constant 0 : i32
    %c0_i32_1 = arith.constant 0 : i32
    return %arg0, %c0_i32, %c0_i32_0 : i32, i32, i32
  }
  func.func @transform_1(%arg0: i32) -> (i32, i32, i32) {
    %c0_i32 = arith.constant 0 : i32
    %c0_i32_0 = arith.constant 0 : i32
    %c0_i32_1 = arith.constant 0 : i32
    %c0_i32_2 = arith.constant 0 : i32
    return %c0_i32, %c0_i32_0, %c0_i32_1 : i32, i32, i32
  }
  func.func @transform_2(%arg0: i32) -> (i32, i32) {
    %c0_i32 = arith.constant 0 : i32
    %c0_i32_0 = arith.constant 0 : i32
    %c0_i32_1 = arith.constant 0 : i32
    return %c0_i32, %c0_i32_0 : i32, i32
  }
  func.func @transform_3(%arg0: i32) -> (i32, i32) {
    %c0_i32 = arith.constant 0 : i32
    %c0_i32_0 = arith.constant 0 : i32
    %c0_i32_1 = arith.constant 0 : i32
    return %c0_i32, %c0_i32_0 : i32, i32
  }
  func.func @transform_4(%arg0: i32) -> (i32, i32, i32) {
    %c0_i32 = arith.constant 0 : i32
    %c0_i32_0 = arith.constant 0 : i32
    %c0_i32_1 = arith.constant 0 : i32
    return %arg0, %c0_i32, %c0_i32_0 : i32, i32, i32
  }
}

module attributes {stable_mosaic.version = 11 : i64} {
  func.func @_max4_kernel(%arg0: i32, %arg1: memref<1x4x4x128xbf16, #tpu.memory_space<vmem>>, %arg2: memref<1x4x4x128xbf16, #tpu.memory_space<vmem>>, %arg3: memref<1x4x4x128xbf16, #tpu.memory_space<vmem>>, %arg4: memref<1x4x4x128xbf16, #tpu.memory_space<vmem>>, %arg5: memref<1x4x4x128xbf16, #tpu.memory_space<vmem>>) attributes {dimension_semantics = [#tpu.dimension_semantics<parallel>], iteration_bounds = array<i64: 2>, scalar_prefetch = 0 : i64, scratch_operands = 0 : i64, tpu.core_type = #tpu.core_type<tc>, window_params = [{transform_indices = @transform_0, window_bounds = array<i64: 1, 4, 4, 128>}, {transform_indices = @transform_1, window_bounds = array<i64: 1, 4, 4, 128>}, {transform_indices = @transform_2, window_bounds = array<i64: 1, 4, 4, 128>}, {transform_indices = @transform_3, window_bounds = array<i64: 1, 4, 4, 128>}, {transform_indices = @transform_4, window_bounds = array<i64: 1, 4, 4, 128>}]} {
    %c0 = arith.constant 0 : index
    %c0_0 = arith.constant 0 : index
    %c0_1 = arith.constant 0 : index
    %c0_2 = arith.constant 0 : index
    %0 = vector.load %arg1[%c0, %c0_0, %c0_1, %c0_2] : memref<1x4x4x128xbf16, #tpu.memory_space<vmem>>, vector<1x4x4x128xbf16>
    %c0_3 = arith.constant 0 : index
    %c0_4 = arith.constant 0 : index
    %c0_5 = arith.constant 0 : index
    %c0_6 = arith.constant 0 : index
    %1 = vector.load %arg2[%c0_3, %c0_4, %c0_5, %c0_6] : memref<1x4x4x128xbf16, #tpu.memory_space<vmem>>, vector<1x4x4x128xbf16>
    %2 = arith.maximumf %0, %1 : vector<1x4x4x128xbf16>
    %c0_7 = arith.constant 0 : index
    %c0_8 = arith.constant 0 : index
    %c0_9 = arith.constant 0 : index
    %c0_10 = arith.constant 0 : index
    %3 = vector.load %arg3[%c0_7, %c0_8, %c0_9, %c0_10] : memref<1x4x4x128xbf16, #tpu.memory_space<vmem>>, vector<1x4x4x128xbf16>
    %c0_11 = arith.constant 0 : index
    %c0_12 = arith.constant 0 : index
    %c0_13 = arith.constant 0 : index
    %c0_14 = arith.constant 0 : index
    %4 = vector.load %arg4[%c0_11, %c0_12, %c0_13, %c0_14] : memref<1x4x4x128xbf16, #tpu.memory_space<vmem>>, vector<1x4x4x128xbf16>
    %5 = arith.maximumf %3, %4 : vector<1x4x4x128xbf16>
    %6 = arith.maximumf %2, %5 : vector<1x4x4x128xbf16>
    %c0_15 = arith.constant 0 : index
    %c0_16 = arith.constant 0 : index
    %c0_17 = arith.constant 0 : index
    %c0_18 = arith.constant 0 : index
    %7 = vector.load %arg5[%c0_15, %c0_16, %c0_17, %c0_18] : memref<1x4x4x128xbf16, #tpu.memory_space<vmem>>, vector<1x4x4x128xbf16>
    tpu.vector_store %arg5[%c0_15, %c0_16, %c0_17, %c0_18], %6 {strides = array<i32>} : memref<1x4x4x128xbf16, #tpu.memory_space<vmem>>, vector<1x4x4x128xbf16>,
    return
  }
  func.func @transform_0(%arg0: i32) -> (i32, i32, i32, i32) {
    %c0_i32 = arith.constant 0 : i32
    %c0_i32_0 = arith.constant 0 : i32
    %c0_i32_1 = arith.constant 0 : i32
    %c0_i32_2 = arith.constant 0 : i32
    return %arg0, %c0_i32, %c0_i32_0, %c0_i32_1 : i32, i32, i32, i32
  }
  func.func @transform_1(%arg0: i32) -> (i32, i32, i32, i32) {
    %c0_i32 = arith.constant 0 : i32
    %c0_i32_0 = arith.constant 0 : i32
    %c0_i32_1 = arith.constant 0 : i32
    %c0_i32_2 = arith.constant 0 : i32
    return %arg0, %c0_i32, %c0_i32_0, %c0_i32_1 : i32, i32, i32, i32
  }
  func.func @transform_2(%arg0: i32) -> (i32, i32, i32, i32) {
    %c0_i32 = arith.constant 0 : i32
    %c0_i32_0 = arith.constant 0 : i32
    %c0_i32_1 = arith.constant 0 : i32
    %c0_i32_2 = arith.constant 0 : i32
    return %arg0, %c0_i32, %c0_i32_0, %c0_i32_1 : i32, i32, i32, i32
  }
  func.func @transform_3(%arg0: i32) -> (i32, i32, i32, i32) {
    %c0_i32 = arith.constant 0 : i32
    %c0_i32_0 = arith.constant 0 : i32
    %c0_i32_1 = arith.constant 0 : i32
    %c0_i32_2 = arith.constant 0 : i32
    return %arg0, %c0_i32, %c0_i32_0, %c0_i32_1 : i32, i32, i32, i32
  }
  func.func @transform_4(%arg0: i32) -> (i32, i32, i32, i32) {
    %c0_i32 = arith.constant 0 : i32
    %c0_i32_0 = arith.constant 0 : i32
    %c0_i32_1 = arith.constant 0 : i32
    %c0_i32_2 = arith.constant 0 : i32
    return %arg0, %c0_i32, %c0_i32_0, %c0_i32_1 : i32, i32, i32, i32
  }
}

module attributes {stable_mosaic.version = 11 : i64} {
  func.func @_conv3x3_kernel(%arg0: i32, %arg1: memref<1x24x384xbf16, #tpu.memory_space<vmem>>, %arg2: memref<3x384x128xbf16, #tpu.memory_space<vmem>>, %arg3: memref<1x128xf32, #tpu.memory_space<vmem>>, %arg4: memref<1x128xf32, #tpu.memory_space<vmem>>, %arg5: memref<1x16x128xbf16, #tpu.memory_space<vmem>>) attributes {dimension_semantics = [#tpu.dimension_semantics<parallel>], iteration_bounds = array<i64: 2>, scalar_prefetch = 0 : i64, scratch_operands = 0 : i64, tpu.core_type = #tpu.core_type<tc>, window_params = [{transform_indices = @transform_0, window_bounds = array<i64: 1, 24, 384>}, {pipeline_mode = #tpu.pipeline_mode<synchronous>, transform_indices = @transform_1, window_bounds = array<i64: 3, 384, 128>}, {pipeline_mode = #tpu.pipeline_mode<synchronous>, transform_indices = @transform_2, window_bounds = array<i64: 1, 128>}, {pipeline_mode = #tpu.pipeline_mode<synchronous>, transform_indices = @transform_3, window_bounds = array<i64: 1, 128>}, {transform_indices = @transform_4, window_bounds = array<i64: 1, 16, 128>}]} {
    %c0 = arith.constant 0 : index
    %c0_0 = arith.constant 0 : index
    %c0_1 = arith.constant 0 : index
    %0 = vector.load %arg1[%c0, %c0_0, %c0_1] : memref<1x24x384xbf16, #tpu.memory_space<vmem>>, vector<1x16x384xbf16>
    %1 = vector.shape_cast %0 : vector<1x16x384xbf16> to vector<16x384xbf16>
    %c0_2 = arith.constant 0 : index
    %c0_3 = arith.constant 0 : index
    %c0_4 = arith.constant 0 : index
    %2 = vector.load %arg2[%c0_2, %c0_3, %c0_4] : memref<3x384x128xbf16, #tpu.memory_space<vmem>>, vector<1x384x128xbf16>
    %3 = vector.shape_cast %2 : vector<1x384x128xbf16> to vector<384x128xbf16>
    %cst = arith.constant dense<0.000000e+00> : vector<16x128xf32>
    %4 = tpu.matmul %1, %3, %cst {dimension_numbers = #tpu.dot_dimension_numbers<[1], [0], [0], [1], [0, 0, 1, 1], [], []>} : vector<16x384xbf16>, vector<384x128xbf16>, vector<16x128xf32> -> vector<16x128xf32>
    %c0_5 = arith.constant 0 : index
    %c4 = arith.constant 4 : index
    %c0_6 = arith.constant 0 : index
    %5 = vector.load %arg1[%c0_5, %c4, %c0_6] : memref<1x24x384xbf16, #tpu.memory_space<vmem>>, vector<1x16x384xbf16>
    %6 = vector.shape_cast %5 : vector<1x16x384xbf16> to vector<16x384xbf16>
    %c1 = arith.constant 1 : index
    %c0_7 = arith.constant 0 : index
    %c0_8 = arith.constant 0 : index
    %7 = vector.load %arg2[%c1, %c0_7, %c0_8] : memref<3x384x128xbf16, #tpu.memory_space<vmem>>, vector<1x384x128xbf16>
    %8 = vector.shape_cast %7 : vector<1x384x128xbf16> to vector<384x128xbf16>
    %cst_9 = arith.constant dense<0.000000e+00> : vector<16x128xf32>
    %9 = tpu.matmul %6, %8, %cst_9 {dimension_numbers = #tpu.dot_dimension_numbers<[1], [0], [0], [1], [0, 0, 1, 1], [], []>} : vector<16x384xbf16>, vector<384x128xbf16>, vector<16x128xf32> -> vector<16x128xf32>
    %10 = arith.addf %4, %9 : vector<16x128xf32>
    %c0_10 = arith.constant 0 : index
    %c8 = arith.constant 8 : index
    %c0_11 = arith.constant 0 : index
    %11 = vector.load %arg1[%c0_10, %c8, %c0_11] : memref<1x24x384xbf16, #tpu.memory_space<vmem>>, vector<1x16x384xbf16>
    %12 = vector.shape_cast %11 : vector<1x16x384xbf16> to vector<16x384xbf16>
    %c2 = arith.constant 2 : index
    %c0_12 = arith.constant 0 : index
    %c0_13 = arith.constant 0 : index
    %13 = vector.load %arg2[%c2, %c0_12, %c0_13] : memref<3x384x128xbf16, #tpu.memory_space<vmem>>, vector<1x384x128xbf16>
    %14 = vector.shape_cast %13 : vector<1x384x128xbf16> to vector<384x128xbf16>
    %cst_14 = arith.constant dense<0.000000e+00> : vector<16x128xf32>
    %15 = tpu.matmul %12, %14, %cst_14 {dimension_numbers = #tpu.dot_dimension_numbers<[1], [0], [0], [1], [0, 0, 1, 1], [], []>} : vector<16x384xbf16>, vector<384x128xbf16>, vector<16x128xf32> -> vector<16x128xf32>
    %16 = arith.addf %10, %15 : vector<16x128xf32>
    %c0_15 = arith.constant 0 : index
    %c0_16 = arith.constant 0 : index
    %17 = vector.load %arg3[%c0_15, %c0_16] : memref<1x128xf32, #tpu.memory_space<vmem>>, vector<1x128xf32>
    %18 = vector.broadcast %17 : vector<1x128xf32> to vector<16x128xf32>
    %19 = arith.mulf %16, %18 : vector<16x128xf32>
    %c0_17 = arith.constant 0 : index
    %c0_18 = arith.constant 0 : index
    %20 = vector.load %arg4[%c0_17, %c0_18] : memref<1x128xf32, #tpu.memory_space<vmem>>, vector<1x128xf32>
    %21 = vector.broadcast %20 : vector<1x128xf32> to vector<16x128xf32>
    %22 = arith.addf %19, %21 : vector<16x128xf32>
    %cst_19 = arith.constant 0.000000e+00 : f32
    %23 = vector.broadcast %cst_19 : f32 to vector<16x128xf32>
    %24 = arith.maximumf %22, %23 : vector<16x128xf32>
    %25 = arith.truncf %24 : vector<16x128xf32> to vector<16x128xbf16>
    %c0_20 = arith.constant 0 : index
    %c0_21 = arith.constant 0 : index
    %c0_22 = arith.constant 0 : index
    %26 = vector.load %arg5[%c0_20, %c0_21, %c0_22] : memref<1x16x128xbf16, #tpu.memory_space<vmem>>, vector<1x16x128xbf16>
    %27 = vector.shape_cast %26 : vector<1x16x128xbf16> to vector<16x128xbf16>
    %28 = vector.shape_cast %25 : vector<16x128xbf16> to vector<1x16x128xbf16>
    tpu.vector_store %arg5[%c0_20, %c0_21, %c0_22], %28 {strides = array<i32>} : memref<1x16x128xbf16, #tpu.memory_space<vmem>>, vector<1x16x128xbf16>,
    return
  }
  func.func @transform_0(%arg0: i32) -> (i32, i32, i32) {
    %c0_i32 = arith.constant 0 : i32
    %c0_i32_0 = arith.constant 0 : i32
    %c0_i32_1 = arith.constant 0 : i32
    return %arg0, %c0_i32, %c0_i32_0 : i32, i32, i32
  }
  func.func @transform_1(%arg0: i32) -> (i32, i32, i32) {
    %c0_i32 = arith.constant 0 : i32
    %c0_i32_0 = arith.constant 0 : i32
    %c0_i32_1 = arith.constant 0 : i32
    %c0_i32_2 = arith.constant 0 : i32
    return %c0_i32, %c0_i32_0, %c0_i32_1 : i32, i32, i32
  }
  func.func @transform_2(%arg0: i32) -> (i32, i32) {
    %c0_i32 = arith.constant 0 : i32
    %c0_i32_0 = arith.constant 0 : i32
    %c0_i32_1 = arith.constant 0 : i32
    return %c0_i32, %c0_i32_0 : i32, i32
  }
  func.func @transform_3(%arg0: i32) -> (i32, i32) {
    %c0_i32 = arith.constant 0 : i32
    %c0_i32_0 = arith.constant 0 : i32
    %c0_i32_1 = arith.constant 0 : i32
    return %c0_i32, %c0_i32_0 : i32, i32
  }
  func.func @transform_4(%arg0: i32) -> (i32, i32, i32) {
    %c0_i32 = arith.constant 0 : i32
    %c0_i32_0 = arith.constant 0 : i32
    %c0_i32_1 = arith.constant 0 : i32
    return %arg0, %c0_i32, %c0_i32_0 : i32, i32, i32
  }
}

module attributes {stable_mosaic.version = 11 : i64} {
  func.func @_matmul_bias_kernel(%arg0: i32, %arg1: memref<32x128xbf16, #tpu.memory_space<vmem>>, %arg2: memref<128x512xbf16, #tpu.memory_space<vmem>>, %arg3: memref<1x512xf32, #tpu.memory_space<vmem>>, %arg4: memref<32x512xbf16, #tpu.memory_space<vmem>>) attributes {dimension_semantics = [#tpu.dimension_semantics<parallel>], iteration_bounds = array<i64: 1>, scalar_prefetch = 0 : i64, scratch_operands = 0 : i64, tpu.core_type = #tpu.core_type<tc>, window_params = [{transform_indices = @transform_0, window_bounds = array<i64: 32, 128>}, {pipeline_mode = #tpu.pipeline_mode<synchronous>, transform_indices = @transform_1, window_bounds = array<i64: 128, 512>}, {pipeline_mode = #tpu.pipeline_mode<synchronous>, transform_indices = @transform_2, window_bounds = array<i64: 1, 512>}, {transform_indices = @transform_3, window_bounds = array<i64: 32, 512>}]} {
    %c0 = arith.constant 0 : index
    %c0_0 = arith.constant 0 : index
    %0 = vector.load %arg1[%c0, %c0_0] : memref<32x128xbf16, #tpu.memory_space<vmem>>, vector<32x128xbf16>
    %c0_1 = arith.constant 0 : index
    %c0_2 = arith.constant 0 : index
    %1 = vector.load %arg2[%c0_1, %c0_2] : memref<128x512xbf16, #tpu.memory_space<vmem>>, vector<128x512xbf16>
    %cst = arith.constant dense<0.000000e+00> : vector<32x512xf32>
    %2 = tpu.matmul %0, %1, %cst {dimension_numbers = #tpu.dot_dimension_numbers<[1], [0], [0], [1], [0, 0, 1, 1], [], []>} : vector<32x128xbf16>, vector<128x512xbf16>, vector<32x512xf32> -> vector<32x512xf32>
    %c0_3 = arith.constant 0 : index
    %c0_4 = arith.constant 0 : index
    %3 = vector.load %arg3[%c0_3, %c0_4] : memref<1x512xf32, #tpu.memory_space<vmem>>, vector<1x512xf32>
    %4 = vector.broadcast %3 : vector<1x512xf32> to vector<32x512xf32>
    %5 = arith.addf %2, %4 : vector<32x512xf32>
    %6 = arith.truncf %5 : vector<32x512xf32> to vector<32x512xbf16>
    %c0_5 = arith.constant 0 : index
    %c0_6 = arith.constant 0 : index
    %7 = vector.load %arg4[%c0_5, %c0_6] : memref<32x512xbf16, #tpu.memory_space<vmem>>, vector<32x512xbf16>
    tpu.vector_store %arg4[%c0_5, %c0_6], %6 {strides = array<i32>} : memref<32x512xbf16, #tpu.memory_space<vmem>>, vector<32x512xbf16>,
    return
  }
  func.func @transform_0(%arg0: i32) -> (i32, i32) {
    %c0_i32 = arith.constant 0 : i32
    %c0_i32_0 = arith.constant 0 : i32
    return %arg0, %c0_i32 : i32, i32
  }
  func.func @transform_1(%arg0: i32) -> (i32, i32) {
    %c0_i32 = arith.constant 0 : i32
    %c0_i32_0 = arith.constant 0 : i32
    %c0_i32_1 = arith.constant 0 : i32
    return %c0_i32, %c0_i32_0 : i32, i32
  }
  func.func @transform_2(%arg0: i32) -> (i32, i32) {
    %c0_i32 = arith.constant 0 : i32
    %c0_i32_0 = arith.constant 0 : i32
    %c0_i32_1 = arith.constant 0 : i32
    return %c0_i32, %c0_i32_0 : i32, i32
  }
  func.func @transform_3(%arg0: i32) -> (i32, i32) {
    %c0_i32 = arith.constant 0 : i32
    %c0_i32_0 = arith.constant 0 : i32
    return %arg0, %c0_i32 : i32, i32
  }
}

module attributes {stable_mosaic.version = 11 : i64} {
  func.func @_dual_matmul_kernel(%arg0: i32, %arg1: memref<128x128xbf16, #tpu.memory_space<vmem>>, %arg2: memref<128x128xbf16, #tpu.memory_space<vmem>>, %arg3: memref<128x128xbf16, #tpu.memory_space<vmem>>, %arg4: memref<128x128xbf16, #tpu.memory_space<vmem>>, %arg5: memref<128x128xbf16, #tpu.memory_space<vmem>>) attributes {dimension_semantics = [#tpu.dimension_semantics<parallel>], iteration_bounds = array<i64: 1>, scalar_prefetch = 0 : i64, scratch_operands = 0 : i64, tpu.core_type = #tpu.core_type<tc>, window_params = [{transform_indices = @transform_0, window_bounds = array<i64: 128, 128>}, {transform_indices = @transform_1, window_bounds = array<i64: 128, 128>}, {pipeline_mode = #tpu.pipeline_mode<synchronous>, transform_indices = @transform_2, window_bounds = array<i64: 128, 128>}, {pipeline_mode = #tpu.pipeline_mode<synchronous>, transform_indices = @transform_3, window_bounds = array<i64: 128, 128>}, {transform_indices = @transform_4, window_bounds = array<i64: 128, 128>}]} {
    %c0 = arith.constant 0 : index
    %c0_0 = arith.constant 0 : index
    %0 = vector.load %arg1[%c0, %c0_0] : memref<128x128xbf16, #tpu.memory_space<vmem>>, vector<128x128xbf16>
    %c0_1 = arith.constant 0 : index
    %c0_2 = arith.constant 0 : index
    %1 = vector.load %arg3[%c0_1, %c0_2] : memref<128x128xbf16, #tpu.memory_space<vmem>>, vector<128x128xbf16>
    %cst = arith.constant dense<0.000000e+00> : vector<128x128xf32>
    %2 = tpu.matmul %0, %1, %cst {dimension_numbers = #tpu.dot_dimension_numbers<[1], [0], [0], [1], [0, 0, 1, 1], [], []>} : vector<128x128xbf16>, vector<128x128xbf16>, vector<128x128xf32> -> vector<128x128xf32>
    %c0_3 = arith.constant 0 : index
    %c0_4 = arith.constant 0 : index
    %3 = vector.load %arg2[%c0_3, %c0_4] : memref<128x128xbf16, #tpu.memory_space<vmem>>, vector<128x128xbf16>
    %c0_5 = arith.constant 0 : index
    %c0_6 = arith.constant 0 : index
    %4 = vector.load %arg4[%c0_5, %c0_6] : memref<128x128xbf16, #tpu.memory_space<vmem>>, vector<128x128xbf16>
    %cst_7 = arith.constant dense<0.000000e+00> : vector<128x128xf32>
    %5 = tpu.matmul %3, %4, %cst_7 {dimension_numbers = #tpu.dot_dimension_numbers<[1], [0], [0], [1], [0, 0, 1, 1], [], []>} : vector<128x128xbf16>, vector<128x128xbf16>, vector<128x128xf32> -> vector<128x128xf32>
    %6 = arith.addf %2, %5 : vector<128x128xf32>
    %7 = arith.truncf %6 : vector<128x128xf32> to vector<128x128xbf16>
    %c0_8 = arith.constant 0 : index
    %c0_9 = arith.constant 0 : index
    %8 = vector.load %arg5[%c0_8, %c0_9] : memref<128x128xbf16, #tpu.memory_space<vmem>>, vector<128x128xbf16>
    tpu.vector_store %arg5[%c0_8, %c0_9], %7 {strides = array<i32>} : memref<128x128xbf16, #tpu.memory_space<vmem>>, vector<128x128xbf16>,
    return
  }
  func.func @transform_0(%arg0: i32) -> (i32, i32) {
    %c0_i32 = arith.constant 0 : i32
    %c0_i32_0 = arith.constant 0 : i32
    return %arg0, %c0_i32 : i32, i32
  }
  func.func @transform_1(%arg0: i32) -> (i32, i32) {
    %c0_i32 = arith.constant 0 : i32
    %c0_i32_0 = arith.constant 0 : i32
    return %arg0, %c0_i32 : i32, i32
  }
  func.func @transform_2(%arg0: i32) -> (i32, i32) {
    %c0_i32 = arith.constant 0 : i32
    %c0_i32_0 = arith.constant 0 : i32
    %c0_i32_1 = arith.constant 0 : i32
    return %c0_i32, %c0_i32_0 : i32, i32
  }
  func.func @transform_3(%arg0: i32) -> (i32, i32) {
    %c0_i32 = arith.constant 0 : i32
    %c0_i32_0 = arith.constant 0 : i32
    %c0_i32_1 = arith.constant 0 : i32
    return %c0_i32, %c0_i32_0 : i32, i32
  }
  func.func @transform_4(%arg0: i32) -> (i32, i32) {
    %c0_i32 = arith.constant 0 : i32
    %c0_i32_0 = arith.constant 0 : i32
    return %arg0, %c0_i32 : i32, i32
  }
}

module attributes {stable_mosaic.version = 11 : i64} {
  func.func @_matmul_bias_kernel(%arg0: i32, %arg1: memref<128x128xbf16, #tpu.memory_space<vmem>>, %arg2: memref<128x512xbf16, #tpu.memory_space<vmem>>, %arg3: memref<1x512xf32, #tpu.memory_space<vmem>>, %arg4: memref<128x512xbf16, #tpu.memory_space<vmem>>) attributes {dimension_semantics = [#tpu.dimension_semantics<parallel>], iteration_bounds = array<i64: 1>, scalar_prefetch = 0 : i64, scratch_operands = 0 : i64, tpu.core_type = #tpu.core_type<tc>, window_params = [{transform_indices = @transform_0, window_bounds = array<i64: 128, 128>}, {pipeline_mode = #tpu.pipeline_mode<synchronous>, transform_indices = @transform_1, window_bounds = array<i64: 128, 512>}, {pipeline_mode = #tpu.pipeline_mode<synchronous>, transform_indices = @transform_2, window_bounds = array<i64: 1, 512>}, {transform_indices = @transform_3, window_bounds = array<i64: 128, 512>}]} {
    %c0 = arith.constant 0 : index
    %c0_0 = arith.constant 0 : index
    %0 = vector.load %arg1[%c0, %c0_0] : memref<128x128xbf16, #tpu.memory_space<vmem>>, vector<128x128xbf16>
    %c0_1 = arith.constant 0 : index
    %c0_2 = arith.constant 0 : index
    %1 = vector.load %arg2[%c0_1, %c0_2] : memref<128x512xbf16, #tpu.memory_space<vmem>>, vector<128x512xbf16>
    %cst = arith.constant dense<0.000000e+00> : vector<128x512xf32>
    %2 = tpu.matmul %0, %1, %cst {dimension_numbers = #tpu.dot_dimension_numbers<[1], [0], [0], [1], [0, 0, 1, 1], [], []>} : vector<128x128xbf16>, vector<128x512xbf16>, vector<128x512xf32> -> vector<128x512xf32>
    %c0_3 = arith.constant 0 : index
    %c0_4 = arith.constant 0 : index
    %3 = vector.load %arg3[%c0_3, %c0_4] : memref<1x512xf32, #tpu.memory_space<vmem>>, vector<1x512xf32>
    %4 = vector.broadcast %3 : vector<1x512xf32> to vector<128x512xf32>
    %5 = arith.addf %2, %4 : vector<128x512xf32>
    %6 = arith.truncf %5 : vector<128x512xf32> to vector<128x512xbf16>
    %c0_5 = arith.constant 0 : index
    %c0_6 = arith.constant 0 : index
    %7 = vector.load %arg4[%c0_5, %c0_6] : memref<128x512xbf16, #tpu.memory_space<vmem>>, vector<128x512xbf16>
    tpu.vector_store %arg4[%c0_5, %c0_6], %6 {strides = array<i32>} : memref<128x512xbf16, #tpu.memory_space<vmem>>, vector<128x512xbf16>,
    return
  }
  func.func @transform_0(%arg0: i32) -> (i32, i32) {
    %c0_i32 = arith.constant 0 : i32
    %c0_i32_0 = arith.constant 0 : i32
    return %arg0, %c0_i32 : i32, i32
  }
  func.func @transform_1(%arg0: i32) -> (i32, i32) {
    %c0_i32 = arith.constant 0 : i32
    %c0_i32_0 = arith.constant 0 : i32
    %c0_i32_1 = arith.constant 0 : i32
    return %c0_i32, %c0_i32_0 : i32, i32
  }
  func.func @transform_2(%arg0: i32) -> (i32, i32) {
    %c0_i32 = arith.constant 0 : i32
    %c0_i32_0 = arith.constant 0 : i32
    %c0_i32_1 = arith.constant 0 : i32
    return %c0_i32, %c0_i32_0 : i32, i32
  }
  func.func @transform_3(%arg0: i32) -> (i32, i32) {
    %c0_i32 = arith.constant 0 : i32
    %c0_i32_0 = arith.constant 0 : i32
    return %arg0, %c0_i32 : i32, i32
  }
}

module attributes {stable_mosaic.version = 11 : i64} {
  func.func @_dual_matmul_kernel(%arg0: i32, %arg1: memref<256x128xbf16, #tpu.memory_space<vmem>>, %arg2: memref<256x128xbf16, #tpu.memory_space<vmem>>, %arg3: memref<128x128xbf16, #tpu.memory_space<vmem>>, %arg4: memref<128x128xbf16, #tpu.memory_space<vmem>>, %arg5: memref<256x128xbf16, #tpu.memory_space<vmem>>) attributes {dimension_semantics = [#tpu.dimension_semantics<parallel>], iteration_bounds = array<i64: 2>, scalar_prefetch = 0 : i64, scratch_operands = 0 : i64, tpu.core_type = #tpu.core_type<tc>, window_params = [{transform_indices = @transform_0, window_bounds = array<i64: 256, 128>}, {transform_indices = @transform_1, window_bounds = array<i64: 256, 128>}, {pipeline_mode = #tpu.pipeline_mode<synchronous>, transform_indices = @transform_2, window_bounds = array<i64: 128, 128>}, {pipeline_mode = #tpu.pipeline_mode<synchronous>, transform_indices = @transform_3, window_bounds = array<i64: 128, 128>}, {transform_indices = @transform_4, window_bounds = array<i64: 256, 128>}]} {
    %c0 = arith.constant 0 : index
    %c0_0 = arith.constant 0 : index
    %0 = vector.load %arg1[%c0, %c0_0] : memref<256x128xbf16, #tpu.memory_space<vmem>>, vector<256x128xbf16>
    %c0_1 = arith.constant 0 : index
    %c0_2 = arith.constant 0 : index
    %1 = vector.load %arg3[%c0_1, %c0_2] : memref<128x128xbf16, #tpu.memory_space<vmem>>, vector<128x128xbf16>
    %cst = arith.constant dense<0.000000e+00> : vector<256x128xf32>
    %2 = tpu.matmul %0, %1, %cst {dimension_numbers = #tpu.dot_dimension_numbers<[1], [0], [0], [1], [0, 0, 1, 1], [], []>} : vector<256x128xbf16>, vector<128x128xbf16>, vector<256x128xf32> -> vector<256x128xf32>
    %c0_3 = arith.constant 0 : index
    %c0_4 = arith.constant 0 : index
    %3 = vector.load %arg2[%c0_3, %c0_4] : memref<256x128xbf16, #tpu.memory_space<vmem>>, vector<256x128xbf16>
    %c0_5 = arith.constant 0 : index
    %c0_6 = arith.constant 0 : index
    %4 = vector.load %arg4[%c0_5, %c0_6] : memref<128x128xbf16, #tpu.memory_space<vmem>>, vector<128x128xbf16>
    %cst_7 = arith.constant dense<0.000000e+00> : vector<256x128xf32>
    %5 = tpu.matmul %3, %4, %cst_7 {dimension_numbers = #tpu.dot_dimension_numbers<[1], [0], [0], [1], [0, 0, 1, 1], [], []>} : vector<256x128xbf16>, vector<128x128xbf16>, vector<256x128xf32> -> vector<256x128xf32>
    %6 = arith.addf %2, %5 : vector<256x128xf32>
    %7 = arith.truncf %6 : vector<256x128xf32> to vector<256x128xbf16>
    %c0_8 = arith.constant 0 : index
    %c0_9 = arith.constant 0 : index
    %8 = vector.load %arg5[%c0_8, %c0_9] : memref<256x128xbf16, #tpu.memory_space<vmem>>, vector<256x128xbf16>
    tpu.vector_store %arg5[%c0_8, %c0_9], %7 {strides = array<i32>} : memref<256x128xbf16, #tpu.memory_space<vmem>>, vector<256x128xbf16>,
    return
  }
  func.func @transform_0(%arg0: i32) -> (i32, i32) {
    %c0_i32 = arith.constant 0 : i32
    %c0_i32_0 = arith.constant 0 : i32
    return %arg0, %c0_i32 : i32, i32
  }
  func.func @transform_1(%arg0: i32) -> (i32, i32) {
    %c0_i32 = arith.constant 0 : i32
    %c0_i32_0 = arith.constant 0 : i32
    return %arg0, %c0_i32 : i32, i32
  }
  func.func @transform_2(%arg0: i32) -> (i32, i32) {
    %c0_i32 = arith.constant 0 : i32
    %c0_i32_0 = arith.constant 0 : i32
    %c0_i32_1 = arith.constant 0 : i32
    return %c0_i32, %c0_i32_0 : i32, i32
  }
  func.func @transform_3(%arg0: i32) -> (i32, i32) {
    %c0_i32 = arith.constant 0 : i32
    %c0_i32_0 = arith.constant 0 : i32
    %c0_i32_1 = arith.constant 0 : i32
    return %c0_i32, %c0_i32_0 : i32, i32
  }
  func.func @transform_4(%arg0: i32) -> (i32, i32) {
    %c0_i32 = arith.constant 0 : i32
    %c0_i32_0 = arith.constant 0 : i32
    return %arg0, %c0_i32 : i32, i32
  }
}

module attributes {stable_mosaic.version = 11 : i64} {
  func.func @_matmul_kernel(%arg0: i32, %arg1: memref<256x128xbf16, #tpu.memory_space<vmem>>, %arg2: memref<128x128xbf16, #tpu.memory_space<vmem>>, %arg3: memref<256x128xf32, #tpu.memory_space<vmem>>) attributes {dimension_semantics = [#tpu.dimension_semantics<parallel>], iteration_bounds = array<i64: 2>, scalar_prefetch = 0 : i64, scratch_operands = 0 : i64, tpu.core_type = #tpu.core_type<tc>, window_params = [{transform_indices = @transform_0, window_bounds = array<i64: 256, 128>}, {pipeline_mode = #tpu.pipeline_mode<synchronous>, transform_indices = @transform_1, window_bounds = array<i64: 128, 128>}, {transform_indices = @transform_2, window_bounds = array<i64: 256, 128>}]} {
    %c0 = arith.constant 0 : index
    %c0_0 = arith.constant 0 : index
    %0 = vector.load %arg1[%c0, %c0_0] : memref<256x128xbf16, #tpu.memory_space<vmem>>, vector<256x128xbf16>
    %c0_1 = arith.constant 0 : index
    %c0_2 = arith.constant 0 : index
    %1 = vector.load %arg2[%c0_1, %c0_2] : memref<128x128xbf16, #tpu.memory_space<vmem>>, vector<128x128xbf16>
    %cst = arith.constant dense<0.000000e+00> : vector<256x128xf32>
    %2 = tpu.matmul %0, %1, %cst {dimension_numbers = #tpu.dot_dimension_numbers<[1], [0], [0], [1], [0, 0, 1, 1], [], []>} : vector<256x128xbf16>, vector<128x128xbf16>, vector<256x128xf32> -> vector<256x128xf32>
    %c0_3 = arith.constant 0 : index
    %c0_4 = arith.constant 0 : index
    %3 = vector.load %arg3[%c0_3, %c0_4] : memref<256x128xf32, #tpu.memory_space<vmem>>, vector<256x128xf32>
    tpu.vector_store %arg3[%c0_3, %c0_4], %2 {strides = array<i32>} : memref<256x128xf32, #tpu.memory_space<vmem>>, vector<256x128xf32>,
    return
  }
  func.func @transform_0(%arg0: i32) -> (i32, i32) {
    %c0_i32 = arith.constant 0 : i32
    %c0_i32_0 = arith.constant 0 : i32
    return %arg0, %c0_i32 : i32, i32
  }
  func.func @transform_1(%arg0: i32) -> (i32, i32) {
    %c0_i32 = arith.constant 0 : i32
    %c0_i32_0 = arith.constant 0 : i32
    %c0_i32_1 = arith.constant 0 : i32
    return %c0_i32, %c0_i32_0 : i32, i32
  }
  func.func @transform_2(%arg0: i32) -> (i32, i32) {
    %c0_i32 = arith.constant 0 : i32
    %c0_i32_0 = arith.constant 0 : i32
    return %arg0, %c0_i32 : i32, i32
  }
}

</mosaic_0001>

<llo_original>
// kernel: unet9_logsigmoid_forward.13
$region0: #{unet9_logsigmoid_forward.13}
  #allocation0 [shape = 'u32[]', space=smem, size = 0x4, offset = 0x4, fixed_abs, tag = 'smem constant byte address 0x4 - core index']
  #allocation1 [shape = 'u32[72,128]{1,0:T(1,128)}', space=vmem, size = 0x9000, scoped, tag = 'internal scratch']
  %s0 = inlined_call_operand.vmem [shape: bf16[2,8,8,128], index: 0, kind: input, shape index: {}]
  %s1 = inlined_call_operand.vmem [shape: bf16[2,8,8,128], index: 1, kind: input, shape index: {}]
  %s2 = inlined_call_operand.vmem [shape: bf16[2,8,8,128], index: 2, kind: input, shape index: {}]
  %s3 = inlined_call_operand.vmem [shape: bf16[2,8,8,128], index: 3, kind: input, shape index: {}]
  %s4 = inlined_call_operand.vmem [shape: bf16[2,8,8,128], index: 4, kind: output, shape index: {}]
  %s5 = sld [smem:[#allocation0]]
  $region49: #{unet9_logsigmoid_forward.13} parent=0
    _
  %s7 = ssub.s32 1, %s5
  %s8 = scalar_select 0, %s7, %s5
  loop: start=0, step=1, limit=4
  $region2: #{unet9_logsigmoid_forward.13} parent=0 // loop_pre_header
    _
  $region3: #{unet9_logsigmoid_forward.13} parent=0 // loop_header
    %s10 = sphi 0, %s14
    %p11 = scmp.ge.s32.totalorder %s10, 4
    %s20 = sphi 0, %s22
    %s23 = sphi 0, %s20
    %s24 = sphi 0, %s23
    %s40 = sphi 0, %s24
    %s46 = sphi 0, %s48
    %s49 = sphi 0, %s46
    %s50 = sphi 0, %s49
    %s66 = sphi 0, %s50
    %s72 = sphi 0, %s74
    %s75 = sphi 0, %s72
    %s76 = sphi 0, %s75
    %s92 = sphi 0, %s76
    %s98 = sphi 0, %s100
    %s101 = sphi 0, %s98
    %s102 = sphi 0, %s101
    %s118 = sphi 0, %s102
    %s124 = sphi 0, %s126
    %s127 = sphi 0, %s124
    %s128 = sphi 0, %s127
    %s144 = sphi 0, %s128
  $region4: #{unet9_logsigmoid_forward.13} parent=0 // loop_header_branch
    %13 = sbr.rel (%p11) target = $region8
  $region5: #{unet9_logsigmoid_forward.13} parent=0 // loop_body
    %s15 = ssub.s32 %s10, 1
    %s16 = ssub.s32 %s10, 2
    %s17 = sadd.s32 %s10, 1
    %s18 = ssub.s32 %s10, %s17
    %p19 = scmp.eq.s32.totalorder %s18, 0
    %s21 = sadd.s32 %s20, 1
    %s22 = scalar_select %p19, %s20, %s21
    %p25 = pneg %p19
    %p26 = scmp.eq.s32.totalorder %s10, 1
    %p27 = por %p25, %p26
    %p28 = scmp.ne.s32.totalorder %s20, %s23
    %p29 = scmp.eq.s32.totalorder %s10, 0
    %p30 = por %p28, %p29
    %p31 = scmp.ne.s32.totalorder %s20, %s23
    %p32 = scmp.eq.s32.totalorder %s15, 1
    %p33 = por %p31, %p32
    %p34 = scmp.ne.s32.totalorder %s23, %s24
    %p35 = scmp.eq.s32.totalorder %s15, 0
    %p36 = por %p34, %p35
    %p37 = scmp.ne.s32.totalorder %s23, %s24
    %p38 = scmp.eq.s32.totalorder %s16, 1
    %p39 = por %p37, %p38
    %p41 = scmp.ne.s32.totalorder %s24, %s40
    %p42 = scmp.eq.s32.totalorder %s16, 0
    %p43 = por %p41, %p42
    %s44 = ssub.s32 %s10, %s17
    %p45 = scmp.eq.s32.totalorder %s44, 0
    %s47 = sadd.s32 %s46, 1
    %s48 = scalar_select %p45, %s46, %s47
    %p51 = pneg %p45
    %p52 = scmp.eq.s32.totalorder %s10, 1
    %p53 = por %p51, %p52
    %p54 = scmp.ne.s32.totalorder %s46, %s49
    %p55 = scmp.eq.s32.totalorder %s10, 0
    %p56 = por %p54, %p55
    %p57 = scmp.ne.s32.totalorder %s46, %s49
    %p58 = scmp.eq.s32.totalorder %s15, 1
    %p59 = por %p57, %p58
    %p60 = scmp.ne.s32.totalorder %s49, %s50
    %p61 = scmp.eq.s32.totalorder %s15, 0
    %p62 = por %p60, %p61
    %p63 = scmp.ne.s32.totalorder %s49, %s50
    %p64 = scmp.eq.s32.totalorder %s16, 1
    %p65 = por %p63, %p64
    %p67 = scmp.ne.s32.totalorder %s50, %s66
    %p68 = scmp.eq.s32.totalorder %s16, 0
    %p69 = por %p67, %p68
    %s70 = ssub.s32 %s10, %s17
    %p71 = scmp.eq.s32.totalorder %s70, 0
    %s73 = sadd.s32 %s72, 1
    %s74 = scalar_select %p71, %s72, %s73
    %p77 = pneg %p71
    %p78 = scmp.eq.s32.totalorder %s10, 1
    %p79 = por %p77, %p78
    %p80 = scmp.ne.s32.totalorder %s72, %s75
    %p81 = scmp.eq.s32.totalorder %s10, 0
    %p82 = por %p80, %p81
    %p83 = scmp.ne.s32.totalorder %s72, %s75
    %p84 = scmp.eq.s32.totalorder %s15, 1
    %p85 = por %p83, %p84
    %p86 = scmp.ne.s32.totalorder %s75, %s76
    %p87 = scmp.eq.s32.totalorder %s15, 0
    %p88 = por %p86, %p87
    %p89 = scmp.ne.s32.totalorder %s75, %s76
    %p90 = scmp.eq.s32.totalorder %s16, 1
    %p91 = por %p89, %p90
    %p93 = scmp.ne.s32.totalorder %s76, %s92
    %p94 = scmp.eq.s32.totalorder %s16, 0
    %p95 = por %p93, %p94
    %s96 = ssub.s32 %s10, %s17
    %p97 = scmp.eq.s32.totalorder %s96, 0
    %s99 = sadd.s32 %s98, 1
    %s100 = scalar_select %p97, %s98, %s99
    %p103 = pneg %p97
    %p104 = scmp.eq.s32.totalorder %s10, 1
    %p105 = por %p103, %p104
    %p106 = scmp.ne.s32.totalorder %s98, %s101
    %p107 = scmp.eq.s32.totalorder %s10, 0
    %p108 = por %p106, %p107
    %p109 = scmp.ne.s32.totalorder %s98, %s101
    %p110 = scmp.eq.s32.totalorder %s15, 1
    %p111 = por %p109, %p110
    %p112 = scmp.ne.s32.totalorder %s101, %s102
    %p113 = scmp.eq.s32.totalorder %s15, 0
    %p114 = por %p112, %p113
    %p115 = scmp.ne.s32.totalorder %s101, %s102
    %p116 = scmp.eq.s32.totalorder %s16, 1
    %p117 = por %p115, %p116
    %p119 = scmp.ne.s32.totalorder %s102, %s118
    %p120 = scmp.eq.s32.totalorder %s16, 0
    %p121 = por %p119, %p120
    %s122 = ssub.s32 %s10, %s17
    %p123 = scmp.eq.s32.totalorder %s122, 0
    %s125 = sadd.s32 %s124, 1
    %s126 = scalar_select %p123, %s124, %s125
    %p129 = pneg %p123
    %p130 = scmp.eq.s32.totalorder %s10, 1
    %p131 = por %p129, %p130
    %p132 = scmp.ne.s32.totalorder %s124, %s127
    %p133 = scmp.eq.s32.totalorder %s10, 0
    %p134 = por %p132, %p133
    %p135 = scmp.ne.s32.totalorder %s124, %s127
    %p136 = scmp.eq.s32.totalorder %s15, 1
    %p137 = por %p135, %p136
    %p138 = scmp.ne.s32.totalorder %s127, %s128
    %p139 = scmp.eq.s32.totalorder %s15, 0
    %p140 = por %p138, %p139
    %p141 = scmp.ne.s32.totalorder %s127, %s128
    %p142 = scmp.eq.s32.totalorder %s16, 1
    %p143 = por %p141, %p142
    %p145 = scmp.ne.s32.totalorder %s128, %s144
    %p146 = scmp.eq.s32.totalorder %s16, 0
    %p147 = por %p145, %p146
    %p148 = scmp.le.s32.totalorder 1, %s10
    %p149 = scmp.lt.s32.totalorder %s10, 3
    %p150 = pnand %p148, %p149
    %p151 = pneg %p150
    // Predicated region
    $region9: #{unet9_logsigmoid_forward.13} parent=5 // pred_check
      _
    $region10: #{unet9_logsigmoid_forward.13} parent=5 // pred_check_branch
      %153 = sbr.rel (%p150) target = $region12
    $region11: #{unet9_logsigmoid_forward.13} parent=5 // pred_region
      %s154 = ssub.s32 %s10, 1
    $region12: #{unet9_logsigmoid_forward.13} parent=5 // pred_fallthru
      _
    %p155 = scmp.lt.s32.totalorder %s10, 2
    // Predicated region
    $region13: #{unet9_logsigmoid_forward.13} parent=5 // pred_check
      %p156 = pneg %p155
    $region14: #{unet9_logsigmoid_forward.13} parent=5 // pred_check_branch
      %158 = sbr.rel (%p156) target = $region16
    $region15: #{unet9_logsigmoid_forward.13} parent=5 // pred_region
      // Predicated region
      $region17: #{unet9_logsigmoid_forward.13} parent=15 // pred_check
        %p159 = pneg %p30
      $region18: #{unet9_logsigmoid_forward.13} parent=15 // pred_check_branch
        %161 = sbr.rel (%p159) target = $region20
      $region19: #{unet9_logsigmoid_forward.13} parent=15 // pred_region
        %p162 = scmp.lt.s32.totalorder %s10, 1
        %s163 = scalar_select %p162, %s10, 1
        %s164 = smul.addr %s163, 8
        %s165 = smul.addr %s164, 4
        %s166 = scalar_lea.vmem %s0, %s165
      $region20: #{unet9_logsigmoid_forward.13} parent=15 // pred_fallthru
        _
      // Predicated region
      $region21: #{unet9_logsigmoid_forward.13} parent=15 // pred_check
        %p167 = pneg %p56
      $region22: #{unet9_logsigmoid_forward.13} parent=15 // pred_check_branch
        %169 = sbr.rel (%p167) target = $region24
      $region23: #{unet9_logsigmoid_forward.13} parent=15 // pred_region
        %p170 = scmp.lt.s32.totalorder %s10, 1
        %s171 = scalar_select %p170, %s10, 1
        %s172 = smul.addr %s171, 8
        %s173 = smul.addr %s172, 4
        %s174 = scalar_lea.vmem %s1, %s173
      $region24: #{unet9_logsigmoid_forward.13} parent=15 // pred_fallthru
        _
      // Predicated region
      $region25: #{unet9_logsigmoid_forward.13} parent=15 // pred_check
        %p175 = pneg %p82
      $region26: #{unet9_logsigmoid_forward.13} parent=15 // pred_check_branch
        %177 = sbr.rel (%p175) target = $region28
      $region27: #{unet9_logsigmoid_forward.13} parent=15 // pred_region
        %p178 = scmp.lt.s32.totalorder %s10, 1
        %s179 = scalar_select %p178, %s10, 1
        %s180 = smul.addr %s179, 8
        %s181 = smul.addr %s180, 4
        %s182 = scalar_lea.vmem %s2, %s181
      $region28: #{unet9_logsigmoid_forward.13} parent=15 // pred_fallthru
        _
      // Predicated region
      $region29: #{unet9_logsigmoid_forward.13} parent=15 // pred_check
        %p183 = pneg %p108
      $region30: #{unet9_logsigmoid_forward.13} parent=15 // pred_check_branch
        %185 = sbr.rel (%p183) target = $region32
      $region31: #{unet9_logsigmoid_forward.13} parent=15 // pred_region
        %p186 = scmp.lt.s32.totalorder %s10, 1
        %s187 = scalar_select %p186, %s10, 1
        %s188 = smul.addr %s187, 8
        %s189 = smul.addr %s188, 4
        %s190 = scalar_lea.vmem %s3, %s189
      $region32: #{unet9_logsigmoid_forward.13} parent=15 // pred_fallthru
        _
    $region16: #{unet9_logsigmoid_forward.13} parent=5 // pred_fallthru
      _
    %p191 = scmp.le.s32.totalorder 1, %s10
    %p192 = scmp.lt.s32.totalorder %s10, 3
    %p193 = pnand %p191, %p192
    %p194 = pneg %p193
    // Predicated region
    $region33: #{unet9_logsigmoid_forward.13} parent=5 // pred_check
      _
    $region34: #{unet9_logsigmoid_forward.13} parent=5 // pred_check_branch
      %196 = sbr.rel (%p193) target = $region36
    $region35: #{unet9_logsigmoid_forward.13} parent=5 // pred_region
      %s197 = ssub.s32 %s10, 1
      %p198 = scmp.lt.s32.totalorder %s15, 1
      %s199 = scalar_select %p198, %s15, 1
      %s200 = smul.addr %s199, 8
      %s201 = smul.addr %s200, 4
      %s202 = scalar_lea.vmem %s0, %s201
      %p203 = pneg %p36
      %p204 = pneg %p33
      %p205 = scmp.lt.s32.totalorder %s15, 1
      %s206 = scalar_select %p205, %s15, 1
      %s207 = smul.addr %s206, 8
      %s208 = smul.addr %s207, 4
      %s209 = scalar_lea.vmem %s1, %s208
      %p210 = pneg %p62
      %p211 = pneg %p59
      %p212 = scmp.lt.s32.totalorder %s15, 1
      %s213 = scalar_select %p212, %s15, 1
      %s214 = smul.addr %s213, 8
      %s215 = smul.addr %s214, 4
      %s216 = scalar_lea.vmem %s2, %s215
      %p217 = pneg %p88
      %p218 = pneg %p85
      %p219 = scmp.lt.s32.totalorder %s15, 1
      %s220 = scalar_select %p219, %s15, 1
      %s221 = smul.addr %s220, 8
      %s222 = smul.addr %s221, 4
      %s223 = scalar_lea.vmem %s3, %s222
      %p224 = pneg %p114
      %p225 = pneg %p111
      %p226 = pneg %p140
      %p227 = pneg %p137
      %p228 = scmp.lt.s32.totalorder %s15, 1
      %s229 = scalar_select %p228, %s15, 1
      %s230 = smul.addr %s229, 8
      %s231 = smul.addr %s230, 4
      %s232 = scalar_lea.vmem %s4, %s231
      %p233 = scmp.lt.s32.totalorder %s15, 1
      %s234 = scalar_select %p233, %s15, 1
      %s235 = smul.addr %s234, 8
      %s236 = smul.addr %s235, 4
      %s237 = scalar_lea.vmem %s0, %s236
      %p238 = scmp.lt.s32.totalorder %s15, 1
      %s239 = scalar_select %p238, %s15, 1
      %s240 = smul.addr %s239, 8
      %s241 = smul.addr %s240, 4
      %s242 = scalar_lea.vmem %s1, %s241
      %p243 = scmp.lt.s32.totalorder %s15, 1
      %s244 = scalar_select %p243, %s15, 1
      %s245 = smul.addr %s244, 8
      %s246 = smul.addr %s245, 4
      %s247 = scalar_lea.vmem %s2, %s246
      %p248 = scmp.lt.s32.totalorder %s15, 1
      %s249 = scalar_select %p248, %s15, 1
      %s250 = smul.addr %s249, 8
      %s251 = smul.addr %s250, 4
      %s252 = scalar_lea.vmem %s3, %s251
      %p253 = scmp.lt.s32.totalorder %s15, 1
      %s254 = scalar_select %p253, %s15, 1
      %s255 = smul.addr %s254, 8
      %s256 = smul.addr %s255, 4
      %s257 = scalar_lea.vmem %s4, %s256
      %v258 = vld [vmem:[%s237] sm:$0xf]
      %v259 = vld [vmem:[%s237 + $0x4] sm:$0xf]
      %v260 = vld [vmem:[%s237 + $0x8] sm:$0xf]
      %v261 = vld [vmem:[%s237 + $0xc] sm:$0xf]
      %v262 = vld [vmem:[%s237 + $0x10] sm:$0xf]
      %v263 = vld [vmem:[%s237 + $0x14] sm:$0xf]
      %v264 = vld [vmem:[%s237 + $0x18] sm:$0xf]
      %v265 = vld [vmem:[%s237 + $0x1c] sm:$0xf]
      %v266 = vld [vmem:[%s242] sm:$0xf]
      %v267 = vld [vmem:[%s242 + $0x4] sm:$0xf]
      %v268 = vld [vmem:[%s242 + $0x8] sm:$0xf]
      %v269 = vld [vmem:[%s242 + $0xc] sm:$0xf]
      %v270 = vld [vmem:[%s242 + $0x10] sm:$0xf]
      %v271 = vld [vmem:[%s242 + $0x14] sm:$0xf]
      %v272 = vld [vmem:[%s242 + $0x18] sm:$0xf]
      %v273 = vld [vmem:[%s242 + $0x1c] sm:$0xf]
      %v274 = vunpack.c.l.bf16 %v258
      %v275 = vunpack.c.l.bf16 %v259
      %v276 = vunpack.c.l.bf16 %v260
      %v277 = vunpack.c.l.bf16 %v261
      %v278 = vunpack.c.l.bf16 %v262
      %v279 = vunpack.c.l.bf16 %v263
      %v280 = vunpack.c.l.bf16 %v264
      %v281 = vunpack.c.l.bf16 %v265
      %v282 = vunpack.c.l.bf16 %v266
      %v283 = vunpack.c.l.bf16 %v267
      %v284 = vunpack.c.l.bf16 %v268
      %v285 = vunpack.c.l.bf16 %v269
      %v286 = vunpack.c.l.bf16 %v270
      %v287 = vunpack.c.l.bf16 %v271
      %v288 = vunpack.c.l.bf16 %v272
      %v289 = vunpack.c.l.bf16 %v273
      %v290 = vmax.f32 %v274, %v282
      %v291 = vmax.f32 %v275, %v283
      %v292 = vmax.f32 %v276, %v284
      %v293 = vmax.f32 %v277, %v285
      %v294 = vmax.f32 %v278, %v286
      %v295 = vmax.f32 %v279, %v287
      %v296 = vmax.f32 %v280, %v288
      %v297 = vmax.f32 %v281, %v289
      %v298 = vpack.c.bf16 %v290, %v290
      %v299 = vpack.c.bf16 %v291, %v291
      %v300 = vpack.c.bf16 %v292, %v292
      %v301 = vpack.c.bf16 %v293, %v293
      %v302 = vpack.c.bf16 %v294, %v294
      %v303 = vpack.c.bf16 %v295, %v295
      %v304 = vpack.c.bf16 %v296, %v296
      %v305 = vpack.c.bf16 %v297, %v297
      %v306 = vld [vmem:[%s247] sm:$0xf]
      %v307 = vld [vmem:[%s247 + $0x4] sm:$0xf]
      %v308 = vld [vmem:[%s247 + $0x8] sm:$0xf]
      %v309 = vld [vmem:[%s247 + $0xc] sm:$0xf]
      %v310 = vld [vmem:[%s247 + $0x10] sm:$0xf]
      %v311 = vld [vmem:[%s247 + $0x14] sm:$0xf]
      %v312 = vld [vmem:[%s247 + $0x18] sm:$0xf]
      %v313 = vld [vmem:[%s247 + $0x1c] sm:$0xf]
      %v314 = vld [vmem:[%s252] sm:$0xf]
      %v315 = vld [vmem:[%s252 + $0x4] sm:$0xf]
      %v316 = vld [vmem:[%s252 + $0x8] sm:$0xf]
      %v317 = vld [vmem:[%s252 + $0xc] sm:$0xf]
      %v318 = vld [vmem:[%s252 + $0x10] sm:$0xf]
      %v319 = vld [vmem:[%s252 + $0x14] sm:$0xf]
      %v320 = vld [vmem:[%s252 + $0x18] sm:$0xf]
      %v321 = vld [vmem:[%s252 + $0x1c] sm:$0xf]
      %v322 = vunpack.c.l.bf16 %v306
      %v323 = vunpack.c.l.bf16 %v307
      %v324 = vunpack.c.l.bf16 %v308
      %v325 = vunpack.c.l.bf16 %v309
      %v326 = vunpack.c.l.bf16 %v310
      %v327 = vunpack.c.l.bf16 %v311
      %v328 = vunpack.c.l.bf16 %v312
      %v329 = vunpack.c.l.bf16 %v313
      %v330 = vunpack.c.l.bf16 %v314
      %v331 = vunpack.c.l.bf16 %v315
      %v332 = vunpack.c.l.bf16 %v316
      %v333 = vunpack.c.l.bf16 %v317
      %v334 = vunpack.c.l.bf16 %v318
      %v335 = vunpack.c.l.bf16 %v319
      %v336 = vunpack.c.l.bf16 %v320
      %v337 = vunpack.c.l.bf16 %v321
      %v338 = vmax.f32 %v322, %v330
      %v339 = vmax.f32 %v323, %v331
      %v340 = vmax.f32 %v324, %v332
      %v341 = vmax.f32 %v325, %v333
      %v342 = vmax.f32 %v326, %v334
      %v343 = vmax.f32 %v327, %v335
      %v344 = vmax.f32 %v328, %v336
      %v345 = vmax.f32 %v329, %v337
      %v346 = vpack.c.bf16 %v338, %v338
      %v347 = vpack.c.bf16 %v339, %v339
      %v348 = vpack.c.bf16 %v340, %v340
      %v349 = vpack.c.bf16 %v341, %v341
      %v350 = vpack.c.bf16 %v342, %v342
      %v351 = vpack.c.bf16 %v343, %v343
      %v352 = vpack.c.bf16 %v344, %v344
      %v353 = vpack.c.bf16 %v345, %v345
      %v354 = vunpack.c.l.bf16 %v298
      %v355 = vunpack.c.l.bf16 %v299
      %v356 = vunpack.c.l.bf16 %v300
      %v357 = vunpack.c.l.bf16 %v301
      %v358 = vunpack.c.l.bf16 %v302
      %v359 = vunpack.c.l.bf16 %v303
      %v360 = vunpack.c.l.bf16 %v304
      %v361 = vunpack.c.l.bf16 %v305
      %v362 = vunpack.c.l.bf16 %v346
      %v363 = vunpack.c.l.bf16 %v347
      %v364 = vunpack.c.l.bf16 %v348
      %v365 = vunpack.c.l.bf16 %v349
      %v366 = vunpack.c.l.bf16 %v350
      %v367 = vunpack.c.l.bf16 %v351
      %v368 = vunpack.c.l.bf16 %v352
      %v369 = vunpack.c.l.bf16 %v353
      %v370 = vmax.f32 %v354, %v362
      %v371 = vmax.f32 %v355, %v363
      %v372 = vmax.f32 %v356, %v364
      %v373 = vmax.f32 %v357, %v365
      %v374 = vmax.f32 %v358, %v366
      %v375 = vmax.f32 %v359, %v367
      %v376 = vmax.f32 %v360, %v368
      %v377 = vmax.f32 %v361, %v369
      %v378 = vpack.c.bf16 %v370, %v370
      %v379 = vpack.c.bf16 %v371, %v371
      %v380 = vpack.c.bf16 %v372, %v372
      %v381 = vpack.c.bf16 %v373, %v373
      %v382 = vpack.c.bf16 %v374, %v374
      %v383 = vpack.c.bf16 %v375, %v375
      %v384 = vpack.c.bf16 %v376, %v376
      %v385 = vpack.c.bf16 %v377, %v377
      %386 = vst [vmem:[%s257] sm:$0xf] %v378
      %387 = vst [vmem:[%s257 + $0x4] sm:$0xf] %v379
      %388 = vst [vmem:[%s257 + $0x8] sm:$0xf] %v380
      %389 = vst [vmem:[%s257 + $0xc] sm:$0xf] %v381
      %390 = vst [vmem:[%s257 + $0x10] sm:$0xf] %v382
      %391 = vst [vmem:[%s257 + $0x14] sm:$0xf] %v383
      %392 = vst [vmem:[%s257 + $0x18] sm:$0xf] %v384
      %393 = vst [vmem:[%s257 + $0x1c] sm:$0xf] %v385
      %p394 = scmp.lt.s32.totalorder %s15, 1
      %s395 = scalar_select %p394, %s15, 1
      %s396 = smul.addr %s395, 8
      %s397 = smul.addr %s396, 4
      %s398 = scalar_lea.vmem %s4, %s397
      // Predicated region
      $region37: #{unet9_logsigmoid_forward.13} parent=35 // pred_check
        %p399 = pneg %p137
      $region38: #{unet9_logsigmoid_forward.13} parent=35 // pred_check_branch
        %401 = sbr.rel (%p399) target = $region40
      $region39: #{unet9_logsigmoid_forward.13} parent=35 // pred_region
        _
      $region40: #{unet9_logsigmoid_forward.13} parent=35 // pred_fallthru
        _
    $region36: #{unet9_logsigmoid_forward.13} parent=5 // pred_fallthru
      _
    %p402 = scmp.le.s32.totalorder 2, %s10
    // Predicated region
    $region41: #{unet9_logsigmoid_forward.13} parent=5 // pred_check
      %p403 = pneg %p402
    $region42: #{unet9_logsigmoid_forward.13} parent=5 // pred_check_branch
      %405 = sbr.rel (%p403) target = $region44
    $region43: #{unet9_logsigmoid_forward.13} parent=5 // pred_region
      %s406 = ssub.s32 %s10, 2
      // Predicated region
      $region45: #{unet9_logsigmoid_forward.13} parent=43 // pred_check
        %p407 = pneg %p143
      $region46: #{unet9_logsigmoid_forward.13} parent=43 // pred_check_branch
        %409 = sbr.rel (%p407) target = $region48
      $region47: #{unet9_logsigmoid_forward.13} parent=43 // pred_region
        %p410 = scmp.lt.s32.totalorder %s16, 1
        %s411 = scalar_select %p410, %s16, 1
        %s412 = smul.addr %s411, 8
        %s413 = smul.addr %s412, 4
        %s414 = scalar_lea.vmem %s4, %s413
      $region48: #{unet9_logsigmoid_forward.13} parent=43 // pred_fallthru
        _
    $region44: #{unet9_logsigmoid_forward.13} parent=5 // pred_fallthru
      _
  $region6: #{unet9_logsigmoid_forward.13} parent=0 // loop_footer
    %s14 = sadd.s32 1, %s10
  $region7: #{unet9_logsigmoid_forward.13} parent=0 // loop_footer_branch
    %9 = sbr.rel target = $region3
  $region8: #{unet9_logsigmoid_forward.13} parent=0 // loop_exit
    _

// kernel: unet9_logsigmoid_forward.12
$region0: #{unet9_logsigmoid_forward.12}
  #allocation0 [shape = 'u32[]', space=smem, size = 0x4, offset = 0x4, fixed_abs, tag = 'smem constant byte address 0x4 - core index']
  #allocation1 [shape = 'u32[72,128]{1,0:T(1,128)}', space=vmem, size = 0x9000, scoped, tag = 'internal scratch']
  %s0 = inlined_call_operand.vmem [shape: bf16[2,288,384], index: 0, kind: input, shape index: {}]
  %s1 = inlined_call_operand.vmem [shape: bf16[3,384,128], index: 1, kind: input, shape index: {}]
  %s2 = inlined_call_operand.vmem [shape: f32[1,128], index: 2, kind: input, shape index: {}]
  %s3 = inlined_call_operand.vmem [shape: f32[1,128], index: 3, kind: input, shape index: {}]
  %s4 = inlined_call_operand.vmem [shape: bf16[2,256,128], index: 4, kind: output, shape index: {}]
  %s5 = sld [smem:[#allocation0]]
  $region49: #{unet9_logsigmoid_forward.12} parent=0
    _
  %s7 = ssub.s32 1, %s5
  %s8 = scalar_select 0, %s7, %s5
  loop: start=0, step=1, limit=4
  $region2: #{unet9_logsigmoid_forward.12} parent=0 // loop_pre_header
    _
  $region3: #{unet9_logsigmoid_forward.12} parent=0 // loop_header
    %s10 = sphi 0, %s14
    %p11 = scmp.ge.s32.totalorder %s10, 4
    %s20 = sphi 0, %s22
    %s23 = sphi 0, %s20
    %s24 = sphi 0, %s23
    %s40 = sphi 0, %s24
    %s44 = sphi 0, %s44
    %s46 = sphi 0, %s44
    %s47 = sphi 0, %s46
    %s61 = sphi 0, %s47
    %s65 = sphi 0, %s65
    %s67 = sphi 0, %s65
    %s68 = sphi 0, %s67
    %s82 = sphi 0, %s68
    %s86 = sphi 0, %s86
    %s88 = sphi 0, %s86
    %s89 = sphi 0, %s88
    %s103 = sphi 0, %s89
    %s109 = sphi 0, %s111
    %s112 = sphi 0, %s109
    %s113 = sphi 0, %s112
    %s129 = sphi 0, %s113
  $region4: #{unet9_logsigmoid_forward.12} parent=0 // loop_header_branch
    %13 = sbr.rel (%p11) target = $region8
  $region5: #{unet9_logsigmoid_forward.12} parent=0 // loop_body
    %s15 = ssub.s32 %s10, 1
    %s16 = ssub.s32 %s10, 2
    %s17 = sadd.s32 %s10, 1
    %s18 = ssub.s32 %s10, %s17
    %p19 = scmp.eq.s32.totalorder %s18, 0
    %s21 = sadd.s32 %s20, 1
    %s22 = scalar_select %p19, %s20, %s21
    %p25 = pneg %p19
    %p26 = scmp.eq.s32.totalorder %s10, 1
    %p27 = por %p25, %p26
    %p28 = scmp.ne.s32.totalorder %s20, %s23
    %p29 = scmp.eq.s32.totalorder %s10, 0
    %p30 = por %p28, %p29
    %p31 = scmp.ne.s32.totalorder %s20, %s23
    %p32 = scmp.eq.s32.totalorder %s15, 1
    %p33 = por %p31, %p32
    %p34 = scmp.ne.s32.totalorder %s23, %s24
    %p35 = scmp.eq.s32.totalorder %s15, 0
    %p36 = por %p34, %p35
    %p37 = scmp.ne.s32.totalorder %s23, %s24
    %p38 = scmp.eq.s32.totalorder %s16, 1
    %p39 = por %p37, %p38
    %p41 = scmp.ne.s32.totalorder %s24, %s40
    %p42 = scmp.eq.s32.totalorder %s16, 0
    %p43 = por %p41, %p42
    %s45 = sadd.s32 %s44, 1
    %p48 = scmp.eq.s32.totalorder %s10, 1
    %p49 = scmp.ne.s32.totalorder %s44, %s46
    %p50 = scmp.eq.s32.totalorder %s10, 0
    %p51 = por %p49, %p50
    %p52 = scmp.ne.s32.totalorder %s44, %s46
    %p53 = scmp.eq.s32.totalorder %s15, 1
    %p54 = por %p52, %p53
    %p55 = scmp.ne.s32.totalorder %s46, %s47
    %p56 = scmp.eq.s32.totalorder %s15, 0
    %p57 = por %p55, %p56
    %p58 = scmp.ne.s32.totalorder %s46, %s47
    %p59 = scmp.eq.s32.totalorder %s16, 1
    %p60 = por %p58, %p59
    %p62 = scmp.ne.s32.totalorder %s47, %s61
    %p63 = scmp.eq.s32.totalorder %s16, 0
    %p64 = por %p62, %p63
    %s66 = sadd.s32 %s65, 1
    %p69 = scmp.eq.s32.totalorder %s10, 1
    %p70 = scmp.ne.s32.totalorder %s65, %s67
    %p71 = scmp.eq.s32.totalorder %s10, 0
    %p72 = por %p70, %p71
    %p73 = scmp.ne.s32.totalorder %s65, %s67
    %p74 = scmp.eq.s32.totalorder %s15, 1
    %p75 = por %p73, %p74
    %p76 = scmp.ne.s32.totalorder %s67, %s68
    %p77 = scmp.eq.s32.totalorder %s15, 0
    %p78 = por %p76, %p77
    %p79 = scmp.ne.s32.totalorder %s67, %s68
    %p80 = scmp.eq.s32.totalorder %s16, 1
    %p81 = por %p79, %p80
    %p83 = scmp.ne.s32.totalorder %s68, %s82
    %p84 = scmp.eq.s32.totalorder %s16, 0
    %p85 = por %p83, %p84
    %s87 = sadd.s32 %s86, 1
    %p90 = scmp.eq.s32.totalorder %s10, 1
    %p91 = scmp.ne.s32.totalorder %s86, %s88
    %p92 = scmp.eq.s32.totalorder %s10, 0
    %p93 = por %p91, %p92
    %p94 = scmp.ne.s32.totalorder %s86, %s88
    %p95 = scmp.eq.s32.totalorder %s15, 1
    %p96 = por %p94, %p95
    %p97 = scmp.ne.s32.totalorder %s88, %s89
    %p98 = scmp.eq.s32.totalorder %s15, 0
    %p99 = por %p97, %p98
    %p100 = scmp.ne.s32.totalorder %s88, %s89
    %p101 = scmp.eq.s32.totalorder %s16, 1
    %p102 = por %p100, %p101
    %p104 = scmp.ne.s32.totalorder %s89, %s103
    %p105 = scmp.eq.s32.totalorder %s16, 0
    %p106 = por %p104, %p105
    %s107 = ssub.s32 %s10, %s17
    %p108 = scmp.eq.s32.totalorder %s107, 0
    %s110 = sadd.s32 %s109, 1
    %s111 = scalar_select %p108, %s109, %s110
    %p114 = pneg %p108
    %p115 = scmp.eq.s32.totalorder %s10, 1
    %p116 = por %p114, %p115
    %p117 = scmp.ne.s32.totalorder %s109, %s112
    %p118 = scmp.eq.s32.totalorder %s10, 0
    %p119 = por %p117, %p118
    %p120 = scmp.ne.s32.totalorder %s109, %s112
    %p121 = scmp.eq.s32.totalorder %s15, 1
    %p122 = por %p120, %p121
    %p123 = scmp.ne.s32.totalorder %s112, %s113
    %p124 = scmp.eq.s32.totalorder %s15, 0
    %p125 = por %p123, %p124
    %p126 = scmp.ne.s32.totalorder %s112, %s113
    %p127 = scmp.eq.s32.totalorder %s16, 1
    %p128 = por %p126, %p127
    %p130 = scmp.ne.s32.totalorder %s113, %s129
    %p131 = scmp.eq.s32.totalorder %s16, 0
    %p132 = por %p130, %p131
    %p133 = scmp.le.s32.totalorder 1, %s10
    %p134 = scmp.lt.s32.totalorder %s10, 3
    %p135 = pnand %p133, %p134
    %p136 = pneg %p135
    // Predicated region
    $region9: #{unet9_logsigmoid_forward.12} parent=5 // pred_check
      _
    $region10: #{unet9_logsigmoid_forward.12} parent=5 // pred_check_branch
      %138 = sbr.rel (%p135) target = $region12
    $region11: #{unet9_logsigmoid_forward.12} parent=5 // pred_region
      %s139 = ssub.s32 %s10, 1
      // Predicated region
      $region13: #{unet9_logsigmoid_forward.12} parent=11 // pred_check
        %p140 = pneg %p57
      $region14: #{unet9_logsigmoid_forward.12} parent=11 // pred_check_branch
        %142 = sbr.rel (%p140) target = $region16
      $region15: #{unet9_logsigmoid_forward.12} parent=11 // pred_region
        _
      $region16: #{unet9_logsigmoid_forward.12} parent=11 // pred_fallthru
        _
      // Predicated region
      $region17: #{unet9_logsigmoid_forward.12} parent=11 // pred_check
        %p143 = pneg %p78
      $region18: #{unet9_logsigmoid_forward.12} parent=11 // pred_check_branch
        %145 = sbr.rel (%p143) target = $region20
      $region19: #{unet9_logsigmoid_forward.12} parent=11 // pred_region
        _
      $region20: #{unet9_logsigmoid_forward.12} parent=11 // pred_fallthru
        _
      // Predicated region
      $region21: #{unet9_logsigmoid_forward.12} parent=11 // pred_check
        %p146 = pneg %p99
      $region22: #{unet9_logsigmoid_forward.12} parent=11 // pred_check_branch
        %148 = sbr.rel (%p146) target = $region24
      $region23: #{unet9_logsigmoid_forward.12} parent=11 // pred_region
        _
      $region24: #{unet9_logsigmoid_forward.12} parent=11 // pred_fallthru
        _
    $region12: #{unet9_logsigmoid_forward.12} parent=5 // pred_fallthru
      _
    %p149 = scmp.lt.s32.totalorder %s10, 2
    // Predicated region
    $region25: #{unet9_logsigmoid_forward.12} parent=5 // pred_check
      %p150 = pneg %p149
    $region26: #{unet9_logsigmoid_forward.12} parent=5 // pred_check_branch
      %152 = sbr.rel (%p150) target = $region28
    $region27: #{unet9_logsigmoid_forward.12} parent=5 // pred_region
      // Predicated region
      $region29: #{unet9_logsigmoid_forward.12} parent=27 // pred_check
        %p153 = pneg %p30
      $region30: #{unet9_logsigmoid_forward.12} parent=27 // pred_check_branch
        %155 = sbr.rel (%p153) target = $region32
      $region31: #{unet9_logsigmoid_forward.12} parent=27 // pred_region
        %p156 = scmp.lt.s32.totalorder %s10, 1
        %s157 = scalar_select %p156, %s10, 1
        %s158 = smul.addr %s157, 108
        %s159 = smul.addr %s158, 4
        %s160 = scalar_lea.vmem %s0, %s159
      $region32: #{unet9_logsigmoid_forward.12} parent=27 // pred_fallthru
        _
    $region28: #{unet9_logsigmoid_forward.12} parent=5 // pred_fallthru
      _
    %p161 = scmp.le.s32.totalorder 1, %s10
    %p162 = scmp.lt.s32.totalorder %s10, 3
    %p163 = pnand %p161, %p162
    %p164 = pneg %p163
    // Predicated region
    $region33: #{unet9_logsigmoid_forward.12} parent=5 // pred_check
      _
    $region34: #{unet9_logsigmoid_forward.12} parent=5 // pred_check_branch
      %166 = sbr.rel (%p163) target = $region36
    $region35: #{unet9_logsigmoid_forward.12} parent=5 // pred_region
      %s167 = ssub.s32 %s10, 1
      %p168 = scmp.lt.s32.totalorder %s15, 1
      %s169 = scalar_select %p168, %s15, 1
      %s170 = smul.addr %s169, 108
      %s171 = smul.addr %s170, 4
      %s172 = scalar_lea.vmem %s0, %s171
      %p173 = pneg %p36
      %p174 = pneg %p33
      %p175 = pneg %p57
      %p176 = pneg %p54
      %p177 = pneg %p78
      %p178 = pneg %p75
      %p179 = pneg %p99
      %p180 = pneg %p96
      %p181 = pneg %p125
      %p182 = pneg %p122
      %p183 = scmp.lt.s32.totalorder %s15, 1
      %s184 = scalar_select %p183, %s15, 1
      %s185 = smul.addr %s184, 32
      %s186 = smul.addr %s185, 4
      %s187 = scalar_lea.vmem %s4, %s186
      %p188 = scmp.lt.s32.totalorder %s15, 1
      %s189 = scalar_select %p188, %s15, 1
      %s190 = smul.addr %s189, 108
      %s191 = smul.addr %s190, 4
      %s192 = scalar_lea.vmem %s0, %s191
      %p193 = scmp.lt.s32.totalorder %s15, 1
      %s194 = scalar_select %p193, %s15, 1
      %s195 = smul.addr %s194, 32
      %s196 = smul.addr %s195, 4
      %s197 = scalar_lea.vmem %s4, %s196
      %v198 = vld [vmem:[%s192] sm:$0xff]
      %v199 = vld [vmem:[%s192 + $0x8] sm:$0xf]
      %v200 = vld [vmem:[%s192 + $0xc] sm:$0xff]
      %v201 = vld [vmem:[%s192 + $0x14] sm:$0xf]
      %v202 = vld [vmem:[%s192 + $0x18] sm:$0xff]
      %v203 = vld [vmem:[%s192 + $0x20] sm:$0xf]
      %v204 = vld [vmem:[%s192 + $0x24] sm:$0xff]
      %v205 = vld [vmem:[%s192 + $0x2c] sm:$0xf]
      %v206 = vld [vmem:[%s192 + $0x30] sm:$0xff]
      %v207 = vld [vmem:[%s192 + $0x38] sm:$0xf]
      %v208 = vld [vmem:[%s192 + $0x3c] sm:$0xff]
      %v209 = vld [vmem:[%s192 + $0x44] sm:$0xf]
      %v210 = vld [vmem:[%s192 + $0x48] sm:$0xff]
      %v211 = vld [vmem:[%s192 + $0x50] sm:$0xf]
      %v212 = vld [vmem:[%s192 + $0x54] sm:$0xff]
      %v213 = vld [vmem:[%s192 + $0x5c] sm:$0xf]
      %v214 = vld [vmem:[%s192 + $0x60] sm:$0xff]
      %v215 = vld [vmem:[%s192 + $0x68] sm:$0xf]
      %v216 = vld [vmem:[%s192 + $0x6c] sm:$0xff]
      %v217 = vld [vmem:[%s192 + $0x74] sm:$0xf]
      %v218 = vld [vmem:[%s192 + $0x78] sm:$0xff]
      %v219 = vld [vmem:[%s192 + $0x80] sm:$0xf]
      %v220 = vld [vmem:[%s192 + $0x84] sm:$0xff]
      %v221 = vld [vmem:[%s192 + $0x8c] sm:$0xf]
      %v222 = vld [vmem:[%s192 + $0x90] sm:$0xff]
      %v223 = vld [vmem:[%s192 + $0x98] sm:$0xf]
      %v224 = vld [vmem:[%s192 + $0x9c] sm:$0xff]
      %v225 = vld [vmem:[%s192 + $0xa4] sm:$0xf]
      %v226 = vld [vmem:[%s192 + $0xa8] sm:$0xff]
      %v227 = vld [vmem:[%s192 + $0xb0] sm:$0xf]
      %v228 = vld [vmem:[%s192 + $0xb4] sm:$0xff]
      %v229 = vld [vmem:[%s192 + $0xbc] sm:$0xf]
      %v230 = vld [vmem:[%s192 + $0xc0] sm:$0xff]
      %v231 = vld [vmem:[%s192 + $0xc8] sm:$0xf]
      %v232 = vld [vmem:[%s192 + $0xcc] sm:$0xff]
      %v233 = vld [vmem:[%s192 + $0xd4] sm:$0xf]
      %v234 = vld [vmem:[%s192 + $0xd8] sm:$0xff]
      %v235 = vld [vmem:[%s192 + $0xe0] sm:$0xf]
      %v236 = vld [vmem:[%s192 + $0xe4] sm:$0xff]
      %v237 = vld [vmem:[%s192 + $0xec] sm:$0xf]
      %v238 = vld [vmem:[%s192 + $0xf0] sm:$0xff]
      %v239 = vld [vmem:[%s192 + $0xf8] sm:$0xf]
      %v240 = vld [vmem:[%s192 + $0xfc] sm:$0xff]
      %v241 = vld [vmem:[%s192 + $0x104] sm:$0xf]
      %v242 = vld [vmem:[%s192 + $0x108] sm:$0xff]
      %v243 = vld [vmem:[%s192 + $0x110] sm:$0xf]
      %v244 = vld [vmem:[%s192 + $0x114] sm:$0xff]
      %v245 = vld [vmem:[%s192 + $0x11c] sm:$0xf]
      %v246 = vld [vmem:[%s192 + $0x120] sm:$0xff]
      %v247 = vld [vmem:[%s192 + $0x128] sm:$0xf]
      %v248 = vld [vmem:[%s192 + $0x12c] sm:$0xff]
      %v249 = vld [vmem:[%s192 + $0x134] sm:$0xf]
      %v250 = vld [vmem:[%s192 + $0x138] sm:$0xff]
      %v251 = vld [vmem:[%s192 + $0x140] sm:$0xf]
      %v252 = vld [vmem:[%s192 + $0x144] sm:$0xff]
      %v253 = vld [vmem:[%s192 + $0x14c] sm:$0xf]
      %v254 = vld [vmem:[%s192 + $0x150] sm:$0xff]
      %v255 = vld [vmem:[%s192 + $0x158] sm:$0xf]
      %v256 = vld [vmem:[%s192 + $0x15c] sm:$0xff]
      %v257 = vld [vmem:[%s192 + $0x164] sm:$0xf]
      %v258 = vld [vmem:[%s192 + $0x168] sm:$0xff]
      %v259 = vld [vmem:[%s192 + $0x170] sm:$0xf]
      %v260 = vld [vmem:[%s192 + $0x174] sm:$0xff]
      %v261 = vld [vmem:[%s192 + $0x17c] sm:$0xf]
      %v262 = vld [vmem:[%s1] sm:$0xf]
      %v263 = vld [vmem:[%s1 + $0x4] sm:$0xf]
      %v264 = vld [vmem:[%s1 + $0x8] sm:$0xf]
      %v265 = vld [vmem:[%s1 + $0xc] sm:$0xf]
      %v266 = vld [vmem:[%s1 + $0x10] sm:$0xf]
      %v267 = vld [vmem:[%s1 + $0x14] sm:$0xf]
      %v268 = vld [vmem:[%s1 + $0x18] sm:$0xf]
      %v269 = vld [vmem:[%s1 + $0x1c] sm:$0xf]
      %v270 = vld [vmem:[%s1 + $0x20] sm:$0xf]
      %v271 = vld [vmem:[%s1 + $0x24] sm:$0xf]
      %v272 = vld [vmem:[%s1 + $0x28] sm:$0xf]
      %v273 = vld [vmem:[%s1 + $0x2c] sm:$0xf]
      %v274 = vld [vmem:[%s1 + $0x30] sm:$0xf]
      %v275 = vld [vmem:[%s1 + $0x34] sm:$0xf]
      %v276 = vld [vmem:[%s1 + $0x38] sm:$0xf]
      %v277 = vld [vmem:[%s1 + $0x3c] sm:$0xf]
      %v278 = vld [vmem:[%s1 + $0x40] sm:$0xf]
      %v279 = vld [vmem:[%s1 + $0x44] sm:$0xf]
      %v280 = vld [vmem:[%s1 + $0x48] sm:$0xf]
      %v281 = vld [vmem:[%s1 + $0x4c] sm:$0xf]
      %v282 = vld [vmem:[%s1 + $0x50] sm:$0xf]
      %v283 = vld [vmem:[%s1 + $0x54] sm:$0xf]
      %v284 = vld [vmem:[%s1 + $0x58] sm:$0xf]
      %v285 = vld [vmem:[%s1 + $0x5c] sm:$0xf]
      %v286 = vld [vmem:[%s1 + $0x60] sm:$0xf]
      %v287 = vld [vmem:[%s1 + $0x64] sm:$0xf]
      %v288 = vld [vmem:[%s1 + $0x68] sm:$0xf]
      %v289 = vld [vmem:[%s1 + $0x6c] sm:$0xf]
      %v290 = vld [vmem:[%s1 + $0x70] sm:$0xf]
      %v291 = vld [vmem:[%s1 + $0x74] sm:$0xf]
      %v292 = vld [vmem:[%s1 + $0x78] sm:$0xf]
      %v293 = vld [vmem:[%s1 + $0x7c] sm:$0xf]
      %v294 = vld [vmem:[%s1 + $0x80] sm:$0xf]
      %v295 = vld [vmem:[%s1 + $0x84] sm:$0xf]
      %v296 = vld [vmem:[%s1 + $0x88] sm:$0xf]
      %v297 = vld [vmem:[%s1 + $0x8c] sm:$0xf]
      %v298 = vld [vmem:[%s1 + $0x90] sm:$0xf]
      %v299 = vld [vmem:[%s1 + $0x94] sm:$0xf]
      %v300 = vld [vmem:[%s1 + $0x98] sm:$0xf]
      %v301 = vld [vmem:[%s1 + $0x9c] sm:$0xf]
      %v302 = vld [vmem:[%s1 + $0xa0] sm:$0xf]
      %v303 = vld [vmem:[%s1 + $0xa4] sm:$0xf]
      %v304 = vld [vmem:[%s1 + $0xa8] sm:$0xf]
      %v305 = vld [vmem:[%s1 + $0xac] sm:$0xf]
      %v306 = vld [vmem:[%s1 + $0xb0] sm:$0xf]
      %v307 = vld [vmem:[%s1 + $0xb4] sm:$0xf]
      %v308 = vld [vmem:[%s1 + $0xb8] sm:$0xf]
      %v309 = vld [vmem:[%s1 + $0xbc] sm:$0xf]
      %v310 = vld [vmem:[%s192 + $0x180] sm:$0xff]
      %v311 = vld [vmem:[%s192 + $0x188] sm:$0xf]
      %v312 = vld [vmem:[%s192 + $0x18c] sm:$0xff]
      %v313 = vld [vmem:[%s192 + $0x194] sm:$0xf]
      %s314 = scalar_lea.vmem %s1, 192
      %v315 = vld [vmem:[%s314] sm:$0xf]
      %v316 = vld [vmem:[%s314 + $0x4] sm:$0xf]
      %v317 = vld [vmem:[%s314 + $0x8] sm:$0xf]
      %v318 = vld [vmem:[%s314 + $0xc] sm:$0xf]
      %v319 = vld [vmem:[%s314 + $0x10] sm:$0xf]
      %v320 = vld [vmem:[%s314 + $0x14] sm:$0xf]
      %v321 = vld [vmem:[%s314 + $0x18] sm:$0xf]
      %v322 = vld [vmem:[%s314 + $0x1c] sm:$0xf]
      %v323 = vld [vmem:[%s314 + $0x20] sm:$0xf]
      %v324 = vld [vmem:[%s314 + $0x24] sm:$0xf]
      %v325 = vld [vmem:[%s314 + $0x28] sm:$0xf]
      %v326 = vld [vmem:[%s314 + $0x2c] sm:$0xf]
      %v327 = vld [vmem:[%s314 + $0x30] sm:$0xf]
      %v328 = vld [vmem:[%s314 + $0x34] sm:$0xf]
      %v329 = vld [vmem:[%s314 + $0x38] sm:$0xf]
      %v330 = vld [vmem:[%s314 + $0x3c] sm:$0xf]
      %v331 = vld [vmem:[%s314 + $0x40] sm:$0xf]
      %v332 = vld [vmem:[%s314 + $0x44] sm:$0xf]
      %v333 = vld [vmem:[%s314 + $0x48] sm:$0xf]
      %v334 = vld [vmem:[%s314 + $0x4c] sm:$0xf]
      %v335 = vld [vmem:[%s314 + $0x50] sm:$0xf]
      %v336 = vld [vmem:[%s314 + $0x54] sm:$0xf]
      %v337 = vld [vmem:[%s314 + $0x58] sm:$0xf]
      %v338 = vld [vmem:[%s314 + $0x5c] sm:$0xf]
      %v339 = vld [vmem:[%s314 + $0x60] sm:$0xf]
      %v340 = vld [vmem:[%s314 + $0x64] sm:$0xf]
      %v341 = vld [vmem:[%s314 + $0x68] sm:$0xf]
      %v342 = vld [vmem:[%s314 + $0x6c] sm:$0xf]
      %v343 = vld [vmem:[%s314 + $0x70] sm:$0xf]
      %v344 = vld [vmem:[%s314 + $0x74] sm:$0xf]
      %v345 = vld [vmem:[%s314 + $0x78] sm:$0xf]
      %v346 = vld [vmem:[%s314 + $0x7c] sm:$0xf]
      %v347 = vld [vmem:[%s314 + $0x80] sm:$0xf]
      %v348 = vld [vmem:[%s314 + $0x84] sm:$0xf]
      %v349 = vld [vmem:[%s314 + $0x88] sm:$0xf]
      %v350 = vld [vmem:[%s314 + $0x8c] sm:$0xf]
      %v351 = vld [vmem:[%s314 + $0x90] sm:$0xf]
      %v352 = vld [vmem:[%s314 + $0x94] sm:$0xf]
      %v353 = vld [vmem:[%s314 + $0x98] sm:$0xf]
      %v354 = vld [vmem:[%s314 + $0x9c] sm:$0xf]
      %v355 = vld [vmem:[%s314 + $0xa0] sm:$0xf]
      %v356 = vld [vmem:[%s314 + $0xa4] sm:$0xf]
      %v357 = vld [vmem:[%s314 + $0xa8] sm:$0xf]
      %v358 = vld [vmem:[%s314 + $0xac] sm:$0xf]
      %v359 = vld [vmem:[%s314 + $0xb0] sm:$0xf]
      %v360 = vld [vmem:[%s314 + $0xb4] sm:$0xf]
      %v361 = vld [vmem:[%s314 + $0xb8] sm:$0xf]
      %v362 = vld [vmem:[%s314 + $0xbc] sm:$0xf]
      %v427 = vunpack.c.l.b16 %v202
      %v428 = vunpack.c.h.b16 %v202
      %v429 = vunpack.c.l.b16 %v203
      %v430 = vunpack.c.l.b16 %v204
      %v431 = vunpack.c.h.b16 %v204
      %v432 = vunpack.c.l.b16 %v205
      %v433 = vunpack.c.l.b16 %v206
      %v434 = vunpack.c.h.b16 %v206
      %v435 = vunpack.c.l.b16 %v207
      %v436 = vunpack.c.l.b16 %v208
      %v437 = vunpack.c.h.b16 %v208
      %v438 = vunpack.c.l.b16 %v209
      %v439 = vunpack.c.l.b16 %v210
      %v440 = vunpack.c.h.b16 %v210
      %v441 = vunpack.c.l.b16 %v211
      %v442 = vunpack.c.l.b16 %v212
      %v443 = vunpack.c.h.b16 %v212
      %v444 = vunpack.c.l.b16 %v213
      %v445 = vunpack.c.l.b16 %v214
      %v446 = vunpack.c.h.b16 %v214
      %v447 = vunpack.c.l.b16 %v215
      %v448 = vunpack.c.l.b16 %v216
      %v449 = vunpack.c.h.b16 %v216
      %v450 = vunpack.c.l.b16 %v217
      %v451 = vunpack.c.l.b16 %v218
      %v452 = vunpack.c.h.b16 %v218
      %v453 = vunpack.c.l.b16 %v219
      %v454 = vunpack.c.l.b16 %v220
      %v455 = vunpack.c.h.b16 %v220
      %v456 = vunpack.c.l.b16 %v221
      %v457 = vunpack.c.l.b16 %v222
      %v458 = vunpack.c.h.b16 %v222
      %v459 = vunpack.c.l.b16 %v223
      %v460 = vunpack.c.l.b16 %v224
      %v461 = vunpack.c.h.b16 %v224
      %v462 = vunpack.c.l.b16 %v225
      %v463 = vunpack.c.l.b16 %v226
      %v464 = vunpack.c.h.b16 %v226
      %v465 = vunpack.c.l.b16 %v227
      %v466 = vunpack.c.l.b16 %v228
      %v467 = vunpack.c.h.b16 %v228
      %v468 = vunpack.c.l.b16 %v229
      %v469 = vunpack.c.l.b16 %v230
      %v470 = vunpack.c.h.b16 %v230
      %v471 = vunpack.c.l.b16 %v231
      %v472 = vunpack.c.l.b16 %v232
      %v473 = vunpack.c.h.b16 %v232
      %v474 = vunpack.c.l.b16 %v233
      %v475 = vunpack.c.l.b16 %v234
      %v476 = vunpack.c.h.b16 %v234
      %v477 = vunpack.c.l.b16 %v235
      %v478 = vunpack.c.l.b16 %v236
      %v479 = vunpack.c.h.b16 %v236
      %v480 = vunpack.c.l.b16 %v237
      %v481 = vunpack.c.l.b16 %v238
      %v482 = vunpack.c.h.b16 %v238
      %v483 = vunpack.c.l.b16 %v239
      %v484 = vunpack.c.l.b16 %v240
      %v485 = vunpack.c.h.b16 %v240
      %v486 = vunpack.c.l.b16 %v241
      %v487 = vunpack.c.l.b16 %v242
      %v488 = vunpack.c.h.b16 %v242
      %v489 = vunpack.c.l.b16 %v243
      %v490 = vunpack.c.l.b16 %v244
      %v491 = vunpack.c.h.b16 %v244
      %v492 = vunpack.c.l.b16 %v245
      %v493 = vunpack.c.l.b16 %v246
      %v494 = vunpack.c.h.b16 %v246
      %v495 = vunpack.c.l.b16 %v247
      %v496 = vunpack.c.l.b16 %v248
      %v497 = vunpack.c.h.b16 %v248
      %v498 = vunpack.c.l.b16 %v249
      %v499 = vunpack.c.l.b16 %v250
      %v500 = vunpack.c.h.b16 %v250
      %v501 = vunpack.c.l.b16 %v251
      %v502 = vunpack.c.l.b16 %v252
      %v503 = vunpack.c.h.b16 %v252
      %v504 = vunpack.c.l.b16 %v253
      %v505 = vunpack.c.l.b16 %v254
      %v506 = vunpack.c.h.b16 %v254
      %v507 = vunpack.c.l.b16 %v255
      %v508 = vunpack.c.l.b16 %v256
      %v509 = vunpack.c.h.b16 %v256
      %v510 = vunpack.c.l.b16 %v257
      %v511 = vunpack.c.l.b16 %v258
      %v512 = vunpack.c.h.b16 %v258
      %v513 = vunpack.c.l.b16 %v259
      %v514 = vunpack.c.l.b16 %v260
      %v515 = vunpack.c.h.b16 %v260
      %v516 = vunpack.c.l.b16 %v261
      %v517 = vunpack.c.l.b16 %v310
      %v518 = vunpack.c.h.b16 %v310
      %v519 = vunpack.c.l.b16 %v311
      %v520 = vunpack.c.l.b16 %v312
      %v521 = vunpack.c.h.b16 %v312
      %v522 = vunpack.c.l.b16 %v313
      %v523 = vpack.c.b16 %v430, %v427
      %v524 = vpack.c.b16 %v431, %v428
      %v525 = vpack.c.b16 %v432, %v429
      %v526 = vpack.c.b16 %v436, %v433
      %v527 = vpack.c.b16 %v437, %v434
      %v528 = vpack.c.b16 %v438, %v435
      %v529 = vpack.c.b16 %v442, %v439
      %v530 = vpack.c.b16 %v443, %v440
      %v531 = vpack.c.b16 %v444, %v441
      %v532 = vpack.c.b16 %v448, %v445
      %v533 = vpack.c.b16 %v449, %v446
      %v534 = vpack.c.b16 %v450, %v447
      %v535 = vpack.c.b16 %v454, %v451
      %v536 = vpack.c.b16 %v455, %v452
      %v537 = vpack.c.b16 %v456, %v453
      %v538 = vpack.c.b16 %v460, %v457
      %v539 = vpack.c.b16 %v461, %v458
      %v540 = vpack.c.b16 %v462, %v459
      %v541 = vpack.c.b16 %v466, %v463
      %v542 = vpack.c.b16 %v467, %v464
      %v543 = vpack.c.b16 %v468, %v465
      %v544 = vpack.c.b16 %v472, %v469
      %v545 = vpack.c.b16 %v473, %v470
      %v546 = vpack.c.b16 %v474, %v471
      %v547 = vpack.c.b16 %v478, %v475
      %v548 = vpack.c.b16 %v479, %v476
      %v549 = vpack.c.b16 %v480, %v477
      %v550 = vpack.c.b16 %v484, %v481
      %v551 = vpack.c.b16 %v485, %v482
      %v552 = vpack.c.b16 %v486, %v483
      %v553 = vpack.c.b16 %v490, %v487
      %v554 = vpack.c.b16 %v491, %v488
      %v555 = vpack.c.b16 %v492, %v489
      %v556 = vpack.c.b16 %v496, %v493
      %v557 = vpack.c.b16 %v497, %v494
      %v558 = vpack.c.b16 %v498, %v495
      %v559 = vpack.c.b16 %v502, %v499
      %v560 = vpack.c.b16 %v503, %v500
      %v561 = vpack.c.b16 %v504, %v501
      %v562 = vpack.c.b16 %v508, %v505
      %v563 = vpack.c.b16 %v509, %v506
      %v564 = vpack.c.b16 %v510, %v507
      %v565 = vpack.c.b16 %v514, %v511
      %v566 = vpack.c.b16 %v515, %v512
      %v567 = vpack.c.b16 %v516, %v513
      %v568 = vpack.c.b16 %v520, %v517
      %v569 = vpack.c.b16 %v521, %v518
      %v570 = vpack.c.b16 %v522, %v519
      %v667 = vunpack.c.l.b16 %v315
      %v668 = vunpack.c.l.b16 %v316
      %v669 = vunpack.c.l.b16 %v317
      %v670 = vunpack.c.l.b16 %v318
      %v671 = vunpack.c.l.b16 %v319
      %v672 = vunpack.c.l.b16 %v320
      %v673 = vunpack.c.l.b16 %v321
      %v674 = vunpack.c.l.b16 %v322
      %v675 = vunpack.c.l.b16 %v323
      %v676 = vunpack.c.l.b16 %v324
      %v677 = vunpack.c.l.b16 %v325
      %v678 = vunpack.c.l.b16 %v326
      %v679 = vunpack.c.l.b16 %v327
      %v680 = vunpack.c.l.b16 %v328
      %v681 = vunpack.c.l.b16 %v329
      %v682 = vunpack.c.l.b16 %v330
      %v683 = vunpack.c.l.b16 %v331
      %v684 = vunpack.c.l.b16 %v332
      %v685 = vunpack.c.l.b16 %v333
      %v686 = vunpack.c.l.b16 %v334
      %v687 = vunpack.c.l.b16 %v335
      %v688 = vunpack.c.l.b16 %v336
      %v689 = vunpack.c.l.b16 %v337
      %v690 = vunpack.c.l.b16 %v338
      %v691 = vunpack.c.l.b16 %v339
      %v692 = vunpack.c.l.b16 %v340
      %v693 = vunpack.c.l.b16 %v341
      %v694 = vunpack.c.l.b16 %v342
      %v695 = vunpack.c.l.b16 %v343
      %v696 = vunpack.c.l.b16 %v344
      %v697 = vunpack.c.l.b16 %v345
      %v698 = vunpack.c.l.b16 %v346
      %v699 = vunpack.c.l.b16 %v347
      %v700 = vunpack.c.l.b16 %v348
      %v701 = vunpack.c.l.b16 %v349
      %v702 = vunpack.c.l.b16 %v350
      %v703 = vunpack.c.l.b16 %v351
      %v704 = vunpack.c.l.b16 %v352
      %v705 = vunpack.c.l.b16 %v353
      %v706 = vunpack.c.l.b16 %v354
      %v707 = vunpack.c.l.b16 %v355
      %v708 = vunpack.c.l.b16 %v356
      %v709 = vunpack.c.l.b16 %v357
      %v710 = vunpack.c.l.b16 %v358
      %v711 = vunpack.c.l.b16 %v359
      %v712 = vunpack.c.l.b16 %v360
      %v713 = vunpack.c.l.b16 %v361
      %v714 = vunpack.c.l.b16 %v362
      %v715 = vpack.c.b16 %v668, %v667
      %v716 = vpack.c.b16 %v670, %v669
      %v717 = vpack.c.b16 %v672, %v671
      %v718 = vpack.c.b16 %v674, %v673
      %v719 = vpack.c.b16 %v676, %v675
      %v720 = vpack.c.b16 %v678, %v677
      %v721 = vpack.c.b16 %v680, %v679
      %v722 = vpack.c.b16 %v682, %v681
      %v723 = vpack.c.b16 %v684, %v683
      %v724 = vpack.c.b16 %v686, %v685
      %v725 = vpack.c.b16 %v688, %v687
      %v726 = vpack.c.b16 %v690, %v689
      %v727 = vpack.c.b16 %v692, %v691
      %v728 = vpack.c.b16 %v694, %v693
      %v729 = vpack.c.b16 %v696, %v695
      %v730 = vpack.c.b16 %v698, %v697
      %v731 = vpack.c.b16 %v700, %v699
      %v732 = vpack.c.b16 %v702, %v701
      %v733 = vpack.c.b16 %v704, %v703
      %v734 = vpack.c.b16 %v706, %v705
      %v735 = vpack.c.b16 %v708, %v707
      %v736 = vpack.c.b16 %v710, %v709
      %v737 = vpack.c.b16 %v712, %v711
      %v738 = vpack.c.b16 %v714, %v713
      %763 = vmatpush.bf16.msra.mxu0 %v722
      %764 = vmatpush.bf16.msra.mxu0 %v721
      %765 = vmatpush.bf16.msra.mxu0 %v720
      %766 = vmatpush.bf16.msra.mxu0 %v719
      %767 = vmatpush.bf16.msra.mxu0 %v718
      %768 = vmatpush.bf16.msra.mxu0 %v717
      %769 = vmatpush.bf16.msra.mxu0 %v716
      %770 = vmatpush.bf16.msra.mxu0 %v715
      %771 = vmatmul.bf16.gmra.mxu0 %v523
      %v772 = vpop.f32.mrf.mxu0
      %v773 = vadd.f32 0.0, %v772
      %v774 = vpop.f32.mrf.mxu0
      %v775 = vadd.f32 0.0, %v774
      %776 = vmatmul.bf16.gmra.mxu0 %v526
      %v777 = vpop.f32.mrf.mxu0
      %v778 = vadd.f32 0.0, %v777
      %v779 = vpop.f32.mrf.mxu0
      %v780 = vadd.f32 0.0, %v779
      %781 = vmatmul.bf16.gmra.mxu0 %v529
      %v782 = vpop.f32.mrf.mxu0
      %v783 = vadd.f32 0.0, %v782
      %v784 = vpop.f32.mrf.mxu0
      %v785 = vadd.f32 0.0, %v784
      %786 = vmatmul.bf16.gmra.mxu0 %v532
      %v787 = vpop.f32.mrf.mxu0
      %v788 = vadd.f32 0.0, %v787
      %v789 = vpop.f32.mrf.mxu0
      %v790 = vadd.f32 0.0, %v789
      %791 = vmatmul.bf16.gmra.mxu0 %v535
      %v792 = vpop.f32.mrf.mxu0
      %v793 = vadd.f32 0.0, %v792
      %v794 = vpop.f32.mrf.mxu0
      %v795 = vadd.f32 0.0, %v794
      %796 = vmatmul.bf16.gmra.mxu0 %v538
      %v797 = vpop.f32.mrf.mxu0
      %v798 = vadd.f32 0.0, %v797
      %v799 = vpop.f32.mrf.mxu0
      %v800 = vadd.f32 0.0, %v799
      %801 = vmatmul.bf16.gmra.mxu0 %v541
      %v802 = vpop.f32.mrf.mxu0
      %v803 = vadd.f32 0.0, %v802
      %v804 = vpop.f32.mrf.mxu0
      %v805 = vadd.f32 0.0, %v804
      %806 = vmatmul.bf16.gmra.mxu0 %v544
      %v807 = vpop.f32.mrf.mxu0
      %v808 = vadd.f32 0.0, %v807
      %v809 = vpop.f32.mrf.mxu0
      %v810 = vadd.f32 0.0, %v809
      %811 = vmatmul.bf16.gmra.mxu0 %v547
      %v812 = vpop.f32.mrf.mxu0
      %v813 = vadd.f32 0.0, %v812
      %v814 = vpop.f32.mrf.mxu0
      %v815 = vadd.f32 0.0, %v814
      %816 = vmatmul.bf16.gmra.mxu0 %v550
      %v817 = vpop.f32.mrf.mxu0
      %v818 = vadd.f32 0.0, %v817
      %v819 = vpop.f32.mrf.mxu0
      %v820 = vadd.f32 0.0, %v819
      %821 = vmatmul.bf16.gmra.mxu0 %v553
      %v822 = vpop.f32.mrf.mxu0
      %v823 = vadd.f32 0.0, %v822
      %v824 = vpop.f32.mrf.mxu0
      %v825 = vadd.f32 0.0, %v824
      %826 = vmatmul.bf16.gmra.mxu0 %v556
      %v827 = vpop.f32.mrf.mxu0
      %v828 = vadd.f32 0.0, %v827
      %v829 = vpop.f32.mrf.mxu0
      %v830 = vadd.f32 0.0, %v829
      %831 = vmatmul.bf16.gmra.mxu0 %v559
      %v832 = vpop.f32.mrf.mxu0
      %v833 = vadd.f32 0.0, %v832
      %v834 = vpop.f32.mrf.mxu0
      %v835 = vadd.f32 0.0, %v834
      %836 = vmatmul.bf16.gmra.mxu0 %v562
      %v837 = vpop.f32.mrf.mxu0
      %v838 = vadd.f32 0.0, %v837
      %v839 = vpop.f32.mrf.mxu0
      %v840 = vadd.f32 0.0, %v839
      %841 = vmatmul.bf16.gmra.mxu0 %v565
      %v842 = vpop.f32.mrf.mxu0
      %v843 = vadd.f32 0.0, %v842
      %v844 = vpop.f32.mrf.mxu0
      %v845 = vadd.f32 0.0, %v844
      %846 = vmatmul.bf16.gmra.mxu0 %v568
      %v847 = vpop.f32.mrf.mxu0
      %v848 = vadd.f32 0.0, %v847
      %v849 = vpop.f32.mrf.mxu0
      %v850 = vadd.f32 0.0, %v849
      %851 = vdwg.mxu0
      %852 = vmatpush.bf16.msra.mxu0 %v730
      %853 = vmatpush.bf16.msra.mxu0 %v729
      %854 = vmatpush.bf16.msra.mxu0 %v728
      %855 = vmatpush.bf16.msra.mxu0 %v727
      %856 = vmatpush.bf16.msra.mxu0 %v726
      %857 = vmatpush.bf16.msra.mxu0 %v725
      %858 = vmatpush.bf16.msra.mxu0 %v724
      %859 = vmatpush.bf16.msra.mxu0 %v723
      %860 = vmatmul.bf16.gmra.mxu0 %v524
      %v861 = vpop.f32.mrf.mxu0
      %v862 = vadd.f32 %v773, %v861
      %v863 = vpop.f32.mrf.mxu0
      %v864 = vadd.f32 %v775, %v863
      %865 = vmatmul.bf16.gmra.mxu0 %v527
      %v866 = vpop.f32.mrf.mxu0
      %v867 = vadd.f32 %v778, %v866
      %v868 = vpop.f32.mrf.mxu0
      %v869 = vadd.f32 %v780, %v868
      %870 = vmatmul.bf16.gmra.mxu0 %v530
      %v871 = vpop.f32.mrf.mxu0
      %v872 = vadd.f32 %v783, %v871
      %v873 = vpop.f32.mrf.mxu0
      %v874 = vadd.f32 %v785, %v873
      %875 = vmatmul.bf16.gmra.mxu0 %v533
      %v876 = vpop.f32.mrf.mxu0
      %v877 = vadd.f32 %v788, %v876
      %v878 = vpop.f32.mrf.mxu0
      %v879 = vadd.f32 %v790, %v878
      %880 = vmatmul.bf16.gmra.mxu0 %v536
      %v881 = vpop.f32.mrf.mxu0
      %v882 = vadd.f32 %v793, %v881
      %v883 = vpop.f32.mrf.mxu0
      %v884 = vadd.f32 %v795, %v883
      %885 = vmatmul.bf16.gmra.mxu0 %v539
      %v886 = vpop.f32.mrf.mxu0
      %v887 = vadd.f32 %v798, %v886
      %v888 = vpop.f32.mrf.mxu0
      %v889 = vadd.f32 %v800, %v888
      %890 = vmatmul.bf16.gmra.mxu0 %v542
      %v891 = vpop.f32.mrf.mxu0
      %v892 = vadd.f32 %v803, %v891
      %v893 = vpop.f32.mrf.mxu0
      %v894 = vadd.f32 %v805, %v893
      %895 = vmatmul.bf16.gmra.mxu0 %v545
      %v896 = vpop.f32.mrf.mxu0
      %v897 = vadd.f32 %v808, %v896
      %v898 = vpop.f32.mrf.mxu0
      %v899 = vadd.f32 %v810, %v898
      %900 = vmatmul.bf16.gmra.mxu0 %v548
      %v901 = vpop.f32.mrf.mxu0
      %v902 = vadd.f32 %v813, %v901
      %v903 = vpop.f32.mrf.mxu0
      %v904 = vadd.f32 %v815, %v903
      %905 = vmatmul.bf16.gmra.mxu0 %v551
      %v906 = vpop.f32.mrf.mxu0
      %v907 = vadd.f32 %v818, %v906
      %v908 = vpop.f32.mrf.mxu0
      %v909 = vadd.f32 %v820, %v908
      %910 = vmatmul.bf16.gmra.mxu0 %v554
      %v911 = vpop.f32.mrf.mxu0
      %v912 = vadd.f32 %v823, %v911
      %v913 = vpop.f32.mrf.mxu0
      %v914 = vadd.f32 %v825, %v913
      %915 = vmatmul.bf16.gmra.mxu0 %v557
      %v916 = vpop.f32.mrf.mxu0
      %v917 = vadd.f32 %v828, %v916
      %v918 = vpop.f32.mrf.mxu0
      %v919 = vadd.f32 %v830, %v918
      %920 = vmatmul.bf16.gmra.mxu0 %v560
      %v921 = vpop.f32.mrf.mxu0
      %v922 = vadd.f32 %v833, %v921
      %v923 = vpop.f32.mrf.mxu0
      %v924 = vadd.f32 %v835, %v923
      %925 = vmatmul.bf16.gmra.mxu0 %v563
      %v926 = vpop.f32.mrf.mxu0
      %v927 = vadd.f32 %v838, %v926
      %v928 = vpop.f32.mrf.mxu0
      %v929 = vadd.f32 %v840, %v928
      %930 = vmatmul.bf16.gmra.mxu0 %v566
      %v931 = vpop.f32.mrf.mxu0
      %v932 = vadd.f32 %v843, %v931
      %v933 = vpop.f32.mrf.mxu0
      %v934 = vadd.f32 %v845, %v933
      %935 = vmatmul.bf16.gmra.mxu0 %v569
      %v936 = vpop.f32.mrf.mxu0
      %v937 = vadd.f32 %v848, %v936
      %v938 = vpop.f32.mrf.mxu0
      %v939 = vadd.f32 %v850, %v938
      %940 = vdwg.mxu0
      %941 = vmatpush.bf16.msra.mxu0 %v738
      %942 = vmatpush.bf16.msra.mxu0 %v737
      %943 = vmatpush.bf16.msra.mxu0 %v736
      %944 = vmatpush.bf16.msra.mxu0 %v735
      %945 = vmatpush.bf16.msra.mxu0 %v734
      %946 = vmatpush.bf16.msra.mxu0 %v733
      %947 = vmatpush.bf16.msra.mxu0 %v732
      %948 = vmatpush.bf16.msra.mxu0 %v731
      %949 = vmatmul.bf16.gmra.mxu0 %v525
      %v950 = vpop.f32.mrf.mxu0
      %v951 = vadd.f32 %v862, %v950
      %v952 = vpop.f32.mrf.mxu0
      %v953 = vadd.f32 %v864, %v952
      %954 = vmatmul.bf16.gmra.mxu0 %v528
      %v955 = vpop.f32.mrf.mxu0
      %v956 = vadd.f32 %v867, %v955
      %v957 = vpop.f32.mrf.mxu0
      %v958 = vadd.f32 %v869, %v957
      %959 = vmatmul.bf16.gmra.mxu0 %v531
      %v960 = vpop.f32.mrf.mxu0
      %v961 = vadd.f32 %v872, %v960
      %v962 = vpop.f32.mrf.mxu0
      %v963 = vadd.f32 %v874, %v962
      %964 = vmatmul.bf16.gmra.mxu0 %v534
      %v965 = vpop.f32.mrf.mxu0
      %v966 = vadd.f32 %v877, %v965
      %v967 = vpop.f32.mrf.mxu0
      %v968 = vadd.f32 %v879, %v967
      %969 = vmatmul.bf16.gmra.mxu0 %v537
      %v970 = vpop.f32.mrf.mxu0
      %v971 = vadd.f32 %v882, %v970
      %v972 = vpop.f32.mrf.mxu0
      %v973 = vadd.f32 %v884, %v972
      %974 = vmatmul.bf16.gmra.mxu0 %v540
      %v975 = vpop.f32.mrf.mxu0
      %v976 = vadd.f32 %v887, %v975
      %v977 = vpop.f32.mrf.mxu0
      %v978 = vadd.f32 %v889, %v977
      %979 = vmatmul.bf16.gmra.mxu0 %v543
      %v980 = vpop.f32.mrf.mxu0
      %v981 = vadd.f32 %v892, %v980
      %v982 = vpop.f32.mrf.mxu0
      %v983 = vadd.f32 %v894, %v982
      %984 = vmatmul.bf16.gmra.mxu0 %v546
      %v985 = vpop.f32.mrf.mxu0
      %v986 = vadd.f32 %v897, %v985
      %v987 = vpop.f32.mrf.mxu0
      %v988 = vadd.f32 %v899, %v987
      %989 = vmatmul.bf16.gmra.mxu0 %v549
      %v990 = vpop.f32.mrf.mxu0
      %v991 = vadd.f32 %v902, %v990
      %v992 = vpop.f32.mrf.mxu0
      %v993 = vadd.f32 %v904, %v992
      %994 = vmatmul.bf16.gmra.mxu0 %v552
      %v995 = vpop.f32.mrf.mxu0
      %v996 = vadd.f32 %v907, %v995
      %v997 = vpop.f32.mrf.mxu0
      %v998 = vadd.f32 %v909, %v997
      %999 = vmatmul.bf16.gmra.mxu0 %v555
      %v1000 = vpop.f32.mrf.mxu0
      %v1001 = vadd.f32 %v912, %v1000
      %v1002 = vpop.f32.mrf.mxu0
      %v1003 = vadd.f32 %v914, %v1002
      %1004 = vmatmul.bf16.gmra.mxu0 %v558
      %v1005 = vpop.f32.mrf.mxu0
      %v1006 = vadd.f32 %v917, %v1005
      %v1007 = vpop.f32.mrf.mxu0
      %v1008 = vadd.f32 %v919, %v1007
      %1009 = vmatmul.bf16.gmra.mxu0 %v561
      %v1010 = vpop.f32.mrf.mxu0
      %v1011 = vadd.f32 %v922, %v1010
      %v1012 = vpop.f32.mrf.mxu0
      %v1013 = vadd.f32 %v924, %v1012
      %1014 = vmatmul.bf16.gmra.mxu0 %v564
      %v1015 = vpop.f32.mrf.mxu0
      %v1016 = vadd.f32 %v927, %v1015
      %v1017 = vpop.f32.mrf.mxu0
      %v1018 = vadd.f32 %v929, %v1017
      %1019 = vmatmul.bf16.gmra.mxu0 %v567
      %v1020 = vpop.f32.mrf.mxu0
      %v1021 = vadd.f32 %v932, %v1020
      %v1022 = vpop.f32.mrf.mxu0
      %v1023 = vadd.f32 %v934, %v1022
      %1024 = vmatmul.bf16.gmra.mxu0 %v570
      %v1025 = vpop.f32.mrf.mxu0
      %v1026 = vadd.f32 %v937, %v1025
      %v1027 = vpop.f32.mrf.mxu0
      %v1028 = vadd.f32 %v939, %v1027
      %1029 = vdwg.mxu0
      %v1034 = vunpack.c.l.b16 %v198
      %v1035 = vunpack.c.h.b16 %v198
      %v1036 = vunpack.c.l.b16 %v199
      %v1037 = vunpack.c.l.b16 %v200
      %v1038 = vunpack.c.h.b16 %v200
      %v1039 = vunpack.c.l.b16 %v201
      %v1040 = vpack.c.b16 %v1037, %v1034
      %v1041 = vpack.c.b16 %v1038, %v1035
      %v1042 = vpack.c.b16 %v1039, %v1036
      %v1094 = vunpack.c.l.b16 %v262
      %v1095 = vunpack.c.l.b16 %v263
      %v1096 = vunpack.c.l.b16 %v264
      %v1097 = vunpack.c.l.b16 %v265
      %v1098 = vunpack.c.l.b16 %v266
      %v1099 = vunpack.c.l.b16 %v267
      %v1100 = vunpack.c.l.b16 %v268
      %v1101 = vunpack.c.l.b16 %v269
      %v1102 = vunpack.c.l.b16 %v270
      %v1103 = vunpack.c.l.b16 %v271
      %v1104 = vunpack.c.l.b16 %v272
      %v1105 = vunpack.c.l.b16 %v273
      %v1106 = vunpack.c.l.b16 %v274
      %v1107 = vunpack.c.l.b16 %v275
      %v1108 = vunpack.c.l.b16 %v276
      %v1109 = vunpack.c.l.b16 %v277
      %v1110 = vunpack.c.l.b16 %v278
      %v1111 = vunpack.c.l.b16 %v279
      %v1112 = vunpack.c.l.b16 %v280
      %v1113 = vunpack.c.l.b16 %v281
      %v1114 = vunpack.c.l.b16 %v282
      %v1115 = vunpack.c.l.b16 %v283
      %v1116 = vunpack.c.l.b16 %v284
      %v1117 = vunpack.c.l.b16 %v285
      %v1118 = vunpack.c.l.b16 %v286
      %v1119 = vunpack.c.l.b16 %v287
      %v1120 = vunpack.c.l.b16 %v288
      %v1121 = vunpack.c.l.b16 %v289
      %v1122 = vunpack.c.l.b16 %v290
      %v1123 = vunpack.c.l.b16 %v291
      %v1124 = vunpack.c.l.b16 %v292
      %v1125 = vunpack.c.l.b16 %v293
      %v1126 = vunpack.c.l.b16 %v294
      %v1127 = vunpack.c.l.b16 %v295
      %v1128 = vunpack.c.l.b16 %v296
      %v1129 = vunpack.c.l.b16 %v297
      %v1130 = vunpack.c.l.b16 %v298
      %v1131 = vunpack.c.l.b16 %v299
      %v1132 = vunpack.c.l.b16 %v300
      %v1133 = vunpack.c.l.b16 %v301
      %v1134 = vunpack.c.l.b16 %v302
      %v1135 = vunpack.c.l.b16 %v303
      %v1136 = vunpack.c.l.b16 %v304
      %v1137 = vunpack.c.l.b16 %v305
      %v1138 = vunpack.c.l.b16 %v306
      %v1139 = vunpack.c.l.b16 %v307
      %v1140 = vunpack.c.l.b16 %v308
      %v1141 = vunpack.c.l.b16 %v309
      %v1142 = vpack.c.b16 %v1095, %v1094
      %v1143 = vpack.c.b16 %v1097, %v1096
      %v1144 = vpack.c.b16 %v1099, %v1098
      %v1145 = vpack.c.b16 %v1101, %v1100
      %v1146 = vpack.c.b16 %v1103, %v1102
      %v1147 = vpack.c.b16 %v1105, %v1104
      %v1148 = vpack.c.b16 %v1107, %v1106
      %v1149 = vpack.c.b16 %v1109, %v1108
      %v1150 = vpack.c.b16 %v1111, %v1110
      %v1151 = vpack.c.b16 %v1113, %v1112
      %v1152 = vpack.c.b16 %v1115, %v1114
      %v1153 = vpack.c.b16 %v1117, %v1116
      %v1154 = vpack.c.b16 %v1119, %v1118
      %v1155 = vpack.c.b16 %v1121, %v1120
      %v1156 = vpack.c.b16 %v1123, %v1122
      %v1157 = vpack.c.b16 %v1125, %v1124
      %v1158 = vpack.c.b16 %v1127, %v1126
      %v1159 = vpack.c.b16 %v1129, %v1128
      %v1160 = vpack.c.b16 %v1131, %v1130
      %v1161 = vpack.c.b16 %v1133, %v1132
      %v1162 = vpack.c.b16 %v1135, %v1134
      %v1163 = vpack.c.b16 %v1137, %v1136
      %v1164 = vpack.c.b16 %v1139, %v1138
      %v1165 = vpack.c.b16 %v1141, %v1140
      %1190 = vmatpush.bf16.msra.mxu0 %v1149
      %1191 = vmatpush.bf16.msra.mxu0 %v1148
      %1192 = vmatpush.bf16.msra.mxu0 %v1147
      %1193 = vmatpush.bf16.msra.mxu0 %v1146
      %1194 = vmatpush.bf16.msra.mxu0 %v1145
      %1195 = vmatpush.bf16.msra.mxu0 %v1144
      %1196 = vmatpush.bf16.msra.mxu0 %v1143
      %1197 = vmatpush.bf16.msra.mxu0 %v1142
      %1198 = vmatmul.bf16.gmra.mxu0 %v1040
      %v1199 = vpop.f32.mrf.mxu0
      %v1200 = vadd.f32 %v951, %v1199
      %v1201 = vpop.f32.mrf.mxu0
      %v1202 = vadd.f32 %v953, %v1201
      %1203 = vmatmul.bf16.gmra.mxu0 %v523
      %v1204 = vpop.f32.mrf.mxu0
      %v1205 = vadd.f32 %v956, %v1204
      %v1206 = vpop.f32.mrf.mxu0
      %v1207 = vadd.f32 %v958, %v1206
      %1208 = vmatmul.bf16.gmra.mxu0 %v526
      %v1209 = vpop.f32.mrf.mxu0
      %v1210 = vadd.f32 %v961, %v1209
      %v1211 = vpop.f32.mrf.mxu0
      %v1212 = vadd.f32 %v963, %v1211
      %1213 = vmatmul.bf16.gmra.mxu0 %v529
      %v1214 = vpop.f32.mrf.mxu0
      %v1215 = vadd.f32 %v966, %v1214
      %v1216 = vpop.f32.mrf.mxu0
      %v1217 = vadd.f32 %v968, %v1216
      %1218 = vmatmul.bf16.gmra.mxu0 %v532
      %v1219 = vpop.f32.mrf.mxu0
      %v1220 = vadd.f32 %v971, %v1219
      %v1221 = vpop.f32.mrf.mxu0
      %v1222 = vadd.f32 %v973, %v1221
      %1223 = vmatmul.bf16.gmra.mxu0 %v535
      %v1224 = vpop.f32.mrf.mxu0
      %v1225 = vadd.f32 %v976, %v1224
      %v1226 = vpop.f32.mrf.mxu0
      %v1227 = vadd.f32 %v978, %v1226
      %1228 = vmatmul.bf16.gmra.mxu0 %v538
      %v1229 = vpop.f32.mrf.mxu0
      %v1230 = vadd.f32 %v981, %v1229
      %v1231 = vpop.f32.mrf.mxu0
      %v1232 = vadd.f32 %v983, %v1231
      %1233 = vmatmul.bf16.gmra.mxu0 %v541
      %v1234 = vpop.f32.mrf.mxu0
      %v1235 = vadd.f32 %v986, %v1234
      %v1236 = vpop.f32.mrf.mxu0
      %v1237 = vadd.f32 %v988, %v1236
      %1238 = vmatmul.bf16.gmra.mxu0 %v544
      %v1239 = vpop.f32.mrf.mxu0
      %v1240 = vadd.f32 %v991, %v1239
      %v1241 = vpop.f32.mrf.mxu0
      %v1242 = vadd.f32 %v993, %v1241
      %1243 = vmatmul.bf16.gmra.mxu0 %v547
      %v1244 = vpop.f32.mrf.mxu0
      %v1245 = vadd.f32 %v996, %v1244
      %v1246 = vpop.f32.mrf.mxu0
      %v1247 = vadd.f32 %v998, %v1246
      %1248 = vmatmul.bf16.gmra.mxu0 %v550
      %v1249 = vpop.f32.mrf.mxu0
      %v1250 = vadd.f32 %v1001, %v1249
      %v1251 = vpop.f32.mrf.mxu0
      %v1252 = vadd.f32 %v1003, %v1251
      %1253 = vmatmul.bf16.gmra.mxu0 %v553
      %v1254 = vpop.f32.mrf.mxu0
      %v1255 = vadd.f32 %v1006, %v1254
      %v1256 = vpop.f32.mrf.mxu0
      %v1257 = vadd.f32 %v1008, %v1256
      %1258 = vmatmul.bf16.gmra.mxu0 %v556
      %v1259 = vpop.f32.mrf.mxu0
      %v1260 = vadd.f32 %v1011, %v1259
      %v1261 = vpop.f32.mrf.mxu0
      %v1262 = vadd.f32 %v1013, %v1261
      %1263 = vmatmul.bf16.gmra.mxu0 %v559
      %v1264 = vpop.f32.mrf.mxu0
      %v1265 = vadd.f32 %v1016, %v1264
      %v1266 = vpop.f32.mrf.mxu0
      %v1267 = vadd.f32 %v1018, %v1266
      %1268 = vmatmul.bf16.gmra.mxu0 %v562
      %v1269 = vpop.f32.mrf.mxu0
      %v1270 = vadd.f32 %v1021, %v1269
      %v1271 = vpop.f32.mrf.mxu0
      %v1272 = vadd.f32 %v1023, %v1271
      %1273 = vmatmul.bf16.gmra.mxu0 %v565
      %v1274 = vpop.f32.mrf.mxu0
      %v1275 = vadd.f32 %v1026, %v1274
      %v1276 = vpop.f32.mrf.mxu0
      %v1277 = vadd.f32 %v1028, %v1276
      %1278 = vdwg.mxu0
      %1279 = vmatpush.bf16.msra.mxu0 %v1157
      %1280 = vmatpush.bf16.msra.mxu0 %v1156
      %1281 = vmatpush.bf16.msra.mxu0 %v1155
      %1282 = vmatpush.bf16.msra.mxu0 %v1154
      %1283 = vmatpush.bf16.msra.mxu0 %v1153
      %1284 = vmatpush.bf16.msra.mxu0 %v1152
      %1285 = vmatpush.bf16.msra.mxu0 %v1151
      %1286 = vmatpush.bf16.msra.mxu0 %v1150
      %1287 = vmatmul.bf16.gmra.mxu0 %v1041
      %v1288 = vpop.f32.mrf.mxu0
      %v1289 = vadd.f32 %v1200, %v1288
      %v1290 = vpop.f32.mrf.mxu0
      %v1291 = vadd.f32 %v1202, %v1290
      %1292 = vmatmul.bf16.gmra.mxu0 %v524
      %v1293 = vpop.f32.mrf.mxu0
      %v1294 = vadd.f32 %v1205, %v1293
      %v1295 = vpop.f32.mrf.mxu0
      %v1296 = vadd.f32 %v1207, %v1295
      %1297 = vmatmul.bf16.gmra.mxu0 %v527
      %v1298 = vpop.f32.mrf.mxu0
      %v1299 = vadd.f32 %v1210, %v1298
      %v1300 = vpop.f32.mrf.mxu0
      %v1301 = vadd.f32 %v1212, %v1300
      %1302 = vmatmul.bf16.gmra.mxu0 %v530
      %v1303 = vpop.f32.mrf.mxu0
      %v1304 = vadd.f32 %v1215, %v1303
      %v1305 = vpop.f32.mrf.mxu0
      %v1306 = vadd.f32 %v1217, %v1305
      %1307 = vmatmul.bf16.gmra.mxu0 %v533
      %v1308 = vpop.f32.mrf.mxu0
      %v1309 = vadd.f32 %v1220, %v1308
      %v1310 = vpop.f32.mrf.mxu0
      %v1311 = vadd.f32 %v1222, %v1310
      %1312 = vmatmul.bf16.gmra.mxu0 %v536
      %v1313 = vpop.f32.mrf.mxu0
      %v1314 = vadd.f32 %v1225, %v1313
      %v1315 = vpop.f32.mrf.mxu0
      %v1316 = vadd.f32 %v1227, %v1315
      %1317 = vmatmul.bf16.gmra.mxu0 %v539
      %v1318 = vpop.f32.mrf.mxu0
      %v1319 = vadd.f32 %v1230, %v1318
      %v1320 = vpop.f32.mrf.mxu0
      %v1321 = vadd.f32 %v1232, %v1320
      %1322 = vmatmul.bf16.gmra.mxu0 %v542
      %v1323 = vpop.f32.mrf.mxu0
      %v1324 = vadd.f32 %v1235, %v1323
      %v1325 = vpop.f32.mrf.mxu0
      %v1326 = vadd.f32 %v1237, %v1325
      %1327 = vmatmul.bf16.gmra.mxu0 %v545
      %v1328 = vpop.f32.mrf.mxu0
      %v1329 = vadd.f32 %v1240, %v1328
      %v1330 = vpop.f32.mrf.mxu0
      %v1331 = vadd.f32 %v1242, %v1330
      %1332 = vmatmul.bf16.gmra.mxu0 %v548
      %v1333 = vpop.f32.mrf.mxu0
      %v1334 = vadd.f32 %v1245, %v1333
      %v1335 = vpop.f32.mrf.mxu0
      %v1336 = vadd.f32 %v1247, %v1335
      %1337 = vmatmul.bf16.gmra.mxu0 %v551
      %v1338 = vpop.f32.mrf.mxu0
      %v1339 = vadd.f32 %v1250, %v1338
      %v1340 = vpop.f32.mrf.mxu0
      %v1341 = vadd.f32 %v1252, %v1340
      %1342 = vmatmul.bf16.gmra.mxu0 %v554
      %v1343 = vpop.f32.mrf.mxu0
      %v1344 = vadd.f32 %v1255, %v1343
      %v1345 = vpop.f32.mrf.mxu0
      %v1346 = vadd.f32 %v1257, %v1345
      %1347 = vmatmul.bf16.gmra.mxu0 %v557
      %v1348 = vpop.f32.mrf.mxu0
      %v1349 = vadd.f32 %v1260, %v1348
      %v1350 = vpop.f32.mrf.mxu0
      %v1351 = vadd.f32 %v1262, %v1350
      %1352 = vmatmul.bf16.gmra.mxu0 %v560
      %v1353 = vpop.f32.mrf.mxu0
      %v1354 = vadd.f32 %v1265, %v1353
      %v1355 = vpop.f32.mrf.mxu0
      %v1356 = vadd.f32 %v1267, %v1355
      %1357 = vmatmul.bf16.gmra.mxu0 %v563
      %v1358 = vpop.f32.mrf.mxu0
      %v1359 = vadd.f32 %v1270, %v1358
      %v1360 = vpop.f32.mrf.mxu0
      %v1361 = vadd.f32 %v1272, %v1360
      %1362 = vmatmul.bf16.gmra.mxu0 %v566
      %v1363 = vpop.f32.mrf.mxu0
      %v1364 = vadd.f32 %v1275, %v1363
      %v1365 = vpop.f32.mrf.mxu0
      %v1366 = vadd.f32 %v1277, %v1365
      %1367 = vdwg.mxu0
      %1368 = vmatpush.bf16.msra.mxu0 %v1165
      %1369 = vmatpush.bf16.msra.mxu0 %v1164
      %1370 = vmatpush.bf16.msra.mxu0 %v1163
      %1371 = vmatpush.bf16.msra.mxu0 %v1162
      %1372 = vmatpush.bf16.msra.mxu0 %v1161
      %1373 = vmatpush.bf16.msra.mxu0 %v1160
      %1374 = vmatpush.bf16.msra.mxu0 %v1159
      %1375 = vmatpush.bf16.msra.mxu0 %v1158
      %1376 = vmatmul.bf16.gmra.mxu0 %v1042
      %v1377 = vpop.f32.mrf.mxu0
      %v1378 = vadd.f32 %v1289, %v1377
      %v1379 = vpop.f32.mrf.mxu0
      %v1380 = vadd.f32 %v1291, %v1379
      %1381 = vmatmul.bf16.gmra.mxu0 %v525
      %v1382 = vpop.f32.mrf.mxu0
      %v1383 = vadd.f32 %v1294, %v1382
      %v1384 = vpop.f32.mrf.mxu0
      %v1385 = vadd.f32 %v1296, %v1384
      %1386 = vmatmul.bf16.gmra.mxu0 %v528
      %v1387 = vpop.f32.mrf.mxu0
      %v1388 = vadd.f32 %v1299, %v1387
      %v1389 = vpop.f32.mrf.mxu0
      %v1390 = vadd.f32 %v1301, %v1389
      %1391 = vmatmul.bf16.gmra.mxu0 %v531
      %v1392 = vpop.f32.mrf.mxu0
      %v1393 = vadd.f32 %v1304, %v1392
      %v1394 = vpop.f32.mrf.mxu0
      %v1395 = vadd.f32 %v1306, %v1394
      %1396 = vmatmul.bf16.gmra.mxu0 %v534
      %v1397 = vpop.f32.mrf.mxu0
      %v1398 = vadd.f32 %v1309, %v1397
      %v1399 = vpop.f32.mrf.mxu0
      %v1400 = vadd.f32 %v1311, %v1399
      %1401 = vmatmul.bf16.gmra.mxu0 %v537
      %v1402 = vpop.f32.mrf.mxu0
      %v1403 = vadd.f32 %v1314, %v1402
      %v1404 = vpop.f32.mrf.mxu0
      %v1405 = vadd.f32 %v1316, %v1404
      %1406 = vmatmul.bf16.gmra.mxu0 %v540
      %v1407 = vpop.f32.mrf.mxu0
      %v1408 = vadd.f32 %v1319, %v1407
      %v1409 = vpop.f32.mrf.mxu0
      %v1410 = vadd.f32 %v1321, %v1409
      %1411 = vmatmul.bf16.gmra.mxu0 %v543
      %v1412 = vpop.f32.mrf.mxu0
      %v1413 = vadd.f32 %v1324, %v1412
      %v1414 = vpop.f32.mrf.mxu0
      %v1415 = vadd.f32 %v1326, %v1414
      %1416 = vmatmul.bf16.gmra.mxu0 %v546
      %v1417 = vpop.f32.mrf.mxu0
      %v1418 = vadd.f32 %v1329, %v1417
      %v1419 = vpop.f32.mrf.mxu0
      %v1420 = vadd.f32 %v1331, %v1419
      %1421 = vmatmul.bf16.gmra.mxu0 %v549
      %v1422 = vpop.f32.mrf.mxu0
      %v1423 = vadd.f32 %v1334, %v1422
      %v1424 = vpop.f32.mrf.mxu0
      %v1425 = vadd.f32 %v1336, %v1424
      %1426 = vmatmul.bf16.gmra.mxu0 %v552
      %v1427 = vpop.f32.mrf.mxu0
      %v1428 = vadd.f32 %v1339, %v1427
      %v1429 = vpop.f32.mrf.mxu0
      %v1430 = vadd.f32 %v1341, %v1429
      %1431 = vmatmul.bf16.gmra.mxu0 %v555
      %v1432 = vpop.f32.mrf.mxu0
      %v1433 = vadd.f32 %v1344, %v1432
      %v1434 = vpop.f32.mrf.mxu0
      %v1435 = vadd.f32 %v1346, %v1434
      %1436 = vmatmul.bf16.gmra.mxu0 %v558
      %v1437 = vpop.f32.mrf.mxu0
      %v1438 = vadd.f32 %v1349, %v1437
      %v1439 = vpop.f32.mrf.mxu0
      %v1440 = vadd.f32 %v1351, %v1439
      %1441 = vmatmul.bf16.gmra.mxu0 %v561
      %v1442 = vpop.f32.mrf.mxu0
      %v1443 = vadd.f32 %v1354, %v1442
      %v1444 = vpop.f32.mrf.mxu0
      %v1445 = vadd.f32 %v1356, %v1444
      %1446 = vmatmul.bf16.gmra.mxu0 %v564
      %v1447 = vpop.f32.mrf.mxu0
      %v1448 = vadd.f32 %v1359, %v1447
      %v1449 = vpop.f32.mrf.mxu0
      %v1450 = vadd.f32 %v1361, %v1449
      %1451 = vmatmul.bf16.gmra.mxu0 %v567
      %v1452 = vpop.f32.mrf.mxu0
      %v1453 = vadd.f32 %v1364, %v1452
      %v1454 = vpop.f32.mrf.mxu0
      %v1455 = vadd.f32 %v1366, %v1454
      %1456 = vdwg.mxu0
      %v1457 = vld [vmem:[%s192 + $0x30] sm:$0xff]
      %v1458 = vld [vmem:[%s192 + $0x38] sm:$0xf]
      %v1459 = vld [vmem:[%s192 + $0x3c] sm:$0xff]
      %v1460 = vld [vmem:[%s192 + $0x44] sm:$0xf]
      %v1461 = vld [vmem:[%s192 + $0x48] sm:$0xff]
      %v1462 = vld [vmem:[%s192 + $0x50] sm:$0xf]
      %v1463 = vld [vmem:[%s192 + $0x54] sm:$0xff]
      %v1464 = vld [vmem:[%s192 + $0x5c] sm:$0xf]
      %v1465 = vld [vmem:[%s192 + $0x60] sm:$0xff]
      %v1466 = vld [vmem:[%s192 + $0x68] sm:$0xf]
      %v1467 = vld [vmem:[%s192 + $0x6c] sm:$0xff]
      %v1468 = vld [vmem:[%s192 + $0x74] sm:$0xf]
      %v1469 = vld [vmem:[%s192 + $0x78] sm:$0xff]
      %v1470 = vld [vmem:[%s192 + $0x80] sm:$0xf]
      %v1471 = vld [vmem:[%s192 + $0x84] sm:$0xff]
      %v1472 = vld [vmem:[%s192 + $0x8c] sm:$0xf]
      %v1473 = vld [vmem:[%s192 + $0x90] sm:$0xff]
      %v1474 = vld [vmem:[%s192 + $0x98] sm:$0xf]
      %v1475 = vld [vmem:[%s192 + $0x9c] sm:$0xff]
      %v1476 = vld [vmem:[%s192 + $0xa4] sm:$0xf]
      %v1477 = vld [vmem:[%s192 + $0xa8] sm:$0xff]
      %v1478 = vld [vmem:[%s192 + $0xb0] sm:$0xf]
      %v1479 = vld [vmem:[%s192 + $0xb4] sm:$0xff]
      %v1480 = vld [vmem:[%s192 + $0xbc] sm:$0xf]
      %v1481 = vld [vmem:[%s192 + $0xc0] sm:$0xff]
      %v1482 = vld [vmem:[%s192 + $0xc8] sm:$0xf]
      %v1483 = vld [vmem:[%s192 + $0xcc] sm:$0xff]
      %v1484 = vld [vmem:[%s192 + $0xd4] sm:$0xf]
      %v1485 = vld [vmem:[%s192 + $0xd8] sm:$0xff]
      %v1486 = vld [vmem:[%s192 + $0xe0] sm:$0xf]
      %v1487 = vld [vmem:[%s192 + $0xe4] sm:$0xff]
      %v1488 = vld [vmem:[%s192 + $0xec] sm:$0xf]
      %v1489 = vld [vmem:[%s192 + $0xf0] sm:$0xff]
      %v1490 = vld [vmem:[%s192 + $0xf8] sm:$0xf]
      %v1491 = vld [vmem:[%s192 + $0xfc] sm:$0xff]
      %v1492 = vld [vmem:[%s192 + $0x104] sm:$0xf]
      %v1493 = vld [vmem:[%s192 + $0x108] sm:$0xff]
      %v1494 = vld [vmem:[%s192 + $0x110] sm:$0xf]
      %v1495 = vld [vmem:[%s192 + $0x114] sm:$0xff]
      %v1496 = vld [vmem:[%s192 + $0x11c] sm:$0xf]
      %v1497 = vld [vmem:[%s192 + $0x120] sm:$0xff]
      %v1498 = vld [vmem:[%s192 + $0x128] sm:$0xf]
      %v1499 = vld [vmem:[%s192 + $0x12c] sm:$0xff]
      %v1500 = vld [vmem:[%s192 + $0x134] sm:$0xf]
      %v1501 = vld [vmem:[%s192 + $0x138] sm:$0xff]
      %v1502 = vld [vmem:[%s192 + $0x140] sm:$0xf]
      %v1503 = vld [vmem:[%s192 + $0x144] sm:$0xff]
      %v1504 = vld [vmem:[%s192 + $0x14c] sm:$0xf]
      %v1505 = vld [vmem:[%s192 + $0x150] sm:$0xff]
      %v1506 = vld [vmem:[%s192 + $0x158] sm:$0xf]
      %v1507 = vld [vmem:[%s192 + $0x15c] sm:$0xff]
      %v1508 = vld [vmem:[%s192 + $0x164] sm:$0xf]
      %v1509 = vld [vmem:[%s192 + $0x168] sm:$0xff]
      %v1510 = vld [vmem:[%s192 + $0x170] sm:$0xf]
      %v1511 = vld [vmem:[%s192 + $0x174] sm:$0xff]
      %v1512 = vld [vmem:[%s192 + $0x17c] sm:$0xf]
      %v1513 = vld [vmem:[%s192 + $0x180] sm:$0xff]
      %v1514 = vld [vmem:[%s192 + $0x188] sm:$0xf]
      %v1515 = vld [vmem:[%s192 + $0x18c] sm:$0xff]
      %v1516 = vld [vmem:[%s192 + $0x194] sm:$0xf]
      %v1517 = vld [vmem:[%s192 + $0x198] sm:$0xff]
      %v1518 = vld [vmem:[%s192 + $0x1a0] sm:$0xf]
      %v1519 = vld [vmem:[%s192 + $0x1a4] sm:$0xff]
      %v1520 = vld [vmem:[%s192 + $0x1ac] sm:$0xf]
      %s1521 = scalar_lea.vmem %s1, 384
      %v1522 = vld [vmem:[%s1521] sm:$0xf]
      %v1523 = vld [vmem:[%s1521 + $0x4] sm:$0xf]
      %v1524 = vld [vmem:[%s1521 + $0x8] sm:$0xf]
      %v1525 = vld [vmem:[%s1521 + $0xc] sm:$0xf]
      %v1526 = vld [vmem:[%s1521 + $0x10] sm:$0xf]
      %v1527 = vld [vmem:[%s1521 + $0x14] sm:$0xf]
      %v1528 = vld [vmem:[%s1521 + $0x18] sm:$0xf]
      %v1529 = vld [vmem:[%s1521 + $0x1c] sm:$0xf]
      %v1530 = vld [vmem:[%s1521 + $0x20] sm:$0xf]
      %v1531 = vld [vmem:[%s1521 + $0x24] sm:$0xf]
      %v1532 = vld [vmem:[%s1521 + $0x28] sm:$0xf]
      %v1533 = vld [vmem:[%s1521 + $0x2c] sm:$0xf]
      %v1534 = vld [vmem:[%s1521 + $0x30] sm:$0xf]
      %v1535 = vld [vmem:[%s1521 + $0x34] sm:$0xf]
      %v1536 = vld [vmem:[%s1521 + $0x38] sm:$0xf]
      %v1537 = vld [vmem:[%s1521 + $0x3c] sm:$0xf]
      %v1538 = vld [vmem:[%s1521 + $0x40] sm:$0xf]
      %v1539 = vld [vmem:[%s1521 + $0x44] sm:$0xf]
      %v1540 = vld [vmem:[%s1521 + $0x48] sm:$0xf]
      %v1541 = vld [vmem:[%s1521 + $0x4c] sm:$0xf]
      %v1542 = vld [vmem:[%s1521 + $0x50] sm:$0xf]
      %v1543 = vld [vmem:[%s1521 + $0x54] sm:$0xf]
      %v1544 = vld [vmem:[%s1521 + $0x58] sm:$0xf]
      %v1545 = vld [vmem:[%s1521 + $0x5c] sm:$0xf]
      %v1546 = vld [vmem:[%s1521 + $0x60] sm:$0xf]
      %v1547 = vld [vmem:[%s1521 + $0x64] sm:$0xf]
      %v1548 = vld [vmem:[%s1521 + $0x68] sm:$0xf]
      %v1549 = vld [vmem:[%s1521 + $0x6c] sm:$0xf]
      %v1550 = vld [vmem:[%s1521 + $0x70] sm:$0xf]
      %v1551 = vld [vmem:[%s1521 + $0x74] sm:$0xf]
      %v1552 = vld [vmem:[%s1521 + $0x78] sm:$0xf]
      %v1553 = vld [vmem:[%s1521 + $0x7c] sm:$0xf]
      %v1554 = vld [vmem:[%s1521 + $0x80] sm:$0xf]
      %v1555 = vld [vmem:[%s1521 + $0x84] sm:$0xf]
      %v1556 = vld [vmem:[%s1521 + $0x88] sm:$0xf]
      %v1557 = vld [vmem:[%s1521 + $0x8c] sm:$0xf]
      %v1558 = vld [vmem:[%s1521 + $0x90] sm:$0xf]
      %v1559 = vld [vmem:[%s1521 + $0x94] sm:$0xf]
      %v1560 = vld [vmem:[%s1521 + $0x98] sm:$0xf]
      %v1561 = vld [vmem:[%s1521 + $0x9c] sm:$0xf]
      %v1562 = vld [vmem:[%s1521 + $0xa0] sm:$0xf]
      %v1563 = vld [vmem:[%s1521 + $0xa4] sm:$0xf]
      %v1564 = vld [vmem:[%s1521 + $0xa8] sm:$0xf]
      %v1565 = vld [vmem:[%s1521 + $0xac] sm:$0xf]
      %v1566 = vld [vmem:[%s1521 + $0xb0] sm:$0xf]
      %v1567 = vld [vmem:[%s1521 + $0xb4] sm:$0xf]
      %v1568 = vld [vmem:[%s1521 + $0xb8] sm:$0xf]
      %v1569 = vld [vmem:[%s1521 + $0xbc] sm:$0xf]
      %v1634 = vunpack.c.l.b16 %v1457
      %v1635 = vunpack.c.h.b16 %v1457
      %v1636 = vunpack.c.l.b16 %v1458
      %v1637 = vunpack.c.l.b16 %v1459
      %v1638 = vunpack.c.h.b16 %v1459
      %v1639 = vunpack.c.l.b16 %v1460
      %v1640 = vunpack.c.l.b16 %v1461
      %v1641 = vunpack.c.h.b16 %v1461
      %v1642 = vunpack.c.l.b16 %v1462
      %v1643 = vunpack.c.l.b16 %v1463
      %v1644 = vunpack.c.h.b16 %v1463
      %v1645 = vunpack.c.l.b16 %v1464
      %v1646 = vunpack.c.l.b16 %v1465
      %v1647 = vunpack.c.h.b16 %v1465
      %v1648 = vunpack.c.l.b16 %v1466
      %v1649 = vunpack.c.l.b16 %v1467
      %v1650 = vunpack.c.h.b16 %v1467
      %v1651 = vunpack.c.l.b16 %v1468
      %v1652 = vunpack.c.l.b16 %v1469
      %v1653 = vunpack.c.h.b16 %v1469
      %v1654 = vunpack.c.l.b16 %v1470
      %v1655 = vunpack.c.l.b16 %v1471
      %v1656 = vunpack.c.h.b16 %v1471
      %v1657 = vunpack.c.l.b16 %v1472
      %v1658 = vunpack.c.l.b16 %v1473
      %v1659 = vunpack.c.h.b16 %v1473
      %v1660 = vunpack.c.l.b16 %v1474
      %v1661 = vunpack.c.l.b16 %v1475
      %v1662 = vunpack.c.h.b16 %v1475
      %v1663 = vunpack.c.l.b16 %v1476
      %v1664 = vunpack.c.l.b16 %v1477
      %v1665 = vunpack.c.h.b16 %v1477
      %v1666 = vunpack.c.l.b16 %v1478
      %v1667 = vunpack.c.l.b16 %v1479
      %v1668 = vunpack.c.h.b16 %v1479
      %v1669 = vunpack.c.l.b16 %v1480
      %v1670 = vunpack.c.l.b16 %v1481
      %v1671 = vunpack.c.h.b16 %v1481
      %v1672 = vunpack.c.l.b16 %v1482
      %v1673 = vunpack.c.l.b16 %v1483
      %v1674 = vunpack.c.h.b16 %v1483
      %v1675 = vunpack.c.l.b16 %v1484
      %v1676 = vunpack.c.l.b16 %v1485
      %v1677 = vunpack.c.h.b16 %v1485
      %v1678 = vunpack.c.l.b16 %v1486
      %v1679 = vunpack.c.l.b16 %v1487
      %v1680 = vunpack.c.h.b16 %v1487
      %v1681 = vunpack.c.l.b16 %v1488
      %v1682 = vunpack.c.l.b16 %v1489
      %v1683 = vunpack.c.h.b16 %v1489
      %v1684 = vunpack.c.l.b16 %v1490
      %v1685 = vunpack.c.l.b16 %v1491
      %v1686 = vunpack.c.h.b16 %v1491
      %v1687 = vunpack.c.l.b16 %v1492
      %v1688 = vunpack.c.l.b16 %v1493
      %v1689 = vunpack.c.h.b16 %v1493
      %v1690 = vunpack.c.l.b16 %v1494
      %v1691 = vunpack.c.l.b16 %v1495
      %v1692 = vunpack.c.h.b16 %v1495
      %v1693 = vunpack.c.l.b16 %v1496
      %v1694 = vunpack.c.l.b16 %v1497
      %v1695 = vunpack.c.h.b16 %v1497
      %v1696 = vunpack.c.l.b16 %v1498
      %v1697 = vunpack.c.l.b16 %v1499
      %v1698 = vunpack.c.h.b16 %v1499
      %v1699 = vunpack.c.l.b16 %v1500
      %v1700 = vunpack.c.l.b16 %v1501
      %v1701 = vunpack.c.h.b16 %v1501
      %v1702 = vunpack.c.l.b16 %v1502
      %v1703 = vunpack.c.l.b16 %v1503
      %v1704 = vunpack.c.h.b16 %v1503
      %v1705 = vunpack.c.l.b16 %v1504
      %v1706 = vunpack.c.l.b16 %v1505
      %v1707 = vunpack.c.h.b16 %v1505
      %v1708 = vunpack.c.l.b16 %v1506
      %v1709 = vunpack.c.l.b16 %v1507
      %v1710 = vunpack.c.h.b16 %v1507
      %v1711 = vunpack.c.l.b16 %v1508
      %v1712 = vunpack.c.l.b16 %v1509
      %v1713 = vunpack.c.h.b16 %v1509
      %v1714 = vunpack.c.l.b16 %v1510
      %v1715 = vunpack.c.l.b16 %v1511
      %v1716 = vunpack.c.h.b16 %v1511
      %v1717 = vunpack.c.l.b16 %v1512
      %v1718 = vunpack.c.l.b16 %v1513
      %v1719 = vunpack.c.h.b16 %v1513
      %v1720 = vunpack.c.l.b16 %v1514
      %v1721 = vunpack.c.l.b16 %v1515
      %v1722 = vunpack.c.h.b16 %v1515
      %v1723 = vunpack.c.l.b16 %v1516
      %v1724 = vunpack.c.l.b16 %v1517
      %v1725 = vunpack.c.h.b16 %v1517
      %v1726 = vunpack.c.l.b16 %v1518
      %v1727 = vunpack.c.l.b16 %v1519
      %v1728 = vunpack.c.h.b16 %v1519
      %v1729 = vunpack.c.l.b16 %v1520
      %v1730 = vpack.c.b16 %v1637, %v1634
      %v1731 = vpack.c.b16 %v1638, %v1635
      %v1732 = vpack.c.b16 %v1639, %v1636
      %v1733 = vpack.c.b16 %v1643, %v1640
      %v1734 = vpack.c.b16 %v1644, %v1641
      %v1735 = vpack.c.b16 %v1645, %v1642
      %v1736 = vpack.c.b16 %v1649, %v1646
      %v1737 = vpack.c.b16 %v1650, %v1647
      %v1738 = vpack.c.b16 %v1651, %v1648
      %v1739 = vpack.c.b16 %v1655, %v1652
      %v1740 = vpack.c.b16 %v1656, %v1653
      %v1741 = vpack.c.b16 %v1657, %v1654
      %v1742 = vpack.c.b16 %v1661, %v1658
      %v1743 = vpack.c.b16 %v1662, %v1659
      %v1744 = vpack.c.b16 %v1663, %v1660
      %v1745 = vpack.c.b16 %v1667, %v1664
      %v1746 = vpack.c.b16 %v1668, %v1665
      %v1747 = vpack.c.b16 %v1669, %v1666
      %v1748 = vpack.c.b16 %v1673, %v1670
      %v1749 = vpack.c.b16 %v1674, %v1671
      %v1750 = vpack.c.b16 %v1675, %v1672
      %v1751 = vpack.c.b16 %v1679, %v1676
      %v1752 = vpack.c.b16 %v1680, %v1677
      %v1753 = vpack.c.b16 %v1681, %v1678
      %v1754 = vpack.c.b16 %v1685, %v1682
      %v1755 = vpack.c.b16 %v1686, %v1683
      %v1756 = vpack.c.b16 %v1687, %v1684
      %v1757 = vpack.c.b16 %v1691, %v1688
      %v1758 = vpack.c.b16 %v1692, %v1689
      %v1759 = vpack.c.b16 %v1693, %v1690
      %v1760 = vpack.c.b16 %v1697, %v1694
      %v1761 = vpack.c.b16 %v1698, %v1695
      %v1762 = vpack.c.b16 %v1699, %v1696
      %v1763 = vpack.c.b16 %v1703, %v1700
      %v1764 = vpack.c.b16 %v1704, %v1701
      %v1765 = vpack.c.b16 %v1705, %v1702
      %v1766 = vpack.c.b16 %v1709, %v1706
      %v1767 = vpack.c.b16 %v1710, %v1707
      %v1768 = vpack.c.b16 %v1711, %v1708
      %v1769 = vpack.c.b16 %v1715, %v1712
      %v1770 = vpack.c.b16 %v1716, %v1713
      %v1771 = vpack.c.b16 %v1717, %v1714
      %v1772 = vpack.c.b16 %v1721, %v1718
      %v1773 = vpack.c.b16 %v1722, %v1719
      %v1774 = vpack.c.b16 %v1723, %v1720
      %v1775 = vpack.c.b16 %v1727, %v1724
      %v1776 = vpack.c.b16 %v1728, %v1725
      %v1777 = vpack.c.b16 %v1729, %v1726
      %v1874 = vunpack.c.l.b16 %v1522
      %v1875 = vunpack.c.l.b16 %v1523
      %v1876 = vunpack.c.l.b16 %v1524
      %v1877 = vunpack.c.l.b16 %v1525
      %v1878 = vunpack.c.l.b16 %v1526
      %v1879 = vunpack.c.l.b16 %v1527
      %v1880 = vunpack.c.l.b16 %v1528
      %v1881 = vunpack.c.l.b16 %v1529
      %v1882 = vunpack.c.l.b16 %v1530
      %v1883 = vunpack.c.l.b16 %v1531
      %v1884 = vunpack.c.l.b16 %v1532
      %v1885 = vunpack.c.l.b16 %v1533
      %v1886 = vunpack.c.l.b16 %v1534
      %v1887 = vunpack.c.l.b16 %v1535
      %v1888 = vunpack.c.l.b16 %v1536
      %v1889 = vunpack.c.l.b16 %v1537
      %v1890 = vunpack.c.l.b16 %v1538
      %v1891 = vunpack.c.l.b16 %v1539
      %v1892 = vunpack.c.l.b16 %v1540
      %v1893 = vunpack.c.l.b16 %v1541
      %v1894 = vunpack.c.l.b16 %v1542
      %v1895 = vunpack.c.l.b16 %v1543
      %v1896 = vunpack.c.l.b16 %v1544
      %v1897 = vunpack.c.l.b16 %v1545
      %v1898 = vunpack.c.l.b16 %v1546
      %v1899 = vunpack.c.l.b16 %v1547
      %v1900 = vunpack.c.l.b16 %v1548
      %v1901 = vunpack.c.l.b16 %v1549
      %v1902 = vunpack.c.l.b16 %v1550
      %v1903 = vunpack.c.l.b16 %v1551
      %v1904 = vunpack.c.l.b16 %v1552
      %v1905 = vunpack.c.l.b16 %v1553
      %v1906 = vunpack.c.l.b16 %v1554
      %v1907 = vunpack.c.l.b16 %v1555
      %v1908 = vunpack.c.l.b16 %v1556
      %v1909 = vunpack.c.l.b16 %v1557
      %v1910 = vunpack.c.l.b16 %v1558
      %v1911 = vunpack.c.l.b16 %v1559
      %v1912 = vunpack.c.l.b16 %v1560
      %v1913 = vunpack.c.l.b16 %v1561
      %v1914 = vunpack.c.l.b16 %v1562
      %v1915 = vunpack.c.l.b16 %v1563
      %v1916 = vunpack.c.l.b16 %v1564
      %v1917 = vunpack.c.l.b16 %v1565
      %v1918 = vunpack.c.l.b16 %v1566
      %v1919 = vunpack.c.l.b16 %v1567
      %v1920 = vunpack.c.l.b16 %v1568
      %v1921 = vunpack.c.l.b16 %v1569
      %v1922 = vpack.c.b16 %v1875, %v1874
      %v1923 = vpack.c.b16 %v1877, %v1876
      %v1924 = vpack.c.b16 %v1879, %v1878
      %v1925 = vpack.c.b16 %v1881, %v1880
      %v1926 = vpack.c.b16 %v1883, %v1882
      %v1927 = vpack.c.b16 %v1885, %v1884
      %v1928 = vpack.c.b16 %v1887, %v1886
      %v1929 = vpack.c.b16 %v1889, %v1888
      %v1930 = vpack.c.b16 %v1891, %v1890
      %v1931 = vpack.c.b16 %v1893, %v1892
      %v1932 = vpack.c.b16 %v1895, %v1894
      %v1933 = vpack.c.b16 %v1897, %v1896
      %v1934 = vpack.c.b16 %v1899, %v1898
      %v1935 = vpack.c.b16 %v1901, %v1900
      %v1936 = vpack.c.b16 %v1903, %v1902
      %v1937 = vpack.c.b16 %v1905, %v1904
      %v1938 = vpack.c.b16 %v1907, %v1906
      %v1939 = vpack.c.b16 %v1909, %v1908
      %v1940 = vpack.c.b16 %v1911, %v1910
      %v1941 = vpack.c.b16 %v1913, %v1912
      %v1942 = vpack.c.b16 %v1915, %v1914
      %v1943 = vpack.c.b16 %v1917, %v1916
      %v1944 = vpack.c.b16 %v1919, %v1918
      %v1945 = vpack.c.b16 %v1921, %v1920
      %1970 = vmatpush.bf16.msra.mxu0 %v1929
      %1971 = vmatpush.bf16.msra.mxu0 %v1928
      %1972 = vmatpush.bf16.msra.mxu0 %v1927
      %1973 = vmatpush.bf16.msra.mxu0 %v1926
      %1974 = vmatpush.bf16.msra.mxu0 %v1925
      %1975 = vmatpush.bf16.msra.mxu0 %v1924
      %1976 = vmatpush.bf16.msra.mxu0 %v1923
      %1977 = vmatpush.bf16.msra.mxu0 %v1922
      %1978 = vmatmul.bf16.gmra.mxu0 %v1730
      %v1979 = vpop.f32.mrf.mxu0
      %v1980 = vadd.f32 0.0, %v1979
      %v1981 = vpop.f32.mrf.mxu0
      %v1982 = vadd.f32 0.0, %v1981
      %1983 = vmatmul.bf16.gmra.mxu0 %v1733
      %v1984 = vpop.f32.mrf.mxu0
      %v1985 = vadd.f32 0.0, %v1984
      %v1986 = vpop.f32.mrf.mxu0
      %v1987 = vadd.f32 0.0, %v1986
      %1988 = vmatmul.bf16.gmra.mxu0 %v1736
      %v1989 = vpop.f32.mrf.mxu0
      %v1990 = vadd.f32 0.0, %v1989
      %v1991 = vpop.f32.mrf.mxu0
      %v1992 = vadd.f32 0.0, %v1991
      %1993 = vmatmul.bf16.gmra.mxu0 %v1739
      %v1994 = vpop.f32.mrf.mxu0
      %v1995 = vadd.f32 0.0, %v1994
      %v1996 = vpop.f32.mrf.mxu0
      %v1997 = vadd.f32 0.0, %v1996
      %1998 = vmatmul.bf16.gmra.mxu0 %v1742
      %v1999 = vpop.f32.mrf.mxu0
      %v2000 = vadd.f32 0.0, %v1999
      %v2001 = vpop.f32.mrf.mxu0
      %v2002 = vadd.f32 0.0, %v2001
      %2003 = vmatmul.bf16.gmra.mxu0 %v1745
      %v2004 = vpop.f32.mrf.mxu0
      %v2005 = vadd.f32 0.0, %v2004
      %v2006 = vpop.f32.mrf.mxu0
      %v2007 = vadd.f32 0.0, %v2006
      %2008 = vmatmul.bf16.gmra.mxu0 %v1748
      %v2009 = vpop.f32.mrf.mxu0
      %v2010 = vadd.f32 0.0, %v2009
      %v2011 = vpop.f32.mrf.mxu0
      %v2012 = vadd.f32 0.0, %v2011
      %2013 = vmatmul.bf16.gmra.mxu0 %v1751
      %v2014 = vpop.f32.mrf.mxu0
      %v2015 = vadd.f32 0.0, %v2014
      %v2016 = vpop.f32.mrf.mxu0
      %v2017 = vadd.f32 0.0, %v2016
      %2018 = vmatmul.bf16.gmra.mxu0 %v1754
      %v2019 = vpop.f32.mrf.mxu0
      %v2020 = vadd.f32 0.0, %v2019
      %v2021 = vpop.f32.mrf.mxu0
      %v2022 = vadd.f32 0.0, %v2021
      %2023 = vmatmul.bf16.gmra.mxu0 %v1757
      %v2024 = vpop.f32.mrf.mxu0
      %v2025 = vadd.f32 0.0, %v2024
      %v2026 = vpop.f32.mrf.mxu0
      %v2027 = vadd.f32 0.0, %v2026
      %2028 = vmatmul.bf16.gmra.mxu0 %v1760
      %v2029 = vpop.f32.mrf.mxu0
      %v2030 = vadd.f32 0.0, %v2029
      %v2031 = vpop.f32.mrf.mxu0
      %v2032 = vadd.f32 0.0, %v2031
      %2033 = vmatmul.bf16.gmra.mxu0 %v1763
      %v2034 = vpop.f32.mrf.mxu0
      %v2035 = vadd.f32 0.0, %v2034
      %v2036 = vpop.f32.mrf.mxu0
      %v2037 = vadd.f32 0.0, %v2036
      %2038 = vmatmul.bf16.gmra.mxu0 %v1766
      %v2039 = vpop.f32.mrf.mxu0
      %v2040 = vadd.f32 0.0, %v2039
      %v2041 = vpop.f32.mrf.mxu0
      %v2042 = vadd.f32 0.0, %v2041
      %2043 = vmatmul.bf16.gmra.mxu0 %v1769
      %v2044 = vpop.f32.mrf.mxu0
      %v2045 = vadd.f32 0.0, %v2044
      %v2046 = vpop.f32.mrf.mxu0
      %v2047 = vadd.f32 0.0, %v2046
      %2048 = vmatmul.bf16.gmra.mxu0 %v1772
      %v2049 = vpop.f32.mrf.mxu0
      %v2050 = vadd.f32 0.0, %v2049
      %v2051 = vpop.f32.mrf.mxu0
      %v2052 = vadd.f32 0.0, %v2051
      %2053 = vmatmul.bf16.gmra.mxu0 %v1775
      %v2054 = vpop.f32.mrf.mxu0
      %v2055 = vadd.f32 0.0, %v2054
      %v2056 = vpop.f32.mrf.mxu0
      %v2057 = vadd.f32 0.0, %v2056
      %2058 = vdwg.mxu0
      %2059 = vmatpush.bf16.msra.mxu0 %v1937
      %2060 = vmatpush.bf16.msra.mxu0 %v1936
      %2061 = vmatpush.bf16.msra.mxu0 %v1935
      %2062 = vmatpush.bf16.msra.mxu0 %v1934
      %2063 = vmatpush.bf16.msra.mxu0 %v1933
      %2064 = vmatpush.bf16.msra.mxu0 %v1932
      %2065 = vmatpush.bf16.msra.mxu0 %v1931
      %2066 = vmatpush.bf16.msra.mxu0 %v1930
      %2067 = vmatmul.bf16.gmra.mxu0 %v1731
      %v2068 = vpop.f32.mrf.mxu0
      %v2069 = vadd.f32 %v1980, %v2068
      %v2070 = vpop.f32.mrf.mxu0
      %v2071 = vadd.f32 %v1982, %v2070
      %2072 = vmatmul.bf16.gmra.mxu0 %v1734
      %v2073 = vpop.f32.mrf.mxu0
      %v2074 = vadd.f32 %v1985, %v2073
      %v2075 = vpop.f32.mrf.mxu0
      %v2076 = vadd.f32 %v1987, %v2075
      %2077 = vmatmul.bf16.gmra.mxu0 %v1737
      %v2078 = vpop.f32.mrf.mxu0
      %v2079 = vadd.f32 %v1990, %v2078
      %v2080 = vpop.f32.mrf.mxu0
      %v2081 = vadd.f32 %v1992, %v2080
      %2082 = vmatmul.bf16.gmra.mxu0 %v1740
      %v2083 = vpop.f32.mrf.mxu0
      %v2084 = vadd.f32 %v1995, %v2083
      %v2085 = vpop.f32.mrf.mxu0
      %v2086 = vadd.f32 %v1997, %v2085
      %2087 = vmatmul.bf16.gmra.mxu0 %v1743
      %v2088 = vpop.f32.mrf.mxu0
      %v2089 = vadd.f32 %v2000, %v2088
      %v2090 = vpop.f32.mrf.mxu0
      %v2091 = vadd.f32 %v2002, %v2090
      %2092 = vmatmul.bf16.gmra.mxu0 %v1746
      %v2093 = vpop.f32.mrf.mxu0
      %v2094 = vadd.f32 %v2005, %v2093
      %v2095 = vpop.f32.mrf.mxu0
      %v2096 = vadd.f32 %v2007, %v2095
      %2097 = vmatmul.bf16.gmra.mxu0 %v1749
      %v2098 = vpop.f32.mrf.mxu0
      %v2099 = vadd.f32 %v2010, %v2098
      %v2100 = vpop.f32.mrf.mxu0
      %v2101 = vadd.f32 %v2012, %v2100
      %2102 = vmatmul.bf16.gmra.mxu0 %v1752
      %v2103 = vpop.f32.mrf.mxu0
      %v2104 = vadd.f32 %v2015, %v2103
      %v2105 = vpop.f32.mrf.mxu0
      %v2106 = vadd.f32 %v2017, %v2105
      %2107 = vmatmul.bf16.gmra.mxu0 %v1755
      %v2108 = vpop.f32.mrf.mxu0
      %v2109 = vadd.f32 %v2020, %v2108
      %v2110 = vpop.f32.mrf.mxu0
      %v2111 = vadd.f32 %v2022, %v2110
      %2112 = vmatmul.bf16.gmra.mxu0 %v1758
      %v2113 = vpop.f32.mrf.mxu0
      %v2114 = vadd.f32 %v2025, %v2113
      %v2115 = vpop.f32.mrf.mxu0
      %v2116 = vadd.f32 %v2027, %v2115
      %2117 = vmatmul.bf16.gmra.mxu0 %v1761
      %v2118 = vpop.f32.mrf.mxu0
      %v2119 = vadd.f32 %v2030, %v2118
      %v2120 = vpop.f32.mrf.mxu0
      %v2121 = vadd.f32 %v2032, %v2120
      %2122 = vmatmul.bf16.gmra.mxu0 %v1764
      %v2123 = vpop.f32.mrf.mxu0
      %v2124 = vadd.f32 %v2035, %v2123
      %v2125 = vpop.f32.mrf.mxu0
      %v2126 = vadd.f32 %v2037, %v2125
      %2127 = vmatmul.bf16.gmra.mxu0 %v1767
      %v2128 = vpop.f32.mrf.mxu0
      %v2129 = vadd.f32 %v2040, %v2128
      %v2130 = vpop.f32.mrf.mxu0
      %v2131 = vadd.f32 %v2042, %v2130
      %2132 = vmatmul.bf16.gmra.mxu0 %v1770
      %v2133 = vpop.f32.mrf.mxu0
      %v2134 = vadd.f32 %v2045, %v2133
      %v2135 = vpop.f32.mrf.mxu0
      %v2136 = vadd.f32 %v2047, %v2135
      %2137 = vmatmul.bf16.gmra.mxu0 %v1773
      %v2138 = vpop.f32.mrf.mxu0
      %v2139 = vadd.f32 %v2050, %v2138
      %v2140 = vpop.f32.mrf.mxu0
      %v2141 = vadd.f32 %v2052, %v2140
      %2142 = vmatmul.bf16.gmra.mxu0 %v1776
      %v2143 = vpop.f32.mrf.mxu0
      %v2144 = vadd.f32 %v2055, %v2143
      %v2145 = vpop.f32.mrf.mxu0
      %v2146 = vadd.f32 %v2057, %v2145
      %2147 = vdwg.mxu0
      %2148 = vmatpush.bf16.msra.mxu0 %v1945
      %2149 = vmatpush.bf16.msra.mxu0 %v1944
      %2150 = vmatpush.bf16.msra.mxu0 %v1943
      %2151 = vmatpush.bf16.msra.mxu0 %v1942
      %2152 = vmatpush.bf16.msra.mxu0 %v1941
      %2153 = vmatpush.bf16.msra.mxu0 %v1940
      %2154 = vmatpush.bf16.msra.mxu0 %v1939
      %2155 = vmatpush.bf16.msra.mxu0 %v1938
      %2156 = vmatmul.bf16.gmra.mxu0 %v1732
      %v2157 = vpop.f32.mrf.mxu0
      %v2158 = vadd.f32 %v2069, %v2157
      %v2159 = vpop.f32.mrf.mxu0
      %v2160 = vadd.f32 %v2071, %v2159
      %2161 = vmatmul.bf16.gmra.mxu0 %v1735
      %v2162 = vpop.f32.mrf.mxu0
      %v2163 = vadd.f32 %v2074, %v2162
      %v2164 = vpop.f32.mrf.mxu0
      %v2165 = vadd.f32 %v2076, %v2164
      %2166 = vmatmul.bf16.gmra.mxu0 %v1738
      %v2167 = vpop.f32.mrf.mxu0
      %v2168 = vadd.f32 %v2079, %v2167
      %v2169 = vpop.f32.mrf.mxu0
      %v2170 = vadd.f32 %v2081, %v2169
      %2171 = vmatmul.bf16.gmra.mxu0 %v1741
      %v2172 = vpop.f32.mrf.mxu0
      %v2173 = vadd.f32 %v2084, %v2172
      %v2174 = vpop.f32.mrf.mxu0
      %v2175 = vadd.f32 %v2086, %v2174
      %2176 = vmatmul.bf16.gmra.mxu0 %v1744
      %v2177 = vpop.f32.mrf.mxu0
      %v2178 = vadd.f32 %v2089, %v2177
      %v2179 = vpop.f32.mrf.mxu0
      %v2180 = vadd.f32 %v2091, %v2179
      %2181 = vmatmul.bf16.gmra.mxu0 %v1747
      %v2182 = vpop.f32.mrf.mxu0
      %v2183 = vadd.f32 %v2094, %v2182
      %v2184 = vpop.f32.mrf.mxu0
      %v2185 = vadd.f32 %v2096, %v2184
      %2186 = vmatmul.bf16.gmra.mxu0 %v1750
      %v2187 = vpop.f32.mrf.mxu0
      %v2188 = vadd.f32 %v2099, %v2187
      %v2189 = vpop.f32.mrf.mxu0
      %v2190 = vadd.f32 %v2101, %v2189
      %2191 = vmatmul.bf16.gmra.mxu0 %v1753
      %v2192 = vpop.f32.mrf.mxu0
      %v2193 = vadd.f32 %v2104, %v2192
      %v2194 = vpop.f32.mrf.mxu0
      %v2195 = vadd.f32 %v2106, %v2194
      %2196 = vmatmul.bf16.gmra.mxu0 %v1756
      %v2197 = vpop.f32.mrf.mxu0
      %v2198 = vadd.f32 %v2109, %v2197
      %v2199 = vpop.f32.mrf.mxu0
      %v2200 = vadd.f32 %v2111, %v2199
      %2201 = vmatmul.bf16.gmra.mxu0 %v1759
      %v2202 = vpop.f32.mrf.mxu0
      %v2203 = vadd.f32 %v2114, %v2202
      %v2204 = vpop.f32.mrf.mxu0
      %v2205 = vadd.f32 %v2116, %v2204
      %2206 = vmatmul.bf16.gmra.mxu0 %v1762
      %v2207 = vpop.f32.mrf.mxu0
      %v2208 = vadd.f32 %v2119, %v2207
      %v2209 = vpop.f32.mrf.mxu0
      %v2210 = vadd.f32 %v2121, %v2209
      %2211 = vmatmul.bf16.gmra.mxu0 %v1765
      %v2212 = vpop.f32.mrf.mxu0
      %v2213 = vadd.f32 %v2124, %v2212
      %v2214 = vpop.f32.mrf.mxu0
      %v2215 = vadd.f32 %v2126, %v2214
      %2216 = vmatmul.bf16.gmra.mxu0 %v1768
      %v2217 = vpop.f32.mrf.mxu0
      %v2218 = vadd.f32 %v2129, %v2217
      %v2219 = vpop.f32.mrf.mxu0
      %v2220 = vadd.f32 %v2131, %v2219
      %2221 = vmatmul.bf16.gmra.mxu0 %v1771
      %v2222 = vpop.f32.mrf.mxu0
      %v2223 = vadd.f32 %v2134, %v2222
      %v2224 = vpop.f32.mrf.mxu0
      %v2225 = vadd.f32 %v2136, %v2224
      %2226 = vmatmul.bf16.gmra.mxu0 %v1774
      %v2227 = vpop.f32.mrf.mxu0
      %v2228 = vadd.f32 %v2139, %v2227
      %v2229 = vpop.f32.mrf.mxu0
      %v2230 = vadd.f32 %v2141, %v2229
      %2231 = vmatmul.bf16.gmra.mxu0 %v1777
      %v2232 = vpop.f32.mrf.mxu0
      %v2233 = vadd.f32 %v2144, %v2232
      %v2234 = vpop.f32.mrf.mxu0
      %v2235 = vadd.f32 %v2146, %v2234
      %2236 = vdwg.mxu0
      %v2237 = vadd.f32 %v1378, %v2158
      %v2238 = vadd.f32 %v1380, %v2160
      %v2239 = vadd.f32 %v1383, %v2163
      %v2240 = vadd.f32 %v1385, %v2165
      %v2241 = vadd.f32 %v1388, %v2168
      %v2242 = vadd.f32 %v1390, %v2170
      %v2243 = vadd.f32 %v1393, %v2173
      %v2244 = vadd.f32 %v1395, %v2175
      %v2245 = vadd.f32 %v1398, %v2178
      %v2246 = vadd.f32 %v1400, %v2180
      %v2247 = vadd.f32 %v1403, %v2183
      %v2248 = vadd.f32 %v1405, %v2185
      %v2249 = vadd.f32 %v1408, %v2188
      %v2250 = vadd.f32 %v1410, %v2190
      %v2251 = vadd.f32 %v1413, %v2193
      %v2252 = vadd.f32 %v1415, %v2195
      %v2253 = vadd.f32 %v1418, %v2198
      %v2254 = vadd.f32 %v1420, %v2200
      %v2255 = vadd.f32 %v1423, %v2203
      %v2256 = vadd.f32 %v1425, %v2205
      %v2257 = vadd.f32 %v1428, %v2208
      %v2258 = vadd.f32 %v1430, %v2210
      %v2259 = vadd.f32 %v1433, %v2213
      %v2260 = vadd.f32 %v1435, %v2215
      %v2261 = vadd.f32 %v1438, %v2218
      %v2262 = vadd.f32 %v1440, %v2220
      %v2263 = vadd.f32 %v1443, %v2223
      %v2264 = vadd.f32 %v1445, %v2225
      %v2265 = vadd.f32 %v1448, %v2228
      %v2266 = vadd.f32 %v1450, %v2230
      %v2267 = vadd.f32 %v1453, %v2233
      %v2268 = vadd.f32 %v1455, %v2235
      %v2269 = vpack.c.bf16 %v2237, %v2237
      %v2270 = vpack.c.bf16 %v2238, %v2238
      %v2271 = vpack.c.bf16 %v2239, %v2239
      %v2272 = vpack.c.bf16 %v2240, %v2240
      %v2273 = vpack.c.bf16 %v2241, %v2241
      %v2274 = vpack.c.bf16 %v2242, %v2242
      %v2275 = vpack.c.bf16 %v2243, %v2243
      %v2276 = vpack.c.bf16 %v2244, %v2244
      %v2277 = vpack.c.bf16 %v2245, %v2245
      %v2278 = vpack.c.bf16 %v2246, %v2246
      %v2279 = vpack.c.bf16 %v2247, %v2247
      %v2280 = vpack.c.bf16 %v2248, %v2248
      %v2281 = vpack.c.bf16 %v2249, %v2249
      %v2282 = vpack.c.bf16 %v2250, %v2250
      %v2283 = vpack.c.bf16 %v2251, %v2251
      %v2284 = vpack.c.bf16 %v2252, %v2252
      %v2285 = vpack.c.bf16 %v2253, %v2253
      %v2286 = vpack.c.bf16 %v2254, %v2254
      %v2287 = vpack.c.bf16 %v2255, %v2255
      %v2288 = vpack.c.bf16 %v2256, %v2256
      %v2289 = vpack.c.bf16 %v2257, %v2257
      %v2290 = vpack.c.bf16 %v2258, %v2258
      %v2291 = vpack.c.bf16 %v2259, %v2259
      %v2292 = vpack.c.bf16 %v2260, %v2260
      %v2293 = vpack.c.bf16 %v2261, %v2261
      %v2294 = vpack.c.bf16 %v2262, %v2262
      %v2295 = vpack.c.bf16 %v2263, %v2263
      %v2296 = vpack.c.bf16 %v2264, %v2264
      %v2297 = vpack.c.bf16 %v2265, %v2265
      %v2298 = vpack.c.bf16 %v2266, %v2266
      %v2299 = vpack.c.bf16 %v2267, %v2267
      %v2300 = vpack.c.bf16 %v2268, %v2268
      %2301 = vst [vmem:[%s197] sm:$0xf] %v2269
      %2302 = vst [vmem:[%s197 + $0x4] sm:$0xf] %v2270
      %2303 = vst [vmem:[%s197 + $0x8] sm:$0xf] %v2271
      %2304 = vst [vmem:[%s197 + $0xc] sm:$0xf] %v2272
      %2305 = vst [vmem:[%s197 + $0x10] sm:$0xf] %v2273
      %2306 = vst [vmem:[%s197 + $0x14] sm:$0xf] %v2274
      %2307 = vst [vmem:[%s197 + $0x18] sm:$0xf] %v2275
      %2308 = vst [vmem:[%s197 + $0x1c] sm:$0xf] %v2276
      %2309 = vst [vmem:[%s197 + $0x20] sm:$0xf] %v2277
      %2310 = vst [vmem:[%s197 + $0x24] sm:$0xf] %v2278
      %2311 = vst [vmem:[%s197 + $0x28] sm:$0xf] %v2279
      %2312 = vst [vmem:[%s197 + $0x2c] sm:$0xf] %v2280
      %2313 = vst [vmem:[%s197 + $0x30] sm:$0xf] %v2281
      %2314 = vst [vmem:[%s197 + $0x34] sm:$0xf] %v2282
      %2315 = vst [vmem:[%s197 + $0x38] sm:$0xf] %v2283
      %2316 = vst [vmem:[%s197 + $0x3c] sm:$0xf] %v2284
      %2317 = vst [vmem:[%s197 + $0x40] sm:$0xf] %v2285
      %2318 = vst [vmem:[%s197 + $0x44] sm:$0xf] %v2286
      %2319 = vst [vmem:[%s197 + $0x48] sm:$0xf] %v2287
      %2320 = vst [vmem:[%s197 + $0x4c] sm:$0xf] %v2288
      %2321 = vst [vmem:[%s197 + $0x50] sm:$0xf] %v2289
      %2322 = vst [vmem:[%s197 + $0x54] sm:$0xf] %v2290
      %2323 = vst [vmem:[%s197 + $0x58] sm:$0xf] %v2291
      %2324 = vst [vmem:[%s197 + $0x5c] sm:$0xf] %v2292
      %2325 = vst [vmem:[%s197 + $0x60] sm:$0xf] %v2293
      %2326 = vst [vmem:[%s197 + $0x64] sm:$0xf] %v2294
      %2327 = vst [vmem:[%s197 + $0x68] sm:$0xf] %v2295
      %2328 = vst [vmem:[%s197 + $0x6c] sm:$0xf] %v2296
      %2329 = vst [vmem:[%s197 + $0x70] sm:$0xf] %v2297
      %2330 = vst [vmem:[%s197 + $0x74] sm:$0xf] %v2298
      %2331 = vst [vmem:[%s197 + $0x78] sm:$0xf] %v2299
      %2332 = vst [vmem:[%s197 + $0x7c] sm:$0xf] %v2300
      %p2333 = scmp.lt.s32.totalorder %s15, 1
      %s2334 = scalar_select %p2333, %s15, 1
      %s2335 = smul.addr %s2334, 32
      %s2336 = smul.addr %s2335, 4
      %s2337 = scalar_lea.vmem %s4, %s2336
      // Predicated region
      $region37: #{unet9_logsigmoid_forward.12} parent=35 // pred_check
        %p2338 = pneg %p122
      $region38: #{unet9_logsigmoid_forward.12} parent=35 // pred_check_branch
        %2340 = sbr.rel (%p2338) target = $region40
      $region39: #{unet9_logsigmoid_forward.12} parent=35 // pred_region
        _
      $region40: #{unet9_logsigmoid_forward.12} parent=35 // pred_fallthru
        _
    $region36: #{unet9_logsigmoid_forward.12} parent=5 // pred_fallthru
      _
    %p2341 = scmp.le.s32.totalorder 2, %s10
    // Predicated region
    $region41: #{unet9_logsigmoid_forward.12} parent=5 // pred_check
      %p2342 = pneg %p2341
    $region42: #{unet9_logsigmoid_forward.12} parent=5 // pred_check_branch
      %2344 = sbr.rel (%p2342) target = $region44
    $region43: #{unet9_logsigmoid_forward.12} parent=5 // pred_region
      %s2345 = ssub.s32 %s10, 2
      // Predicated region
      $region45: #{unet9_logsigmoid_forward.12} parent=43 // pred_check
        %p2346 = pneg %p128
      $region46: #{unet9_logsigmoid_forward.12} parent=43 // pred_check_branch
        %2348 = sbr.rel (%p2346) target = $region48
      $region47: #{unet9_logsigmoid_forward.12} parent=43 // pred_region
        %p2349 = scmp.lt.s32.totalorder %s16, 1
        %s2350 = scalar_select %p2349, %s16, 1
        %s2351 = smul.addr %s2350, 32
        %s2352 = smul.addr %s2351, 4
        %s2353 = scalar_lea.vmem %s4, %s2352
      $region48: #{unet9_logsigmoid_forward.12} parent=43 // pred_fallthru
        _
    $region44: #{unet9_logsigmoid_forward.12} parent=5 // pred_fallthru
      _
  $region6: #{unet9_logsigmoid_forward.12} parent=0 // loop_footer
    %s14 = sadd.s32 1, %s10
  $region7: #{unet9_logsigmoid_forward.12} parent=0 // loop_footer_branch
    %9 = sbr.rel target = $region3
  $region8: #{unet9_logsigmoid_forward.12} parent=0 // loop_exit
    _

// kernel: unet9_logsigmoid_forward.14
$region0: #{unet9_logsigmoid_forward.14}
  #allocation0 [shape = 'u32[]', space=smem, size = 0x4, offset = 0x4, fixed_abs, tag = 'smem constant byte address 0x4 - core index']
  #allocation1 [shape = 'u32[72,128]{1,0:T(1,128)}', space=vmem, size = 0x9000, scoped, tag = 'internal scratch']
  %s0 = inlined_call_operand.vmem [shape: bf16[2,80,384], index: 0, kind: input, shape index: {}]
  %s1 = inlined_call_operand.vmem [shape: bf16[3,384,128], index: 1, kind: input, shape index: {}]
  %s2 = inlined_call_operand.vmem [shape: f32[1,128], index: 2, kind: input, shape index: {}]
  %s3 = inlined_call_operand.vmem [shape: f32[1,128], index: 3, kind: input, shape index: {}]
  %s4 = inlined_call_operand.vmem [shape: bf16[2,64,128], index: 4, kind: output, shape index: {}]
  %s5 = sld [smem:[#allocation0]]
  $region49: #{unet9_logsigmoid_forward.14} parent=0
    _
  %s7 = ssub.s32 1, %s5
  %s8 = scalar_select 0, %s7, %s5
  loop: start=0, step=1, limit=4
  $region2: #{unet9_logsigmoid_forward.14} parent=0 // loop_pre_header
    _
  $region3: #{unet9_logsigmoid_forward.14} parent=0 // loop_header
    %s10 = sphi 0, %s14
    %p11 = scmp.ge.s32.totalorder %s10, 4
    %s20 = sphi 0, %s22
    %s23 = sphi 0, %s20
    %s24 = sphi 0, %s23
    %s40 = sphi 0, %s24
    %s44 = sphi 0, %s44
    %s46 = sphi 0, %s44
    %s47 = sphi 0, %s46
    %s61 = sphi 0, %s47
    %s65 = sphi 0, %s65
    %s67 = sphi 0, %s65
    %s68 = sphi 0, %s67
    %s82 = sphi 0, %s68
    %s86 = sphi 0, %s86
    %s88 = sphi 0, %s86
    %s89 = sphi 0, %s88
    %s103 = sphi 0, %s89
    %s109 = sphi 0, %s111
    %s112 = sphi 0, %s109
    %s113 = sphi 0, %s112
    %s129 = sphi 0, %s113
  $region4: #{unet9_logsigmoid_forward.14} parent=0 // loop_header_branch
    %13 = sbr.rel (%p11) target = $region8
  $region5: #{unet9_logsigmoid_forward.14} parent=0 // loop_body
    %s15 = ssub.s32 %s10, 1
    %s16 = ssub.s32 %s10, 2
    %s17 = sadd.s32 %s10, 1
    %s18 = ssub.s32 %s10, %s17
    %p19 = scmp.eq.s32.totalorder %s18, 0
    %s21 = sadd.s32 %s20, 1
    %s22 = scalar_select %p19, %s20, %s21
    %p25 = pneg %p19
    %p26 = scmp.eq.s32.totalorder %s10, 1
    %p27 = por %p25, %p26
    %p28 = scmp.ne.s32.totalorder %s20, %s23
    %p29 = scmp.eq.s32.totalorder %s10, 0
    %p30 = por %p28, %p29
    %p31 = scmp.ne.s32.totalorder %s20, %s23
    %p32 = scmp.eq.s32.totalorder %s15, 1
    %p33 = por %p31, %p32
    %p34 = scmp.ne.s32.totalorder %s23, %s24
    %p35 = scmp.eq.s32.totalorder %s15, 0
    %p36 = por %p34, %p35
    %p37 = scmp.ne.s32.totalorder %s23, %s24
    %p38 = scmp.eq.s32.totalorder %s16, 1
    %p39 = por %p37, %p38
    %p41 = scmp.ne.s32.totalorder %s24, %s40
    %p42 = scmp.eq.s32.totalorder %s16, 0
    %p43 = por %p41, %p42
    %s45 = sadd.s32 %s44, 1
    %p48 = scmp.eq.s32.totalorder %s10, 1
    %p49 = scmp.ne.s32.totalorder %s44, %s46
    %p50 = scmp.eq.s32.totalorder %s10, 0
    %p51 = por %p49, %p50
    %p52 = scmp.ne.s32.totalorder %s44, %s46
    %p53 = scmp.eq.s32.totalorder %s15, 1
    %p54 = por %p52, %p53
    %p55 = scmp.ne.s32.totalorder %s46, %s47
    %p56 = scmp.eq.s32.totalorder %s15, 0
    %p57 = por %p55, %p56
    %p58 = scmp.ne.s32.totalorder %s46, %s47
    %p59 = scmp.eq.s32.totalorder %s16, 1
    %p60 = por %p58, %p59
    %p62 = scmp.ne.s32.totalorder %s47, %s61
    %p63 = scmp.eq.s32.totalorder %s16, 0
    %p64 = por %p62, %p63
    %s66 = sadd.s32 %s65, 1
    %p69 = scmp.eq.s32.totalorder %s10, 1
    %p70 = scmp.ne.s32.totalorder %s65, %s67
    %p71 = scmp.eq.s32.totalorder %s10, 0
    %p72 = por %p70, %p71
    %p73 = scmp.ne.s32.totalorder %s65, %s67
    %p74 = scmp.eq.s32.totalorder %s15, 1
    %p75 = por %p73, %p74
    %p76 = scmp.ne.s32.totalorder %s67, %s68
    %p77 = scmp.eq.s32.totalorder %s15, 0
    %p78 = por %p76, %p77
    %p79 = scmp.ne.s32.totalorder %s67, %s68
    %p80 = scmp.eq.s32.totalorder %s16, 1
    %p81 = por %p79, %p80
    %p83 = scmp.ne.s32.totalorder %s68, %s82
    %p84 = scmp.eq.s32.totalorder %s16, 0
    %p85 = por %p83, %p84
    %s87 = sadd.s32 %s86, 1
    %p90 = scmp.eq.s32.totalorder %s10, 1
    %p91 = scmp.ne.s32.totalorder %s86, %s88
    %p92 = scmp.eq.s32.totalorder %s10, 0
    %p93 = por %p91, %p92
    %p94 = scmp.ne.s32.totalorder %s86, %s88
    %p95 = scmp.eq.s32.totalorder %s15, 1
    %p96 = por %p94, %p95
    %p97 = scmp.ne.s32.totalorder %s88, %s89
    %p98 = scmp.eq.s32.totalorder %s15, 0
    %p99 = por %p97, %p98
    %p100 = scmp.ne.s32.totalorder %s88, %s89
    %p101 = scmp.eq.s32.totalorder %s16, 1
    %p102 = por %p100, %p101
    %p104 = scmp.ne.s32.totalorder %s89, %s103
    %p105 = scmp.eq.s32.totalorder %s16, 0
    %p106 = por %p104, %p105
    %s107 = ssub.s32 %s10, %s17
    %p108 = scmp.eq.s32.totalorder %s107, 0
    %s110 = sadd.s32 %s109, 1
    %s111 = scalar_select %p108, %s109, %s110
    %p114 = pneg %p108
    %p115 = scmp.eq.s32.totalorder %s10, 1
    %p116 = por %p114, %p115
    %p117 = scmp.ne.s32.totalorder %s109, %s112
    %p118 = scmp.eq.s32.totalorder %s10, 0
    %p119 = por %p117, %p118
    %p120 = scmp.ne.s32.totalorder %s109, %s112
    %p121 = scmp.eq.s32.totalorder %s15, 1
    %p122 = por %p120, %p121
    %p123 = scmp.ne.s32.totalorder %s112, %s113
    %p124 = scmp.eq.s32.totalorder %s15, 0
    %p125 = por %p123, %p124
    %p126 = scmp.ne.s32.totalorder %s112, %s113
    %p127 = scmp.eq.s32.totalorder %s16, 1
    %p128 = por %p126, %p127
    %p130 = scmp.ne.s32.totalorder %s113, %s129
    %p131 = scmp.eq.s32.totalorder %s16, 0
    %p132 = por %p130, %p131
    %p133 = scmp.le.s32.totalorder 1, %s10
    %p134 = scmp.lt.s32.totalorder %s10, 3
    %p135 = pnand %p133, %p134
    %p136 = pneg %p135
    // Predicated region
    $region9: #{unet9_logsigmoid_forward.14} parent=5 // pred_check
      _
    $region10: #{unet9_logsigmoid_forward.14} parent=5 // pred_check_branch
      %138 = sbr.rel (%p135) target = $region12
    $region11: #{unet9_logsigmoid_forward.14} parent=5 // pred_region
      %s139 = ssub.s32 %s10, 1
      // Predicated region
      $region13: #{unet9_logsigmoid_forward.14} parent=11 // pred_check
        %p140 = pneg %p57
      $region14: #{unet9_logsigmoid_forward.14} parent=11 // pred_check_branch
        %142 = sbr.rel (%p140) target = $region16
      $region15: #{unet9_logsigmoid_forward.14} parent=11 // pred_region
        _
      $region16: #{unet9_logsigmoid_forward.14} parent=11 // pred_fallthru
        _
      // Predicated region
      $region17: #{unet9_logsigmoid_forward.14} parent=11 // pred_check
        %p143 = pneg %p78
      $region18: #{unet9_logsigmoid_forward.14} parent=11 // pred_check_branch
        %145 = sbr.rel (%p143) target = $region20
      $region19: #{unet9_logsigmoid_forward.14} parent=11 // pred_region
        _
      $region20: #{unet9_logsigmoid_forward.14} parent=11 // pred_fallthru
        _
      // Predicated region
      $region21: #{unet9_logsigmoid_forward.14} parent=11 // pred_check
        %p146 = pneg %p99
      $region22: #{unet9_logsigmoid_forward.14} parent=11 // pred_check_branch
        %148 = sbr.rel (%p146) target = $region24
      $region23: #{unet9_logsigmoid_forward.14} parent=11 // pred_region
        _
      $region24: #{unet9_logsigmoid_forward.14} parent=11 // pred_fallthru
        _
    $region12: #{unet9_logsigmoid_forward.14} parent=5 // pred_fallthru
      _
    %p149 = scmp.lt.s32.totalorder %s10, 2
    // Predicated region
    $region25: #{unet9_logsigmoid_forward.14} parent=5 // pred_check
      %p150 = pneg %p149
    $region26: #{unet9_logsigmoid_forward.14} parent=5 // pred_check_branch
      %152 = sbr.rel (%p150) target = $region28
    $region27: #{unet9_logsigmoid_forward.14} parent=5 // pred_region
      // Predicated region
      $region29: #{unet9_logsigmoid_forward.14} parent=27 // pred_check
        %p153 = pneg %p30
      $region30: #{unet9_logsigmoid_forward.14} parent=27 // pred_check_branch
        %155 = sbr.rel (%p153) target = $region32
      $region31: #{unet9_logsigmoid_forward.14} parent=27 // pred_region
        %p156 = scmp.lt.s32.totalorder %s10, 1
        %s157 = scalar_select %p156, %s10, 1
        %s158 = smul.addr %s157, 30
        %s159 = smul.addr %s158, 4
        %s160 = scalar_lea.vmem %s0, %s159
      $region32: #{unet9_logsigmoid_forward.14} parent=27 // pred_fallthru
        _
    $region28: #{unet9_logsigmoid_forward.14} parent=5 // pred_fallthru
      _
    %p161 = scmp.le.s32.totalorder 1, %s10
    %p162 = scmp.lt.s32.totalorder %s10, 3
    %p163 = pnand %p161, %p162
    %p164 = pneg %p163
    // Predicated region
    $region33: #{unet9_logsigmoid_forward.14} parent=5 // pred_check
      _
    $region34: #{unet9_logsigmoid_forward.14} parent=5 // pred_check_branch
      %166 = sbr.rel (%p163) target = $region36
    $region35: #{unet9_logsigmoid_forward.14} parent=5 // pred_region
      %s167 = ssub.s32 %s10, 1
      %p168 = scmp.lt.s32.totalorder %s15, 1
      %s169 = scalar_select %p168, %s15, 1
      %s170 = smul.addr %s169, 30
      %s171 = smul.addr %s170, 4
      %s172 = scalar_lea.vmem %s0, %s171
      %p173 = pneg %p36
      %p174 = pneg %p33
      %p175 = pneg %p57
      %p176 = pneg %p54
      %p177 = pneg %p78
      %p178 = pneg %p75
      %p179 = pneg %p99
      %p180 = pneg %p96
      %p181 = pneg %p125
      %p182 = pneg %p122
      %p183 = scmp.lt.s32.totalorder %s15, 1
      %s184 = scalar_select %p183, %s15, 1
      %s185 = smul.addr %s184, 8
      %s186 = smul.addr %s185, 4
      %s187 = scalar_lea.vmem %s4, %s186
      %p188 = scmp.lt.s32.totalorder %s15, 1
      %s189 = scalar_select %p188, %s15, 1
      %s190 = smul.addr %s189, 30
      %s191 = smul.addr %s190, 4
      %s192 = scalar_lea.vmem %s0, %s191
      %p193 = scmp.lt.s32.totalorder %s15, 1
      %s194 = scalar_select %p193, %s15, 1
      %s195 = smul.addr %s194, 8
      %s196 = smul.addr %s195, 4
      %s197 = scalar_lea.vmem %s4, %s196
      %v198 = vld [vmem:[%s192] sm:$0xff]
      %v199 = vld [vmem:[%s192 + $0x8] sm:$0xf]
      %v200 = vld [vmem:[%s192 + $0xc] sm:$0xff]
      %v201 = vld [vmem:[%s192 + $0x14] sm:$0xf]
      %v202 = vld [vmem:[%s192 + $0x18] sm:$0xff]
      %v203 = vld [vmem:[%s192 + $0x20] sm:$0xf]
      %v204 = vld [vmem:[%s192 + $0x24] sm:$0xff]
      %v205 = vld [vmem:[%s192 + $0x2c] sm:$0xf]
      %v206 = vld [vmem:[%s192 + $0x30] sm:$0xff]
      %v207 = vld [vmem:[%s192 + $0x38] sm:$0xf]
      %v208 = vld [vmem:[%s192 + $0x3c] sm:$0xff]
      %v209 = vld [vmem:[%s192 + $0x44] sm:$0xf]
      %v210 = vld [vmem:[%s192 + $0x48] sm:$0xff]
      %v211 = vld [vmem:[%s192 + $0x50] sm:$0xf]
      %v212 = vld [vmem:[%s192 + $0x54] sm:$0xff]
      %v213 = vld [vmem:[%s192 + $0x5c] sm:$0xf]
      %v214 = vld [vmem:[%s1] sm:$0xf]
      %v215 = vld [vmem:[%s1 + $0x4] sm:$0xf]
      %v216 = vld [vmem:[%s1 + $0x8] sm:$0xf]
      %v217 = vld [vmem:[%s1 + $0xc] sm:$0xf]
      %v218 = vld [vmem:[%s1 + $0x10] sm:$0xf]
      %v219 = vld [vmem:[%s1 + $0x14] sm:$0xf]
      %v220 = vld [vmem:[%s1 + $0x18] sm:$0xf]
      %v221 = vld [vmem:[%s1 + $0x1c] sm:$0xf]
      %v222 = vld [vmem:[%s1 + $0x20] sm:$0xf]
      %v223 = vld [vmem:[%s1 + $0x24] sm:$0xf]
      %v224 = vld [vmem:[%s1 + $0x28] sm:$0xf]
      %v225 = vld [vmem:[%s1 + $0x2c] sm:$0xf]
      %v226 = vld [vmem:[%s1 + $0x30] sm:$0xf]
      %v227 = vld [vmem:[%s1 + $0x34] sm:$0xf]
      %v228 = vld [vmem:[%s1 + $0x38] sm:$0xf]
      %v229 = vld [vmem:[%s1 + $0x3c] sm:$0xf]
      %v230 = vld [vmem:[%s1 + $0x40] sm:$0xf]
      %v231 = vld [vmem:[%s1 + $0x44] sm:$0xf]
      %v232 = vld [vmem:[%s1 + $0x48] sm:$0xf]
      %v233 = vld [vmem:[%s1 + $0x4c] sm:$0xf]
      %v234 = vld [vmem:[%s1 + $0x50] sm:$0xf]
      %v235 = vld [vmem:[%s1 + $0x54] sm:$0xf]
      %v236 = vld [vmem:[%s1 + $0x58] sm:$0xf]
      %v237 = vld [vmem:[%s1 + $0x5c] sm:$0xf]
      %v238 = vld [vmem:[%s1 + $0x60] sm:$0xf]
      %v239 = vld [vmem:[%s1 + $0x64] sm:$0xf]
      %v240 = vld [vmem:[%s1 + $0x68] sm:$0xf]
      %v241 = vld [vmem:[%s1 + $0x6c] sm:$0xf]
      %v242 = vld [vmem:[%s1 + $0x70] sm:$0xf]
      %v243 = vld [vmem:[%s1 + $0x74] sm:$0xf]
      %v244 = vld [vmem:[%s1 + $0x78] sm:$0xf]
      %v245 = vld [vmem:[%s1 + $0x7c] sm:$0xf]
      %v246 = vld [vmem:[%s1 + $0x80] sm:$0xf]
      %v247 = vld [vmem:[%s1 + $0x84] sm:$0xf]
      %v248 = vld [vmem:[%s1 + $0x88] sm:$0xf]
      %v249 = vld [vmem:[%s1 + $0x8c] sm:$0xf]
      %v250 = vld [vmem:[%s1 + $0x90] sm:$0xf]
      %v251 = vld [vmem:[%s1 + $0x94] sm:$0xf]
      %v252 = vld [vmem:[%s1 + $0x98] sm:$0xf]
      %v253 = vld [vmem:[%s1 + $0x9c] sm:$0xf]
      %v254 = vld [vmem:[%s1 + $0xa0] sm:$0xf]
      %v255 = vld [vmem:[%s1 + $0xa4] sm:$0xf]
      %v256 = vld [vmem:[%s1 + $0xa8] sm:$0xf]
      %v257 = vld [vmem:[%s1 + $0xac] sm:$0xf]
      %v258 = vld [vmem:[%s1 + $0xb0] sm:$0xf]
      %v259 = vld [vmem:[%s1 + $0xb4] sm:$0xf]
      %v260 = vld [vmem:[%s1 + $0xb8] sm:$0xf]
      %v261 = vld [vmem:[%s1 + $0xbc] sm:$0xf]
      %v262 = vld [vmem:[%s192 + $0x60] sm:$0xff]
      %v263 = vld [vmem:[%s192 + $0x68] sm:$0xf]
      %s264 = scalar_lea.vmem %s1, 192
      %v265 = vld [vmem:[%s264] sm:$0xf]
      %v266 = vld [vmem:[%s264 + $0x4] sm:$0xf]
      %v267 = vld [vmem:[%s264 + $0x8] sm:$0xf]
      %v268 = vld [vmem:[%s264 + $0xc] sm:$0xf]
      %v269 = vld [vmem:[%s264 + $0x10] sm:$0xf]
      %v270 = vld [vmem:[%s264 + $0x14] sm:$0xf]
      %v271 = vld [vmem:[%s264 + $0x18] sm:$0xf]
      %v272 = vld [vmem:[%s264 + $0x1c] sm:$0xf]
      %v273 = vld [vmem:[%s264 + $0x20] sm:$0xf]
      %v274 = vld [vmem:[%s264 + $0x24] sm:$0xf]
      %v275 = vld [vmem:[%s264 + $0x28] sm:$0xf]
      %v276 = vld [vmem:[%s264 + $0x2c] sm:$0xf]
      %v277 = vld [vmem:[%s264 + $0x30] sm:$0xf]
      %v278 = vld [vmem:[%s264 + $0x34] sm:$0xf]
      %v279 = vld [vmem:[%s264 + $0x38] sm:$0xf]
      %v280 = vld [vmem:[%s264 + $0x3c] sm:$0xf]
      %v281 = vld [vmem:[%s264 + $0x40] sm:$0xf]
      %v282 = vld [vmem:[%s264 + $0x44] sm:$0xf]
      %v283 = vld [vmem:[%s264 + $0x48] sm:$0xf]
      %v284 = vld [vmem:[%s264 + $0x4c] sm:$0xf]
      %v285 = vld [vmem:[%s264 + $0x50] sm:$0xf]
      %v286 = vld [vmem:[%s264 + $0x54] sm:$0xf]
      %v287 = vld [vmem:[%s264 + $0x58] sm:$0xf]
      %v288 = vld [vmem:[%s264 + $0x5c] sm:$0xf]
      %v289 = vld [vmem:[%s264 + $0x60] sm:$0xf]
      %v290 = vld [vmem:[%s264 + $0x64] sm:$0xf]
      %v291 = vld [vmem:[%s264 + $0x68] sm:$0xf]
      %v292 = vld [vmem:[%s264 + $0x6c] sm:$0xf]
      %v293 = vld [vmem:[%s264 + $0x70] sm:$0xf]
      %v294 = vld [vmem:[%s264 + $0x74] sm:$0xf]
      %v295 = vld [vmem:[%s264 + $0x78] sm:$0xf]
      %v296 = vld [vmem:[%s264 + $0x7c] sm:$0xf]
      %v297 = vld [vmem:[%s264 + $0x80] sm:$0xf]
      %v298 = vld [vmem:[%s264 + $0x84] sm:$0xf]
      %v299 = vld [vmem:[%s264 + $0x88] sm:$0xf]
      %v300 = vld [vmem:[%s264 + $0x8c] sm:$0xf]
      %v301 = vld [vmem:[%s264 + $0x90] sm:$0xf]
      %v302 = vld [vmem:[%s264 + $0x94] sm:$0xf]
      %v303 = vld [vmem:[%s264 + $0x98] sm:$0xf]
      %v304 = vld [vmem:[%s264 + $0x9c] sm:$0xf]
      %v305 = vld [vmem:[%s264 + $0xa0] sm:$0xf]
      %v306 = vld [vmem:[%s264 + $0xa4] sm:$0xf]
      %v307 = vld [vmem:[%s264 + $0xa8] sm:$0xf]
      %v308 = vld [vmem:[%s264 + $0xac] sm:$0xf]
      %v309 = vld [vmem:[%s264 + $0xb0] sm:$0xf]
      %v310 = vld [vmem:[%s264 + $0xb4] sm:$0xf]
      %v311 = vld [vmem:[%s264 + $0xb8] sm:$0xf]
      %v312 = vld [vmem:[%s264 + $0xbc] sm:$0xf]
      %v329 = vunpack.c.l.b16 %v200
      %v330 = vunpack.c.h.b16 %v200
      %v331 = vunpack.c.l.b16 %v201
      %v332 = vunpack.c.l.b16 %v202
      %v333 = vunpack.c.h.b16 %v202
      %v334 = vunpack.c.l.b16 %v203
      %v335 = vunpack.c.l.b16 %v204
      %v336 = vunpack.c.h.b16 %v204
      %v337 = vunpack.c.l.b16 %v205
      %v338 = vunpack.c.l.b16 %v206
      %v339 = vunpack.c.h.b16 %v206
      %v340 = vunpack.c.l.b16 %v207
      %v341 = vunpack.c.l.b16 %v208
      %v342 = vunpack.c.h.b16 %v208
      %v343 = vunpack.c.l.b16 %v209
      %v344 = vunpack.c.l.b16 %v210
      %v345 = vunpack.c.h.b16 %v210
      %v346 = vunpack.c.l.b16 %v211
      %v347 = vunpack.c.l.b16 %v212
      %v348 = vunpack.c.h.b16 %v212
      %v349 = vunpack.c.l.b16 %v213
      %v350 = vunpack.c.l.b16 %v262
      %v351 = vunpack.c.h.b16 %v262
      %v352 = vunpack.c.l.b16 %v263
      %v353 = vpack.c.b16 %v332, %v329
      %v354 = vpack.c.b16 %v333, %v330
      %v355 = vpack.c.b16 %v334, %v331
      %v356 = vpack.c.b16 %v338, %v335
      %v357 = vpack.c.b16 %v339, %v336
      %v358 = vpack.c.b16 %v340, %v337
      %v359 = vpack.c.b16 %v344, %v341
      %v360 = vpack.c.b16 %v345, %v342
      %v361 = vpack.c.b16 %v346, %v343
      %v362 = vpack.c.b16 %v350, %v347
      %v363 = vpack.c.b16 %v351, %v348
      %v364 = vpack.c.b16 %v352, %v349
      %v425 = vunpack.c.l.b16 %v265
      %v426 = vunpack.c.l.b16 %v266
      %v427 = vunpack.c.l.b16 %v267
      %v428 = vunpack.c.l.b16 %v268
      %v429 = vunpack.c.l.b16 %v269
      %v430 = vunpack.c.l.b16 %v270
      %v431 = vunpack.c.l.b16 %v271
      %v432 = vunpack.c.l.b16 %v272
      %v433 = vunpack.c.l.b16 %v273
      %v434 = vunpack.c.l.b16 %v274
      %v435 = vunpack.c.l.b16 %v275
      %v436 = vunpack.c.l.b16 %v276
      %v437 = vunpack.c.l.b16 %v277
      %v438 = vunpack.c.l.b16 %v278
      %v439 = vunpack.c.l.b16 %v279
      %v440 = vunpack.c.l.b16 %v280
      %v441 = vunpack.c.l.b16 %v281
      %v442 = vunpack.c.l.b16 %v282
      %v443 = vunpack.c.l.b16 %v283
      %v444 = vunpack.c.l.b16 %v284
      %v445 = vunpack.c.l.b16 %v285
      %v446 = vunpack.c.l.b16 %v286
      %v447 = vunpack.c.l.b16 %v287
      %v448 = vunpack.c.l.b16 %v288
      %v449 = vunpack.c.l.b16 %v289
      %v450 = vunpack.c.l.b16 %v290
      %v451 = vunpack.c.l.b16 %v291
      %v452 = vunpack.c.l.b16 %v292
      %v453 = vunpack.c.l.b16 %v293
      %v454 = vunpack.c.l.b16 %v294
      %v455 = vunpack.c.l.b16 %v295
      %v456 = vunpack.c.l.b16 %v296
      %v457 = vunpack.c.l.b16 %v297
      %v458 = vunpack.c.l.b16 %v298
      %v459 = vunpack.c.l.b16 %v299
      %v460 = vunpack.c.l.b16 %v300
      %v461 = vunpack.c.l.b16 %v301
      %v462 = vunpack.c.l.b16 %v302
      %v463 = vunpack.c.l.b16 %v303
      %v464 = vunpack.c.l.b16 %v304
      %v465 = vunpack.c.l.b16 %v305
      %v466 = vunpack.c.l.b16 %v306
      %v467 = vunpack.c.l.b16 %v307
      %v468 = vunpack.c.l.b16 %v308
      %v469 = vunpack.c.l.b16 %v309
      %v470 = vunpack.c.l.b16 %v310
      %v471 = vunpack.c.l.b16 %v311
      %v472 = vunpack.c.l.b16 %v312
      %v473 = vpack.c.b16 %v426, %v425
      %v474 = vpack.c.b16 %v428, %v427
      %v475 = vpack.c.b16 %v430, %v429
      %v476 = vpack.c.b16 %v432, %v431
      %v477 = vpack.c.b16 %v434, %v433
      %v478 = vpack.c.b16 %v436, %v435
      %v479 = vpack.c.b16 %v438, %v437
      %v480 = vpack.c.b16 %v440, %v439
      %v481 = vpack.c.b16 %v442, %v441
      %v482 = vpack.c.b16 %v444, %v443
      %v483 = vpack.c.b16 %v446, %v445
      %v484 = vpack.c.b16 %v448, %v447
      %v485 = vpack.c.b16 %v450, %v449
      %v486 = vpack.c.b16 %v452, %v451
      %v487 = vpack.c.b16 %v454, %v453
      %v488 = vpack.c.b16 %v456, %v455
      %v489 = vpack.c.b16 %v458, %v457
      %v490 = vpack.c.b16 %v460, %v459
      %v491 = vpack.c.b16 %v462, %v461
      %v492 = vpack.c.b16 %v464, %v463
      %v493 = vpack.c.b16 %v466, %v465
      %v494 = vpack.c.b16 %v468, %v467
      %v495 = vpack.c.b16 %v470, %v469
      %v496 = vpack.c.b16 %v472, %v471
      %521 = vmatpush.bf16.msra.mxu0 %v480
      %522 = vmatpush.bf16.msra.mxu0 %v479
      %523 = vmatpush.bf16.msra.mxu0 %v478
      %524 = vmatpush.bf16.msra.mxu0 %v477
      %525 = vmatpush.bf16.msra.mxu0 %v476
      %526 = vmatpush.bf16.msra.mxu0 %v475
      %527 = vmatpush.bf16.msra.mxu0 %v474
      %528 = vmatpush.bf16.msra.mxu0 %v473
      %529 = vmatmul.bf16.gmra.mxu0 %v353
      %v530 = vpop.f32.mrf.mxu0
      %v531 = vadd.f32 0.0, %v530
      %v532 = vpop.f32.mrf.mxu0
      %v533 = vadd.f32 0.0, %v532
      %534 = vmatmul.bf16.gmra.mxu0 %v356
      %v535 = vpop.f32.mrf.mxu0
      %v536 = vadd.f32 0.0, %v535
      %v537 = vpop.f32.mrf.mxu0
      %v538 = vadd.f32 0.0, %v537
      %539 = vmatmul.bf16.gmra.mxu0 %v359
      %v540 = vpop.f32.mrf.mxu0
      %v541 = vadd.f32 0.0, %v540
      %v542 = vpop.f32.mrf.mxu0
      %v543 = vadd.f32 0.0, %v542
      %544 = vmatmul.bf16.gmra.mxu0 %v362
      %v545 = vpop.f32.mrf.mxu0
      %v546 = vadd.f32 0.0, %v545
      %v547 = vpop.f32.mrf.mxu0
      %v548 = vadd.f32 0.0, %v547
      %549 = vdwg.mxu0
      %550 = vmatpush.bf16.msra.mxu0 %v488
      %551 = vmatpush.bf16.msra.mxu0 %v487
      %552 = vmatpush.bf16.msra.mxu0 %v486
      %553 = vmatpush.bf16.msra.mxu0 %v485
      %554 = vmatpush.bf16.msra.mxu0 %v484
      %555 = vmatpush.bf16.msra.mxu0 %v483
      %556 = vmatpush.bf16.msra.mxu0 %v482
      %557 = vmatpush.bf16.msra.mxu0 %v481
      %558 = vmatmul.bf16.gmra.mxu0 %v354
      %v559 = vpop.f32.mrf.mxu0
      %v560 = vadd.f32 %v531, %v559
      %v561 = vpop.f32.mrf.mxu0
      %v562 = vadd.f32 %v533, %v561
      %563 = vmatmul.bf16.gmra.mxu0 %v357
      %v564 = vpop.f32.mrf.mxu0
      %v565 = vadd.f32 %v536, %v564
      %v566 = vpop.f32.mrf.mxu0
      %v567 = vadd.f32 %v538, %v566
      %568 = vmatmul.bf16.gmra.mxu0 %v360
      %v569 = vpop.f32.mrf.mxu0
      %v570 = vadd.f32 %v541, %v569
      %v571 = vpop.f32.mrf.mxu0
      %v572 = vadd.f32 %v543, %v571
      %573 = vmatmul.bf16.gmra.mxu0 %v363
      %v574 = vpop.f32.mrf.mxu0
      %v575 = vadd.f32 %v546, %v574
      %v576 = vpop.f32.mrf.mxu0
      %v577 = vadd.f32 %v548, %v576
      %578 = vdwg.mxu0
      %579 = vmatpush.bf16.msra.mxu0 %v496
      %580 = vmatpush.bf16.msra.mxu0 %v495
      %581 = vmatpush.bf16.msra.mxu0 %v494
      %582 = vmatpush.bf16.msra.mxu0 %v493
      %583 = vmatpush.bf16.msra.mxu0 %v492
      %584 = vmatpush.bf16.msra.mxu0 %v491
      %585 = vmatpush.bf16.msra.mxu0 %v490
      %586 = vmatpush.bf16.msra.mxu0 %v489
      %587 = vmatmul.bf16.gmra.mxu0 %v355
      %v588 = vpop.f32.mrf.mxu0
      %v589 = vadd.f32 %v560, %v588
      %v590 = vpop.f32.mrf.mxu0
      %v591 = vadd.f32 %v562, %v590
      %592 = vmatmul.bf16.gmra.mxu0 %v358
      %v593 = vpop.f32.mrf.mxu0
      %v594 = vadd.f32 %v565, %v593
      %v595 = vpop.f32.mrf.mxu0
      %v596 = vadd.f32 %v567, %v595
      %597 = vmatmul.bf16.gmra.mxu0 %v361
      %v598 = vpop.f32.mrf.mxu0
      %v599 = vadd.f32 %v570, %v598
      %v600 = vpop.f32.mrf.mxu0
      %v601 = vadd.f32 %v572, %v600
      %602 = vmatmul.bf16.gmra.mxu0 %v364
      %v603 = vpop.f32.mrf.mxu0
      %v604 = vadd.f32 %v575, %v603
      %v605 = vpop.f32.mrf.mxu0
      %v606 = vadd.f32 %v577, %v605
      %607 = vdwg.mxu0
      %v610 = vunpack.c.l.b16 %v198
      %v611 = vunpack.c.h.b16 %v198
      %v612 = vunpack.c.l.b16 %v199
      %v613 = vpack.c.b16 %v329, %v610
      %v614 = vpack.c.b16 %v330, %v611
      %v615 = vpack.c.b16 %v331, %v612
      %v616 = vpack.c.b16 %v335, %v332
      %v617 = vpack.c.b16 %v336, %v333
      %v618 = vpack.c.b16 %v337, %v334
      %v619 = vpack.c.b16 %v341, %v338
      %v620 = vpack.c.b16 %v342, %v339
      %v621 = vpack.c.b16 %v343, %v340
      %v622 = vpack.c.b16 %v347, %v344
      %v623 = vpack.c.b16 %v348, %v345
      %v624 = vpack.c.b16 %v349, %v346
      %v685 = vunpack.c.l.b16 %v214
      %v686 = vunpack.c.l.b16 %v215
      %v687 = vunpack.c.l.b16 %v216
      %v688 = vunpack.c.l.b16 %v217
      %v689 = vunpack.c.l.b16 %v218
      %v690 = vunpack.c.l.b16 %v219
      %v691 = vunpack.c.l.b16 %v220
      %v692 = vunpack.c.l.b16 %v221
      %v693 = vunpack.c.l.b16 %v222
      %v694 = vunpack.c.l.b16 %v223
      %v695 = vunpack.c.l.b16 %v224
      %v696 = vunpack.c.l.b16 %v225
      %v697 = vunpack.c.l.b16 %v226
      %v698 = vunpack.c.l.b16 %v227
      %v699 = vunpack.c.l.b16 %v228
      %v700 = vunpack.c.l.b16 %v229
      %v701 = vunpack.c.l.b16 %v230
      %v702 = vunpack.c.l.b16 %v231
      %v703 = vunpack.c.l.b16 %v232
      %v704 = vunpack.c.l.b16 %v233
      %v705 = vunpack.c.l.b16 %v234
      %v706 = vunpack.c.l.b16 %v235
      %v707 = vunpack.c.l.b16 %v236
      %v708 = vunpack.c.l.b16 %v237
      %v709 = vunpack.c.l.b16 %v238
      %v710 = vunpack.c.l.b16 %v239
      %v711 = vunpack.c.l.b16 %v240
      %v712 = vunpack.c.l.b16 %v241
      %v713 = vunpack.c.l.b16 %v242
      %v714 = vunpack.c.l.b16 %v243
      %v715 = vunpack.c.l.b16 %v244
      %v716 = vunpack.c.l.b16 %v245
      %v717 = vunpack.c.l.b16 %v246
      %v718 = vunpack.c.l.b16 %v247
      %v719 = vunpack.c.l.b16 %v248
      %v720 = vunpack.c.l.b16 %v249
      %v721 = vunpack.c.l.b16 %v250
      %v722 = vunpack.c.l.b16 %v251
      %v723 = vunpack.c.l.b16 %v252
      %v724 = vunpack.c.l.b16 %v253
      %v725 = vunpack.c.l.b16 %v254
      %v726 = vunpack.c.l.b16 %v255
      %v727 = vunpack.c.l.b16 %v256
      %v728 = vunpack.c.l.b16 %v257
      %v729 = vunpack.c.l.b16 %v258
      %v730 = vunpack.c.l.b16 %v259
      %v731 = vunpack.c.l.b16 %v260
      %v732 = vunpack.c.l.b16 %v261
      %v733 = vpack.c.b16 %v686, %v685
      %v734 = vpack.c.b16 %v688, %v687
      %v735 = vpack.c.b16 %v690, %v689
      %v736 = vpack.c.b16 %v692, %v691
      %v737 = vpack.c.b16 %v694, %v693
      %v738 = vpack.c.b16 %v696, %v695
      %v739 = vpack.c.b16 %v698, %v697
      %v740 = vpack.c.b16 %v700, %v699
      %v741 = vpack.c.b16 %v702, %v701
      %v742 = vpack.c.b16 %v704, %v703
      %v743 = vpack.c.b16 %v706, %v705
      %v744 = vpack.c.b16 %v708, %v707
      %v745 = vpack.c.b16 %v710, %v709
      %v746 = vpack.c.b16 %v712, %v711
      %v747 = vpack.c.b16 %v714, %v713
      %v748 = vpack.c.b16 %v716, %v715
      %v749 = vpack.c.b16 %v718, %v717
      %v750 = vpack.c.b16 %v720, %v719
      %v751 = vpack.c.b16 %v722, %v721
      %v752 = vpack.c.b16 %v724, %v723
      %v753 = vpack.c.b16 %v726, %v725
      %v754 = vpack.c.b16 %v728, %v727
      %v755 = vpack.c.b16 %v730, %v729
      %v756 = vpack.c.b16 %v732, %v731
      %781 = vmatpush.bf16.msra.mxu0 %v740
      %782 = vmatpush.bf16.msra.mxu0 %v739
      %783 = vmatpush.bf16.msra.mxu0 %v738
      %784 = vmatpush.bf16.msra.mxu0 %v737
      %785 = vmatpush.bf16.msra.mxu0 %v736
      %786 = vmatpush.bf16.msra.mxu0 %v735
      %787 = vmatpush.bf16.msra.mxu0 %v734
      %788 = vmatpush.bf16.msra.mxu0 %v733
      %789 = vmatmul.bf16.gmra.mxu0 %v613
      %v790 = vpop.f32.mrf.mxu0
      %v791 = vadd.f32 %v589, %v790
      %v792 = vpop.f32.mrf.mxu0
      %v793 = vadd.f32 %v591, %v792
      %794 = vmatmul.bf16.gmra.mxu0 %v616
      %v795 = vpop.f32.mrf.mxu0
      %v796 = vadd.f32 %v594, %v795
      %v797 = vpop.f32.mrf.mxu0
      %v798 = vadd.f32 %v596, %v797
      %799 = vmatmul.bf16.gmra.mxu0 %v619
      %v800 = vpop.f32.mrf.mxu0
      %v801 = vadd.f32 %v599, %v800
      %v802 = vpop.f32.mrf.mxu0
      %v803 = vadd.f32 %v601, %v802
      %804 = vmatmul.bf16.gmra.mxu0 %v622
      %v805 = vpop.f32.mrf.mxu0
      %v806 = vadd.f32 %v604, %v805
      %v807 = vpop.f32.mrf.mxu0
      %v808 = vadd.f32 %v606, %v807
      %809 = vdwg.mxu0
      %810 = vmatpush.bf16.msra.mxu0 %v748
      %811 = vmatpush.bf16.msra.mxu0 %v747
      %812 = vmatpush.bf16.msra.mxu0 %v746
      %813 = vmatpush.bf16.msra.mxu0 %v745
      %814 = vmatpush.bf16.msra.mxu0 %v744
      %815 = vmatpush.bf16.msra.mxu0 %v743
      %816 = vmatpush.bf16.msra.mxu0 %v742
      %817 = vmatpush.bf16.msra.mxu0 %v741
      %818 = vmatmul.bf16.gmra.mxu0 %v614
      %v819 = vpop.f32.mrf.mxu0
      %v820 = vadd.f32 %v791, %v819
      %v821 = vpop.f32.mrf.mxu0
      %v822 = vadd.f32 %v793, %v821
      %823 = vmatmul.bf16.gmra.mxu0 %v617
      %v824 = vpop.f32.mrf.mxu0
      %v825 = vadd.f32 %v796, %v824
      %v826 = vpop.f32.mrf.mxu0
      %v827 = vadd.f32 %v798, %v826
      %828 = vmatmul.bf16.gmra.mxu0 %v620
      %v829 = vpop.f32.mrf.mxu0
      %v830 = vadd.f32 %v801, %v829
      %v831 = vpop.f32.mrf.mxu0
      %v832 = vadd.f32 %v803, %v831
      %833 = vmatmul.bf16.gmra.mxu0 %v623
      %v834 = vpop.f32.mrf.mxu0
      %v835 = vadd.f32 %v806, %v834
      %v836 = vpop.f32.mrf.mxu0
      %v837 = vadd.f32 %v808, %v836
      %838 = vdwg.mxu0
      %839 = vmatpush.bf16.msra.mxu0 %v756
      %840 = vmatpush.bf16.msra.mxu0 %v755
      %841 = vmatpush.bf16.msra.mxu0 %v754
      %842 = vmatpush.bf16.msra.mxu0 %v753
      %843 = vmatpush.bf16.msra.mxu0 %v752
      %844 = vmatpush.bf16.msra.mxu0 %v751
      %845 = vmatpush.bf16.msra.mxu0 %v750
      %846 = vmatpush.bf16.msra.mxu0 %v749
      %847 = vmatmul.bf16.gmra.mxu0 %v615
      %v848 = vpop.f32.mrf.mxu0
      %v849 = vadd.f32 %v820, %v848
      %v850 = vpop.f32.mrf.mxu0
      %v851 = vadd.f32 %v822, %v850
      %852 = vmatmul.bf16.gmra.mxu0 %v618
      %v853 = vpop.f32.mrf.mxu0
      %v854 = vadd.f32 %v825, %v853
      %v855 = vpop.f32.mrf.mxu0
      %v856 = vadd.f32 %v827, %v855
      %857 = vmatmul.bf16.gmra.mxu0 %v621
      %v858 = vpop.f32.mrf.mxu0
      %v859 = vadd.f32 %v830, %v858
      %v860 = vpop.f32.mrf.mxu0
      %v861 = vadd.f32 %v832, %v860
      %862 = vmatmul.bf16.gmra.mxu0 %v624
      %v863 = vpop.f32.mrf.mxu0
      %v864 = vadd.f32 %v835, %v863
      %v865 = vpop.f32.mrf.mxu0
      %v866 = vadd.f32 %v837, %v865
      %867 = vdwg.mxu0
      %v868 = vld [vmem:[%s192 + $0x18] sm:$0xff]
      %v869 = vld [vmem:[%s192 + $0x20] sm:$0xf]
      %v870 = vld [vmem:[%s192 + $0x24] sm:$0xff]
      %v871 = vld [vmem:[%s192 + $0x2c] sm:$0xf]
      %v872 = vld [vmem:[%s192 + $0x30] sm:$0xff]
      %v873 = vld [vmem:[%s192 + $0x38] sm:$0xf]
      %v874 = vld [vmem:[%s192 + $0x3c] sm:$0xff]
      %v875 = vld [vmem:[%s192 + $0x44] sm:$0xf]
      %v876 = vld [vmem:[%s192 + $0x48] sm:$0xff]
      %v877 = vld [vmem:[%s192 + $0x50] sm:$0xf]
      %v878 = vld [vmem:[%s192 + $0x54] sm:$0xff]
      %v879 = vld [vmem:[%s192 + $0x5c] sm:$0xf]
      %v880 = vld [vmem:[%s192 + $0x60] sm:$0xff]
      %v881 = vld [vmem:[%s192 + $0x68] sm:$0xf]
      %v882 = vld [vmem:[%s192 + $0x6c] sm:$0xff]
      %v883 = vld [vmem:[%s192 + $0x74] sm:$0xf]
      %s884 = scalar_lea.vmem %s1, 384
      %v885 = vld [vmem:[%s884] sm:$0xf]
      %v886 = vld [vmem:[%s884 + $0x4] sm:$0xf]
      %v887 = vld [vmem:[%s884 + $0x8] sm:$0xf]
      %v888 = vld [vmem:[%s884 + $0xc] sm:$0xf]
      %v889 = vld [vmem:[%s884 + $0x10] sm:$0xf]
      %v890 = vld [vmem:[%s884 + $0x14] sm:$0xf]
      %v891 = vld [vmem:[%s884 + $0x18] sm:$0xf]
      %v892 = vld [vmem:[%s884 + $0x1c] sm:$0xf]
      %v893 = vld [vmem:[%s884 + $0x20] sm:$0xf]
      %v894 = vld [vmem:[%s884 + $0x24] sm:$0xf]
      %v895 = vld [vmem:[%s884 + $0x28] sm:$0xf]
      %v896 = vld [vmem:[%s884 + $0x2c] sm:$0xf]
      %v897 = vld [vmem:[%s884 + $0x30] sm:$0xf]
      %v898 = vld [vmem:[%s884 + $0x34] sm:$0xf]
      %v899 = vld [vmem:[%s884 + $0x38] sm:$0xf]
      %v900 = vld [vmem:[%s884 + $0x3c] sm:$0xf]
      %v901 = vld [vmem:[%s884 + $0x40] sm:$0xf]
      %v902 = vld [vmem:[%s884 + $0x44] sm:$0xf]
      %v903 = vld [vmem:[%s884 + $0x48] sm:$0xf]
      %v904 = vld [vmem:[%s884 + $0x4c] sm:$0xf]
      %v905 = vld [vmem:[%s884 + $0x50] sm:$0xf]
      %v906 = vld [vmem:[%s884 + $0x54] sm:$0xf]
      %v907 = vld [vmem:[%s884 + $0x58] sm:$0xf]
      %v908 = vld [vmem:[%s884 + $0x5c] sm:$0xf]
      %v909 = vld [vmem:[%s884 + $0x60] sm:$0xf]
      %v910 = vld [vmem:[%s884 + $0x64] sm:$0xf]
      %v911 = vld [vmem:[%s884 + $0x68] sm:$0xf]
      %v912 = vld [vmem:[%s884 + $0x6c] sm:$0xf]
      %v913 = vld [vmem:[%s884 + $0x70] sm:$0xf]
      %v914 = vld [vmem:[%s884 + $0x74] sm:$0xf]
      %v915 = vld [vmem:[%s884 + $0x78] sm:$0xf]
      %v916 = vld [vmem:[%s884 + $0x7c] sm:$0xf]
      %v917 = vld [vmem:[%s884 + $0x80] sm:$0xf]
      %v918 = vld [vmem:[%s884 + $0x84] sm:$0xf]
      %v919 = vld [vmem:[%s884 + $0x88] sm:$0xf]
      %v920 = vld [vmem:[%s884 + $0x8c] sm:$0xf]
      %v921 = vld [vmem:[%s884 + $0x90] sm:$0xf]
      %v922 = vld [vmem:[%s884 + $0x94] sm:$0xf]
      %v923 = vld [vmem:[%s884 + $0x98] sm:$0xf]
      %v924 = vld [vmem:[%s884 + $0x9c] sm:$0xf]
      %v925 = vld [vmem:[%s884 + $0xa0] sm:$0xf]
      %v926 = vld [vmem:[%s884 + $0xa4] sm:$0xf]
      %v927 = vld [vmem:[%s884 + $0xa8] sm:$0xf]
      %v928 = vld [vmem:[%s884 + $0xac] sm:$0xf]
      %v929 = vld [vmem:[%s884 + $0xb0] sm:$0xf]
      %v930 = vld [vmem:[%s884 + $0xb4] sm:$0xf]
      %v931 = vld [vmem:[%s884 + $0xb8] sm:$0xf]
      %v932 = vld [vmem:[%s884 + $0xbc] sm:$0xf]
      %v949 = vunpack.c.l.b16 %v868
      %v950 = vunpack.c.h.b16 %v868
      %v951 = vunpack.c.l.b16 %v869
      %v952 = vunpack.c.l.b16 %v870
      %v953 = vunpack.c.h.b16 %v870
      %v954 = vunpack.c.l.b16 %v871
      %v955 = vunpack.c.l.b16 %v872
      %v956 = vunpack.c.h.b16 %v872
      %v957 = vunpack.c.l.b16 %v873
      %v958 = vunpack.c.l.b16 %v874
      %v959 = vunpack.c.h.b16 %v874
      %v960 = vunpack.c.l.b16 %v875
      %v961 = vunpack.c.l.b16 %v876
      %v962 = vunpack.c.h.b16 %v876
      %v963 = vunpack.c.l.b16 %v877
      %v964 = vunpack.c.l.b16 %v878
      %v965 = vunpack.c.h.b16 %v878
      %v966 = vunpack.c.l.b16 %v879
      %v967 = vunpack.c.l.b16 %v880
      %v968 = vunpack.c.h.b16 %v880
      %v969 = vunpack.c.l.b16 %v881
      %v970 = vunpack.c.l.b16 %v882
      %v971 = vunpack.c.h.b16 %v882
      %v972 = vunpack.c.l.b16 %v883
      %v973 = vpack.c.b16 %v952, %v949
      %v974 = vpack.c.b16 %v953, %v950
      %v975 = vpack.c.b16 %v954, %v951
      %v976 = vpack.c.b16 %v958, %v955
      %v977 = vpack.c.b16 %v959, %v956
      %v978 = vpack.c.b16 %v960, %v957
      %v979 = vpack.c.b16 %v964, %v961
      %v980 = vpack.c.b16 %v965, %v962
      %v981 = vpack.c.b16 %v966, %v963
      %v982 = vpack.c.b16 %v970, %v967
      %v983 = vpack.c.b16 %v971, %v968
      %v984 = vpack.c.b16 %v972, %v969
      %v1045 = vunpack.c.l.b16 %v885
      %v1046 = vunpack.c.l.b16 %v886
      %v1047 = vunpack.c.l.b16 %v887
      %v1048 = vunpack.c.l.b16 %v888
      %v1049 = vunpack.c.l.b16 %v889
      %v1050 = vunpack.c.l.b16 %v890
      %v1051 = vunpack.c.l.b16 %v891
      %v1052 = vunpack.c.l.b16 %v892
      %v1053 = vunpack.c.l.b16 %v893
      %v1054 = vunpack.c.l.b16 %v894
      %v1055 = vunpack.c.l.b16 %v895
      %v1056 = vunpack.c.l.b16 %v896
      %v1057 = vunpack.c.l.b16 %v897
      %v1058 = vunpack.c.l.b16 %v898
      %v1059 = vunpack.c.l.b16 %v899
      %v1060 = vunpack.c.l.b16 %v900
      %v1061 = vunpack.c.l.b16 %v901
      %v1062 = vunpack.c.l.b16 %v902
      %v1063 = vunpack.c.l.b16 %v903
      %v1064 = vunpack.c.l.b16 %v904
      %v1065 = vunpack.c.l.b16 %v905
      %v1066 = vunpack.c.l.b16 %v906
      %v1067 = vunpack.c.l.b16 %v907
      %v1068 = vunpack.c.l.b16 %v908
      %v1069 = vunpack.c.l.b16 %v909
      %v1070 = vunpack.c.l.b16 %v910
      %v1071 = vunpack.c.l.b16 %v911
      %v1072 = vunpack.c.l.b16 %v912
      %v1073 = vunpack.c.l.b16 %v913
      %v1074 = vunpack.c.l.b16 %v914
      %v1075 = vunpack.c.l.b16 %v915
      %v1076 = vunpack.c.l.b16 %v916
      %v1077 = vunpack.c.l.b16 %v917
      %v1078 = vunpack.c.l.b16 %v918
      %v1079 = vunpack.c.l.b16 %v919
      %v1080 = vunpack.c.l.b16 %v920
      %v1081 = vunpack.c.l.b16 %v921
      %v1082 = vunpack.c.l.b16 %v922
      %v1083 = vunpack.c.l.b16 %v923
      %v1084 = vunpack.c.l.b16 %v924
      %v1085 = vunpack.c.l.b16 %v925
      %v1086 = vunpack.c.l.b16 %v926
      %v1087 = vunpack.c.l.b16 %v927
      %v1088 = vunpack.c.l.b16 %v928
      %v1089 = vunpack.c.l.b16 %v929
      %v1090 = vunpack.c.l.b16 %v930
      %v1091 = vunpack.c.l.b16 %v931
      %v1092 = vunpack.c.l.b16 %v932
      %v1093 = vpack.c.b16 %v1046, %v1045
      %v1094 = vpack.c.b16 %v1048, %v1047
      %v1095 = vpack.c.b16 %v1050, %v1049
      %v1096 = vpack.c.b16 %v1052, %v1051
      %v1097 = vpack.c.b16 %v1054, %v1053
      %v1098 = vpack.c.b16 %v1056, %v1055
      %v1099 = vpack.c.b16 %v1058, %v1057
      %v1100 = vpack.c.b16 %v1060, %v1059
      %v1101 = vpack.c.b16 %v1062, %v1061
      %v1102 = vpack.c.b16 %v1064, %v1063
      %v1103 = vpack.c.b16 %v1066, %v1065
      %v1104 = vpack.c.b16 %v1068, %v1067
      %v1105 = vpack.c.b16 %v1070, %v1069
      %v1106 = vpack.c.b16 %v1072, %v1071
      %v1107 = vpack.c.b16 %v1074, %v1073
      %v1108 = vpack.c.b16 %v1076, %v1075
      %v1109 = vpack.c.b16 %v1078, %v1077
      %v1110 = vpack.c.b16 %v1080, %v1079
      %v1111 = vpack.c.b16 %v1082, %v1081
      %v1112 = vpack.c.b16 %v1084, %v1083
      %v1113 = vpack.c.b16 %v1086, %v1085
      %v1114 = vpack.c.b16 %v1088, %v1087
      %v1115 = vpack.c.b16 %v1090, %v1089
      %v1116 = vpack.c.b16 %v1092, %v1091
      %1141 = vmatpush.bf16.msra.mxu0 %v1100
      %1142 = vmatpush.bf16.msra.mxu0 %v1099
      %1143 = vmatpush.bf16.msra.mxu0 %v1098
      %1144 = vmatpush.bf16.msra.mxu0 %v1097
      %1145 = vmatpush.bf16.msra.mxu0 %v1096
      %1146 = vmatpush.bf16.msra.mxu0 %v1095
      %1147 = vmatpush.bf16.msra.mxu0 %v1094
      %1148 = vmatpush.bf16.msra.mxu0 %v1093
      %1149 = vmatmul.bf16.gmra.mxu0 %v973
      %v1150 = vpop.f32.mrf.mxu0
      %v1151 = vadd.f32 0.0, %v1150
      %v1152 = vpop.f32.mrf.mxu0
      %v1153 = vadd.f32 0.0, %v1152
      %1154 = vmatmul.bf16.gmra.mxu0 %v976
      %v1155 = vpop.f32.mrf.mxu0
      %v1156 = vadd.f32 0.0, %v1155
      %v1157 = vpop.f32.mrf.mxu0
      %v1158 = vadd.f32 0.0, %v1157
      %1159 = vmatmul.bf16.gmra.mxu0 %v979
      %v1160 = vpop.f32.mrf.mxu0
      %v1161 = vadd.f32 0.0, %v1160
      %v1162 = vpop.f32.mrf.mxu0
      %v1163 = vadd.f32 0.0, %v1162
      %1164 = vmatmul.bf16.gmra.mxu0 %v982
      %v1165 = vpop.f32.mrf.mxu0
      %v1166 = vadd.f32 0.0, %v1165
      %v1167 = vpop.f32.mrf.mxu0
      %v1168 = vadd.f32 0.0, %v1167
      %1169 = vdwg.mxu0
      %1170 = vmatpush.bf16.msra.mxu0 %v1108
      %1171 = vmatpush.bf16.msra.mxu0 %v1107
      %1172 = vmatpush.bf16.msra.mxu0 %v1106
      %1173 = vmatpush.bf16.msra.mxu0 %v1105
      %1174 = vmatpush.bf16.msra.mxu0 %v1104
      %1175 = vmatpush.bf16.msra.mxu0 %v1103
      %1176 = vmatpush.bf16.msra.mxu0 %v1102
      %1177 = vmatpush.bf16.msra.mxu0 %v1101
      %1178 = vmatmul.bf16.gmra.mxu0 %v974
      %v1179 = vpop.f32.mrf.mxu0
      %v1180 = vadd.f32 %v1151, %v1179
      %v1181 = vpop.f32.mrf.mxu0
      %v1182 = vadd.f32 %v1153, %v1181
      %1183 = vmatmul.bf16.gmra.mxu0 %v977
      %v1184 = vpop.f32.mrf.mxu0
      %v1185 = vadd.f32 %v1156, %v1184
      %v1186 = vpop.f32.mrf.mxu0
      %v1187 = vadd.f32 %v1158, %v1186
      %1188 = vmatmul.bf16.gmra.mxu0 %v980
      %v1189 = vpop.f32.mrf.mxu0
      %v1190 = vadd.f32 %v1161, %v1189
      %v1191 = vpop.f32.mrf.mxu0
      %v1192 = vadd.f32 %v1163, %v1191
      %1193 = vmatmul.bf16.gmra.mxu0 %v983
      %v1194 = vpop.f32.mrf.mxu0
      %v1195 = vadd.f32 %v1166, %v1194
      %v1196 = vpop.f32.mrf.mxu0
      %v1197 = vadd.f32 %v1168, %v1196
      %1198 = vdwg.mxu0
      %1199 = vmatpush.bf16.msra.mxu0 %v1116
      %1200 = vmatpush.bf16.msra.mxu0 %v1115
      %1201 = vmatpush.bf16.msra.mxu0 %v1114
      %1202 = vmatpush.bf16.msra.mxu0 %v1113
      %1203 = vmatpush.bf16.msra.mxu0 %v1112
      %1204 = vmatpush.bf16.msra.mxu0 %v1111
      %1205 = vmatpush.bf16.msra.mxu0 %v1110
      %1206 = vmatpush.bf16.msra.mxu0 %v1109
      %1207 = vmatmul.bf16.gmra.mxu0 %v975
      %v1208 = vpop.f32.mrf.mxu0
      %v1209 = vadd.f32 %v1180, %v1208
      %v1210 = vpop.f32.mrf.mxu0
      %v1211 = vadd.f32 %v1182, %v1210
      %1212 = vmatmul.bf16.gmra.mxu0 %v978
      %v1213 = vpop.f32.mrf.mxu0
      %v1214 = vadd.f32 %v1185, %v1213
      %v1215 = vpop.f32.mrf.mxu0
      %v1216 = vadd.f32 %v1187, %v1215
      %1217 = vmatmul.bf16.gmra.mxu0 %v981
      %v1218 = vpop.f32.mrf.mxu0
      %v1219 = vadd.f32 %v1190, %v1218
      %v1220 = vpop.f32.mrf.mxu0
      %v1221 = vadd.f32 %v1192, %v1220
      %1222 = vmatmul.bf16.gmra.mxu0 %v984
      %v1223 = vpop.f32.mrf.mxu0
      %v1224 = vadd.f32 %v1195, %v1223
      %v1225 = vpop.f32.mrf.mxu0
      %v1226 = vadd.f32 %v1197, %v1225
      %1227 = vdwg.mxu0
      %v1228 = vadd.f32 %v849, %v1209
      %v1229 = vadd.f32 %v851, %v1211
      %v1230 = vadd.f32 %v854, %v1214
      %v1231 = vadd.f32 %v856, %v1216
      %v1232 = vadd.f32 %v859, %v1219
      %v1233 = vadd.f32 %v861, %v1221
      %v1234 = vadd.f32 %v864, %v1224
      %v1235 = vadd.f32 %v866, %v1226
      %v1236 = vld [vmem:[%s2] sm:$0x1]
      %v1238 = vperm.slane %v1236, 0
      %v1240 = vmul.f32 %v1228, %v1238
      %v1241 = vmul.f32 %v1229, %v1238
      %v1242 = vmul.f32 %v1230, %v1238
      %v1243 = vmul.f32 %v1231, %v1238
      %v1244 = vmul.f32 %v1232, %v1238
      %v1245 = vmul.f32 %v1233, %v1238
      %v1246 = vmul.f32 %v1234, %v1238
      %v1247 = vmul.f32 %v1235, %v1238
      %v1248 = vld [vmem:[%s3] sm:$0x1]
      %v1250 = vperm.slane %v1248, 0
      %v1252 = vadd.f32 %v1240, %v1250
      %v1253 = vadd.f32 %v1241, %v1250
      %v1254 = vadd.f32 %v1242, %v1250
      %v1255 = vadd.f32 %v1243, %v1250
      %v1256 = vadd.f32 %v1244, %v1250
      %v1257 = vadd.f32 %v1245, %v1250
      %v1258 = vadd.f32 %v1246, %v1250
      %v1259 = vadd.f32 %v1247, %v1250
      %v1260 = vmax.f32 %v1252, 0.0
      %v1261 = vmax.f32 %v1253, 0.0
      %v1262 = vmax.f32 %v1254, 0.0
      %v1263 = vmax.f32 %v1255, 0.0
      %v1264 = vmax.f32 %v1256, 0.0
      %v1265 = vmax.f32 %v1257, 0.0
      %v1266 = vmax.f32 %v1258, 0.0
      %v1267 = vmax.f32 %v1259, 0.0
      %v1268 = vpack.c.bf16 %v1260, %v1260
      %v1269 = vpack.c.bf16 %v1261, %v1261
      %v1270 = vpack.c.bf16 %v1262, %v1262
      %v1271 = vpack.c.bf16 %v1263, %v1263
      %v1272 = vpack.c.bf16 %v1264, %v1264
      %v1273 = vpack.c.bf16 %v1265, %v1265
      %v1274 = vpack.c.bf16 %v1266, %v1266
      %v1275 = vpack.c.bf16 %v1267, %v1267
      %1276 = vst [vmem:[%s197] sm:$0xf] %v1268
      %1277 = vst [vmem:[%s197 + $0x4] sm:$0xf] %v1269
      %1278 = vst [vmem:[%s197 + $0x8] sm:$0xf] %v1270
      %1279 = vst [vmem:[%s197 + $0xc] sm:$0xf] %v1271
      %1280 = vst [vmem:[%s197 + $0x10] sm:$0xf] %v1272
      %1281 = vst [vmem:[%s197 + $0x14] sm:$0xf] %v1273
      %1282 = vst [vmem:[%s197 + $0x18] sm:$0xf] %v1274
      %1283 = vst [vmem:[%s197 + $0x1c] sm:$0xf] %v1275
      %p1284 = scmp.lt.s32.totalorder %s15, 1
      %s1285 = scalar_select %p1284, %s15, 1
      %s1286 = smul.addr %s1285, 8
      %s1287 = smul.addr %s1286, 4
      %s1288 = scalar_lea.vmem %s4, %s1287
      // Predicated region
      $region37: #{unet9_logsigmoid_forward.14} parent=35 // pred_check
        %p1289 = pneg %p122
      $region38: #{unet9_logsigmoid_forward.14} parent=35 // pred_check_branch
        %1291 = sbr.rel (%p1289) target = $region40
      $region39: #{unet9_logsigmoid_forward.14} parent=35 // pred_region
        _
      $region40: #{unet9_logsigmoid_forward.14} parent=35 // pred_fallthru
        _
    $region36: #{unet9_logsigmoid_forward.14} parent=5 // pred_fallthru
      _
    %p1292 = scmp.le.s32.totalorder 2, %s10
    // Predicated region
    $region41: #{unet9_logsigmoid_forward.14} parent=5 // pred_check
      %p1293 = pneg %p1292
    $region42: #{unet9_logsigmoid_forward.14} parent=5 // pred_check_branch
      %1295 = sbr.rel (%p1293) target = $region44
    $region43: #{unet9_logsigmoid_forward.14} parent=5 // pred_region
      %s1296 = ssub.s32 %s10, 2
      // Predicated region
      $region45: #{unet9_logsigmoid_forward.14} parent=43 // pred_check
        %p1297 = pneg %p128
      $region46: #{unet9_logsigmoid_forward.14} parent=43 // pred_check_branch
        %1299 = sbr.rel (%p1297) target = $region48
      $region47: #{unet9_logsigmoid_forward.14} parent=43 // pred_region
        %p1300 = scmp.lt.s32.totalorder %s16, 1
        %s1301 = scalar_select %p1300, %s16, 1
        %s1302 = smul.addr %s1301, 8
        %s1303 = smul.addr %s1302, 4
        %s1304 = scalar_lea.vmem %s4, %s1303
      $region48: #{unet9_logsigmoid_forward.14} parent=43 // pred_fallthru
        _
    $region44: #{unet9_logsigmoid_forward.14} parent=5 // pred_fallthru
      _
  $region6: #{unet9_logsigmoid_forward.14} parent=0 // loop_footer
    %s14 = sadd.s32 1, %s10
  $region7: #{unet9_logsigmoid_forward.14} parent=0 // loop_footer_branch
    %9 = sbr.rel target = $region3
  $region8: #{unet9_logsigmoid_forward.14} parent=0 // loop_exit
    _

// kernel: unet9_logsigmoid_forward.16
$region0: #{unet9_logsigmoid_forward.16}
  #allocation0 [shape = 'u32[]', space=smem, size = 0x4, offset = 0x4, fixed_abs, tag = 'smem constant byte address 0x4 - core index']
  #allocation1 [shape = 'u32[72,128]{1,0:T(1,128)}', space=vmem, size = 0x9000, scoped, tag = 'internal scratch']
  %s0 = inlined_call_operand.vmem [shape: bf16[2,4,4,128], index: 0, kind: input, shape index: {}]
  %s1 = inlined_call_operand.vmem [shape: bf16[2,4,4,128], index: 1, kind: input, shape index: {}]
  %s2 = inlined_call_operand.vmem [shape: bf16[2,4,4,128], index: 2, kind: input, shape index: {}]
  %s3 = inlined_call_operand.vmem [shape: bf16[2,4,4,128], index: 3, kind: input, shape index: {}]
  %s4 = inlined_call_operand.vmem [shape: bf16[2,4,4,128], index: 4, kind: output, shape index: {}]
  %s5 = sld [smem:[#allocation0]]
  $region49: #{unet9_logsigmoid_forward.16} parent=0
    _
  %s7 = ssub.s32 1, %s5
  %s8 = scalar_select 0, %s7, %s5
  loop: start=0, step=1, limit=4
  $region2: #{unet9_logsigmoid_forward.16} parent=0 // loop_pre_header
    _
  $region3: #{unet9_logsigmoid_forward.16} parent=0 // loop_header
    %s10 = sphi 0, %s14
    %p11 = scmp.ge.s32.totalorder %s10, 4
    %s20 = sphi 0, %s22
    %s23 = sphi 0, %s20
    %s24 = sphi 0, %s23
    %s40 = sphi 0, %s24
    %s46 = sphi 0, %s48
    %s49 = sphi 0, %s46
    %s50 = sphi 0, %s49
    %s66 = sphi 0, %s50
    %s72 = sphi 0, %s74
    %s75 = sphi 0, %s72
    %s76 = sphi 0, %s75
    %s92 = sphi 0, %s76
    %s98 = sphi 0, %s100
    %s101 = sphi 0, %s98
    %s102 = sphi 0, %s101
    %s118 = sphi 0, %s102
    %s124 = sphi 0, %s126
    %s127 = sphi 0, %s124
    %s128 = sphi 0, %s127
    %s144 = sphi 0, %s128
  $region4: #{unet9_logsigmoid_forward.16} parent=0 // loop_header_branch
    %13 = sbr.rel (%p11) target = $region8
  $region5: #{unet9_logsigmoid_forward.16} parent=0 // loop_body
    %s15 = ssub.s32 %s10, 1
    %s16 = ssub.s32 %s10, 2
    %s17 = sadd.s32 %s10, 1
    %s18 = ssub.s32 %s10, %s17
    %p19 = scmp.eq.s32.totalorder %s18, 0
    %s21 = sadd.s32 %s20, 1
    %s22 = scalar_select %p19, %s20, %s21
    %p25 = pneg %p19
    %p26 = scmp.eq.s32.totalorder %s10, 1
    %p27 = por %p25, %p26
    %p28 = scmp.ne.s32.totalorder %s20, %s23
    %p29 = scmp.eq.s32.totalorder %s10, 0
    %p30 = por %p28, %p29
    %p31 = scmp.ne.s32.totalorder %s20, %s23
    %p32 = scmp.eq.s32.totalorder %s15, 1
    %p33 = por %p31, %p32
    %p34 = scmp.ne.s32.totalorder %s23, %s24
    %p35 = scmp.eq.s32.totalorder %s15, 0
    %p36 = por %p34, %p35
    %p37 = scmp.ne.s32.totalorder %s23, %s24
    %p38 = scmp.eq.s32.totalorder %s16, 1
    %p39 = por %p37, %p38
    %p41 = scmp.ne.s32.totalorder %s24, %s40
    %p42 = scmp.eq.s32.totalorder %s16, 0
    %p43 = por %p41, %p42
    %s44 = ssub.s32 %s10, %s17
    %p45 = scmp.eq.s32.totalorder %s44, 0
    %s47 = sadd.s32 %s46, 1
    %s48 = scalar_select %p45, %s46, %s47
    %p51 = pneg %p45
    %p52 = scmp.eq.s32.totalorder %s10, 1
    %p53 = por %p51, %p52
    %p54 = scmp.ne.s32.totalorder %s46, %s49
    %p55 = scmp.eq.s32.totalorder %s10, 0
    %p56 = por %p54, %p55
    %p57 = scmp.ne.s32.totalorder %s46, %s49
    %p58 = scmp.eq.s32.totalorder %s15, 1
    %p59 = por %p57, %p58
    %p60 = scmp.ne.s32.totalorder %s49, %s50
    %p61 = scmp.eq.s32.totalorder %s15, 0
    %p62 = por %p60, %p61
    %p63 = scmp.ne.s32.totalorder %s49, %s50
    %p64 = scmp.eq.s32.totalorder %s16, 1
    %p65 = por %p63, %p64
    %p67 = scmp.ne.s32.totalorder %s50, %s66
    %p68 = scmp.eq.s32.totalorder %s16, 0
    %p69 = por %p67, %p68
    %s70 = ssub.s32 %s10, %s17
    %p71 = scmp.eq.s32.totalorder %s70, 0
    %s73 = sadd.s32 %s72, 1
    %s74 = scalar_select %p71, %s72, %s73
    %p77 = pneg %p71
    %p78 = scmp.eq.s32.totalorder %s10, 1
    %p79 = por %p77, %p78
    %p80 = scmp.ne.s32.totalorder %s72, %s75
    %p81 = scmp.eq.s32.totalorder %s10, 0
    %p82 = por %p80, %p81
    %p83 = scmp.ne.s32.totalorder %s72, %s75
    %p84 = scmp.eq.s32.totalorder %s15, 1
    %p85 = por %p83, %p84
    %p86 = scmp.ne.s32.totalorder %s75, %s76
    %p87 = scmp.eq.s32.totalorder %s15, 0
    %p88 = por %p86, %p87
    %p89 = scmp.ne.s32.totalorder %s75, %s76
    %p90 = scmp.eq.s32.totalorder %s16, 1
    %p91 = por %p89, %p90
    %p93 = scmp.ne.s32.totalorder %s76, %s92
    %p94 = scmp.eq.s32.totalorder %s16, 0
    %p95 = por %p93, %p94
    %s96 = ssub.s32 %s10, %s17
    %p97 = scmp.eq.s32.totalorder %s96, 0
    %s99 = sadd.s32 %s98, 1
    %s100 = scalar_select %p97, %s98, %s99
    %p103 = pneg %p97
    %p104 = scmp.eq.s32.totalorder %s10, 1
    %p105 = por %p103, %p104
    %p106 = scmp.ne.s32.totalorder %s98, %s101
    %p107 = scmp.eq.s32.totalorder %s10, 0
    %p108 = por %p106, %p107
    %p109 = scmp.ne.s32.totalorder %s98, %s101
    %p110 = scmp.eq.s32.totalorder %s15, 1
    %p111 = por %p109, %p110
    %p112 = scmp.ne.s32.totalorder %s101, %s102
    %p113 = scmp.eq.s32.totalorder %s15, 0
    %p114 = por %p112, %p113
    %p115 = scmp.ne.s32.totalorder %s101, %s102
    %p116 = scmp.eq.s32.totalorder %s16, 1
    %p117 = por %p115, %p116
    %p119 = scmp.ne.s32.totalorder %s102, %s118
    %p120 = scmp.eq.s32.totalorder %s16, 0
    %p121 = por %p119, %p120
    %s122 = ssub.s32 %s10, %s17
    %p123 = scmp.eq.s32.totalorder %s122, 0
    %s125 = sadd.s32 %s124, 1
    %s126 = scalar_select %p123, %s124, %s125
    %p129 = pneg %p123
    %p130 = scmp.eq.s32.totalorder %s10, 1
    %p131 = por %p129, %p130
    %p132 = scmp.ne.s32.totalorder %s124, %s127
    %p133 = scmp.eq.s32.totalorder %s10, 0
    %p134 = por %p132, %p133
    %p135 = scmp.ne.s32.totalorder %s124, %s127
    %p136 = scmp.eq.s32.totalorder %s15, 1
    %p137 = por %p135, %p136
    %p138 = scmp.ne.s32.totalorder %s127, %s128
    %p139 = scmp.eq.s32.totalorder %s15, 0
    %p140 = por %p138, %p139
    %p141 = scmp.ne.s32.totalorder %s127, %s128
    %p142 = scmp.eq.s32.totalorder %s16, 1
    %p143 = por %p141, %p142
    %p145 = scmp.ne.s32.totalorder %s128, %s144
    %p146 = scmp.eq.s32.totalorder %s16, 0
    %p147 = por %p145, %p146
    %p148 = scmp.le.s32.totalorder 1, %s10
    %p149 = scmp.lt.s32.totalorder %s10, 3
    %p150 = pnand %p148, %p149
    %p151 = pneg %p150
    // Predicated region
    $region9: #{unet9_logsigmoid_forward.16} parent=5 // pred_check
      _
    $region10: #{unet9_logsigmoid_forward.16} parent=5 // pred_check_branch
      %153 = sbr.rel (%p150) target = $region12
    $region11: #{unet9_logsigmoid_forward.16} parent=5 // pred_region
      %s154 = ssub.s32 %s10, 1
    $region12: #{unet9_logsigmoid_forward.16} parent=5 // pred_fallthru
      _
    %p155 = scmp.lt.s32.totalorder %s10, 2
    // Predicated region
    $region13: #{unet9_logsigmoid_forward.16} parent=5 // pred_check
      %p156 = pneg %p155
    $region14: #{unet9_logsigmoid_forward.16} parent=5 // pred_check_branch
      %158 = sbr.rel (%p156) target = $region16
    $region15: #{unet9_logsigmoid_forward.16} parent=5 // pred_region
      // Predicated region
      $region17: #{unet9_logsigmoid_forward.16} parent=15 // pred_check
        %p159 = pneg %p30
      $region18: #{unet9_logsigmoid_forward.16} parent=15 // pred_check_branch
        %161 = sbr.rel (%p159) target = $region20
      $region19: #{unet9_logsigmoid_forward.16} parent=15 // pred_region
        %p162 = scmp.lt.s32.totalorder %s10, 1
        %s163 = scalar_select %p162, %s10, 1
        %s164 = smul.addr %s163, 4
        %s165 = smul.addr %s164, 2
        %s166 = scalar_lea.vmem %s0, %s165
      $region20: #{unet9_logsigmoid_forward.16} parent=15 // pred_fallthru
        _
      // Predicated region
      $region21: #{unet9_logsigmoid_forward.16} parent=15 // pred_check
        %p167 = pneg %p56
      $region22: #{unet9_logsigmoid_forward.16} parent=15 // pred_check_branch
        %169 = sbr.rel (%p167) target = $region24
      $region23: #{unet9_logsigmoid_forward.16} parent=15 // pred_region
        %p170 = scmp.lt.s32.totalorder %s10, 1
        %s171 = scalar_select %p170, %s10, 1
        %s172 = smul.addr %s171, 4
        %s173 = smul.addr %s172, 2
        %s174 = scalar_lea.vmem %s1, %s173
      $region24: #{unet9_logsigmoid_forward.16} parent=15 // pred_fallthru
        _
      // Predicated region
      $region25: #{unet9_logsigmoid_forward.16} parent=15 // pred_check
        %p175 = pneg %p82
      $region26: #{unet9_logsigmoid_forward.16} parent=15 // pred_check_branch
        %177 = sbr.rel (%p175) target = $region28
      $region27: #{unet9_logsigmoid_forward.16} parent=15 // pred_region
        %p178 = scmp.lt.s32.totalorder %s10, 1
        %s179 = scalar_select %p178, %s10, 1
        %s180 = smul.addr %s179, 4
        %s181 = smul.addr %s180, 2
        %s182 = scalar_lea.vmem %s2, %s181
      $region28: #{unet9_logsigmoid_forward.16} parent=15 // pred_fallthru
        _
      // Predicated region
      $region29: #{unet9_logsigmoid_forward.16} parent=15 // pred_check
        %p183 = pneg %p108
      $region30: #{unet9_logsigmoid_forward.16} parent=15 // pred_check_branch
        %185 = sbr.rel (%p183) target = $region32
      $region31: #{unet9_logsigmoid_forward.16} parent=15 // pred_region
        %p186 = scmp.lt.s32.totalorder %s10, 1
        %s187 = scalar_select %p186, %s10, 1
        %s188 = smul.addr %s187, 4
        %s189 = smul.addr %s188, 2
        %s190 = scalar_lea.vmem %s3, %s189
      $region32: #{unet9_logsigmoid_forward.16} parent=15 // pred_fallthru
        _
    $region16: #{unet9_logsigmoid_forward.16} parent=5 // pred_fallthru
      _
    %p191 = scmp.le.s32.totalorder 1, %s10
    %p192 = scmp.lt.s32.totalorder %s10, 3
    %p193 = pnand %p191, %p192
    %p194 = pneg %p193
    // Predicated region
    $region33: #{unet9_logsigmoid_forward.16} parent=5 // pred_check
      _
    $region34: #{unet9_logsigmoid_forward.16} parent=5 // pred_check_branch
      %196 = sbr.rel (%p193) target = $region36
    $region35: #{unet9_logsigmoid_forward.16} parent=5 // pred_region
      %s197 = ssub.s32 %s10, 1
      %p198 = scmp.lt.s32.totalorder %s15, 1
      %s199 = scalar_select %p198, %s15, 1
      %s200 = smul.addr %s199, 4
      %s201 = smul.addr %s200, 2
      %s202 = scalar_lea.vmem %s0, %s201
      %p203 = pneg %p36
      %p204 = pneg %p33
      %p205 = scmp.lt.s32.totalorder %s15, 1
      %s206 = scalar_select %p205, %s15, 1
      %s207 = smul.addr %s206, 4
      %s208 = smul.addr %s207, 2
      %s209 = scalar_lea.vmem %s1, %s208
      %p210 = pneg %p62
      %p211 = pneg %p59
      %p212 = scmp.lt.s32.totalorder %s15, 1
      %s213 = scalar_select %p212, %s15, 1
      %s214 = smul.addr %s213, 4
      %s215 = smul.addr %s214, 2
      %s216 = scalar_lea.vmem %s2, %s215
      %p217 = pneg %p88
      %p218 = pneg %p85
      %p219 = scmp.lt.s32.totalorder %s15, 1
      %s220 = scalar_select %p219, %s15, 1
      %s221 = smul.addr %s220, 4
      %s222 = smul.addr %s221, 2
      %s223 = scalar_lea.vmem %s3, %s222
      %p224 = pneg %p114
      %p225 = pneg %p111
      %p226 = pneg %p140
      %p227 = pneg %p137
      %p228 = scmp.lt.s32.totalorder %s15, 1
      %s229 = scalar_select %p228, %s15, 1
      %s230 = smul.addr %s229, 4
      %s231 = smul.addr %s230, 2
      %s232 = scalar_lea.vmem %s4, %s231
      %p233 = scmp.lt.s32.totalorder %s15, 1
      %s234 = scalar_select %p233, %s15, 1
      %s235 = smul.addr %s234, 4
      %s236 = smul.addr %s235, 2
      %s237 = scalar_lea.vmem %s0, %s236
      %p238 = scmp.lt.s32.totalorder %s15, 1
      %s239 = scalar_select %p238, %s15, 1
      %s240 = smul.addr %s239, 4
      %s241 = smul.addr %s240, 2
      %s242 = scalar_lea.vmem %s1, %s241
      %p243 = scmp.lt.s32.totalorder %s15, 1
      %s244 = scalar_select %p243, %s15, 1
      %s245 = smul.addr %s244, 4
      %s246 = smul.addr %s245, 2
      %s247 = scalar_lea.vmem %s2, %s246
      %p248 = scmp.lt.s32.totalorder %s15, 1
      %s249 = scalar_select %p248, %s15, 1
      %s250 = smul.addr %s249, 4
      %s251 = smul.addr %s250, 2
      %s252 = scalar_lea.vmem %s3, %s251
      %p253 = scmp.lt.s32.totalorder %s15, 1
      %s254 = scalar_select %p253, %s15, 1
      %s255 = smul.addr %s254, 4
      %s256 = smul.addr %s255, 2
      %s257 = scalar_lea.vmem %s4, %s256
      %v258 = vld [vmem:[%s237] sm:$0x3]
      %v259 = vld [vmem:[%s237 + $0x2] sm:$0x3]
      %v260 = vld [vmem:[%s237 + $0x4] sm:$0x3]
      %v261 = vld [vmem:[%s237 + $0x6] sm:$0x3]
      %v262 = vld [vmem:[%s242] sm:$0x3]
      %v263 = vld [vmem:[%s242 + $0x2] sm:$0x3]
      %v264 = vld [vmem:[%s242 + $0x4] sm:$0x3]
      %v265 = vld [vmem:[%s242 + $0x6] sm:$0x3]
      %v266 = vunpack.c.l.bf16 %v258
      %v267 = vunpack.c.l.bf16 %v259
      %v268 = vunpack.c.l.bf16 %v260
      %v269 = vunpack.c.l.bf16 %v261
      %v270 = vunpack.c.l.bf16 %v262
      %v271 = vunpack.c.l.bf16 %v263
      %v272 = vunpack.c.l.bf16 %v264
      %v273 = vunpack.c.l.bf16 %v265
      %v274 = vmax.f32 %v266, %v270
      %v275 = vmax.f32 %v267, %v271
      %v276 = vmax.f32 %v268, %v272
      %v277 = vmax.f32 %v269, %v273
      %v278 = vpack.c.bf16 %v274, %v274
      %v279 = vpack.c.bf16 %v275, %v275
      %v280 = vpack.c.bf16 %v276, %v276
      %v281 = vpack.c.bf16 %v277, %v277
      %v282 = vld [vmem:[%s247] sm:$0x3]
      %v283 = vld [vmem:[%s247 + $0x2] sm:$0x3]
      %v284 = vld [vmem:[%s247 + $0x4] sm:$0x3]
      %v285 = vld [vmem:[%s247 + $0x6] sm:$0x3]
      %v286 = vld [vmem:[%s252] sm:$0x3]
      %v287 = vld [vmem:[%s252 + $0x2] sm:$0x3]
      %v288 = vld [vmem:[%s252 + $0x4] sm:$0x3]
      %v289 = vld [vmem:[%s252 + $0x6] sm:$0x3]
      %v290 = vunpack.c.l.bf16 %v282
      %v291 = vunpack.c.l.bf16 %v283
      %v292 = vunpack.c.l.bf16 %v284
      %v293 = vunpack.c.l.bf16 %v285
      %v294 = vunpack.c.l.bf16 %v286
      %v295 = vunpack.c.l.bf16 %v287
      %v296 = vunpack.c.l.bf16 %v288
      %v297 = vunpack.c.l.bf16 %v289
      %v298 = vmax.f32 %v290, %v294
      %v299 = vmax.f32 %v291, %v295
      %v300 = vmax.f32 %v292, %v296
      %v301 = vmax.f32 %v293, %v297
      %v302 = vpack.c.bf16 %v298, %v298
      %v303 = vpack.c.bf16 %v299, %v299
      %v304 = vpack.c.bf16 %v300, %v300
      %v305 = vpack.c.bf16 %v301, %v301
      %v306 = vunpack.c.l.bf16 %v278
      %v307 = vunpack.c.l.bf16 %v279
      %v308 = vunpack.c.l.bf16 %v280
      %v309 = vunpack.c.l.bf16 %v281
      %v310 = vunpack.c.l.bf16 %v302
      %v311 = vunpack.c.l.bf16 %v303
      %v312 = vunpack.c.l.bf16 %v304
      %v313 = vunpack.c.l.bf16 %v305
      %v314 = vmax.f32 %v306, %v310
      %v315 = vmax.f32 %v307, %v311
      %v316 = vmax.f32 %v308, %v312
      %v317 = vmax.f32 %v309, %v313
      %v318 = vpack.c.bf16 %v314, %v314
      %v319 = vpack.c.bf16 %v315, %v315
      %v320 = vpack.c.bf16 %v316, %v316
      %v321 = vpack.c.bf16 %v317, %v317
      %322 = vst [vmem:[%s257] sm:$0x3] %v318
      %323 = vst [vmem:[%s257 + $0x2] sm:$0x3] %v319
      %324 = vst [vmem:[%s257 + $0x4] sm:$0x3] %v320
      %325 = vst [vmem:[%s257 + $0x6] sm:$0x3] %v321
      %p326 = scmp.lt.s32.totalorder %s15, 1
      %s327 = scalar_select %p326, %s15, 1
      %s328 = smul.addr %s327, 4
      %s329 = smul.addr %s328, 2
      %s330 = scalar_lea.vmem %s4, %s329
      // Predicated region
      $region37: #{unet9_logsigmoid_forward.16} parent=35 // pred_check
        %p331 = pneg %p137
      $region38: #{unet9_logsigmoid_forward.16} parent=35 // pred_check_branch
        %333 = sbr.rel (%p331) target = $region40
      $region39: #{unet9_logsigmoid_forward.16} parent=35 // pred_region
        _
      $region40: #{unet9_logsigmoid_forward.16} parent=35 // pred_fallthru
        _
    $region36: #{unet9_logsigmoid_forward.16} parent=5 // pred_fallthru
      _
    %p334 = scmp.le.s32.totalorder 2, %s10
    // Predicated region
    $region41: #{unet9_logsigmoid_forward.16} parent=5 // pred_check
      %p335 = pneg %p334
    $region42: #{unet9_logsigmoid_forward.16} parent=5 // pred_check_branch
      %337 = sbr.rel (%p335) target = $region44
    $region43: #{unet9_logsigmoid_forward.16} parent=5 // pred_region
      %s338 = ssub.s32 %s10, 2
      // Predicated region
      $region45: #{unet9_logsigmoid_forward.16} parent=43 // pred_check
        %p339 = pneg %p143
      $region46: #{unet9_logsigmoid_forward.16} parent=43 // pred_check_branch
        %341 = sbr.rel (%p339) target = $region48
      $region47: #{unet9_logsigmoid_forward.16} parent=43 // pred_region
        %p342 = scmp.lt.s32.totalorder %s16, 1
        %s343 = scalar_select %p342, %s16, 1
        %s344 = smul.addr %s343, 4
        %s345 = smul.addr %s344, 2
        %s346 = scalar_lea.vmem %s4, %s345
      $region48: #{unet9_logsigmoid_forward.16} parent=43 // pred_fallthru
        _
    $region44: #{unet9_logsigmoid_forward.16} parent=5 // pred_fallthru
      _
  $region6: #{unet9_logsigmoid_forward.16} parent=0 // loop_footer
    %s14 = sadd.s32 1, %s10
  $region7: #{unet9_logsigmoid_forward.16} parent=0 // loop_footer_branch
    %9 = sbr.rel target = $region3
  $region8: #{unet9_logsigmoid_forward.16} parent=0 // loop_exit
    _

// kernel: unet9_logsigmoid_forward.19
$region0: #{unet9_logsigmoid_forward.19}
  #allocation0 [shape = 'u32[]', space=smem, size = 0x4, offset = 0x4, fixed_abs, tag = 'smem constant byte address 0x4 - core index']
  #allocation1 [shape = 'u32[72,128]{1,0:T(1,128)}', space=vmem, size = 0x9000, scoped, tag = 'internal scratch']
  %s0 = inlined_call_operand.vmem [shape: bf16[32,128], index: 0, kind: input, shape index: {}]
  %s1 = inlined_call_operand.vmem [shape: bf16[128,512], index: 1, kind: input, shape index: {}]
  %s2 = inlined_call_operand.vmem [shape: f32[1,512], index: 2, kind: input, shape index: {}]
  %s3 = inlined_call_operand.vmem [shape: bf16[32,512], index: 3, kind: output, shape index: {}]
  %s4 = sld [smem:[#allocation0]]
  $region22: #{unet9_logsigmoid_forward.19} parent=0
    _
  %s6 = ssub.s32 1, %s4
  %s7 = scalar_select 0, %s6, %s4
  // Predicated region
  $region2: #{unet9_logsigmoid_forward.19} parent=0 // pred_check
    _
  $region3: #{unet9_logsigmoid_forward.19} parent=0 // pred_check_branch
    %9 = sbr.rel (0) target = $region5
  $region4: #{unet9_logsigmoid_forward.19} parent=0 // pred_region
    _
  $region5: #{unet9_logsigmoid_forward.19} parent=0 // pred_fallthru
    _
  // Predicated region
  $region6: #{unet9_logsigmoid_forward.19} parent=0 // pred_check
    _
  $region7: #{unet9_logsigmoid_forward.19} parent=0 // pred_check_branch
    %11 = sbr.rel (0) target = $region9
  $region8: #{unet9_logsigmoid_forward.19} parent=0 // pred_region
    _
  $region9: #{unet9_logsigmoid_forward.19} parent=0 // pred_fallthru
    _
  // Predicated region
  $region10: #{unet9_logsigmoid_forward.19} parent=0 // pred_check
    _
  $region11: #{unet9_logsigmoid_forward.19} parent=0 // pred_check_branch
    %13 = sbr.rel (0) target = $region13
  $region12: #{unet9_logsigmoid_forward.19} parent=0 // pred_region
    _
  $region13: #{unet9_logsigmoid_forward.19} parent=0 // pred_fallthru
    _
  %v14 = vld [vmem:[%s0] sm:$0xf]
  %v15 = vld [vmem:[%s0 + $0x4] sm:$0xf]
  %v16 = vld [vmem:[%s0 + $0x8] sm:$0xf]
  %v17 = vld [vmem:[%s0 + $0xc] sm:$0xf]
  %v18 = vld [vmem:[%s1] sm:$0xff]
  %v19 = vld [vmem:[%s1 + $0x8] sm:$0xff]
  %v20 = vld [vmem:[%s1 + $0x10] sm:$0xff]
  %v21 = vld [vmem:[%s1 + $0x18] sm:$0xff]
  %v22 = vld [vmem:[%s1 + $0x20] sm:$0xff]
  %v23 = vld [vmem:[%s1 + $0x28] sm:$0xff]
  %v24 = vld [vmem:[%s1 + $0x30] sm:$0xff]
  %v25 = vld [vmem:[%s1 + $0x38] sm:$0xff]
  %v26 = vld [vmem:[%s1 + $0x40] sm:$0xff]
  %v27 = vld [vmem:[%s1 + $0x48] sm:$0xff]
  %v28 = vld [vmem:[%s1 + $0x50] sm:$0xff]
  %v29 = vld [vmem:[%s1 + $0x58] sm:$0xff]
  %v30 = vld [vmem:[%s1 + $0x60] sm:$0xff]
  %v31 = vld [vmem:[%s1 + $0x68] sm:$0xff]
  %v32 = vld [vmem:[%s1 + $0x70] sm:$0xff]
  %v33 = vld [vmem:[%s1 + $0x78] sm:$0xff]
  %v34 = vld [vmem:[%s1 + $0x80] sm:$0xff]
  %v35 = vld [vmem:[%s1 + $0x88] sm:$0xff]
  %v36 = vld [vmem:[%s1 + $0x90] sm:$0xff]
  %v37 = vld [vmem:[%s1 + $0x98] sm:$0xff]
  %v38 = vld [vmem:[%s1 + $0xa0] sm:$0xff]
  %v39 = vld [vmem:[%s1 + $0xa8] sm:$0xff]
  %v40 = vld [vmem:[%s1 + $0xb0] sm:$0xff]
  %v41 = vld [vmem:[%s1 + $0xb8] sm:$0xff]
  %v42 = vld [vmem:[%s1 + $0xc0] sm:$0xff]
  %v43 = vld [vmem:[%s1 + $0xc8] sm:$0xff]
  %v44 = vld [vmem:[%s1 + $0xd0] sm:$0xff]
  %v45 = vld [vmem:[%s1 + $0xd8] sm:$0xff]
  %v46 = vld [vmem:[%s1 + $0xe0] sm:$0xff]
  %v47 = vld [vmem:[%s1 + $0xe8] sm:$0xff]
  %v48 = vld [vmem:[%s1 + $0xf0] sm:$0xff]
  %v49 = vld [vmem:[%s1 + $0xf8] sm:$0xff]
  %v50 = vld [vmem:[%s2] sm:$0xf]
  %v52 = vperm.slane %v50, 0
  %v53 = vperm.slane %v50, 1
  %v54 = vperm.slane %v50, 2
  %v55 = vperm.slane %v50, 3
  %v64 = vunpack.c.l.b16 %v14
  %v65 = vunpack.c.l.b16 %v15
  %v66 = vunpack.c.l.b16 %v16
  %v67 = vunpack.c.l.b16 %v17
  %v68 = vpack.c.b16 %v65, %v64
  %v69 = vpack.c.b16 %v67, %v66
  %v104 = vunpack.c.l.b16 %v18
  %v105 = vunpack.c.h.b16 %v18
  %v106 = vunpack.c.l.b16 %v19
  %v107 = vunpack.c.h.b16 %v19
  %v108 = vunpack.c.l.b16 %v20
  %v109 = vunpack.c.h.b16 %v20
  %v110 = vunpack.c.l.b16 %v21
  %v111 = vunpack.c.h.b16 %v21
  %v112 = vunpack.c.l.b16 %v22
  %v113 = vunpack.c.h.b16 %v22
  %v114 = vunpack.c.l.b16 %v23
  %v115 = vunpack.c.h.b16 %v23
  %v116 = vunpack.c.l.b16 %v24
  %v117 = vunpack.c.h.b16 %v24
  %v118 = vunpack.c.l.b16 %v25
  %v119 = vunpack.c.h.b16 %v25
  %v120 = vunpack.c.l.b16 %v26
  %v121 = vunpack.c.h.b16 %v26
  %v122 = vunpack.c.l.b16 %v27
  %v123 = vunpack.c.h.b16 %v27
  %v124 = vunpack.c.l.b16 %v28
  %v125 = vunpack.c.h.b16 %v28
  %v126 = vunpack.c.l.b16 %v29
  %v127 = vunpack.c.h.b16 %v29
  %v128 = vunpack.c.l.b16 %v30
  %v129 = vunpack.c.h.b16 %v30
  %v130 = vunpack.c.l.b16 %v31
  %v131 = vunpack.c.h.b16 %v31
  %v132 = vunpack.c.l.b16 %v32
  %v133 = vunpack.c.h.b16 %v32
  %v134 = vunpack.c.l.b16 %v33
  %v135 = vunpack.c.h.b16 %v33
  %v136 = vunpack.c.l.b16 %v34
  %v137 = vunpack.c.h.b16 %v34
  %v138 = vunpack.c.l.b16 %v35
  %v139 = vunpack.c.h.b16 %v35
  %v140 = vunpack.c.l.b16 %v36
  %v141 = vunpack.c.h.b16 %v36
  %v142 = vunpack.c.l.b16 %v37
  %v143 = vunpack.c.h.b16 %v37
  %v144 = vunpack.c.l.b16 %v38
  %v145 = vunpack.c.h.b16 %v38
  %v146 = vunpack.c.l.b16 %v39
  %v147 = vunpack.c.h.b16 %v39
  %v148 = vunpack.c.l.b16 %v40
  %v149 = vunpack.c.h.b16 %v40
  %v150 = vunpack.c.l.b16 %v41
  %v151 = vunpack.c.h.b16 %v41
  %v152 = vunpack.c.l.b16 %v42
  %v153 = vunpack.c.h.b16 %v42
  %v154 = vunpack.c.l.b16 %v43
  %v155 = vunpack.c.h.b16 %v43
  %v156 = vunpack.c.l.b16 %v44
  %v157 = vunpack.c.h.b16 %v44
  %v158 = vunpack.c.l.b16 %v45
  %v159 = vunpack.c.h.b16 %v45
  %v160 = vunpack.c.l.b16 %v46
  %v161 = vunpack.c.h.b16 %v46
  %v162 = vunpack.c.l.b16 %v47
  %v163 = vunpack.c.h.b16 %v47
  %v164 = vunpack.c.l.b16 %v48
  %v165 = vunpack.c.h.b16 %v48
  %v166 = vunpack.c.l.b16 %v49
  %v167 = vunpack.c.h.b16 %v49
  %v168 = vpack.c.b16 %v108, %v104
  %v169 = vpack.c.b16 %v109, %v105
  %v170 = vpack.c.b16 %v110, %v106
  %v171 = vpack.c.b16 %v111, %v107
  %v172 = vpack.c.b16 %v116, %v112
  %v173 = vpack.c.b16 %v117, %v113
  %v174 = vpack.c.b16 %v118, %v114
  %v175 = vpack.c.b16 %v119, %v115
  %v176 = vpack.c.b16 %v124, %v120
  %v177 = vpack.c.b16 %v125, %v121
  %v178 = vpack.c.b16 %v126, %v122
  %v179 = vpack.c.b16 %v127, %v123
  %v180 = vpack.c.b16 %v132, %v128
  %v181 = vpack.c.b16 %v133, %v129
  %v182 = vpack.c.b16 %v134, %v130
  %v183 = vpack.c.b16 %v135, %v131
  %v184 = vpack.c.b16 %v140, %v136
  %v185 = vpack.c.b16 %v141, %v137
  %v186 = vpack.c.b16 %v142, %v138
  %v187 = vpack.c.b16 %v143, %v139
  %v188 = vpack.c.b16 %v148, %v144
  %v189 = vpack.c.b16 %v149, %v145
  %v190 = vpack.c.b16 %v150, %v146
  %v191 = vpack.c.b16 %v151, %v147
  %v192 = vpack.c.b16 %v156, %v152
  %v193 = vpack.c.b16 %v157, %v153
  %v194 = vpack.c.b16 %v158, %v154
  %v195 = vpack.c.b16 %v159, %v155
  %v196 = vpack.c.b16 %v164, %v160
  %v197 = vpack.c.b16 %v165, %v161
  %v198 = vpack.c.b16 %v166, %v162
  %v199 = vpack.c.b16 %v167, %v163
  %232 = vmatpush.bf16.msra.mxu0 %v196
  %233 = vmatpush.bf16.msra.mxu0 %v192
  %234 = vmatpush.bf16.msra.mxu0 %v188
  %235 = vmatpush.bf16.msra.mxu0 %v184
  %236 = vmatpush.bf16.msra.mxu0 %v180
  %237 = vmatpush.bf16.msra.mxu0 %v176
  %238 = vmatpush.bf16.msra.mxu0 %v172
  %239 = vmatpush.bf16.msra.mxu0 %v168
  %240 = vmatmul.bf16.gmra.mxu0 %v68
  %v241 = vpop.f32.mrf.mxu0
  %v242 = vadd.f32 %v52, %v241
  %v243 = vpop.f32.mrf.mxu0
  %v244 = vadd.f32 %v52, %v243
  %245 = vmatmul.bf16.gmra.mxu0 %v69
  %v246 = vpop.f32.mrf.mxu0
  %v247 = vadd.f32 %v52, %v246
  %v248 = vpop.f32.mrf.mxu0
  %v249 = vadd.f32 %v52, %v248
  %250 = vdwg.mxu0
  %251 = vmatpush.bf16.msra.mxu0 %v197
  %252 = vmatpush.bf16.msra.mxu0 %v193
  %253 = vmatpush.bf16.msra.mxu0 %v189
  %254 = vmatpush.bf16.msra.mxu0 %v185
  %255 = vmatpush.bf16.msra.mxu0 %v181
  %256 = vmatpush.bf16.msra.mxu0 %v177
  %257 = vmatpush.bf16.msra.mxu0 %v173
  %258 = vmatpush.bf16.msra.mxu0 %v169
  %259 = vmatmul.bf16.gmra.mxu0 %v68
  %v260 = vpop.f32.mrf.mxu0
  %v261 = vadd.f32 %v53, %v260
  %v262 = vpop.f32.mrf.mxu0
  %v263 = vadd.f32 %v53, %v262
  %264 = vmatmul.bf16.gmra.mxu0 %v69
  %v265 = vpop.f32.mrf.mxu0
  %v266 = vadd.f32 %v53, %v265
  %v267 = vpop.f32.mrf.mxu0
  %v268 = vadd.f32 %v53, %v267
  %269 = vdwg.mxu0
  %270 = vmatpush.bf16.msra.mxu0 %v198
  %271 = vmatpush.bf16.msra.mxu0 %v194
  %272 = vmatpush.bf16.msra.mxu0 %v190
  %273 = vmatpush.bf16.msra.mxu0 %v186
  %274 = vmatpush.bf16.msra.mxu0 %v182
  %275 = vmatpush.bf16.msra.mxu0 %v178
  %276 = vmatpush.bf16.msra.mxu0 %v174
  %277 = vmatpush.bf16.msra.mxu0 %v170
  %278 = vmatmul.bf16.gmra.mxu0 %v68
  %v279 = vpop.f32.mrf.mxu0
  %v280 = vadd.f32 %v54, %v279
  %v281 = vpop.f32.mrf.mxu0
  %v282 = vadd.f32 %v54, %v281
  %283 = vmatmul.bf16.gmra.mxu0 %v69
  %v284 = vpop.f32.mrf.mxu0
  %v285 = vadd.f32 %v54, %v284
  %v286 = vpop.f32.mrf.mxu0
  %v287 = vadd.f32 %v54, %v286
  %288 = vdwg.mxu0
  %289 = vmatpush.bf16.msra.mxu0 %v199
  %290 = vmatpush.bf16.msra.mxu0 %v195
  %291 = vmatpush.bf16.msra.mxu0 %v191
  %292 = vmatpush.bf16.msra.mxu0 %v187
  %293 = vmatpush.bf16.msra.mxu0 %v183
  %294 = vmatpush.bf16.msra.mxu0 %v179
  %295 = vmatpush.bf16.msra.mxu0 %v175
  %296 = vmatpush.bf16.msra.mxu0 %v171
  %297 = vmatmul.bf16.gmra.mxu0 %v68
  %v298 = vpop.f32.mrf.mxu0
  %v299 = vadd.f32 %v55, %v298
  %v300 = vpop.f32.mrf.mxu0
  %v301 = vadd.f32 %v55, %v300
  %302 = vmatmul.bf16.gmra.mxu0 %v69
  %v303 = vpop.f32.mrf.mxu0
  %v304 = vadd.f32 %v55, %v303
  %v305 = vpop.f32.mrf.mxu0
  %v306 = vadd.f32 %v55, %v305
  %307 = vdwg.mxu0
  %v308 = vpack.c.bf16 %v261, %v242
  %v309 = vpack.c.bf16 %v299, %v280
  %v310 = vpack.c.bf16 %v263, %v244
  %v311 = vpack.c.bf16 %v301, %v282
  %v312 = vpack.c.bf16 %v266, %v247
  %v313 = vpack.c.bf16 %v304, %v285
  %v314 = vpack.c.bf16 %v268, %v249
  %v315 = vpack.c.bf16 %v306, %v287
  %316 = vst [vmem:[%s3] sm:$0xff] %v308
  %317 = vst [vmem:[%s3 + $0x8] sm:$0xff] %v309
  %318 = vst [vmem:[%s3 + $0x10] sm:$0xff] %v310
  %319 = vst [vmem:[%s3 + $0x18] sm:$0xff] %v311
  %320 = vst [vmem:[%s3 + $0x20] sm:$0xff] %v312
  %321 = vst [vmem:[%s3 + $0x28] sm:$0xff] %v313
  %322 = vst [vmem:[%s3 + $0x30] sm:$0xff] %v314
  %323 = vst [vmem:[%s3 + $0x38] sm:$0xff] %v315
  // Predicated region
  $region14: #{unet9_logsigmoid_forward.19} parent=0 // pred_check
    _
  $region15: #{unet9_logsigmoid_forward.19} parent=0 // pred_check_branch
    %325 = sbr.rel (0) target = $region17
  $region16: #{unet9_logsigmoid_forward.19} parent=0 // pred_region
    _
  $region17: #{unet9_logsigmoid_forward.19} parent=0 // pred_fallthru
    _
  // Predicated region
  $region18: #{unet9_logsigmoid_forward.19} parent=0 // pred_check
    _
  $region19: #{unet9_logsigmoid_forward.19} parent=0 // pred_check_branch
    %327 = sbr.rel (0) target = $region21
  $region20: #{unet9_logsigmoid_forward.19} parent=0 // pred_region
    _
  $region21: #{unet9_logsigmoid_forward.19} parent=0 // pred_fallthru
    _

// kernel: unet9_logsigmoid_forward.17
$region0: #{unet9_logsigmoid_forward.17}
  #allocation0 [shape = 'u32[]', space=smem, size = 0x4, offset = 0x4, fixed_abs, tag = 'smem constant byte address 0x4 - core index']
  #allocation1 [shape = 'u32[72,128]{1,0:T(1,128)}', space=vmem, size = 0x9000, scoped, tag = 'internal scratch']
  %s0 = inlined_call_operand.vmem [shape: bf16[2,24,384], index: 0, kind: input, shape index: {}]
  %s1 = inlined_call_operand.vmem [shape: bf16[3,384,128], index: 1, kind: input, shape index: {}]
  %s2 = inlined_call_operand.vmem [shape: f32[1,128], index: 2, kind: input, shape index: {}]
  %s3 = inlined_call_operand.vmem [shape: f32[1,128], index: 3, kind: input, shape index: {}]
  %s4 = inlined_call_operand.vmem [shape: bf16[2,16,128], index: 4, kind: output, shape index: {}]
  %s5 = sld [smem:[#allocation0]]
  $region49: #{unet9_logsigmoid_forward.17} parent=0
    _
  %s7 = ssub.s32 1, %s5
  %s8 = scalar_select 0, %s7, %s5
  loop: start=0, step=1, limit=4
  $region2: #{unet9_logsigmoid_forward.17} parent=0 // loop_pre_header
    _
  $region3: #{unet9_logsigmoid_forward.17} parent=0 // loop_header
    %s10 = sphi 0, %s14
    %p11 = scmp.ge.s32.totalorder %s10, 4
    %s20 = sphi 0, %s22
    %s23 = sphi 0, %s20
    %s24 = sphi 0, %s23
    %s40 = sphi 0, %s24
    %s44 = sphi 0, %s44
    %s46 = sphi 0, %s44
    %s47 = sphi 0, %s46
    %s61 = sphi 0, %s47
    %s65 = sphi 0, %s65
    %s67 = sphi 0, %s65
    %s68 = sphi 0, %s67
    %s82 = sphi 0, %s68
    %s86 = sphi 0, %s86
    %s88 = sphi 0, %s86
    %s89 = sphi 0, %s88
    %s103 = sphi 0, %s89
    %s109 = sphi 0, %s111
    %s112 = sphi 0, %s109
    %s113 = sphi 0, %s112
    %s129 = sphi 0, %s113
  $region4: #{unet9_logsigmoid_forward.17} parent=0 // loop_header_branch
    %13 = sbr.rel (%p11) target = $region8
  $region5: #{unet9_logsigmoid_forward.17} parent=0 // loop_body
    %s15 = ssub.s32 %s10, 1
    %s16 = ssub.s32 %s10, 2
    %s17 = sadd.s32 %s10, 1
    %s18 = ssub.s32 %s10, %s17
    %p19 = scmp.eq.s32.totalorder %s18, 0
    %s21 = sadd.s32 %s20, 1
    %s22 = scalar_select %p19, %s20, %s21
    %p25 = pneg %p19
    %p26 = scmp.eq.s32.totalorder %s10, 1
    %p27 = por %p25, %p26
    %p28 = scmp.ne.s32.totalorder %s20, %s23
    %p29 = scmp.eq.s32.totalorder %s10, 0
    %p30 = por %p28, %p29
    %p31 = scmp.ne.s32.totalorder %s20, %s23
    %p32 = scmp.eq.s32.totalorder %s15, 1
    %p33 = por %p31, %p32
    %p34 = scmp.ne.s32.totalorder %s23, %s24
    %p35 = scmp.eq.s32.totalorder %s15, 0
    %p36 = por %p34, %p35
    %p37 = scmp.ne.s32.totalorder %s23, %s24
    %p38 = scmp.eq.s32.totalorder %s16, 1
    %p39 = por %p37, %p38
    %p41 = scmp.ne.s32.totalorder %s24, %s40
    %p42 = scmp.eq.s32.totalorder %s16, 0
    %p43 = por %p41, %p42
    %s45 = sadd.s32 %s44, 1
    %p48 = scmp.eq.s32.totalorder %s10, 1
    %p49 = scmp.ne.s32.totalorder %s44, %s46
    %p50 = scmp.eq.s32.totalorder %s10, 0
    %p51 = por %p49, %p50
    %p52 = scmp.ne.s32.totalorder %s44, %s46
    %p53 = scmp.eq.s32.totalorder %s15, 1
    %p54 = por %p52, %p53
    %p55 = scmp.ne.s32.totalorder %s46, %s47
    %p56 = scmp.eq.s32.totalorder %s15, 0
    %p57 = por %p55, %p56
    %p58 = scmp.ne.s32.totalorder %s46, %s47
    %p59 = scmp.eq.s32.totalorder %s16, 1
    %p60 = por %p58, %p59
    %p62 = scmp.ne.s32.totalorder %s47, %s61
    %p63 = scmp.eq.s32.totalorder %s16, 0
    %p64 = por %p62, %p63
    %s66 = sadd.s32 %s65, 1
    %p69 = scmp.eq.s32.totalorder %s10, 1
    %p70 = scmp.ne.s32.totalorder %s65, %s67
    %p71 = scmp.eq.s32.totalorder %s10, 0
    %p72 = por %p70, %p71
    %p73 = scmp.ne.s32.totalorder %s65, %s67
    %p74 = scmp.eq.s32.totalorder %s15, 1
    %p75 = por %p73, %p74
    %p76 = scmp.ne.s32.totalorder %s67, %s68
    %p77 = scmp.eq.s32.totalorder %s15, 0
    %p78 = por %p76, %p77
    %p79 = scmp.ne.s32.totalorder %s67, %s68
    %p80 = scmp.eq.s32.totalorder %s16, 1
    %p81 = por %p79, %p80
    %p83 = scmp.ne.s32.totalorder %s68, %s82
    %p84 = scmp.eq.s32.totalorder %s16, 0
    %p85 = por %p83, %p84
    %s87 = sadd.s32 %s86, 1
    %p90 = scmp.eq.s32.totalorder %s10, 1
    %p91 = scmp.ne.s32.totalorder %s86, %s88
    %p92 = scmp.eq.s32.totalorder %s10, 0
    %p93 = por %p91, %p92
    %p94 = scmp.ne.s32.totalorder %s86, %s88
    %p95 = scmp.eq.s32.totalorder %s15, 1
    %p96 = por %p94, %p95
    %p97 = scmp.ne.s32.totalorder %s88, %s89
    %p98 = scmp.eq.s32.totalorder %s15, 0
    %p99 = por %p97, %p98
    %p100 = scmp.ne.s32.totalorder %s88, %s89
    %p101 = scmp.eq.s32.totalorder %s16, 1
    %p102 = por %p100, %p101
    %p104 = scmp.ne.s32.totalorder %s89, %s103
    %p105 = scmp.eq.s32.totalorder %s16, 0
    %p106 = por %p104, %p105
    %s107 = ssub.s32 %s10, %s17
    %p108 = scmp.eq.s32.totalorder %s107, 0
    %s110 = sadd.s32 %s109, 1
    %s111 = scalar_select %p108, %s109, %s110
    %p114 = pneg %p108
    %p115 = scmp.eq.s32.totalorder %s10, 1
    %p116 = por %p114, %p115
    %p117 = scmp.ne.s32.totalorder %s109, %s112
    %p118 = scmp.eq.s32.totalorder %s10, 0
    %p119 = por %p117, %p118
    %p120 = scmp.ne.s32.totalorder %s109, %s112
    %p121 = scmp.eq.s32.totalorder %s15, 1
    %p122 = por %p120, %p121
    %p123 = scmp.ne.s32.totalorder %s112, %s113
    %p124 = scmp.eq.s32.totalorder %s15, 0
    %p125 = por %p123, %p124
    %p126 = scmp.ne.s32.totalorder %s112, %s113
    %p127 = scmp.eq.s32.totalorder %s16, 1
    %p128 = por %p126, %p127
    %p130 = scmp.ne.s32.totalorder %s113, %s129
    %p131 = scmp.eq.s32.totalorder %s16, 0
    %p132 = por %p130, %p131
    %p133 = scmp.le.s32.totalorder 1, %s10
    %p134 = scmp.lt.s32.totalorder %s10, 3
    %p135 = pnand %p133, %p134
    %p136 = pneg %p135
    // Predicated region
    $region9: #{unet9_logsigmoid_forward.17} parent=5 // pred_check
      _
    $region10: #{unet9_logsigmoid_forward.17} parent=5 // pred_check_branch
      %138 = sbr.rel (%p135) target = $region12
    $region11: #{unet9_logsigmoid_forward.17} parent=5 // pred_region
      %s139 = ssub.s32 %s10, 1
      // Predicated region
      $region13: #{unet9_logsigmoid_forward.17} parent=11 // pred_check
        %p140 = pneg %p57
      $region14: #{unet9_logsigmoid_forward.17} parent=11 // pred_check_branch
        %142 = sbr.rel (%p140) target = $region16
      $region15: #{unet9_logsigmoid_forward.17} parent=11 // pred_region
        _
      $region16: #{unet9_logsigmoid_forward.17} parent=11 // pred_fallthru
        _
      // Predicated region
      $region17: #{unet9_logsigmoid_forward.17} parent=11 // pred_check
        %p143 = pneg %p78
      $region18: #{unet9_logsigmoid_forward.17} parent=11 // pred_check_branch
        %145 = sbr.rel (%p143) target = $region20
      $region19: #{unet9_logsigmoid_forward.17} parent=11 // pred_region
        _
      $region20: #{unet9_logsigmoid_forward.17} parent=11 // pred_fallthru
        _
      // Predicated region
      $region21: #{unet9_logsigmoid_forward.17} parent=11 // pred_check
        %p146 = pneg %p99
      $region22: #{unet9_logsigmoid_forward.17} parent=11 // pred_check_branch
        %148 = sbr.rel (%p146) target = $region24
      $region23: #{unet9_logsigmoid_forward.17} parent=11 // pred_region
        _
      $region24: #{unet9_logsigmoid_forward.17} parent=11 // pred_fallthru
        _
    $region12: #{unet9_logsigmoid_forward.17} parent=5 // pred_fallthru
      _
    %p149 = scmp.lt.s32.totalorder %s10, 2
    // Predicated region
    $region25: #{unet9_logsigmoid_forward.17} parent=5 // pred_check
      %p150 = pneg %p149
    $region26: #{unet9_logsigmoid_forward.17} parent=5 // pred_check_branch
      %152 = sbr.rel (%p150) target = $region28
    $region27: #{unet9_logsigmoid_forward.17} parent=5 // pred_region
      // Predicated region
      $region29: #{unet9_logsigmoid_forward.17} parent=27 // pred_check
        %p153 = pneg %p30
      $region30: #{unet9_logsigmoid_forward.17} parent=27 // pred_check_branch
        %155 = sbr.rel (%p153) target = $region32
      $region31: #{unet9_logsigmoid_forward.17} parent=27 // pred_region
        %p156 = scmp.lt.s32.totalorder %s10, 1
        %s157 = scalar_select %p156, %s10, 1
        %s158 = smul.addr %s157, 9
        %s159 = smul.addr %s158, 4
        %s160 = scalar_lea.vmem %s0, %s159
      $region32: #{unet9_logsigmoid_forward.17} parent=27 // pred_fallthru
        _
    $region28: #{unet9_logsigmoid_forward.17} parent=5 // pred_fallthru
      _
    %p161 = scmp.le.s32.totalorder 1, %s10
    %p162 = scmp.lt.s32.totalorder %s10, 3
    %p163 = pnand %p161, %p162
    %p164 = pneg %p163
    // Predicated region
    $region33: #{unet9_logsigmoid_forward.17} parent=5 // pred_check
      _
    $region34: #{unet9_logsigmoid_forward.17} parent=5 // pred_check_branch
      %166 = sbr.rel (%p163) target = $region36
    $region35: #{unet9_logsigmoid_forward.17} parent=5 // pred_region
      %s167 = ssub.s32 %s10, 1
      %p168 = scmp.lt.s32.totalorder %s15, 1
      %s169 = scalar_select %p168, %s15, 1
      %s170 = smul.addr %s169, 9
      %s171 = smul.addr %s170, 4
      %s172 = scalar_lea.vmem %s0, %s171
      %p173 = pneg %p36
      %p174 = pneg %p33
      %p175 = pneg %p57
      %p176 = pneg %p54
      %p177 = pneg %p78
      %p178 = pneg %p75
      %p179 = pneg %p99
      %p180 = pneg %p96
      %p181 = pneg %p125
      %p182 = pneg %p122
      %p183 = scmp.lt.s32.totalorder %s15, 1
      %s184 = scalar_select %p183, %s15, 1
      %s185 = smul.addr %s184, 2
      %s186 = smul.addr %s185, 4
      %s187 = scalar_lea.vmem %s4, %s186
      %p188 = scmp.lt.s32.totalorder %s15, 1
      %s189 = scalar_select %p188, %s15, 1
      %s190 = smul.addr %s189, 9
      %s191 = smul.addr %s190, 4
      %s192 = scalar_lea.vmem %s0, %s191
      %p193 = scmp.lt.s32.totalorder %s15, 1
      %s194 = scalar_select %p193, %s15, 1
      %s195 = smul.addr %s194, 2
      %s196 = smul.addr %s195, 4
      %s197 = scalar_lea.vmem %s4, %s196
      %v198 = vld [vmem:[%s192] sm:$0xff]
      %v199 = vld [vmem:[%s192 + $0x8] sm:$0xf]
      %v200 = vld [vmem:[%s192 + $0xc] sm:$0xff]
      %v201 = vld [vmem:[%s192 + $0x14] sm:$0xf]
      %v202 = vld [vmem:[%s1] sm:$0xf]
      %v203 = vld [vmem:[%s1 + $0x4] sm:$0xf]
      %v204 = vld [vmem:[%s1 + $0x8] sm:$0xf]
      %v205 = vld [vmem:[%s1 + $0xc] sm:$0xf]
      %v206 = vld [vmem:[%s1 + $0x10] sm:$0xf]
      %v207 = vld [vmem:[%s1 + $0x14] sm:$0xf]
      %v208 = vld [vmem:[%s1 + $0x18] sm:$0xf]
      %v209 = vld [vmem:[%s1 + $0x1c] sm:$0xf]
      %v210 = vld [vmem:[%s1 + $0x20] sm:$0xf]
      %v211 = vld [vmem:[%s1 + $0x24] sm:$0xf]
      %v212 = vld [vmem:[%s1 + $0x28] sm:$0xf]
      %v213 = vld [vmem:[%s1 + $0x2c] sm:$0xf]
      %v214 = vld [vmem:[%s1 + $0x30] sm:$0xf]
      %v215 = vld [vmem:[%s1 + $0x34] sm:$0xf]
      %v216 = vld [vmem:[%s1 + $0x38] sm:$0xf]
      %v217 = vld [vmem:[%s1 + $0x3c] sm:$0xf]
      %v218 = vld [vmem:[%s1 + $0x40] sm:$0xf]
      %v219 = vld [vmem:[%s1 + $0x44] sm:$0xf]
      %v220 = vld [vmem:[%s1 + $0x48] sm:$0xf]
      %v221 = vld [vmem:[%s1 + $0x4c] sm:$0xf]
      %v222 = vld [vmem:[%s1 + $0x50] sm:$0xf]
      %v223 = vld [vmem:[%s1 + $0x54] sm:$0xf]
      %v224 = vld [vmem:[%s1 + $0x58] sm:$0xf]
      %v225 = vld [vmem:[%s1 + $0x5c] sm:$0xf]
      %v226 = vld [vmem:[%s1 + $0x60] sm:$0xf]
      %v227 = vld [vmem:[%s1 + $0x64] sm:$0xf]
      %v228 = vld [vmem:[%s1 + $0x68] sm:$0xf]
      %v229 = vld [vmem:[%s1 + $0x6c] sm:$0xf]
      %v230 = vld [vmem:[%s1 + $0x70] sm:$0xf]
      %v231 = vld [vmem:[%s1 + $0x74] sm:$0xf]
      %v232 = vld [vmem:[%s1 + $0x78] sm:$0xf]
      %v233 = vld [vmem:[%s1 + $0x7c] sm:$0xf]
      %v234 = vld [vmem:[%s1 + $0x80] sm:$0xf]
      %v235 = vld [vmem:[%s1 + $0x84] sm:$0xf]
      %v236 = vld [vmem:[%s1 + $0x88] sm:$0xf]
      %v237 = vld [vmem:[%s1 + $0x8c] sm:$0xf]
      %v238 = vld [vmem:[%s1 + $0x90] sm:$0xf]
      %v239 = vld [vmem:[%s1 + $0x94] sm:$0xf]
      %v240 = vld [vmem:[%s1 + $0x98] sm:$0xf]
      %v241 = vld [vmem:[%s1 + $0x9c] sm:$0xf]
      %v242 = vld [vmem:[%s1 + $0xa0] sm:$0xf]
      %v243 = vld [vmem:[%s1 + $0xa4] sm:$0xf]
      %v244 = vld [vmem:[%s1 + $0xa8] sm:$0xf]
      %v245 = vld [vmem:[%s1 + $0xac] sm:$0xf]
      %v246 = vld [vmem:[%s1 + $0xb0] sm:$0xf]
      %v247 = vld [vmem:[%s1 + $0xb4] sm:$0xf]
      %v248 = vld [vmem:[%s1 + $0xb8] sm:$0xf]
      %v249 = vld [vmem:[%s1 + $0xbc] sm:$0xf]
      %v250 = vld [vmem:[%s192] sm:$0xcc]
      %v251 = vld [vmem:[%s192 + $0x8] sm:$0xc]
      %v252 = vld [vmem:[%s192 + $0xc] sm:$0xff]
      %v253 = vld [vmem:[%s192 + $0x14] sm:$0xf]
      %v254 = vld [vmem:[%s192 + $0x18] sm:$0x33]
      %v255 = vld [vmem:[%s192 + $0x20] sm:$0x3]
      %s256 = scalar_lea.vmem %s1, 192
      %v257 = vld [vmem:[%s256] sm:$0xf]
      %v258 = vld [vmem:[%s256 + $0x4] sm:$0xf]
      %v259 = vld [vmem:[%s256 + $0x8] sm:$0xf]
      %v260 = vld [vmem:[%s256 + $0xc] sm:$0xf]
      %v261 = vld [vmem:[%s256 + $0x10] sm:$0xf]
      %v262 = vld [vmem:[%s256 + $0x14] sm:$0xf]
      %v263 = vld [vmem:[%s256 + $0x18] sm:$0xf]
      %v264 = vld [vmem:[%s256 + $0x1c] sm:$0xf]
      %v265 = vld [vmem:[%s256 + $0x20] sm:$0xf]
      %v266 = vld [vmem:[%s256 + $0x24] sm:$0xf]
      %v267 = vld [vmem:[%s256 + $0x28] sm:$0xf]
      %v268 = vld [vmem:[%s256 + $0x2c] sm:$0xf]
      %v269 = vld [vmem:[%s256 + $0x30] sm:$0xf]
      %v270 = vld [vmem:[%s256 + $0x34] sm:$0xf]
      %v271 = vld [vmem:[%s256 + $0x38] sm:$0xf]
      %v272 = vld [vmem:[%s256 + $0x3c] sm:$0xf]
      %v273 = vld [vmem:[%s256 + $0x40] sm:$0xf]
      %v274 = vld [vmem:[%s256 + $0x44] sm:$0xf]
      %v275 = vld [vmem:[%s256 + $0x48] sm:$0xf]
      %v276 = vld [vmem:[%s256 + $0x4c] sm:$0xf]
      %v277 = vld [vmem:[%s256 + $0x50] sm:$0xf]
      %v278 = vld [vmem:[%s256 + $0x54] sm:$0xf]
      %v279 = vld [vmem:[%s256 + $0x58] sm:$0xf]
      %v280 = vld [vmem:[%s256 + $0x5c] sm:$0xf]
      %v281 = vld [vmem:[%s256 + $0x60] sm:$0xf]
      %v282 = vld [vmem:[%s256 + $0x64] sm:$0xf]
      %v283 = vld [vmem:[%s256 + $0x68] sm:$0xf]
      %v284 = vld [vmem:[%s256 + $0x6c] sm:$0xf]
      %v285 = vld [vmem:[%s256 + $0x70] sm:$0xf]
      %v286 = vld [vmem:[%s256 + $0x74] sm:$0xf]
      %v287 = vld [vmem:[%s256 + $0x78] sm:$0xf]
      %v288 = vld [vmem:[%s256 + $0x7c] sm:$0xf]
      %v289 = vld [vmem:[%s256 + $0x80] sm:$0xf]
      %v290 = vld [vmem:[%s256 + $0x84] sm:$0xf]
      %v291 = vld [vmem:[%s256 + $0x88] sm:$0xf]
      %v292 = vld [vmem:[%s256 + $0x8c] sm:$0xf]
      %v293 = vld [vmem:[%s256 + $0x90] sm:$0xf]
      %v294 = vld [vmem:[%s256 + $0x94] sm:$0xf]
      %v295 = vld [vmem:[%s256 + $0x98] sm:$0xf]
      %v296 = vld [vmem:[%s256 + $0x9c] sm:$0xf]
      %v297 = vld [vmem:[%s256 + $0xa0] sm:$0xf]
      %v298 = vld [vmem:[%s256 + $0xa4] sm:$0xf]
      %v299 = vld [vmem:[%s256 + $0xa8] sm:$0xf]
      %v300 = vld [vmem:[%s256 + $0xac] sm:$0xf]
      %v301 = vld [vmem:[%s256 + $0xb0] sm:$0xf]
      %v302 = vld [vmem:[%s256 + $0xb4] sm:$0xf]
      %v303 = vld [vmem:[%s256 + $0xb8] sm:$0xf]
      %v304 = vld [vmem:[%s256 + $0xbc] sm:$0xf]
      %v311 = vunpack.c.l.b16 %v250
      %v312 = vunpack.c.h.b16 %v250
      %v313 = vunpack.c.l.b16 %v251
      %v314 = vunpack.c.l.b16 %v252
      %v315 = vunpack.c.h.b16 %v252
      %v316 = vunpack.c.l.b16 %v253
      %v317 = vunpack.c.l.b16 %v254
      %v318 = vunpack.c.h.b16 %v254
      %v319 = vunpack.c.l.b16 %v255
      %v320 = vpack.c.b16 %v314, %v311
      %v321 = vpack.c.b16 %v315, %v312
      %v322 = vpack.c.b16 %v316, %v313
      %v323 = vpack.c.b16 %v317, %v317
      %v324 = vpack.c.b16 %v318, %v318
      %v325 = vpack.c.b16 %v319, %v319
      %vm326 = vcmask 1045504
      %v327 = vrot.slane %v320, 2
      %v328 = vrot.slane %v323, 2
      %v329 = vsel %vm326, %v327, %v328
      %v330 = vrot.slane %v321, 2
      %v331 = vrot.slane %v324, 2
      %v332 = vsel %vm326, %v330, %v331
      %v333 = vrot.slane %v322, 2
      %v334 = vrot.slane %v325, 2
      %v335 = vsel %vm326, %v333, %v334
      %v387 = vunpack.c.l.b16 %v257
      %v388 = vunpack.c.l.b16 %v258
      %v389 = vunpack.c.l.b16 %v259
      %v390 = vunpack.c.l.b16 %v260
      %v391 = vunpack.c.l.b16 %v261
      %v392 = vunpack.c.l.b16 %v262
      %v393 = vunpack.c.l.b16 %v263
      %v394 = vunpack.c.l.b16 %v264
      %v395 = vunpack.c.l.b16 %v265
      %v396 = vunpack.c.l.b16 %v266
      %v397 = vunpack.c.l.b16 %v267
      %v398 = vunpack.c.l.b16 %v268
      %v399 = vunpack.c.l.b16 %v269
      %v400 = vunpack.c.l.b16 %v270
      %v401 = vunpack.c.l.b16 %v271
      %v402 = vunpack.c.l.b16 %v272
      %v403 = vunpack.c.l.b16 %v273
      %v404 = vunpack.c.l.b16 %v274
      %v405 = vunpack.c.l.b16 %v275
      %v406 = vunpack.c.l.b16 %v276
      %v407 = vunpack.c.l.b16 %v277
      %v408 = vunpack.c.l.b16 %v278
      %v409 = vunpack.c.l.b16 %v279
      %v410 = vunpack.c.l.b16 %v280
      %v411 = vunpack.c.l.b16 %v281
      %v412 = vunpack.c.l.b16 %v282
      %v413 = vunpack.c.l.b16 %v283
      %v414 = vunpack.c.l.b16 %v284
      %v415 = vunpack.c.l.b16 %v285
      %v416 = vunpack.c.l.b16 %v286
      %v417 = vunpack.c.l.b16 %v287
      %v418 = vunpack.c.l.b16 %v288
      %v419 = vunpack.c.l.b16 %v289
      %v420 = vunpack.c.l.b16 %v290
      %v421 = vunpack.c.l.b16 %v291
      %v422 = vunpack.c.l.b16 %v292
      %v423 = vunpack.c.l.b16 %v293
      %v424 = vunpack.c.l.b16 %v294
      %v425 = vunpack.c.l.b16 %v295
      %v426 = vunpack.c.l.b16 %v296
      %v427 = vunpack.c.l.b16 %v297
      %v428 = vunpack.c.l.b16 %v298
      %v429 = vunpack.c.l.b16 %v299
      %v430 = vunpack.c.l.b16 %v300
      %v431 = vunpack.c.l.b16 %v301
      %v432 = vunpack.c.l.b16 %v302
      %v433 = vunpack.c.l.b16 %v303
      %v434 = vunpack.c.l.b16 %v304
      %v435 = vpack.c.b16 %v388, %v387
      %v436 = vpack.c.b16 %v390, %v389
      %v437 = vpack.c.b16 %v392, %v391
      %v438 = vpack.c.b16 %v394, %v393
      %v439 = vpack.c.b16 %v396, %v395
      %v440 = vpack.c.b16 %v398, %v397
      %v441 = vpack.c.b16 %v400, %v399
      %v442 = vpack.c.b16 %v402, %v401
      %v443 = vpack.c.b16 %v404, %v403
      %v444 = vpack.c.b16 %v406, %v405
      %v445 = vpack.c.b16 %v408, %v407
      %v446 = vpack.c.b16 %v410, %v409
      %v447 = vpack.c.b16 %v412, %v411
      %v448 = vpack.c.b16 %v414, %v413
      %v449 = vpack.c.b16 %v416, %v415
      %v450 = vpack.c.b16 %v418, %v417
      %v451 = vpack.c.b16 %v420, %v419
      %v452 = vpack.c.b16 %v422, %v421
      %v453 = vpack.c.b16 %v424, %v423
      %v454 = vpack.c.b16 %v426, %v425
      %v455 = vpack.c.b16 %v428, %v427
      %v456 = vpack.c.b16 %v430, %v429
      %v457 = vpack.c.b16 %v432, %v431
      %v458 = vpack.c.b16 %v434, %v433
      %483 = vmatpush.bf16.msra.mxu0 %v442
      %484 = vmatpush.bf16.msra.mxu0 %v441
      %485 = vmatpush.bf16.msra.mxu0 %v440
      %486 = vmatpush.bf16.msra.mxu0 %v439
      %487 = vmatpush.bf16.msra.mxu0 %v438
      %488 = vmatpush.bf16.msra.mxu0 %v437
      %489 = vmatpush.bf16.msra.mxu0 %v436
      %490 = vmatpush.bf16.msra.mxu0 %v435
      %491 = vmatmul.bf16.gmra.mxu0 %v329
      %v492 = vpop.f32.mrf.mxu0
      %v493 = vadd.f32 0.0, %v492
      %v494 = vpop.f32.mrf.mxu0
      %v495 = vadd.f32 0.0, %v494
      %496 = vdwg.mxu0
      %497 = vmatpush.bf16.msra.mxu0 %v450
      %498 = vmatpush.bf16.msra.mxu0 %v449
      %499 = vmatpush.bf16.msra.mxu0 %v448
      %500 = vmatpush.bf16.msra.mxu0 %v447
      %501 = vmatpush.bf16.msra.mxu0 %v446
      %502 = vmatpush.bf16.msra.mxu0 %v445
      %503 = vmatpush.bf16.msra.mxu0 %v444
      %504 = vmatpush.bf16.msra.mxu0 %v443
      %505 = vmatmul.bf16.gmra.mxu0 %v332
      %v506 = vpop.f32.mrf.mxu0
      %v507 = vadd.f32 %v493, %v506
      %v508 = vpop.f32.mrf.mxu0
      %v509 = vadd.f32 %v495, %v508
      %510 = vdwg.mxu0
      %511 = vmatpush.bf16.msra.mxu0 %v458
      %512 = vmatpush.bf16.msra.mxu0 %v457
      %513 = vmatpush.bf16.msra.mxu0 %v456
      %514 = vmatpush.bf16.msra.mxu0 %v455
      %515 = vmatpush.bf16.msra.mxu0 %v454
      %516 = vmatpush.bf16.msra.mxu0 %v453
      %517 = vmatpush.bf16.msra.mxu0 %v452
      %518 = vmatpush.bf16.msra.mxu0 %v451
      %519 = vmatmul.bf16.gmra.mxu0 %v335
      %v520 = vpop.f32.mrf.mxu0
      %v521 = vadd.f32 %v507, %v520
      %v522 = vpop.f32.mrf.mxu0
      %v523 = vadd.f32 %v509, %v522
      %524 = vdwg.mxu0
      %v529 = vunpack.c.l.b16 %v198
      %v530 = vunpack.c.h.b16 %v198
      %v531 = vunpack.c.l.b16 %v199
      %v532 = vunpack.c.l.b16 %v200
      %v533 = vunpack.c.h.b16 %v200
      %v534 = vunpack.c.l.b16 %v201
      %v535 = vpack.c.b16 %v532, %v529
      %v536 = vpack.c.b16 %v533, %v530
      %v537 = vpack.c.b16 %v534, %v531
      %v589 = vunpack.c.l.b16 %v202
      %v590 = vunpack.c.l.b16 %v203
      %v591 = vunpack.c.l.b16 %v204
      %v592 = vunpack.c.l.b16 %v205
      %v593 = vunpack.c.l.b16 %v206
      %v594 = vunpack.c.l.b16 %v207
      %v595 = vunpack.c.l.b16 %v208
      %v596 = vunpack.c.l.b16 %v209
      %v597 = vunpack.c.l.b16 %v210
      %v598 = vunpack.c.l.b16 %v211
      %v599 = vunpack.c.l.b16 %v212
      %v600 = vunpack.c.l.b16 %v213
      %v601 = vunpack.c.l.b16 %v214
      %v602 = vunpack.c.l.b16 %v215
      %v603 = vunpack.c.l.b16 %v216
      %v604 = vunpack.c.l.b16 %v217
      %v605 = vunpack.c.l.b16 %v218
      %v606 = vunpack.c.l.b16 %v219
      %v607 = vunpack.c.l.b16 %v220
      %v608 = vunpack.c.l.b16 %v221
      %v609 = vunpack.c.l.b16 %v222
      %v610 = vunpack.c.l.b16 %v223
      %v611 = vunpack.c.l.b16 %v224
      %v612 = vunpack.c.l.b16 %v225
      %v613 = vunpack.c.l.b16 %v226
      %v614 = vunpack.c.l.b16 %v227
      %v615 = vunpack.c.l.b16 %v228
      %v616 = vunpack.c.l.b16 %v229
      %v617 = vunpack.c.l.b16 %v230
      %v618 = vunpack.c.l.b16 %v231
      %v619 = vunpack.c.l.b16 %v232
      %v620 = vunpack.c.l.b16 %v233
      %v621 = vunpack.c.l.b16 %v234
      %v622 = vunpack.c.l.b16 %v235
      %v623 = vunpack.c.l.b16 %v236
      %v624 = vunpack.c.l.b16 %v237
      %v625 = vunpack.c.l.b16 %v238
      %v626 = vunpack.c.l.b16 %v239
      %v627 = vunpack.c.l.b16 %v240
      %v628 = vunpack.c.l.b16 %v241
      %v629 = vunpack.c.l.b16 %v242
      %v630 = vunpack.c.l.b16 %v243
      %v631 = vunpack.c.l.b16 %v244
      %v632 = vunpack.c.l.b16 %v245
      %v633 = vunpack.c.l.b16 %v246
      %v634 = vunpack.c.l.b16 %v247
      %v635 = vunpack.c.l.b16 %v248
      %v636 = vunpack.c.l.b16 %v249
      %v637 = vpack.c.b16 %v590, %v589
      %v638 = vpack.c.b16 %v592, %v591
      %v639 = vpack.c.b16 %v594, %v593
      %v640 = vpack.c.b16 %v596, %v595
      %v641 = vpack.c.b16 %v598, %v597
      %v642 = vpack.c.b16 %v600, %v599
      %v643 = vpack.c.b16 %v602, %v601
      %v644 = vpack.c.b16 %v604, %v603
      %v645 = vpack.c.b16 %v606, %v605
      %v646 = vpack.c.b16 %v608, %v607
      %v647 = vpack.c.b16 %v610, %v609
      %v648 = vpack.c.b16 %v612, %v611
      %v649 = vpack.c.b16 %v614, %v613
      %v650 = vpack.c.b16 %v616, %v615
      %v651 = vpack.c.b16 %v618, %v617
      %v652 = vpack.c.b16 %v620, %v619
      %v653 = vpack.c.b16 %v622, %v621
      %v654 = vpack.c.b16 %v624, %v623
      %v655 = vpack.c.b16 %v626, %v625
      %v656 = vpack.c.b16 %v628, %v627
      %v657 = vpack.c.b16 %v630, %v629
      %v658 = vpack.c.b16 %v632, %v631
      %v659 = vpack.c.b16 %v634, %v633
      %v660 = vpack.c.b16 %v636, %v635
      %685 = vmatpush.bf16.msra.mxu0 %v644
      %686 = vmatpush.bf16.msra.mxu0 %v643
      %687 = vmatpush.bf16.msra.mxu0 %v642
      %688 = vmatpush.bf16.msra.mxu0 %v641
      %689 = vmatpush.bf16.msra.mxu0 %v640
      %690 = vmatpush.bf16.msra.mxu0 %v639
      %691 = vmatpush.bf16.msra.mxu0 %v638
      %692 = vmatpush.bf16.msra.mxu0 %v637
      %693 = vmatmul.bf16.gmra.mxu0 %v535
      %v694 = vpop.f32.mrf.mxu0
      %v695 = vadd.f32 %v521, %v694
      %v696 = vpop.f32.mrf.mxu0
      %v697 = vadd.f32 %v523, %v696
      %698 = vdwg.mxu0
      %699 = vmatpush.bf16.msra.mxu0 %v652
      %700 = vmatpush.bf16.msra.mxu0 %v651
      %701 = vmatpush.bf16.msra.mxu0 %v650
      %702 = vmatpush.bf16.msra.mxu0 %v649
      %703 = vmatpush.bf16.msra.mxu0 %v648
      %704 = vmatpush.bf16.msra.mxu0 %v647
      %705 = vmatpush.bf16.msra.mxu0 %v646
      %706 = vmatpush.bf16.msra.mxu0 %v645
      %707 = vmatmul.bf16.gmra.mxu0 %v536
      %v708 = vpop.f32.mrf.mxu0
      %v709 = vadd.f32 %v695, %v708
      %v710 = vpop.f32.mrf.mxu0
      %v711 = vadd.f32 %v697, %v710
      %712 = vdwg.mxu0
      %713 = vmatpush.bf16.msra.mxu0 %v660
      %714 = vmatpush.bf16.msra.mxu0 %v659
      %715 = vmatpush.bf16.msra.mxu0 %v658
      %716 = vmatpush.bf16.msra.mxu0 %v657
      %717 = vmatpush.bf16.msra.mxu0 %v656
      %718 = vmatpush.bf16.msra.mxu0 %v655
      %719 = vmatpush.bf16.msra.mxu0 %v654
      %720 = vmatpush.bf16.msra.mxu0 %v653
      %721 = vmatmul.bf16.gmra.mxu0 %v537
      %v722 = vpop.f32.mrf.mxu0
      %v723 = vadd.f32 %v709, %v722
      %v724 = vpop.f32.mrf.mxu0
      %v725 = vadd.f32 %v711, %v724
      %726 = vdwg.mxu0
      %v727 = vld [vmem:[%s192 + $0x18] sm:$0xff]
      %v728 = vld [vmem:[%s192 + $0x20] sm:$0xf]
      %s729 = scalar_lea.vmem %s1, 384
      %v730 = vld [vmem:[%s729] sm:$0xf]
      %v731 = vld [vmem:[%s729 + $0x4] sm:$0xf]
      %v732 = vld [vmem:[%s729 + $0x8] sm:$0xf]
      %v733 = vld [vmem:[%s729 + $0xc] sm:$0xf]
      %v734 = vld [vmem:[%s729 + $0x10] sm:$0xf]
      %v735 = vld [vmem:[%s729 + $0x14] sm:$0xf]
      %v736 = vld [vmem:[%s729 + $0x18] sm:$0xf]
      %v737 = vld [vmem:[%s729 + $0x1c] sm:$0xf]
      %v738 = vld [vmem:[%s729 + $0x20] sm:$0xf]
      %v739 = vld [vmem:[%s729 + $0x24] sm:$0xf]
      %v740 = vld [vmem:[%s729 + $0x28] sm:$0xf]
      %v741 = vld [vmem:[%s729 + $0x2c] sm:$0xf]
      %v742 = vld [vmem:[%s729 + $0x30] sm:$0xf]
      %v743 = vld [vmem:[%s729 + $0x34] sm:$0xf]
      %v744 = vld [vmem:[%s729 + $0x38] sm:$0xf]
      %v745 = vld [vmem:[%s729 + $0x3c] sm:$0xf]
      %v746 = vld [vmem:[%s729 + $0x40] sm:$0xf]
      %v747 = vld [vmem:[%s729 + $0x44] sm:$0xf]
      %v748 = vld [vmem:[%s729 + $0x48] sm:$0xf]
      %v749 = vld [vmem:[%s729 + $0x4c] sm:$0xf]
      %v750 = vld [vmem:[%s729 + $0x50] sm:$0xf]
      %v751 = vld [vmem:[%s729 + $0x54] sm:$0xf]
      %v752 = vld [vmem:[%s729 + $0x58] sm:$0xf]
      %v753 = vld [vmem:[%s729 + $0x5c] sm:$0xf]
      %v754 = vld [vmem:[%s729 + $0x60] sm:$0xf]
      %v755 = vld [vmem:[%s729 + $0x64] sm:$0xf]
      %v756 = vld [vmem:[%s729 + $0x68] sm:$0xf]
      %v757 = vld [vmem:[%s729 + $0x6c] sm:$0xf]
      %v758 = vld [vmem:[%s729 + $0x70] sm:$0xf]
      %v759 = vld [vmem:[%s729 + $0x74] sm:$0xf]
      %v760 = vld [vmem:[%s729 + $0x78] sm:$0xf]
      %v761 = vld [vmem:[%s729 + $0x7c] sm:$0xf]
      %v762 = vld [vmem:[%s729 + $0x80] sm:$0xf]
      %v763 = vld [vmem:[%s729 + $0x84] sm:$0xf]
      %v764 = vld [vmem:[%s729 + $0x88] sm:$0xf]
      %v765 = vld [vmem:[%s729 + $0x8c] sm:$0xf]
      %v766 = vld [vmem:[%s729 + $0x90] sm:$0xf]
      %v767 = vld [vmem:[%s729 + $0x94] sm:$0xf]
      %v768 = vld [vmem:[%s729 + $0x98] sm:$0xf]
      %v769 = vld [vmem:[%s729 + $0x9c] sm:$0xf]
      %v770 = vld [vmem:[%s729 + $0xa0] sm:$0xf]
      %v771 = vld [vmem:[%s729 + $0xa4] sm:$0xf]
      %v772 = vld [vmem:[%s729 + $0xa8] sm:$0xf]
      %v773 = vld [vmem:[%s729 + $0xac] sm:$0xf]
      %v774 = vld [vmem:[%s729 + $0xb0] sm:$0xf]
      %v775 = vld [vmem:[%s729 + $0xb4] sm:$0xf]
      %v776 = vld [vmem:[%s729 + $0xb8] sm:$0xf]
      %v777 = vld [vmem:[%s729 + $0xbc] sm:$0xf]
      %v780 = vunpack.c.l.b16 %v727
      %v781 = vunpack.c.h.b16 %v727
      %v782 = vunpack.c.l.b16 %v728
      %v783 = vpack.c.b16 %v780, %v314
      %v784 = vpack.c.b16 %v781, %v315
      %v785 = vpack.c.b16 %v782, %v316
      %v837 = vunpack.c.l.b16 %v730
      %v838 = vunpack.c.l.b16 %v731
      %v839 = vunpack.c.l.b16 %v732
      %v840 = vunpack.c.l.b16 %v733
      %v841 = vunpack.c.l.b16 %v734
      %v842 = vunpack.c.l.b16 %v735
      %v843 = vunpack.c.l.b16 %v736
      %v844 = vunpack.c.l.b16 %v737
      %v845 = vunpack.c.l.b16 %v738
      %v846 = vunpack.c.l.b16 %v739
      %v847 = vunpack.c.l.b16 %v740
      %v848 = vunpack.c.l.b16 %v741
      %v849 = vunpack.c.l.b16 %v742
      %v850 = vunpack.c.l.b16 %v743
      %v851 = vunpack.c.l.b16 %v744
      %v852 = vunpack.c.l.b16 %v745
      %v853 = vunpack.c.l.b16 %v746
      %v854 = vunpack.c.l.b16 %v747
      %v855 = vunpack.c.l.b16 %v748
      %v856 = vunpack.c.l.b16 %v749
      %v857 = vunpack.c.l.b16 %v750
      %v858 = vunpack.c.l.b16 %v751
      %v859 = vunpack.c.l.b16 %v752
      %v860 = vunpack.c.l.b16 %v753
      %v861 = vunpack.c.l.b16 %v754
      %v862 = vunpack.c.l.b16 %v755
      %v863 = vunpack.c.l.b16 %v756
      %v864 = vunpack.c.l.b16 %v757
      %v865 = vunpack.c.l.b16 %v758
      %v866 = vunpack.c.l.b16 %v759
      %v867 = vunpack.c.l.b16 %v760
      %v868 = vunpack.c.l.b16 %v761
      %v869 = vunpack.c.l.b16 %v762
      %v870 = vunpack.c.l.b16 %v763
      %v871 = vunpack.c.l.b16 %v764
      %v872 = vunpack.c.l.b16 %v765
      %v873 = vunpack.c.l.b16 %v766
      %v874 = vunpack.c.l.b16 %v767
      %v875 = vunpack.c.l.b16 %v768
      %v876 = vunpack.c.l.b16 %v769
      %v877 = vunpack.c.l.b16 %v770
      %v878 = vunpack.c.l.b16 %v771
      %v879 = vunpack.c.l.b16 %v772
      %v880 = vunpack.c.l.b16 %v773
      %v881 = vunpack.c.l.b16 %v774
      %v882 = vunpack.c.l.b16 %v775
      %v883 = vunpack.c.l.b16 %v776
      %v884 = vunpack.c.l.b16 %v777
      %v885 = vpack.c.b16 %v838, %v837
      %v886 = vpack.c.b16 %v840, %v839
      %v887 = vpack.c.b16 %v842, %v841
      %v888 = vpack.c.b16 %v844, %v843
      %v889 = vpack.c.b16 %v846, %v845
      %v890 = vpack.c.b16 %v848, %v847
      %v891 = vpack.c.b16 %v850, %v849
      %v892 = vpack.c.b16 %v852, %v851
      %v893 = vpack.c.b16 %v854, %v853
      %v894 = vpack.c.b16 %v856, %v855
      %v895 = vpack.c.b16 %v858, %v857
      %v896 = vpack.c.b16 %v860, %v859
      %v897 = vpack.c.b16 %v862, %v861
      %v898 = vpack.c.b16 %v864, %v863
      %v899 = vpack.c.b16 %v866, %v865
      %v900 = vpack.c.b16 %v868, %v867
      %v901 = vpack.c.b16 %v870, %v869
      %v902 = vpack.c.b16 %v872, %v871
      %v903 = vpack.c.b16 %v874, %v873
      %v904 = vpack.c.b16 %v876, %v875
      %v905 = vpack.c.b16 %v878, %v877
      %v906 = vpack.c.b16 %v880, %v879
      %v907 = vpack.c.b16 %v882, %v881
      %v908 = vpack.c.b16 %v884, %v883
      %933 = vmatpush.bf16.msra.mxu0 %v892
      %934 = vmatpush.bf16.msra.mxu0 %v891
      %935 = vmatpush.bf16.msra.mxu0 %v890
      %936 = vmatpush.bf16.msra.mxu0 %v889
      %937 = vmatpush.bf16.msra.mxu0 %v888
      %938 = vmatpush.bf16.msra.mxu0 %v887
      %939 = vmatpush.bf16.msra.mxu0 %v886
      %940 = vmatpush.bf16.msra.mxu0 %v885
      %941 = vmatmul.bf16.gmra.mxu0 %v783
      %v942 = vpop.f32.mrf.mxu0
      %v943 = vadd.f32 0.0, %v942
      %v944 = vpop.f32.mrf.mxu0
      %v945 = vadd.f32 0.0, %v944
      %946 = vdwg.mxu0
      %947 = vmatpush.bf16.msra.mxu0 %v900
      %948 = vmatpush.bf16.msra.mxu0 %v899
      %949 = vmatpush.bf16.msra.mxu0 %v898
      %950 = vmatpush.bf16.msra.mxu0 %v897
      %951 = vmatpush.bf16.msra.mxu0 %v896
      %952 = vmatpush.bf16.msra.mxu0 %v895
      %953 = vmatpush.bf16.msra.mxu0 %v894
      %954 = vmatpush.bf16.msra.mxu0 %v893
      %955 = vmatmul.bf16.gmra.mxu0 %v784
      %v956 = vpop.f32.mrf.mxu0
      %v957 = vadd.f32 %v943, %v956
      %v958 = vpop.f32.mrf.mxu0
      %v959 = vadd.f32 %v945, %v958
      %960 = vdwg.mxu0
      %961 = vmatpush.bf16.msra.mxu0 %v908
      %962 = vmatpush.bf16.msra.mxu0 %v907
      %963 = vmatpush.bf16.msra.mxu0 %v906
      %964 = vmatpush.bf16.msra.mxu0 %v905
      %965 = vmatpush.bf16.msra.mxu0 %v904
      %966 = vmatpush.bf16.msra.mxu0 %v903
      %967 = vmatpush.bf16.msra.mxu0 %v902
      %968 = vmatpush.bf16.msra.mxu0 %v901
      %969 = vmatmul.bf16.gmra.mxu0 %v785
      %v970 = vpop.f32.mrf.mxu0
      %v971 = vadd.f32 %v957, %v970
      %v972 = vpop.f32.mrf.mxu0
      %v973 = vadd.f32 %v959, %v972
      %974 = vdwg.mxu0
      %v975 = vadd.f32 %v723, %v971
      %v976 = vadd.f32 %v725, %v973
      %v977 = vld [vmem:[%s2] sm:$0x1]
      %v979 = vperm.slane %v977, 0
      %v981 = vmul.f32 %v975, %v979
      %v982 = vmul.f32 %v976, %v979
      %v983 = vld [vmem:[%s3] sm:$0x1]
      %v985 = vperm.slane %v983, 0
      %v987 = vadd.f32 %v981, %v985
      %v988 = vadd.f32 %v982, %v985
      %v989 = vmax.f32 %v987, 0.0
      %v990 = vmax.f32 %v988, 0.0
      %v991 = vpack.c.bf16 %v989, %v989
      %v992 = vpack.c.bf16 %v990, %v990
      %993 = vst [vmem:[%s197] sm:$0xf] %v991
      %994 = vst [vmem:[%s197 + $0x4] sm:$0xf] %v992
      %p995 = scmp.lt.s32.totalorder %s15, 1
      %s996 = scalar_select %p995, %s15, 1
      %s997 = smul.addr %s996, 2
      %s998 = smul.addr %s997, 4
      %s999 = scalar_lea.vmem %s4, %s998
      // Predicated region
      $region37: #{unet9_logsigmoid_forward.17} parent=35 // pred_check
        %p1000 = pneg %p122
      $region38: #{unet9_logsigmoid_forward.17} parent=35 // pred_check_branch
        %1002 = sbr.rel (%p1000) target = $region40
      $region39: #{unet9_logsigmoid_forward.17} parent=35 // pred_region
        _
      $region40: #{unet9_logsigmoid_forward.17} parent=35 // pred_fallthru
        _
    $region36: #{unet9_logsigmoid_forward.17} parent=5 // pred_fallthru
      _
    %p1003 = scmp.le.s32.totalorder 2, %s10
    // Predicated region
    $region41: #{unet9_logsigmoid_forward.17} parent=5 // pred_check
      %p1004 = pneg %p1003
    $region42: #{unet9_logsigmoid_forward.17} parent=5 // pred_check_branch
      %1006 = sbr.rel (%p1004) target = $region44
    $region43: #{unet9_logsigmoid_forward.17} parent=5 // pred_region
      %s1007 = ssub.s32 %s10, 2
      // Predicated region
      $region45: #{unet9_logsigmoid_forward.17} parent=43 // pred_check
        %p1008 = pneg %p128
      $region46: #{unet9_logsigmoid_forward.17} parent=43 // pred_check_branch
        %1010 = sbr.rel (%p1008) target = $region48
      $region47: #{unet9_logsigmoid_forward.17} parent=43 // pred_region
        %p1011 = scmp.lt.s32.totalorder %s16, 1
        %s1012 = scalar_select %p1011, %s16, 1
        %s1013 = smul.addr %s1012, 2
        %s1014 = smul.addr %s1013, 4
        %s1015 = scalar_lea.vmem %s4, %s1014
      $region48: #{unet9_logsigmoid_forward.17} parent=43 // pred_fallthru
        _
    $region44: #{unet9_logsigmoid_forward.17} parent=5 // pred_fallthru
      _
  $region6: #{unet9_logsigmoid_forward.17} parent=0 // loop_footer
    %s14 = sadd.s32 1, %s10
  $region7: #{unet9_logsigmoid_forward.17} parent=0 // loop_footer_branch
    %9 = sbr.rel target = $region3
  $region8: #{unet9_logsigmoid_forward.17} parent=0 // loop_exit
    _

// kernel: unet9_logsigmoid_forward.20
$region0: #{unet9_logsigmoid_forward.20}
  #allocation0 [shape = 'u32[]', space=smem, size = 0x4, offset = 0x4, fixed_abs, tag = 'smem constant byte address 0x4 - core index']
  #allocation1 [shape = 'u32[72,128]{1,0:T(1,128)}', space=vmem, size = 0x9000, scoped, tag = 'internal scratch']
  %s0 = inlined_call_operand.vmem [shape: bf16[128,128], index: 0, kind: input, shape index: {}]
  %s1 = inlined_call_operand.vmem [shape: bf16[128,128], index: 1, kind: input, shape index: {}]
  %s2 = inlined_call_operand.vmem [shape: bf16[128,128], index: 2, kind: input, shape index: {}]
  %s3 = inlined_call_operand.vmem [shape: bf16[128,128], index: 3, kind: input, shape index: {}]
  %s4 = inlined_call_operand.vmem [shape: bf16[128,128], index: 4, kind: output, shape index: {}]
  %s5 = sld [smem:[#allocation0]]
  $region26: #{unet9_logsigmoid_forward.20} parent=0
    _
  %s7 = ssub.s32 1, %s5
  %s8 = scalar_select 0, %s7, %s5
  // Predicated region
  $region2: #{unet9_logsigmoid_forward.20} parent=0 // pred_check
    _
  $region3: #{unet9_logsigmoid_forward.20} parent=0 // pred_check_branch
    %10 = sbr.rel (0) target = $region5
  $region4: #{unet9_logsigmoid_forward.20} parent=0 // pred_region
    _
  $region5: #{unet9_logsigmoid_forward.20} parent=0 // pred_fallthru
    _
  // Predicated region
  $region6: #{unet9_logsigmoid_forward.20} parent=0 // pred_check
    _
  $region7: #{unet9_logsigmoid_forward.20} parent=0 // pred_check_branch
    %12 = sbr.rel (0) target = $region9
  $region8: #{unet9_logsigmoid_forward.20} parent=0 // pred_region
    _
  $region9: #{unet9_logsigmoid_forward.20} parent=0 // pred_fallthru
    _
  // Predicated region
  $region10: #{unet9_logsigmoid_forward.20} parent=0 // pred_check
    _
  $region11: #{unet9_logsigmoid_forward.20} parent=0 // pred_check_branch
    %14 = sbr.rel (0) target = $region13
  $region12: #{unet9_logsigmoid_forward.20} parent=0 // pred_region
    _
  $region13: #{unet9_logsigmoid_forward.20} parent=0 // pred_fallthru
    _
  // Predicated region
  $region14: #{unet9_logsigmoid_forward.20} parent=0 // pred_check
    _
  $region15: #{unet9_logsigmoid_forward.20} parent=0 // pred_check_branch
    %16 = sbr.rel (0) target = $region17
  $region16: #{unet9_logsigmoid_forward.20} parent=0 // pred_region
    _
  $region17: #{unet9_logsigmoid_forward.20} parent=0 // pred_fallthru
    _
  %v17 = vld [vmem:[%s0] sm:$0xf]
  %v18 = vld [vmem:[%s0 + $0x4] sm:$0xf]
  %v19 = vld [vmem:[%s0 + $0x8] sm:$0xf]
  %v20 = vld [vmem:[%s0 + $0xc] sm:$0xf]
  %v21 = vld [vmem:[%s0 + $0x10] sm:$0xf]
  %v22 = vld [vmem:[%s0 + $0x14] sm:$0xf]
  %v23 = vld [vmem:[%s0 + $0x18] sm:$0xf]
  %v24 = vld [vmem:[%s0 + $0x1c] sm:$0xf]
  %v25 = vld [vmem:[%s0 + $0x20] sm:$0xf]
  %v26 = vld [vmem:[%s0 + $0x24] sm:$0xf]
  %v27 = vld [vmem:[%s0 + $0x28] sm:$0xf]
  %v28 = vld [vmem:[%s0 + $0x2c] sm:$0xf]
  %v29 = vld [vmem:[%s0 + $0x30] sm:$0xf]
  %v30 = vld [vmem:[%s0 + $0x34] sm:$0xf]
  %v31 = vld [vmem:[%s0 + $0x38] sm:$0xf]
  %v32 = vld [vmem:[%s0 + $0x3c] sm:$0xf]
  %v33 = vld [vmem:[%s2] sm:$0xf]
  %v34 = vld [vmem:[%s2 + $0x4] sm:$0xf]
  %v35 = vld [vmem:[%s2 + $0x8] sm:$0xf]
  %v36 = vld [vmem:[%s2 + $0xc] sm:$0xf]
  %v37 = vld [vmem:[%s2 + $0x10] sm:$0xf]
  %v38 = vld [vmem:[%s2 + $0x14] sm:$0xf]
  %v39 = vld [vmem:[%s2 + $0x18] sm:$0xf]
  %v40 = vld [vmem:[%s2 + $0x1c] sm:$0xf]
  %v41 = vld [vmem:[%s2 + $0x20] sm:$0xf]
  %v42 = vld [vmem:[%s2 + $0x24] sm:$0xf]
  %v43 = vld [vmem:[%s2 + $0x28] sm:$0xf]
  %v44 = vld [vmem:[%s2 + $0x2c] sm:$0xf]
  %v45 = vld [vmem:[%s2 + $0x30] sm:$0xf]
  %v46 = vld [vmem:[%s2 + $0x34] sm:$0xf]
  %v47 = vld [vmem:[%s2 + $0x38] sm:$0xf]
  %v48 = vld [vmem:[%s2 + $0x3c] sm:$0xf]
  %v49 = vld [vmem:[%s1] sm:$0xf]
  %v50 = vld [vmem:[%s1 + $0x4] sm:$0xf]
  %v51 = vld [vmem:[%s1 + $0x8] sm:$0xf]
  %v52 = vld [vmem:[%s1 + $0xc] sm:$0xf]
  %v53 = vld [vmem:[%s1 + $0x10] sm:$0xf]
  %v54 = vld [vmem:[%s1 + $0x14] sm:$0xf]
  %v55 = vld [vmem:[%s1 + $0x18] sm:$0xf]
  %v56 = vld [vmem:[%s1 + $0x1c] sm:$0xf]
  %v57 = vld [vmem:[%s1 + $0x20] sm:$0xf]
  %v58 = vld [vmem:[%s1 + $0x24] sm:$0xf]
  %v59 = vld [vmem:[%s1 + $0x28] sm:$0xf]
  %v60 = vld [vmem:[%s1 + $0x2c] sm:$0xf]
  %v61 = vld [vmem:[%s1 + $0x30] sm:$0xf]
  %v62 = vld [vmem:[%s1 + $0x34] sm:$0xf]
  %v63 = vld [vmem:[%s1 + $0x38] sm:$0xf]
  %v64 = vld [vmem:[%s1 + $0x3c] sm:$0xf]
  %v65 = vld [vmem:[%s3] sm:$0xf]
  %v66 = vld [vmem:[%s3 + $0x4] sm:$0xf]
  %v67 = vld [vmem:[%s3 + $0x8] sm:$0xf]
  %v68 = vld [vmem:[%s3 + $0xc] sm:$0xf]
  %v69 = vld [vmem:[%s3 + $0x10] sm:$0xf]
  %v70 = vld [vmem:[%s3 + $0x14] sm:$0xf]
  %v71 = vld [vmem:[%s3 + $0x18] sm:$0xf]
  %v72 = vld [vmem:[%s3 + $0x1c] sm:$0xf]
  %v73 = vld [vmem:[%s3 + $0x20] sm:$0xf]
  %v74 = vld [vmem:[%s3 + $0x24] sm:$0xf]
  %v75 = vld [vmem:[%s3 + $0x28] sm:$0xf]
  %v76 = vld [vmem:[%s3 + $0x2c] sm:$0xf]
  %v77 = vld [vmem:[%s3 + $0x30] sm:$0xf]
  %v78 = vld [vmem:[%s3 + $0x34] sm:$0xf]
  %v79 = vld [vmem:[%s3 + $0x38] sm:$0xf]
  %v80 = vld [vmem:[%s3 + $0x3c] sm:$0xf]
  %v97 = vunpack.c.l.b16 %v49
  %v98 = vunpack.c.l.b16 %v50
  %v99 = vunpack.c.l.b16 %v51
  %v100 = vunpack.c.l.b16 %v52
  %v101 = vunpack.c.l.b16 %v53
  %v102 = vunpack.c.l.b16 %v54
  %v103 = vunpack.c.l.b16 %v55
  %v104 = vunpack.c.l.b16 %v56
  %v105 = vunpack.c.l.b16 %v57
  %v106 = vunpack.c.l.b16 %v58
  %v107 = vunpack.c.l.b16 %v59
  %v108 = vunpack.c.l.b16 %v60
  %v109 = vunpack.c.l.b16 %v61
  %v110 = vunpack.c.l.b16 %v62
  %v111 = vunpack.c.l.b16 %v63
  %v112 = vunpack.c.l.b16 %v64
  %v113 = vpack.c.b16 %v98, %v97
  %v114 = vpack.c.b16 %v100, %v99
  %v115 = vpack.c.b16 %v102, %v101
  %v116 = vpack.c.b16 %v104, %v103
  %v117 = vpack.c.b16 %v106, %v105
  %v118 = vpack.c.b16 %v108, %v107
  %v119 = vpack.c.b16 %v110, %v109
  %v120 = vpack.c.b16 %v112, %v111
  %v145 = vunpack.c.l.b16 %v65
  %v146 = vunpack.c.l.b16 %v66
  %v147 = vunpack.c.l.b16 %v67
  %v148 = vunpack.c.l.b16 %v68
  %v149 = vunpack.c.l.b16 %v69
  %v150 = vunpack.c.l.b16 %v70
  %v151 = vunpack.c.l.b16 %v71
  %v152 = vunpack.c.l.b16 %v72
  %v153 = vunpack.c.l.b16 %v73
  %v154 = vunpack.c.l.b16 %v74
  %v155 = vunpack.c.l.b16 %v75
  %v156 = vunpack.c.l.b16 %v76
  %v157 = vunpack.c.l.b16 %v77
  %v158 = vunpack.c.l.b16 %v78
  %v159 = vunpack.c.l.b16 %v79
  %v160 = vunpack.c.l.b16 %v80
  %v161 = vpack.c.b16 %v146, %v145
  %v162 = vpack.c.b16 %v148, %v147
  %v163 = vpack.c.b16 %v150, %v149
  %v164 = vpack.c.b16 %v152, %v151
  %v165 = vpack.c.b16 %v154, %v153
  %v166 = vpack.c.b16 %v156, %v155
  %v167 = vpack.c.b16 %v158, %v157
  %v168 = vpack.c.b16 %v160, %v159
  %177 = vmatpush.bf16.msra.mxu0 %v168
  %178 = vmatpush.bf16.msra.mxu0 %v167
  %179 = vmatpush.bf16.msra.mxu0 %v166
  %180 = vmatpush.bf16.msra.mxu0 %v165
  %181 = vmatpush.bf16.msra.mxu0 %v164
  %182 = vmatpush.bf16.msra.mxu0 %v163
  %183 = vmatpush.bf16.msra.mxu0 %v162
  %184 = vmatpush.bf16.msra.mxu0 %v161
  %185 = vmatmul.bf16.gmra.mxu0 %v113
  %v186 = vpop.f32.mrf.mxu0
  %v187 = vadd.f32 0.0, %v186
  %v188 = vpop.f32.mrf.mxu0
  %v189 = vadd.f32 0.0, %v188
  %190 = vmatmul.bf16.gmra.mxu0 %v114
  %v191 = vpop.f32.mrf.mxu0
  %v192 = vadd.f32 0.0, %v191
  %v193 = vpop.f32.mrf.mxu0
  %v194 = vadd.f32 0.0, %v193
  %195 = vmatmul.bf16.gmra.mxu0 %v115
  %v196 = vpop.f32.mrf.mxu0
  %v197 = vadd.f32 0.0, %v196
  %v198 = vpop.f32.mrf.mxu0
  %v199 = vadd.f32 0.0, %v198
  %200 = vmatmul.bf16.gmra.mxu0 %v116
  %v201 = vpop.f32.mrf.mxu0
  %v202 = vadd.f32 0.0, %v201
  %v203 = vpop.f32.mrf.mxu0
  %v204 = vadd.f32 0.0, %v203
  %205 = vmatmul.bf16.gmra.mxu0 %v117
  %v206 = vpop.f32.mrf.mxu0
  %v207 = vadd.f32 0.0, %v206
  %v208 = vpop.f32.mrf.mxu0
  %v209 = vadd.f32 0.0, %v208
  %210 = vmatmul.bf16.gmra.mxu0 %v118
  %v211 = vpop.f32.mrf.mxu0
  %v212 = vadd.f32 0.0, %v211
  %v213 = vpop.f32.mrf.mxu0
  %v214 = vadd.f32 0.0, %v213
  %215 = vmatmul.bf16.gmra.mxu0 %v119
  %v216 = vpop.f32.mrf.mxu0
  %v217 = vadd.f32 0.0, %v216
  %v218 = vpop.f32.mrf.mxu0
  %v219 = vadd.f32 0.0, %v218
  %220 = vmatmul.bf16.gmra.mxu0 %v120
  %v221 = vpop.f32.mrf.mxu0
  %v222 = vadd.f32 0.0, %v221
  %v223 = vpop.f32.mrf.mxu0
  %v224 = vadd.f32 0.0, %v223
  %225 = vdwg.mxu0
  %v242 = vunpack.c.l.b16 %v17
  %v243 = vunpack.c.l.b16 %v18
  %v244 = vunpack.c.l.b16 %v19
  %v245 = vunpack.c.l.b16 %v20
  %v246 = vunpack.c.l.b16 %v21
  %v247 = vunpack.c.l.b16 %v22
  %v248 = vunpack.c.l.b16 %v23
  %v249 = vunpack.c.l.b16 %v24
  %v250 = vunpack.c.l.b16 %v25
  %v251 = vunpack.c.l.b16 %v26
  %v252 = vunpack.c.l.b16 %v27
  %v253 = vunpack.c.l.b16 %v28
  %v254 = vunpack.c.l.b16 %v29
  %v255 = vunpack.c.l.b16 %v30
  %v256 = vunpack.c.l.b16 %v31
  %v257 = vunpack.c.l.b16 %v32
  %v258 = vpack.c.b16 %v243, %v242
  %v259 = vpack.c.b16 %v245, %v244
  %v260 = vpack.c.b16 %v247, %v246
  %v261 = vpack.c.b16 %v249, %v248
  %v262 = vpack.c.b16 %v251, %v250
  %v263 = vpack.c.b16 %v253, %v252
  %v264 = vpack.c.b16 %v255, %v254
  %v265 = vpack.c.b16 %v257, %v256
  %v290 = vunpack.c.l.b16 %v33
  %v291 = vunpack.c.l.b16 %v34
  %v292 = vunpack.c.l.b16 %v35
  %v293 = vunpack.c.l.b16 %v36
  %v294 = vunpack.c.l.b16 %v37
  %v295 = vunpack.c.l.b16 %v38
  %v296 = vunpack.c.l.b16 %v39
  %v297 = vunpack.c.l.b16 %v40
  %v298 = vunpack.c.l.b16 %v41
  %v299 = vunpack.c.l.b16 %v42
  %v300 = vunpack.c.l.b16 %v43
  %v301 = vunpack.c.l.b16 %v44
  %v302 = vunpack.c.l.b16 %v45
  %v303 = vunpack.c.l.b16 %v46
  %v304 = vunpack.c.l.b16 %v47
  %v305 = vunpack.c.l.b16 %v48
  %v306 = vpack.c.b16 %v291, %v290
  %v307 = vpack.c.b16 %v293, %v292
  %v308 = vpack.c.b16 %v295, %v294
  %v309 = vpack.c.b16 %v297, %v296
  %v310 = vpack.c.b16 %v299, %v298
  %v311 = vpack.c.b16 %v301, %v300
  %v312 = vpack.c.b16 %v303, %v302
  %v313 = vpack.c.b16 %v305, %v304
  %322 = vmatpush.bf16.msra.mxu0 %v313
  %323 = vmatpush.bf16.msra.mxu0 %v312
  %324 = vmatpush.bf16.msra.mxu0 %v311
  %325 = vmatpush.bf16.msra.mxu0 %v310
  %326 = vmatpush.bf16.msra.mxu0 %v309
  %327 = vmatpush.bf16.msra.mxu0 %v308
  %328 = vmatpush.bf16.msra.mxu0 %v307
  %329 = vmatpush.bf16.msra.mxu0 %v306
  %330 = vmatmul.bf16.gmra.mxu0 %v258
  %v331 = vpop.f32.mrf.mxu0
  %v332 = vadd.f32 %v187, %v331
  %v333 = vpop.f32.mrf.mxu0
  %v334 = vadd.f32 %v189, %v333
  %335 = vmatmul.bf16.gmra.mxu0 %v259
  %v336 = vpop.f32.mrf.mxu0
  %v337 = vadd.f32 %v192, %v336
  %v338 = vpop.f32.mrf.mxu0
  %v339 = vadd.f32 %v194, %v338
  %340 = vmatmul.bf16.gmra.mxu0 %v260
  %v341 = vpop.f32.mrf.mxu0
  %v342 = vadd.f32 %v197, %v341
  %v343 = vpop.f32.mrf.mxu0
  %v344 = vadd.f32 %v199, %v343
  %345 = vmatmul.bf16.gmra.mxu0 %v261
  %v346 = vpop.f32.mrf.mxu0
  %v347 = vadd.f32 %v202, %v346
  %v348 = vpop.f32.mrf.mxu0
  %v349 = vadd.f32 %v204, %v348
  %350 = vmatmul.bf16.gmra.mxu0 %v262
  %v351 = vpop.f32.mrf.mxu0
  %v352 = vadd.f32 %v207, %v351
  %v353 = vpop.f32.mrf.mxu0
  %v354 = vadd.f32 %v209, %v353
  %355 = vmatmul.bf16.gmra.mxu0 %v263
  %v356 = vpop.f32.mrf.mxu0
  %v357 = vadd.f32 %v212, %v356
  %v358 = vpop.f32.mrf.mxu0
  %v359 = vadd.f32 %v214, %v358
  %360 = vmatmul.bf16.gmra.mxu0 %v264
  %v361 = vpop.f32.mrf.mxu0
  %v362 = vadd.f32 %v217, %v361
  %v363 = vpop.f32.mrf.mxu0
  %v364 = vadd.f32 %v219, %v363
  %365 = vmatmul.bf16.gmra.mxu0 %v265
  %v366 = vpop.f32.mrf.mxu0
  %v367 = vadd.f32 %v222, %v366
  %v368 = vpop.f32.mrf.mxu0
  %v369 = vadd.f32 %v224, %v368
  %370 = vdwg.mxu0
  %v371 = vpack.c.bf16 %v332, %v332
  %v372 = vpack.c.bf16 %v334, %v334
  %v373 = vpack.c.bf16 %v337, %v337
  %v374 = vpack.c.bf16 %v339, %v339
  %v375 = vpack.c.bf16 %v342, %v342
  %v376 = vpack.c.bf16 %v344, %v344
  %v377 = vpack.c.bf16 %v347, %v347
  %v378 = vpack.c.bf16 %v349, %v349
  %v379 = vpack.c.bf16 %v352, %v352
  %v380 = vpack.c.bf16 %v354, %v354
  %v381 = vpack.c.bf16 %v357, %v357
  %v382 = vpack.c.bf16 %v359, %v359
  %v383 = vpack.c.bf16 %v362, %v362
  %v384 = vpack.c.bf16 %v364, %v364
  %v385 = vpack.c.bf16 %v367, %v367
  %v386 = vpack.c.bf16 %v369, %v369
  %387 = vst [vmem:[%s4] sm:$0xf] %v371
  %388 = vst [vmem:[%s4 + $0x4] sm:$0xf] %v372
  %389 = vst [vmem:[%s4 + $0x8] sm:$0xf] %v373
  %390 = vst [vmem:[%s4 + $0xc] sm:$0xf] %v374
  %391 = vst [vmem:[%s4 + $0x10] sm:$0xf] %v375
  %392 = vst [vmem:[%s4 + $0x14] sm:$0xf] %v376
  %393 = vst [vmem:[%s4 + $0x18] sm:$0xf] %v377
  %394 = vst [vmem:[%s4 + $0x1c] sm:$0xf] %v378
  %395 = vst [vmem:[%s4 + $0x20] sm:$0xf] %v379
  %396 = vst [vmem:[%s4 + $0x24] sm:$0xf] %v380
  %397 = vst [vmem:[%s4 + $0x28] sm:$0xf] %v381
  %398 = vst [vmem:[%s4 + $0x2c] sm:$0xf] %v382
  %399 = vst [vmem:[%s4 + $0x30] sm:$0xf] %v383
  %400 = vst [vmem:[%s4 + $0x34] sm:$0xf] %v384
  %401 = vst [vmem:[%s4 + $0x38] sm:$0xf] %v385
  %402 = vst [vmem:[%s4 + $0x3c] sm:$0xf] %v386
  // Predicated region
  $region18: #{unet9_logsigmoid_forward.20} parent=0 // pred_check
    _
  $region19: #{unet9_logsigmoid_forward.20} parent=0 // pred_check_branch
    %404 = sbr.rel (0) target = $region21
  $region20: #{unet9_logsigmoid_forward.20} parent=0 // pred_region
    _
  $region21: #{unet9_logsigmoid_forward.20} parent=0 // pred_fallthru
    _
  // Predicated region
  $region22: #{unet9_logsigmoid_forward.20} parent=0 // pred_check
    _
  $region23: #{unet9_logsigmoid_forward.20} parent=0 // pred_check_branch
    %406 = sbr.rel (0) target = $region25
  $region24: #{unet9_logsigmoid_forward.20} parent=0 // pred_region
    _
  $region25: #{unet9_logsigmoid_forward.20} parent=0 // pred_fallthru
    _

// kernel: unet9_logsigmoid_forward.21
$region0: #{unet9_logsigmoid_forward.21}
  #allocation0 [shape = 'u32[]', space=smem, size = 0x4, offset = 0x4, fixed_abs, tag = 'smem constant byte address 0x4 - core index']
  #allocation1 [shape = 'u32[72,128]{1,0:T(1,128)}', space=vmem, size = 0x9000, scoped, tag = 'internal scratch']
  %s0 = inlined_call_operand.vmem [shape: bf16[128,128], index: 0, kind: input, shape index: {}]
  %s1 = inlined_call_operand.vmem [shape: bf16[128,512], index: 1, kind: input, shape index: {}]
  %s2 = inlined_call_operand.vmem [shape: f32[1,512], index: 2, kind: input, shape index: {}]
  %s3 = inlined_call_operand.vmem [shape: bf16[128,512], index: 3, kind: output, shape index: {}]
  %s4 = sld [smem:[#allocation0]]
  $region22: #{unet9_logsigmoid_forward.21} parent=0
    _
  %s6 = ssub.s32 1, %s4
  %s7 = scalar_select 0, %s6, %s4
  // Predicated region
  $region2: #{unet9_logsigmoid_forward.21} parent=0 // pred_check
    _
  $region3: #{unet9_logsigmoid_forward.21} parent=0 // pred_check_branch
    %9 = sbr.rel (0) target = $region5
  $region4: #{unet9_logsigmoid_forward.21} parent=0 // pred_region
    _
  $region5: #{unet9_logsigmoid_forward.21} parent=0 // pred_fallthru
    _
  // Predicated region
  $region6: #{unet9_logsigmoid_forward.21} parent=0 // pred_check
    _
  $region7: #{unet9_logsigmoid_forward.21} parent=0 // pred_check_branch
    %11 = sbr.rel (0) target = $region9
  $region8: #{unet9_logsigmoid_forward.21} parent=0 // pred_region
    _
  $region9: #{unet9_logsigmoid_forward.21} parent=0 // pred_fallthru
    _
  // Predicated region
  $region10: #{unet9_logsigmoid_forward.21} parent=0 // pred_check
    _
  $region11: #{unet9_logsigmoid_forward.21} parent=0 // pred_check_branch
    %13 = sbr.rel (0) target = $region13
  $region12: #{unet9_logsigmoid_forward.21} parent=0 // pred_region
    _
  $region13: #{unet9_logsigmoid_forward.21} parent=0 // pred_fallthru
    _
  %v14 = vld [vmem:[%s0] sm:$0xf]
  %v15 = vld [vmem:[%s0 + $0x4] sm:$0xf]
  %v16 = vld [vmem:[%s0 + $0x8] sm:$0xf]
  %v17 = vld [vmem:[%s0 + $0xc] sm:$0xf]
  %v18 = vld [vmem:[%s0 + $0x10] sm:$0xf]
  %v19 = vld [vmem:[%s0 + $0x14] sm:$0xf]
  %v20 = vld [vmem:[%s0 + $0x18] sm:$0xf]
  %v21 = vld [vmem:[%s0 + $0x1c] sm:$0xf]
  %v22 = vld [vmem:[%s0 + $0x20] sm:$0xf]
  %v23 = vld [vmem:[%s0 + $0x24] sm:$0xf]
  %v24 = vld [vmem:[%s0 + $0x28] sm:$0xf]
  %v25 = vld [vmem:[%s0 + $0x2c] sm:$0xf]
  %v26 = vld [vmem:[%s0 + $0x30] sm:$0xf]
  %v27 = vld [vmem:[%s0 + $0x34] sm:$0xf]
  %v28 = vld [vmem:[%s0 + $0x38] sm:$0xf]
  %v29 = vld [vmem:[%s0 + $0x3c] sm:$0xf]
  %v30 = vld [vmem:[%s1] sm:$0xff]
  %v31 = vld [vmem:[%s1 + $0x8] sm:$0xff]
  %v32 = vld [vmem:[%s1 + $0x10] sm:$0xff]
  %v33 = vld [vmem:[%s1 + $0x18] sm:$0xff]
  %v34 = vld [vmem:[%s1 + $0x20] sm:$0xff]
  %v35 = vld [vmem:[%s1 + $0x28] sm:$0xff]
  %v36 = vld [vmem:[%s1 + $0x30] sm:$0xff]
  %v37 = vld [vmem:[%s1 + $0x38] sm:$0xff]
  %v38 = vld [vmem:[%s1 + $0x40] sm:$0xff]
  %v39 = vld [vmem:[%s1 + $0x48] sm:$0xff]
  %v40 = vld [vmem:[%s1 + $0x50] sm:$0xff]
  %v41 = vld [vmem:[%s1 + $0x58] sm:$0xff]
  %v42 = vld [vmem:[%s1 + $0x60] sm:$0xff]
  %v43 = vld [vmem:[%s1 + $0x68] sm:$0xff]
  %v44 = vld [vmem:[%s1 + $0x70] sm:$0xff]
  %v45 = vld [vmem:[%s1 + $0x78] sm:$0xff]
  %v46 = vld [vmem:[%s1 + $0x80] sm:$0xff]
  %v47 = vld [vmem:[%s1 + $0x88] sm:$0xff]
  %v48 = vld [vmem:[%s1 + $0x90] sm:$0xff]
  %v49 = vld [vmem:[%s1 + $0x98] sm:$0xff]
  %v50 = vld [vmem:[%s1 + $0xa0] sm:$0xff]
  %v51 = vld [vmem:[%s1 + $0xa8] sm:$0xff]
  %v52 = vld [vmem:[%s1 + $0xb0] sm:$0xff]
  %v53 = vld [vmem:[%s1 + $0xb8] sm:$0xff]
  %v54 = vld [vmem:[%s1 + $0xc0] sm:$0xff]
  %v55 = vld [vmem:[%s1 + $0xc8] sm:$0xff]
  %v56 = vld [vmem:[%s1 + $0xd0] sm:$0xff]
  %v57 = vld [vmem:[%s1 + $0xd8] sm:$0xff]
  %v58 = vld [vmem:[%s1 + $0xe0] sm:$0xff]
  %v59 = vld [vmem:[%s1 + $0xe8] sm:$0xff]
  %v60 = vld [vmem:[%s1 + $0xf0] sm:$0xff]
  %v61 = vld [vmem:[%s1 + $0xf8] sm:$0xff]
  %v62 = vld [vmem:[%s2] sm:$0xf]
  %v64 = vperm.slane %v62, 0
  %v65 = vperm.slane %v62, 1
  %v66 = vperm.slane %v62, 2
  %v67 = vperm.slane %v62, 3
  %v88 = vunpack.c.l.b16 %v14
  %v89 = vunpack.c.l.b16 %v15
  %v90 = vunpack.c.l.b16 %v16
  %v91 = vunpack.c.l.b16 %v17
  %v92 = vunpack.c.l.b16 %v18
  %v93 = vunpack.c.l.b16 %v19
  %v94 = vunpack.c.l.b16 %v20
  %v95 = vunpack.c.l.b16 %v21
  %v96 = vunpack.c.l.b16 %v22
  %v97 = vunpack.c.l.b16 %v23
  %v98 = vunpack.c.l.b16 %v24
  %v99 = vunpack.c.l.b16 %v25
  %v100 = vunpack.c.l.b16 %v26
  %v101 = vunpack.c.l.b16 %v27
  %v102 = vunpack.c.l.b16 %v28
  %v103 = vunpack.c.l.b16 %v29
  %v104 = vpack.c.b16 %v89, %v88
  %v105 = vpack.c.b16 %v91, %v90
  %v106 = vpack.c.b16 %v93, %v92
  %v107 = vpack.c.b16 %v95, %v94
  %v108 = vpack.c.b16 %v97, %v96
  %v109 = vpack.c.b16 %v99, %v98
  %v110 = vpack.c.b16 %v101, %v100
  %v111 = vpack.c.b16 %v103, %v102
  %v152 = vunpack.c.l.b16 %v30
  %v153 = vunpack.c.h.b16 %v30
  %v154 = vunpack.c.l.b16 %v31
  %v155 = vunpack.c.h.b16 %v31
  %v156 = vunpack.c.l.b16 %v32
  %v157 = vunpack.c.h.b16 %v32
  %v158 = vunpack.c.l.b16 %v33
  %v159 = vunpack.c.h.b16 %v33
  %v160 = vunpack.c.l.b16 %v34
  %v161 = vunpack.c.h.b16 %v34
  %v162 = vunpack.c.l.b16 %v35
  %v163 = vunpack.c.h.b16 %v35
  %v164 = vunpack.c.l.b16 %v36
  %v165 = vunpack.c.h.b16 %v36
  %v166 = vunpack.c.l.b16 %v37
  %v167 = vunpack.c.h.b16 %v37
  %v168 = vunpack.c.l.b16 %v38
  %v169 = vunpack.c.h.b16 %v38
  %v170 = vunpack.c.l.b16 %v39
  %v171 = vunpack.c.h.b16 %v39
  %v172 = vunpack.c.l.b16 %v40
  %v173 = vunpack.c.h.b16 %v40
  %v174 = vunpack.c.l.b16 %v41
  %v175 = vunpack.c.h.b16 %v41
  %v176 = vunpack.c.l.b16 %v42
  %v177 = vunpack.c.h.b16 %v42
  %v178 = vunpack.c.l.b16 %v43
  %v179 = vunpack.c.h.b16 %v43
  %v180 = vunpack.c.l.b16 %v44
  %v181 = vunpack.c.h.b16 %v44
  %v182 = vunpack.c.l.b16 %v45
  %v183 = vunpack.c.h.b16 %v45
  %v184 = vunpack.c.l.b16 %v46
  %v185 = vunpack.c.h.b16 %v46
  %v186 = vunpack.c.l.b16 %v47
  %v187 = vunpack.c.h.b16 %v47
  %v188 = vunpack.c.l.b16 %v48
  %v189 = vunpack.c.h.b16 %v48
  %v190 = vunpack.c.l.b16 %v49
  %v191 = vunpack.c.h.b16 %v49
  %v192 = vunpack.c.l.b16 %v50
  %v193 = vunpack.c.h.b16 %v50
  %v194 = vunpack.c.l.b16 %v51
  %v195 = vunpack.c.h.b16 %v51
  %v196 = vunpack.c.l.b16 %v52
  %v197 = vunpack.c.h.b16 %v52
  %v198 = vunpack.c.l.b16 %v53
  %v199 = vunpack.c.h.b16 %v53
  %v200 = vunpack.c.l.b16 %v54
  %v201 = vunpack.c.h.b16 %v54
  %v202 = vunpack.c.l.b16 %v55
  %v203 = vunpack.c.h.b16 %v55
  %v204 = vunpack.c.l.b16 %v56
  %v205 = vunpack.c.h.b16 %v56
  %v206 = vunpack.c.l.b16 %v57
  %v207 = vunpack.c.h.b16 %v57
  %v208 = vunpack.c.l.b16 %v58
  %v209 = vunpack.c.h.b16 %v58
  %v210 = vunpack.c.l.b16 %v59
  %v211 = vunpack.c.h.b16 %v59
  %v212 = vunpack.c.l.b16 %v60
  %v213 = vunpack.c.h.b16 %v60
  %v214 = vunpack.c.l.b16 %v61
  %v215 = vunpack.c.h.b16 %v61
  %v216 = vpack.c.b16 %v156, %v152
  %v217 = vpack.c.b16 %v157, %v153
  %v218 = vpack.c.b16 %v158, %v154
  %v219 = vpack.c.b16 %v159, %v155
  %v220 = vpack.c.b16 %v164, %v160
  %v221 = vpack.c.b16 %v165, %v161
  %v222 = vpack.c.b16 %v166, %v162
  %v223 = vpack.c.b16 %v167, %v163
  %v224 = vpack.c.b16 %v172, %v168
  %v225 = vpack.c.b16 %v173, %v169
  %v226 = vpack.c.b16 %v174, %v170
  %v227 = vpack.c.b16 %v175, %v171
  %v228 = vpack.c.b16 %v180, %v176
  %v229 = vpack.c.b16 %v181, %v177
  %v230 = vpack.c.b16 %v182, %v178
  %v231 = vpack.c.b16 %v183, %v179
  %v232 = vpack.c.b16 %v188, %v184
  %v233 = vpack.c.b16 %v189, %v185
  %v234 = vpack.c.b16 %v190, %v186
  %v235 = vpack.c.b16 %v191, %v187
  %v236 = vpack.c.b16 %v196, %v192
  %v237 = vpack.c.b16 %v197, %v193
  %v238 = vpack.c.b16 %v198, %v194
  %v239 = vpack.c.b16 %v199, %v195
  %v240 = vpack.c.b16 %v204, %v200
  %v241 = vpack.c.b16 %v205, %v201
  %v242 = vpack.c.b16 %v206, %v202
  %v243 = vpack.c.b16 %v207, %v203
  %v244 = vpack.c.b16 %v212, %v208
  %v245 = vpack.c.b16 %v213, %v209
  %v246 = vpack.c.b16 %v214, %v210
  %v247 = vpack.c.b16 %v215, %v211
  %280 = vmatpush.bf16.msra.mxu0 %v244
  %281 = vmatpush.bf16.msra.mxu0 %v240
  %282 = vmatpush.bf16.msra.mxu0 %v236
  %283 = vmatpush.bf16.msra.mxu0 %v232
  %284 = vmatpush.bf16.msra.mxu0 %v228
  %285 = vmatpush.bf16.msra.mxu0 %v224
  %286 = vmatpush.bf16.msra.mxu0 %v220
  %287 = vmatpush.bf16.msra.mxu0 %v216
  %288 = vmatmul.bf16.gmra.mxu0 %v104
  %v289 = vpop.f32.mrf.mxu0
  %v290 = vadd.f32 %v64, %v289
  %v291 = vpop.f32.mrf.mxu0
  %v292 = vadd.f32 %v64, %v291
  %293 = vmatmul.bf16.gmra.mxu0 %v105
  %v294 = vpop.f32.mrf.mxu0
  %v295 = vadd.f32 %v64, %v294
  %v296 = vpop.f32.mrf.mxu0
  %v297 = vadd.f32 %v64, %v296
  %298 = vmatmul.bf16.gmra.mxu0 %v106
  %v299 = vpop.f32.mrf.mxu0
  %v300 = vadd.f32 %v64, %v299
  %v301 = vpop.f32.mrf.mxu0
  %v302 = vadd.f32 %v64, %v301
  %303 = vmatmul.bf16.gmra.mxu0 %v107
  %v304 = vpop.f32.mrf.mxu0
  %v305 = vadd.f32 %v64, %v304
  %v306 = vpop.f32.mrf.mxu0
  %v307 = vadd.f32 %v64, %v306
  %308 = vmatmul.bf16.gmra.mxu0 %v108
  %v309 = vpop.f32.mrf.mxu0
  %v310 = vadd.f32 %v64, %v309
  %v311 = vpop.f32.mrf.mxu0
  %v312 = vadd.f32 %v64, %v311
  %313 = vmatmul.bf16.gmra.mxu0 %v109
  %v314 = vpop.f32.mrf.mxu0
  %v315 = vadd.f32 %v64, %v314
  %v316 = vpop.f32.mrf.mxu0
  %v317 = vadd.f32 %v64, %v316
  %318 = vmatmul.bf16.gmra.mxu0 %v110
  %v319 = vpop.f32.mrf.mxu0
  %v320 = vadd.f32 %v64, %v319
  %v321 = vpop.f32.mrf.mxu0
  %v322 = vadd.f32 %v64, %v321
  %323 = vmatmul.bf16.gmra.mxu0 %v111
  %v324 = vpop.f32.mrf.mxu0
  %v325 = vadd.f32 %v64, %v324
  %v326 = vpop.f32.mrf.mxu0
  %v327 = vadd.f32 %v64, %v326
  %328 = vdwg.mxu0
  %329 = vmatpush.bf16.msra.mxu0 %v245
  %330 = vmatpush.bf16.msra.mxu0 %v241
  %331 = vmatpush.bf16.msra.mxu0 %v237
  %332 = vmatpush.bf16.msra.mxu0 %v233
  %333 = vmatpush.bf16.msra.mxu0 %v229
  %334 = vmatpush.bf16.msra.mxu0 %v225
  %335 = vmatpush.bf16.msra.mxu0 %v221
  %336 = vmatpush.bf16.msra.mxu0 %v217
  %337 = vmatmul.bf16.gmra.mxu0 %v104
  %v338 = vpop.f32.mrf.mxu0
  %v339 = vadd.f32 %v65, %v338
  %v340 = vpop.f32.mrf.mxu0
  %v341 = vadd.f32 %v65, %v340
  %342 = vmatmul.bf16.gmra.mxu0 %v105
  %v343 = vpop.f32.mrf.mxu0
  %v344 = vadd.f32 %v65, %v343
  %v345 = vpop.f32.mrf.mxu0
  %v346 = vadd.f32 %v65, %v345
  %347 = vmatmul.bf16.gmra.mxu0 %v106
  %v348 = vpop.f32.mrf.mxu0
  %v349 = vadd.f32 %v65, %v348
  %v350 = vpop.f32.mrf.mxu0
  %v351 = vadd.f32 %v65, %v350
  %352 = vmatmul.bf16.gmra.mxu0 %v107
  %v353 = vpop.f32.mrf.mxu0
  %v354 = vadd.f32 %v65, %v353
  %v355 = vpop.f32.mrf.mxu0
  %v356 = vadd.f32 %v65, %v355
  %357 = vmatmul.bf16.gmra.mxu0 %v108
  %v358 = vpop.f32.mrf.mxu0
  %v359 = vadd.f32 %v65, %v358
  %v360 = vpop.f32.mrf.mxu0
  %v361 = vadd.f32 %v65, %v360
  %362 = vmatmul.bf16.gmra.mxu0 %v109
  %v363 = vpop.f32.mrf.mxu0
  %v364 = vadd.f32 %v65, %v363
  %v365 = vpop.f32.mrf.mxu0
  %v366 = vadd.f32 %v65, %v365
  %367 = vmatmul.bf16.gmra.mxu0 %v110
  %v368 = vpop.f32.mrf.mxu0
  %v369 = vadd.f32 %v65, %v368
  %v370 = vpop.f32.mrf.mxu0
  %v371 = vadd.f32 %v65, %v370
  %372 = vmatmul.bf16.gmra.mxu0 %v111
  %v373 = vpop.f32.mrf.mxu0
  %v374 = vadd.f32 %v65, %v373
  %v375 = vpop.f32.mrf.mxu0
  %v376 = vadd.f32 %v65, %v375
  %377 = vdwg.mxu0
  %378 = vmatpush.bf16.msra.mxu0 %v246
  %379 = vmatpush.bf16.msra.mxu0 %v242
  %380 = vmatpush.bf16.msra.mxu0 %v238
  %381 = vmatpush.bf16.msra.mxu0 %v234
  %382 = vmatpush.bf16.msra.mxu0 %v230
  %383 = vmatpush.bf16.msra.mxu0 %v226
  %384 = vmatpush.bf16.msra.mxu0 %v222
  %385 = vmatpush.bf16.msra.mxu0 %v218
  %386 = vmatmul.bf16.gmra.mxu0 %v104
  %v387 = vpop.f32.mrf.mxu0
  %v388 = vadd.f32 %v66, %v387
  %v389 = vpop.f32.mrf.mxu0
  %v390 = vadd.f32 %v66, %v389
  %391 = vmatmul.bf16.gmra.mxu0 %v105
  %v392 = vpop.f32.mrf.mxu0
  %v393 = vadd.f32 %v66, %v392
  %v394 = vpop.f32.mrf.mxu0
  %v395 = vadd.f32 %v66, %v394
  %396 = vmatmul.bf16.gmra.mxu0 %v106
  %v397 = vpop.f32.mrf.mxu0
  %v398 = vadd.f32 %v66, %v397
  %v399 = vpop.f32.mrf.mxu0
  %v400 = vadd.f32 %v66, %v399
  %401 = vmatmul.bf16.gmra.mxu0 %v107
  %v402 = vpop.f32.mrf.mxu0
  %v403 = vadd.f32 %v66, %v402
  %v404 = vpop.f32.mrf.mxu0
  %v405 = vadd.f32 %v66, %v404
  %406 = vmatmul.bf16.gmra.mxu0 %v108
  %v407 = vpop.f32.mrf.mxu0
  %v408 = vadd.f32 %v66, %v407
  %v409 = vpop.f32.mrf.mxu0
  %v410 = vadd.f32 %v66, %v409
  %411 = vmatmul.bf16.gmra.mxu0 %v109
  %v412 = vpop.f32.mrf.mxu0
  %v413 = vadd.f32 %v66, %v412
  %v414 = vpop.f32.mrf.mxu0
  %v415 = vadd.f32 %v66, %v414
  %416 = vmatmul.bf16.gmra.mxu0 %v110
  %v417 = vpop.f32.mrf.mxu0
  %v418 = vadd.f32 %v66, %v417
  %v419 = vpop.f32.mrf.mxu0
  %v420 = vadd.f32 %v66, %v419
  %421 = vmatmul.bf16.gmra.mxu0 %v111
  %v422 = vpop.f32.mrf.mxu0
  %v423 = vadd.f32 %v66, %v422
  %v424 = vpop.f32.mrf.mxu0
  %v425 = vadd.f32 %v66, %v424
  %426 = vdwg.mxu0
  %427 = vmatpush.bf16.msra.mxu0 %v247
  %428 = vmatpush.bf16.msra.mxu0 %v243
  %429 = vmatpush.bf16.msra.mxu0 %v239
  %430 = vmatpush.bf16.msra.mxu0 %v235
  %431 = vmatpush.bf16.msra.mxu0 %v231
  %432 = vmatpush.bf16.msra.mxu0 %v227
  %433 = vmatpush.bf16.msra.mxu0 %v223
  %434 = vmatpush.bf16.msra.mxu0 %v219
  %435 = vmatmul.bf16.gmra.mxu0 %v104
  %v436 = vpop.f32.mrf.mxu0
  %v437 = vadd.f32 %v67, %v436
  %v438 = vpop.f32.mrf.mxu0
  %v439 = vadd.f32 %v67, %v438
  %440 = vmatmul.bf16.gmra.mxu0 %v105
  %v441 = vpop.f32.mrf.mxu0
  %v442 = vadd.f32 %v67, %v441
  %v443 = vpop.f32.mrf.mxu0
  %v444 = vadd.f32 %v67, %v443
  %445 = vmatmul.bf16.gmra.mxu0 %v106
  %v446 = vpop.f32.mrf.mxu0
  %v447 = vadd.f32 %v67, %v446
  %v448 = vpop.f32.mrf.mxu0
  %v449 = vadd.f32 %v67, %v448
  %450 = vmatmul.bf16.gmra.mxu0 %v107
  %v451 = vpop.f32.mrf.mxu0
  %v452 = vadd.f32 %v67, %v451
  %v453 = vpop.f32.mrf.mxu0
  %v454 = vadd.f32 %v67, %v453
  %455 = vmatmul.bf16.gmra.mxu0 %v108
  %v456 = vpop.f32.mrf.mxu0
  %v457 = vadd.f32 %v67, %v456
  %v458 = vpop.f32.mrf.mxu0
  %v459 = vadd.f32 %v67, %v458
  %460 = vmatmul.bf16.gmra.mxu0 %v109
  %v461 = vpop.f32.mrf.mxu0
  %v462 = vadd.f32 %v67, %v461
  %v463 = vpop.f32.mrf.mxu0
  %v464 = vadd.f32 %v67, %v463
  %465 = vmatmul.bf16.gmra.mxu0 %v110
  %v466 = vpop.f32.mrf.mxu0
  %v467 = vadd.f32 %v67, %v466
  %v468 = vpop.f32.mrf.mxu0
  %v469 = vadd.f32 %v67, %v468
  %470 = vmatmul.bf16.gmra.mxu0 %v111
  %v471 = vpop.f32.mrf.mxu0
  %v472 = vadd.f32 %v67, %v471
  %v473 = vpop.f32.mrf.mxu0
  %v474 = vadd.f32 %v67, %v473
  %475 = vdwg.mxu0
  %v476 = vpack.c.bf16 %v339, %v290
  %v477 = vpack.c.bf16 %v437, %v388
  %v478 = vpack.c.bf16 %v341, %v292
  %v479 = vpack.c.bf16 %v439, %v390
  %v480 = vpack.c.bf16 %v344, %v295
  %v481 = vpack.c.bf16 %v442, %v393
  %v482 = vpack.c.bf16 %v346, %v297
  %v483 = vpack.c.bf16 %v444, %v395
  %v484 = vpack.c.bf16 %v349, %v300
  %v485 = vpack.c.bf16 %v447, %v398
  %v486 = vpack.c.bf16 %v351, %v302
  %v487 = vpack.c.bf16 %v449, %v400
  %v488 = vpack.c.bf16 %v354, %v305
  %v489 = vpack.c.bf16 %v452, %v403
  %v490 = vpack.c.bf16 %v356, %v307
  %v491 = vpack.c.bf16 %v454, %v405
  %v492 = vpack.c.bf16 %v359, %v310
  %v493 = vpack.c.bf16 %v457, %v408
  %v494 = vpack.c.bf16 %v361, %v312
  %v495 = vpack.c.bf16 %v459, %v410
  %v496 = vpack.c.bf16 %v364, %v315
  %v497 = vpack.c.bf16 %v462, %v413
  %v498 = vpack.c.bf16 %v366, %v317
  %v499 = vpack.c.bf16 %v464, %v415
  %v500 = vpack.c.bf16 %v369, %v320
  %v501 = vpack.c.bf16 %v467, %v418
  %v502 = vpack.c.bf16 %v371, %v322
  %v503 = vpack.c.bf16 %v469, %v420
  %v504 = vpack.c.bf16 %v374, %v325
  %v505 = vpack.c.bf16 %v472, %v423
  %v506 = vpack.c.bf16 %v376, %v327
  %v507 = vpack.c.bf16 %v474, %v425
  %508 = vst [vmem:[%s3] sm:$0xff] %v476
  %509 = vst [vmem:[%s3 + $0x8] sm:$0xff] %v477
  %510 = vst [vmem:[%s3 + $0x10] sm:$0xff] %v478
  %511 = vst [vmem:[%s3 + $0x18] sm:$0xff] %v479
  %512 = vst [vmem:[%s3 + $0x20] sm:$0xff] %v480
  %513 = vst [vmem:[%s3 + $0x28] sm:$0xff] %v481
  %514 = vst [vmem:[%s3 + $0x30] sm:$0xff] %v482
  %515 = vst [vmem:[%s3 + $0x38] sm:$0xff] %v483
  %516 = vst [vmem:[%s3 + $0x40] sm:$0xff] %v484
  %517 = vst [vmem:[%s3 + $0x48] sm:$0xff] %v485
  %518 = vst [vmem:[%s3 + $0x50] sm:$0xff] %v486
  %519 = vst [vmem:[%s3 + $0x58] sm:$0xff] %v487
  %520 = vst [vmem:[%s3 + $0x60] sm:$0xff] %v488
  %521 = vst [vmem:[%s3 + $0x68] sm:$0xff] %v489
  %522 = vst [vmem:[%s3 + $0x70] sm:$0xff] %v490
  %523 = vst [vmem:[%s3 + $0x78] sm:$0xff] %v491
  %524 = vst [vmem:[%s3 + $0x80] sm:$0xff] %v492
  %525 = vst [vmem:[%s3 + $0x88] sm:$0xff] %v493
  %526 = vst [vmem:[%s3 + $0x90] sm:$0xff] %v494
  %527 = vst [vmem:[%s3 + $0x98] sm:$0xff] %v495
  %528 = vst [vmem:[%s3 + $0xa0] sm:$0xff] %v496
  %529 = vst [vmem:[%s3 + $0xa8] sm:$0xff] %v497
  %530 = vst [vmem:[%s3 + $0xb0] sm:$0xff] %v498
  %531 = vst [vmem:[%s3 + $0xb8] sm:$0xff] %v499
  %532 = vst [vmem:[%s3 + $0xc0] sm:$0xff] %v500
  %533 = vst [vmem:[%s3 + $0xc8] sm:$0xff] %v501
  %534 = vst [vmem:[%s3 + $0xd0] sm:$0xff] %v502
  %535 = vst [vmem:[%s3 + $0xd8] sm:$0xff] %v503
  %536 = vst [vmem:[%s3 + $0xe0] sm:$0xff] %v504
  %537 = vst [vmem:[%s3 + $0xe8] sm:$0xff] %v505
  %538 = vst [vmem:[%s3 + $0xf0] sm:$0xff] %v506
  %539 = vst [vmem:[%s3 + $0xf8] sm:$0xff] %v507
  // Predicated region
  $region14: #{unet9_logsigmoid_forward.21} parent=0 // pred_check
    _
  $region15: #{unet9_logsigmoid_forward.21} parent=0 // pred_check_branch
    %541 = sbr.rel (0) target = $region17
  $region16: #{unet9_logsigmoid_forward.21} parent=0 // pred_region
    _
  $region17: #{unet9_logsigmoid_forward.21} parent=0 // pred_fallthru
    _
  // Predicated region
  $region18: #{unet9_logsigmoid_forward.21} parent=0 // pred_check
    _
  $region19: #{unet9_logsigmoid_forward.21} parent=0 // pred_check_branch
    %543 = sbr.rel (0) target = $region21
  $region20: #{unet9_logsigmoid_forward.21} parent=0 // pred_region
    _
  $region21: #{unet9_logsigmoid_forward.21} parent=0 // pred_fallthru
    _

// kernel: unet9_logsigmoid_forward.22
$region0: #{unet9_logsigmoid_forward.22}
  #allocation0 [shape = 'u32[]', space=smem, size = 0x4, offset = 0x4, fixed_abs, tag = 'smem constant byte address 0x4 - core index']
  #allocation1 [shape = 'u32[72,128]{1,0:T(1,128)}', space=vmem, size = 0x9000, scoped, tag = 'internal scratch']
  %s0 = inlined_call_operand.vmem [shape: bf16[512,128], index: 0, kind: input, shape index: {}]
  %s1 = inlined_call_operand.vmem [shape: bf16[512,128], index: 1, kind: input, shape index: {}]
  %s2 = inlined_call_operand.vmem [shape: bf16[128,128], index: 2, kind: input, shape index: {}]
  %s3 = inlined_call_operand.vmem [shape: bf16[128,128], index: 3, kind: input, shape index: {}]
  %s4 = inlined_call_operand.vmem [shape: bf16[512,128], index: 4, kind: output, shape index: {}]
  %s5 = sld [smem:[#allocation0]]
  $region49: #{unet9_logsigmoid_forward.22} parent=0
    _
  %s7 = ssub.s32 1, %s5
  %s8 = scalar_select 0, %s7, %s5
  loop: start=0, step=1, limit=4
  $region2: #{unet9_logsigmoid_forward.22} parent=0 // loop_pre_header
    _
  $region3: #{unet9_logsigmoid_forward.22} parent=0 // loop_header
    %s10 = sphi 0, %s14
    %p11 = scmp.ge.s32.totalorder %s10, 4
    %s20 = sphi 0, %s22
    %s23 = sphi 0, %s20
    %s24 = sphi 0, %s23
    %s40 = sphi 0, %s24
    %s46 = sphi 0, %s48
    %s49 = sphi 0, %s46
    %s50 = sphi 0, %s49
    %s66 = sphi 0, %s50
    %s70 = sphi 0, %s70
    %s72 = sphi 0, %s70
    %s73 = sphi 0, %s72
    %s87 = sphi 0, %s73
    %s91 = sphi 0, %s91
    %s93 = sphi 0, %s91
    %s94 = sphi 0, %s93
    %s108 = sphi 0, %s94
    %s114 = sphi 0, %s116
    %s117 = sphi 0, %s114
    %s118 = sphi 0, %s117
    %s134 = sphi 0, %s118
  $region4: #{unet9_logsigmoid_forward.22} parent=0 // loop_header_branch
    %13 = sbr.rel (%p11) target = $region8
  $region5: #{unet9_logsigmoid_forward.22} parent=0 // loop_body
    %s15 = ssub.s32 %s10, 1
    %s16 = ssub.s32 %s10, 2
    %s17 = sadd.s32 %s10, 1
    %s18 = ssub.s32 %s10, %s17
    %p19 = scmp.eq.s32.totalorder %s18, 0
    %s21 = sadd.s32 %s20, 1
    %s22 = scalar_select %p19, %s20, %s21
    %p25 = pneg %p19
    %p26 = scmp.eq.s32.totalorder %s10, 1
    %p27 = por %p25, %p26
    %p28 = scmp.ne.s32.totalorder %s20, %s23
    %p29 = scmp.eq.s32.totalorder %s10, 0
    %p30 = por %p28, %p29
    %p31 = scmp.ne.s32.totalorder %s20, %s23
    %p32 = scmp.eq.s32.totalorder %s15, 1
    %p33 = por %p31, %p32
    %p34 = scmp.ne.s32.totalorder %s23, %s24
    %p35 = scmp.eq.s32.totalorder %s15, 0
    %p36 = por %p34, %p35
    %p37 = scmp.ne.s32.totalorder %s23, %s24
    %p38 = scmp.eq.s32.totalorder %s16, 1
    %p39 = por %p37, %p38
    %p41 = scmp.ne.s32.totalorder %s24, %s40
    %p42 = scmp.eq.s32.totalorder %s16, 0
    %p43 = por %p41, %p42
    %s44 = ssub.s32 %s10, %s17
    %p45 = scmp.eq.s32.totalorder %s44, 0
    %s47 = sadd.s32 %s46, 1
    %s48 = scalar_select %p45, %s46, %s47
    %p51 = pneg %p45
    %p52 = scmp.eq.s32.totalorder %s10, 1
    %p53 = por %p51, %p52
    %p54 = scmp.ne.s32.totalorder %s46, %s49
    %p55 = scmp.eq.s32.totalorder %s10, 0
    %p56 = por %p54, %p55
    %p57 = scmp.ne.s32.totalorder %s46, %s49
    %p58 = scmp.eq.s32.totalorder %s15, 1
    %p59 = por %p57, %p58
    %p60 = scmp.ne.s32.totalorder %s49, %s50
    %p61 = scmp.eq.s32.totalorder %s15, 0
    %p62 = por %p60, %p61
    %p63 = scmp.ne.s32.totalorder %s49, %s50
    %p64 = scmp.eq.s32.totalorder %s16, 1
    %p65 = por %p63, %p64
    %p67 = scmp.ne.s32.totalorder %s50, %s66
    %p68 = scmp.eq.s32.totalorder %s16, 0
    %p69 = por %p67, %p68
    %s71 = sadd.s32 %s70, 1
    %p74 = scmp.eq.s32.totalorder %s10, 1
    %p75 = scmp.ne.s32.totalorder %s70, %s72
    %p76 = scmp.eq.s32.totalorder %s10, 0
    %p77 = por %p75, %p76
    %p78 = scmp.ne.s32.totalorder %s70, %s72
    %p79 = scmp.eq.s32.totalorder %s15, 1
    %p80 = por %p78, %p79
    %p81 = scmp.ne.s32.totalorder %s72, %s73
    %p82 = scmp.eq.s32.totalorder %s15, 0
    %p83 = por %p81, %p82
    %p84 = scmp.ne.s32.totalorder %s72, %s73
    %p85 = scmp.eq.s32.totalorder %s16, 1
    %p86 = por %p84, %p85
    %p88 = scmp.ne.s32.totalorder %s73, %s87
    %p89 = scmp.eq.s32.totalorder %s16, 0
    %p90 = por %p88, %p89
    %s92 = sadd.s32 %s91, 1
    %p95 = scmp.eq.s32.totalorder %s10, 1
    %p96 = scmp.ne.s32.totalorder %s91, %s93
    %p97 = scmp.eq.s32.totalorder %s10, 0
    %p98 = por %p96, %p97
    %p99 = scmp.ne.s32.totalorder %s91, %s93
    %p100 = scmp.eq.s32.totalorder %s15, 1
    %p101 = por %p99, %p100
    %p102 = scmp.ne.s32.totalorder %s93, %s94
    %p103 = scmp.eq.s32.totalorder %s15, 0
    %p104 = por %p102, %p103
    %p105 = scmp.ne.s32.totalorder %s93, %s94
    %p106 = scmp.eq.s32.totalorder %s16, 1
    %p107 = por %p105, %p106
    %p109 = scmp.ne.s32.totalorder %s94, %s108
    %p110 = scmp.eq.s32.totalorder %s16, 0
    %p111 = por %p109, %p110
    %s112 = ssub.s32 %s10, %s17
    %p113 = scmp.eq.s32.totalorder %s112, 0
    %s115 = sadd.s32 %s114, 1
    %s116 = scalar_select %p113, %s114, %s115
    %p119 = pneg %p113
    %p120 = scmp.eq.s32.totalorder %s10, 1
    %p121 = por %p119, %p120
    %p122 = scmp.ne.s32.totalorder %s114, %s117
    %p123 = scmp.eq.s32.totalorder %s10, 0
    %p124 = por %p122, %p123
    %p125 = scmp.ne.s32.totalorder %s114, %s117
    %p126 = scmp.eq.s32.totalorder %s15, 1
    %p127 = por %p125, %p126
    %p128 = scmp.ne.s32.totalorder %s117, %s118
    %p129 = scmp.eq.s32.totalorder %s15, 0
    %p130 = por %p128, %p129
    %p131 = scmp.ne.s32.totalorder %s117, %s118
    %p132 = scmp.eq.s32.totalorder %s16, 1
    %p133 = por %p131, %p132
    %p135 = scmp.ne.s32.totalorder %s118, %s134
    %p136 = scmp.eq.s32.totalorder %s16, 0
    %p137 = por %p135, %p136
    %p138 = scmp.le.s32.totalorder 1, %s10
    %p139 = scmp.lt.s32.totalorder %s10, 3
    %p140 = pnand %p138, %p139
    %p141 = pneg %p140
    // Predicated region
    $region9: #{unet9_logsigmoid_forward.22} parent=5 // pred_check
      _
    $region10: #{unet9_logsigmoid_forward.22} parent=5 // pred_check_branch
      %143 = sbr.rel (%p140) target = $region12
    $region11: #{unet9_logsigmoid_forward.22} parent=5 // pred_region
      %s144 = ssub.s32 %s10, 1
      // Predicated region
      $region13: #{unet9_logsigmoid_forward.22} parent=11 // pred_check
        %p145 = pneg %p83
      $region14: #{unet9_logsigmoid_forward.22} parent=11 // pred_check_branch
        %147 = sbr.rel (%p145) target = $region16
      $region15: #{unet9_logsigmoid_forward.22} parent=11 // pred_region
        _
      $region16: #{unet9_logsigmoid_forward.22} parent=11 // pred_fallthru
        _
      // Predicated region
      $region17: #{unet9_logsigmoid_forward.22} parent=11 // pred_check
        %p148 = pneg %p104
      $region18: #{unet9_logsigmoid_forward.22} parent=11 // pred_check_branch
        %150 = sbr.rel (%p148) target = $region20
      $region19: #{unet9_logsigmoid_forward.22} parent=11 // pred_region
        _
      $region20: #{unet9_logsigmoid_forward.22} parent=11 // pred_fallthru
        _
    $region12: #{unet9_logsigmoid_forward.22} parent=5 // pred_fallthru
      _
    %p151 = scmp.lt.s32.totalorder %s10, 2
    // Predicated region
    $region21: #{unet9_logsigmoid_forward.22} parent=5 // pred_check
      %p152 = pneg %p151
    $region22: #{unet9_logsigmoid_forward.22} parent=5 // pred_check_branch
      %154 = sbr.rel (%p152) target = $region24
    $region23: #{unet9_logsigmoid_forward.22} parent=5 // pred_region
      // Predicated region
      $region25: #{unet9_logsigmoid_forward.22} parent=23 // pred_check
        %p155 = pneg %p30
      $region26: #{unet9_logsigmoid_forward.22} parent=23 // pred_check_branch
        %157 = sbr.rel (%p155) target = $region28
      $region27: #{unet9_logsigmoid_forward.22} parent=23 // pred_region
        %s158 = smul.u32 32, %s10
        %p159 = scmp.lt.s32.totalorder %s158, 63
        %s160 = scalar_select %p159, %s158, 63
        %s161 = smul.addr %s160, 4
        %s162 = scalar_lea.vmem %s0, %s161
        %s163 = smul.u32 32, %s10
      $region28: #{unet9_logsigmoid_forward.22} parent=23 // pred_fallthru
        _
      // Predicated region
      $region29: #{unet9_logsigmoid_forward.22} parent=23 // pred_check
        %p164 = pneg %p56
      $region30: #{unet9_logsigmoid_forward.22} parent=23 // pred_check_branch
        %166 = sbr.rel (%p164) target = $region32
      $region31: #{unet9_logsigmoid_forward.22} parent=23 // pred_region
        %s167 = smul.u32 32, %s10
        %p168 = scmp.lt.s32.totalorder %s167, 63
        %s169 = scalar_select %p168, %s167, 63
        %s170 = smul.addr %s169, 4
        %s171 = scalar_lea.vmem %s1, %s170
        %s172 = smul.u32 32, %s10
      $region32: #{unet9_logsigmoid_forward.22} parent=23 // pred_fallthru
        _
    $region24: #{unet9_logsigmoid_forward.22} parent=5 // pred_fallthru
      _
    %p173 = scmp.le.s32.totalorder 1, %s10
    %p174 = scmp.lt.s32.totalorder %s10, 3
    %p175 = pnand %p173, %p174
    %p176 = pneg %p175
    // Predicated region
    $region33: #{unet9_logsigmoid_forward.22} parent=5 // pred_check
      _
    $region34: #{unet9_logsigmoid_forward.22} parent=5 // pred_check_branch
      %178 = sbr.rel (%p175) target = $region36
    $region35: #{unet9_logsigmoid_forward.22} parent=5 // pred_region
      %s179 = ssub.s32 %s10, 1
      %s180 = smul.u32 32, %s15
      %p181 = scmp.lt.s32.totalorder %s180, 63
      %s182 = scalar_select %p181, %s180, 63
      %s183 = smul.addr %s182, 4
      %s184 = scalar_lea.vmem %s0, %s183
      %p185 = pneg %p36
      %p186 = pneg %p33
      %s187 = smul.u32 32, %s15
      %p188 = scmp.lt.s32.totalorder %s187, 63
      %s189 = scalar_select %p188, %s187, 63
      %s190 = smul.addr %s189, 4
      %s191 = scalar_lea.vmem %s1, %s190
      %p192 = pneg %p62
      %p193 = pneg %p59
      %p194 = pneg %p83
      %p195 = pneg %p80
      %p196 = pneg %p104
      %p197 = pneg %p101
      %p198 = pneg %p130
      %p199 = pneg %p127
      %s200 = smul.u32 32, %s15
      %p201 = scmp.lt.s32.totalorder %s200, 63
      %s202 = scalar_select %p201, %s200, 63
      %s203 = smul.addr %s202, 4
      %s204 = scalar_lea.vmem %s4, %s203
      %s205 = smul.u32 32, %s15
      %p206 = scmp.lt.s32.totalorder %s205, 63
      %s207 = scalar_select %p206, %s205, 63
      %s208 = smul.addr %s207, 4
      %s209 = scalar_lea.vmem %s0, %s208
      %s210 = smul.u32 32, %s15
      %s211 = smul.u32 32, %s15
      %p212 = scmp.lt.s32.totalorder %s211, 63
      %s213 = scalar_select %p212, %s211, 63
      %s214 = smul.addr %s213, 4
      %s215 = scalar_lea.vmem %s1, %s214
      %s216 = smul.u32 32, %s15
      %s217 = smul.u32 32, %s15
      %p218 = scmp.lt.s32.totalorder %s217, 63
      %s219 = scalar_select %p218, %s217, 63
      %s220 = smul.addr %s219, 4
      %s221 = scalar_lea.vmem %s4, %s220
      %s222 = smul.u32 32, %s15
      %v223 = vld [vmem:[%s209] sm:$0xf]
      %v224 = vld [vmem:[%s209 + $0x4] sm:$0xf]
      %v225 = vld [vmem:[%s209 + $0x8] sm:$0xf]
      %v226 = vld [vmem:[%s209 + $0xc] sm:$0xf]
      %v227 = vld [vmem:[%s209 + $0x10] sm:$0xf]
      %v228 = vld [vmem:[%s209 + $0x14] sm:$0xf]
      %v229 = vld [vmem:[%s209 + $0x18] sm:$0xf]
      %v230 = vld [vmem:[%s209 + $0x1c] sm:$0xf]
      %v231 = vld [vmem:[%s209 + $0x20] sm:$0xf]
      %v232 = vld [vmem:[%s209 + $0x24] sm:$0xf]
      %v233 = vld [vmem:[%s209 + $0x28] sm:$0xf]
      %v234 = vld [vmem:[%s209 + $0x2c] sm:$0xf]
      %v235 = vld [vmem:[%s209 + $0x30] sm:$0xf]
      %v236 = vld [vmem:[%s209 + $0x34] sm:$0xf]
      %v237 = vld [vmem:[%s209 + $0x38] sm:$0xf]
      %v238 = vld [vmem:[%s209 + $0x3c] sm:$0xf]
      %v239 = vld [vmem:[%s209 + $0x40] sm:$0xf]
      %v240 = vld [vmem:[%s209 + $0x44] sm:$0xf]
      %v241 = vld [vmem:[%s209 + $0x48] sm:$0xf]
      %v242 = vld [vmem:[%s209 + $0x4c] sm:$0xf]
      %v243 = vld [vmem:[%s209 + $0x50] sm:$0xf]
      %v244 = vld [vmem:[%s209 + $0x54] sm:$0xf]
      %v245 = vld [vmem:[%s209 + $0x58] sm:$0xf]
      %v246 = vld [vmem:[%s209 + $0x5c] sm:$0xf]
      %v247 = vld [vmem:[%s209 + $0x60] sm:$0xf]
      %v248 = vld [vmem:[%s209 + $0x64] sm:$0xf]
      %v249 = vld [vmem:[%s209 + $0x68] sm:$0xf]
      %v250 = vld [vmem:[%s209 + $0x6c] sm:$0xf]
      %v251 = vld [vmem:[%s209 + $0x70] sm:$0xf]
      %v252 = vld [vmem:[%s209 + $0x74] sm:$0xf]
      %v253 = vld [vmem:[%s209 + $0x78] sm:$0xf]
      %v254 = vld [vmem:[%s209 + $0x7c] sm:$0xf]
      %v255 = vld [vmem:[%s2] sm:$0xf]
      %v256 = vld [vmem:[%s2 + $0x4] sm:$0xf]
      %v257 = vld [vmem:[%s2 + $0x8] sm:$0xf]
      %v258 = vld [vmem:[%s2 + $0xc] sm:$0xf]
      %v259 = vld [vmem:[%s2 + $0x10] sm:$0xf]
      %v260 = vld [vmem:[%s2 + $0x14] sm:$0xf]
      %v261 = vld [vmem:[%s2 + $0x18] sm:$0xf]
      %v262 = vld [vmem:[%s2 + $0x1c] sm:$0xf]
      %v263 = vld [vmem:[%s2 + $0x20] sm:$0xf]
      %v264 = vld [vmem:[%s2 + $0x24] sm:$0xf]
      %v265 = vld [vmem:[%s2 + $0x28] sm:$0xf]
      %v266 = vld [vmem:[%s2 + $0x2c] sm:$0xf]
      %v267 = vld [vmem:[%s2 + $0x30] sm:$0xf]
      %v268 = vld [vmem:[%s2 + $0x34] sm:$0xf]
      %v269 = vld [vmem:[%s2 + $0x38] sm:$0xf]
      %v270 = vld [vmem:[%s2 + $0x3c] sm:$0xf]
      %v271 = vld [vmem:[%s215] sm:$0xf]
      %v272 = vld [vmem:[%s215 + $0x4] sm:$0xf]
      %v273 = vld [vmem:[%s215 + $0x8] sm:$0xf]
      %v274 = vld [vmem:[%s215 + $0xc] sm:$0xf]
      %v275 = vld [vmem:[%s215 + $0x10] sm:$0xf]
      %v276 = vld [vmem:[%s215 + $0x14] sm:$0xf]
      %v277 = vld [vmem:[%s215 + $0x18] sm:$0xf]
      %v278 = vld [vmem:[%s215 + $0x1c] sm:$0xf]
      %v279 = vld [vmem:[%s215 + $0x20] sm:$0xf]
      %v280 = vld [vmem:[%s215 + $0x24] sm:$0xf]
      %v281 = vld [vmem:[%s215 + $0x28] sm:$0xf]
      %v282 = vld [vmem:[%s215 + $0x2c] sm:$0xf]
      %v283 = vld [vmem:[%s215 + $0x30] sm:$0xf]
      %v284 = vld [vmem:[%s215 + $0x34] sm:$0xf]
      %v285 = vld [vmem:[%s215 + $0x38] sm:$0xf]
      %v286 = vld [vmem:[%s215 + $0x3c] sm:$0xf]
      %v287 = vld [vmem:[%s215 + $0x40] sm:$0xf]
      %v288 = vld [vmem:[%s215 + $0x44] sm:$0xf]
      %v289 = vld [vmem:[%s215 + $0x48] sm:$0xf]
      %v290 = vld [vmem:[%s215 + $0x4c] sm:$0xf]
      %v291 = vld [vmem:[%s215 + $0x50] sm:$0xf]
      %v292 = vld [vmem:[%s215 + $0x54] sm:$0xf]
      %v293 = vld [vmem:[%s215 + $0x58] sm:$0xf]
      %v294 = vld [vmem:[%s215 + $0x5c] sm:$0xf]
      %v295 = vld [vmem:[%s215 + $0x60] sm:$0xf]
      %v296 = vld [vmem:[%s215 + $0x64] sm:$0xf]
      %v297 = vld [vmem:[%s215 + $0x68] sm:$0xf]
      %v298 = vld [vmem:[%s215 + $0x6c] sm:$0xf]
      %v299 = vld [vmem:[%s215 + $0x70] sm:$0xf]
      %v300 = vld [vmem:[%s215 + $0x74] sm:$0xf]
      %v301 = vld [vmem:[%s215 + $0x78] sm:$0xf]
      %v302 = vld [vmem:[%s215 + $0x7c] sm:$0xf]
      %v303 = vld [vmem:[%s3] sm:$0xf]
      %v304 = vld [vmem:[%s3 + $0x4] sm:$0xf]
      %v305 = vld [vmem:[%s3 + $0x8] sm:$0xf]
      %v306 = vld [vmem:[%s3 + $0xc] sm:$0xf]
      %v307 = vld [vmem:[%s3 + $0x10] sm:$0xf]
      %v308 = vld [vmem:[%s3 + $0x14] sm:$0xf]
      %v309 = vld [vmem:[%s3 + $0x18] sm:$0xf]
      %v310 = vld [vmem:[%s3 + $0x1c] sm:$0xf]
      %v311 = vld [vmem:[%s3 + $0x20] sm:$0xf]
      %v312 = vld [vmem:[%s3 + $0x24] sm:$0xf]
      %v313 = vld [vmem:[%s3 + $0x28] sm:$0xf]
      %v314 = vld [vmem:[%s3 + $0x2c] sm:$0xf]
      %v315 = vld [vmem:[%s3 + $0x30] sm:$0xf]
      %v316 = vld [vmem:[%s3 + $0x34] sm:$0xf]
      %v317 = vld [vmem:[%s3 + $0x38] sm:$0xf]
      %v318 = vld [vmem:[%s3 + $0x3c] sm:$0xf]
      %v351 = vunpack.c.l.b16 %v271
      %v352 = vunpack.c.l.b16 %v272
      %v353 = vunpack.c.l.b16 %v273
      %v354 = vunpack.c.l.b16 %v274
      %v355 = vunpack.c.l.b16 %v275
      %v356 = vunpack.c.l.b16 %v276
      %v357 = vunpack.c.l.b16 %v277
      %v358 = vunpack.c.l.b16 %v278
      %v359 = vunpack.c.l.b16 %v279
      %v360 = vunpack.c.l.b16 %v280
      %v361 = vunpack.c.l.b16 %v281
      %v362 = vunpack.c.l.b16 %v282
      %v363 = vunpack.c.l.b16 %v283
      %v364 = vunpack.c.l.b16 %v284
      %v365 = vunpack.c.l.b16 %v285
      %v366 = vunpack.c.l.b16 %v286
      %v367 = vunpack.c.l.b16 %v287
      %v368 = vunpack.c.l.b16 %v288
      %v369 = vunpack.c.l.b16 %v289
      %v370 = vunpack.c.l.b16 %v290
      %v371 = vunpack.c.l.b16 %v291
      %v372 = vunpack.c.l.b16 %v292
      %v373 = vunpack.c.l.b16 %v293
      %v374 = vunpack.c.l.b16 %v294
      %v375 = vunpack.c.l.b16 %v295
      %v376 = vunpack.c.l.b16 %v296
      %v377 = vunpack.c.l.b16 %v297
      %v378 = vunpack.c.l.b16 %v298
      %v379 = vunpack.c.l.b16 %v299
      %v380 = vunpack.c.l.b16 %v300
      %v381 = vunpack.c.l.b16 %v301
      %v382 = vunpack.c.l.b16 %v302
      %v383 = vpack.c.b16 %v352, %v351
      %v384 = vpack.c.b16 %v354, %v353
      %v385 = vpack.c.b16 %v356, %v355
      %v386 = vpack.c.b16 %v358, %v357
      %v387 = vpack.c.b16 %v360, %v359
      %v388 = vpack.c.b16 %v362, %v361
      %v389 = vpack.c.b16 %v364, %v363
      %v390 = vpack.c.b16 %v366, %v365
      %v391 = vpack.c.b16 %v368, %v367
      %v392 = vpack.c.b16 %v370, %v369
      %v393 = vpack.c.b16 %v372, %v371
      %v394 = vpack.c.b16 %v374, %v373
      %v395 = vpack.c.b16 %v376, %v375
      %v396 = vpack.c.b16 %v378, %v377
      %v397 = vpack.c.b16 %v380, %v379
      %v398 = vpack.c.b16 %v382, %v381
      %v431 = vunpack.c.l.b16 %v303
      %v432 = vunpack.c.l.b16 %v304
      %v433 = vunpack.c.l.b16 %v305
      %v434 = vunpack.c.l.b16 %v306
      %v435 = vunpack.c.l.b16 %v307
      %v436 = vunpack.c.l.b16 %v308
      %v437 = vunpack.c.l.b16 %v309
      %v438 = vunpack.c.l.b16 %v310
      %v439 = vunpack.c.l.b16 %v311
      %v440 = vunpack.c.l.b16 %v312
      %v441 = vunpack.c.l.b16 %v313
      %v442 = vunpack.c.l.b16 %v314
      %v443 = vunpack.c.l.b16 %v315
      %v444 = vunpack.c.l.b16 %v316
      %v445 = vunpack.c.l.b16 %v317
      %v446 = vunpack.c.l.b16 %v318
      %v447 = vpack.c.b16 %v432, %v431
      %v448 = vpack.c.b16 %v434, %v433
      %v449 = vpack.c.b16 %v436, %v435
      %v450 = vpack.c.b16 %v438, %v437
      %v451 = vpack.c.b16 %v440, %v439
      %v452 = vpack.c.b16 %v442, %v441
      %v453 = vpack.c.b16 %v444, %v443
      %v454 = vpack.c.b16 %v446, %v445
      %463 = vmatpush.bf16.msra.mxu0 %v454
      %464 = vmatpush.bf16.msra.mxu0 %v453
      %465 = vmatpush.bf16.msra.mxu0 %v452
      %466 = vmatpush.bf16.msra.mxu0 %v451
      %467 = vmatpush.bf16.msra.mxu0 %v450
      %468 = vmatpush.bf16.msra.mxu0 %v449
      %469 = vmatpush.bf16.msra.mxu0 %v448
      %470 = vmatpush.bf16.msra.mxu0 %v447
      %471 = vmatmul.bf16.gmra.mxu0 %v383
      %v472 = vpop.f32.mrf.mxu0
      %v473 = vadd.f32 0.0, %v472
      %v474 = vpop.f32.mrf.mxu0
      %v475 = vadd.f32 0.0, %v474
      %476 = vmatmul.bf16.gmra.mxu0 %v384
      %v477 = vpop.f32.mrf.mxu0
      %v478 = vadd.f32 0.0, %v477
      %v479 = vpop.f32.mrf.mxu0
      %v480 = vadd.f32 0.0, %v479
      %481 = vmatmul.bf16.gmra.mxu0 %v385
      %v482 = vpop.f32.mrf.mxu0
      %v483 = vadd.f32 0.0, %v482
      %v484 = vpop.f32.mrf.mxu0
      %v485 = vadd.f32 0.0, %v484
      %486 = vmatmul.bf16.gmra.mxu0 %v386
      %v487 = vpop.f32.mrf.mxu0
      %v488 = vadd.f32 0.0, %v487
      %v489 = vpop.f32.mrf.mxu0
      %v490 = vadd.f32 0.0, %v489
      %491 = vmatmul.bf16.gmra.mxu0 %v387
      %v492 = vpop.f32.mrf.mxu0
      %v493 = vadd.f32 0.0, %v492
      %v494 = vpop.f32.mrf.mxu0
      %v495 = vadd.f32 0.0, %v494
      %496 = vmatmul.bf16.gmra.mxu0 %v388
      %v497 = vpop.f32.mrf.mxu0
      %v498 = vadd.f32 0.0, %v497
      %v499 = vpop.f32.mrf.mxu0
      %v500 = vadd.f32 0.0, %v499
      %501 = vmatmul.bf16.gmra.mxu0 %v389
      %v502 = vpop.f32.mrf.mxu0
      %v503 = vadd.f32 0.0, %v502
      %v504 = vpop.f32.mrf.mxu0
      %v505 = vadd.f32 0.0, %v504
      %506 = vmatmul.bf16.gmra.mxu0 %v390
      %v507 = vpop.f32.mrf.mxu0
      %v508 = vadd.f32 0.0, %v507
      %v509 = vpop.f32.mrf.mxu0
      %v510 = vadd.f32 0.0, %v509
      %511 = vmatmul.bf16.gmra.mxu0 %v391
      %v512 = vpop.f32.mrf.mxu0
      %v513 = vadd.f32 0.0, %v512
      %v514 = vpop.f32.mrf.mxu0
      %v515 = vadd.f32 0.0, %v514
      %516 = vmatmul.bf16.gmra.mxu0 %v392
      %v517 = vpop.f32.mrf.mxu0
      %v518 = vadd.f32 0.0, %v517
      %v519 = vpop.f32.mrf.mxu0
      %v520 = vadd.f32 0.0, %v519
      %521 = vmatmul.bf16.gmra.mxu0 %v393
      %v522 = vpop.f32.mrf.mxu0
      %v523 = vadd.f32 0.0, %v522
      %v524 = vpop.f32.mrf.mxu0
      %v525 = vadd.f32 0.0, %v524
      %526 = vmatmul.bf16.gmra.mxu0 %v394
      %v527 = vpop.f32.mrf.mxu0
      %v528 = vadd.f32 0.0, %v527
      %v529 = vpop.f32.mrf.mxu0
      %v530 = vadd.f32 0.0, %v529
      %531 = vmatmul.bf16.gmra.mxu0 %v395
      %v532 = vpop.f32.mrf.mxu0
      %v533 = vadd.f32 0.0, %v532
      %v534 = vpop.f32.mrf.mxu0
      %v535 = vadd.f32 0.0, %v534
      %536 = vmatmul.bf16.gmra.mxu0 %v396
      %v537 = vpop.f32.mrf.mxu0
      %v538 = vadd.f32 0.0, %v537
      %v539 = vpop.f32.mrf.mxu0
      %v540 = vadd.f32 0.0, %v539
      %541 = vmatmul.bf16.gmra.mxu0 %v397
      %v542 = vpop.f32.mrf.mxu0
      %v543 = vadd.f32 0.0, %v542
      %v544 = vpop.f32.mrf.mxu0
      %v545 = vadd.f32 0.0, %v544
      %546 = vmatmul.bf16.gmra.mxu0 %v398
      %v547 = vpop.f32.mrf.mxu0
      %v548 = vadd.f32 0.0, %v547
      %v549 = vpop.f32.mrf.mxu0
      %v550 = vadd.f32 0.0, %v549
      %551 = vdwg.mxu0
      %v584 = vunpack.c.l.b16 %v223
      %v585 = vunpack.c.l.b16 %v224
      %v586 = vunpack.c.l.b16 %v225
      %v587 = vunpack.c.l.b16 %v226
      %v588 = vunpack.c.l.b16 %v227
      %v589 = vunpack.c.l.b16 %v228
      %v590 = vunpack.c.l.b16 %v229
      %v591 = vunpack.c.l.b16 %v230
      %v592 = vunpack.c.l.b16 %v231
      %v593 = vunpack.c.l.b16 %v232
      %v594 = vunpack.c.l.b16 %v233
      %v595 = vunpack.c.l.b16 %v234
      %v596 = vunpack.c.l.b16 %v235
      %v597 = vunpack.c.l.b16 %v236
      %v598 = vunpack.c.l.b16 %v237
      %v599 = vunpack.c.l.b16 %v238
      %v600 = vunpack.c.l.b16 %v239
      %v601 = vunpack.c.l.b16 %v240
      %v602 = vunpack.c.l.b16 %v241
      %v603 = vunpack.c.l.b16 %v242
      %v604 = vunpack.c.l.b16 %v243
      %v605 = vunpack.c.l.b16 %v244
      %v606 = vunpack.c.l.b16 %v245
      %v607 = vunpack.c.l.b16 %v246
      %v608 = vunpack.c.l.b16 %v247
      %v609 = vunpack.c.l.b16 %v248
      %v610 = vunpack.c.l.b16 %v249
      %v611 = vunpack.c.l.b16 %v250
      %v612 = vunpack.c.l.b16 %v251
      %v613 = vunpack.c.l.b16 %v252
      %v614 = vunpack.c.l.b16 %v253
      %v615 = vunpack.c.l.b16 %v254
      %v616 = vpack.c.b16 %v585, %v584
      %v617 = vpack.c.b16 %v587, %v586
      %v618 = vpack.c.b16 %v589, %v588
      %v619 = vpack.c.b16 %v591, %v590
      %v620 = vpack.c.b16 %v593, %v592
      %v621 = vpack.c.b16 %v595, %v594
      %v622 = vpack.c.b16 %v597, %v596
      %v623 = vpack.c.b16 %v599, %v598
      %v624 = vpack.c.b16 %v601, %v600
      %v625 = vpack.c.b16 %v603, %v602
      %v626 = vpack.c.b16 %v605, %v604
      %v627 = vpack.c.b16 %v607, %v606
      %v628 = vpack.c.b16 %v609, %v608
      %v629 = vpack.c.b16 %v611, %v610
      %v630 = vpack.c.b16 %v613, %v612
      %v631 = vpack.c.b16 %v615, %v614
      %v664 = vunpack.c.l.b16 %v255
      %v665 = vunpack.c.l.b16 %v256
      %v666 = vunpack.c.l.b16 %v257
      %v667 = vunpack.c.l.b16 %v258
      %v668 = vunpack.c.l.b16 %v259
      %v669 = vunpack.c.l.b16 %v260
      %v670 = vunpack.c.l.b16 %v261
      %v671 = vunpack.c.l.b16 %v262
      %v672 = vunpack.c.l.b16 %v263
      %v673 = vunpack.c.l.b16 %v264
      %v674 = vunpack.c.l.b16 %v265
      %v675 = vunpack.c.l.b16 %v266
      %v676 = vunpack.c.l.b16 %v267
      %v677 = vunpack.c.l.b16 %v268
      %v678 = vunpack.c.l.b16 %v269
      %v679 = vunpack.c.l.b16 %v270
      %v680 = vpack.c.b16 %v665, %v664
      %v681 = vpack.c.b16 %v667, %v666
      %v682 = vpack.c.b16 %v669, %v668
      %v683 = vpack.c.b16 %v671, %v670
      %v684 = vpack.c.b16 %v673, %v672
      %v685 = vpack.c.b16 %v675, %v674
      %v686 = vpack.c.b16 %v677, %v676
      %v687 = vpack.c.b16 %v679, %v678
      %696 = vmatpush.bf16.msra.mxu0 %v687
      %697 = vmatpush.bf16.msra.mxu0 %v686
      %698 = vmatpush.bf16.msra.mxu0 %v685
      %699 = vmatpush.bf16.msra.mxu0 %v684
      %700 = vmatpush.bf16.msra.mxu0 %v683
      %701 = vmatpush.bf16.msra.mxu0 %v682
      %702 = vmatpush.bf16.msra.mxu0 %v681
      %703 = vmatpush.bf16.msra.mxu0 %v680
      %704 = vmatmul.bf16.gmra.mxu0 %v616
      %v705 = vpop.f32.mrf.mxu0
      %v706 = vadd.f32 %v473, %v705
      %v707 = vpop.f32.mrf.mxu0
      %v708 = vadd.f32 %v475, %v707
      %709 = vmatmul.bf16.gmra.mxu0 %v617
      %v710 = vpop.f32.mrf.mxu0
      %v711 = vadd.f32 %v478, %v710
      %v712 = vpop.f32.mrf.mxu0
      %v713 = vadd.f32 %v480, %v712
      %714 = vmatmul.bf16.gmra.mxu0 %v618
      %v715 = vpop.f32.mrf.mxu0
      %v716 = vadd.f32 %v483, %v715
      %v717 = vpop.f32.mrf.mxu0
      %v718 = vadd.f32 %v485, %v717
      %719 = vmatmul.bf16.gmra.mxu0 %v619
      %v720 = vpop.f32.mrf.mxu0
      %v721 = vadd.f32 %v488, %v720
      %v722 = vpop.f32.mrf.mxu0
      %v723 = vadd.f32 %v490, %v722
      %724 = vmatmul.bf16.gmra.mxu0 %v620
      %v725 = vpop.f32.mrf.mxu0
      %v726 = vadd.f32 %v493, %v725
      %v727 = vpop.f32.mrf.mxu0
      %v728 = vadd.f32 %v495, %v727
      %729 = vmatmul.bf16.gmra.mxu0 %v621
      %v730 = vpop.f32.mrf.mxu0
      %v731 = vadd.f32 %v498, %v730
      %v732 = vpop.f32.mrf.mxu0
      %v733 = vadd.f32 %v500, %v732
      %734 = vmatmul.bf16.gmra.mxu0 %v622
      %v735 = vpop.f32.mrf.mxu0
      %v736 = vadd.f32 %v503, %v735
      %v737 = vpop.f32.mrf.mxu0
      %v738 = vadd.f32 %v505, %v737
      %739 = vmatmul.bf16.gmra.mxu0 %v623
      %v740 = vpop.f32.mrf.mxu0
      %v741 = vadd.f32 %v508, %v740
      %v742 = vpop.f32.mrf.mxu0
      %v743 = vadd.f32 %v510, %v742
      %744 = vmatmul.bf16.gmra.mxu0 %v624
      %v745 = vpop.f32.mrf.mxu0
      %v746 = vadd.f32 %v513, %v745
      %v747 = vpop.f32.mrf.mxu0
      %v748 = vadd.f32 %v515, %v747
      %749 = vmatmul.bf16.gmra.mxu0 %v625
      %v750 = vpop.f32.mrf.mxu0
      %v751 = vadd.f32 %v518, %v750
      %v752 = vpop.f32.mrf.mxu0
      %v753 = vadd.f32 %v520, %v752
      %754 = vmatmul.bf16.gmra.mxu0 %v626
      %v755 = vpop.f32.mrf.mxu0
      %v756 = vadd.f32 %v523, %v755
      %v757 = vpop.f32.mrf.mxu0
      %v758 = vadd.f32 %v525, %v757
      %759 = vmatmul.bf16.gmra.mxu0 %v627
      %v760 = vpop.f32.mrf.mxu0
      %v761 = vadd.f32 %v528, %v760
      %v762 = vpop.f32.mrf.mxu0
      %v763 = vadd.f32 %v530, %v762
      %764 = vmatmul.bf16.gmra.mxu0 %v628
      %v765 = vpop.f32.mrf.mxu0
      %v766 = vadd.f32 %v533, %v765
      %v767 = vpop.f32.mrf.mxu0
      %v768 = vadd.f32 %v535, %v767
      %769 = vmatmul.bf16.gmra.mxu0 %v629
      %v770 = vpop.f32.mrf.mxu0
      %v771 = vadd.f32 %v538, %v770
      %v772 = vpop.f32.mrf.mxu0
      %v773 = vadd.f32 %v540, %v772
      %774 = vmatmul.bf16.gmra.mxu0 %v630
      %v775 = vpop.f32.mrf.mxu0
      %v776 = vadd.f32 %v543, %v775
      %v777 = vpop.f32.mrf.mxu0
      %v778 = vadd.f32 %v545, %v777
      %779 = vmatmul.bf16.gmra.mxu0 %v631
      %v780 = vpop.f32.mrf.mxu0
      %v781 = vadd.f32 %v548, %v780
      %v782 = vpop.f32.mrf.mxu0
      %v783 = vadd.f32 %v550, %v782
      %784 = vdwg.mxu0
      %v785 = vpack.c.bf16 %v706, %v706
      %v786 = vpack.c.bf16 %v708, %v708
      %v787 = vpack.c.bf16 %v711, %v711
      %v788 = vpack.c.bf16 %v713, %v713
      %v789 = vpack.c.bf16 %v716, %v716
      %v790 = vpack.c.bf16 %v718, %v718
      %v791 = vpack.c.bf16 %v721, %v721
      %v792 = vpack.c.bf16 %v723, %v723
      %v793 = vpack.c.bf16 %v726, %v726
      %v794 = vpack.c.bf16 %v728, %v728
      %v795 = vpack.c.bf16 %v731, %v731
      %v796 = vpack.c.bf16 %v733, %v733
      %v797 = vpack.c.bf16 %v736, %v736
      %v798 = vpack.c.bf16 %v738, %v738
      %v799 = vpack.c.bf16 %v741, %v741
      %v800 = vpack.c.bf16 %v743, %v743
      %v801 = vpack.c.bf16 %v746, %v746
      %v802 = vpack.c.bf16 %v748, %v748
      %v803 = vpack.c.bf16 %v751, %v751
      %v804 = vpack.c.bf16 %v753, %v753
      %v805 = vpack.c.bf16 %v756, %v756
      %v806 = vpack.c.bf16 %v758, %v758
      %v807 = vpack.c.bf16 %v761, %v761
      %v808 = vpack.c.bf16 %v763, %v763
      %v809 = vpack.c.bf16 %v766, %v766
      %v810 = vpack.c.bf16 %v768, %v768
      %v811 = vpack.c.bf16 %v771, %v771
      %v812 = vpack.c.bf16 %v773, %v773
      %v813 = vpack.c.bf16 %v776, %v776
      %v814 = vpack.c.bf16 %v778, %v778
      %v815 = vpack.c.bf16 %v781, %v781
      %v816 = vpack.c.bf16 %v783, %v783
      %817 = vst [vmem:[%s221] sm:$0xf] %v785
      %818 = vst [vmem:[%s221 + $0x4] sm:$0xf] %v786
      %819 = vst [vmem:[%s221 + $0x8] sm:$0xf] %v787
      %820 = vst [vmem:[%s221 + $0xc] sm:$0xf] %v788
      %821 = vst [vmem:[%s221 + $0x10] sm:$0xf] %v789
      %822 = vst [vmem:[%s221 + $0x14] sm:$0xf] %v790
      %823 = vst [vmem:[%s221 + $0x18] sm:$0xf] %v791
      %824 = vst [vmem:[%s221 + $0x1c] sm:$0xf] %v792
      %825 = vst [vmem:[%s221 + $0x20] sm:$0xf] %v793
      %826 = vst [vmem:[%s221 + $0x24] sm:$0xf] %v794
      %827 = vst [vmem:[%s221 + $0x28] sm:$0xf] %v795
      %828 = vst [vmem:[%s221 + $0x2c] sm:$0xf] %v796
      %829 = vst [vmem:[%s221 + $0x30] sm:$0xf] %v797
      %830 = vst [vmem:[%s221 + $0x34] sm:$0xf] %v798
      %831 = vst [vmem:[%s221 + $0x38] sm:$0xf] %v799
      %832 = vst [vmem:[%s221 + $0x3c] sm:$0xf] %v800
      %833 = vst [vmem:[%s221 + $0x40] sm:$0xf] %v801
      %834 = vst [vmem:[%s221 + $0x44] sm:$0xf] %v802
      %835 = vst [vmem:[%s221 + $0x48] sm:$0xf] %v803
      %836 = vst [vmem:[%s221 + $0x4c] sm:$0xf] %v804
      %837 = vst [vmem:[%s221 + $0x50] sm:$0xf] %v805
      %838 = vst [vmem:[%s221 + $0x54] sm:$0xf] %v806
      %839 = vst [vmem:[%s221 + $0x58] sm:$0xf] %v807
      %840 = vst [vmem:[%s221 + $0x5c] sm:$0xf] %v808
      %841 = vst [vmem:[%s221 + $0x60] sm:$0xf] %v809
      %842 = vst [vmem:[%s221 + $0x64] sm:$0xf] %v810
      %843 = vst [vmem:[%s221 + $0x68] sm:$0xf] %v811
      %844 = vst [vmem:[%s221 + $0x6c] sm:$0xf] %v812
      %845 = vst [vmem:[%s221 + $0x70] sm:$0xf] %v813
      %846 = vst [vmem:[%s221 + $0x74] sm:$0xf] %v814
      %847 = vst [vmem:[%s221 + $0x78] sm:$0xf] %v815
      %848 = vst [vmem:[%s221 + $0x7c] sm:$0xf] %v816
      %s849 = smul.u32 32, %s15
      %p850 = scmp.lt.s32.totalorder %s849, 63
      %s851 = scalar_select %p850, %s849, 63
      %s852 = smul.addr %s851, 4
      %s853 = scalar_lea.vmem %s4, %s852
      // Predicated region
      $region37: #{unet9_logsigmoid_forward.22} parent=35 // pred_check
        %p854 = pneg %p127
      $region38: #{unet9_logsigmoid_forward.22} parent=35 // pred_check_branch
        %856 = sbr.rel (%p854) target = $region40
      $region39: #{unet9_logsigmoid_forward.22} parent=35 // pred_region
        %s857 = smul.u32 32, %s15
      $region40: #{unet9_logsigmoid_forward.22} parent=35 // pred_fallthru
        _
    $region36: #{unet9_logsigmoid_forward.22} parent=5 // pred_fallthru
      _
    %p858 = scmp.le.s32.totalorder 2, %s10
    // Predicated region
    $region41: #{unet9_logsigmoid_forward.22} parent=5 // pred_check
      %p859 = pneg %p858
    $region42: #{unet9_logsigmoid_forward.22} parent=5 // pred_check_branch
      %861 = sbr.rel (%p859) target = $region44
    $region43: #{unet9_logsigmoid_forward.22} parent=5 // pred_region
      %s862 = ssub.s32 %s10, 2
      // Predicated region
      $region45: #{unet9_logsigmoid_forward.22} parent=43 // pred_check
        %p863 = pneg %p133
      $region46: #{unet9_logsigmoid_forward.22} parent=43 // pred_check_branch
        %865 = sbr.rel (%p863) target = $region48
      $region47: #{unet9_logsigmoid_forward.22} parent=43 // pred_region
        %s866 = smul.u32 32, %s16
        %p867 = scmp.lt.s32.totalorder %s866, 63
        %s868 = scalar_select %p867, %s866, 63
        %s869 = smul.addr %s868, 4
        %s870 = scalar_lea.vmem %s4, %s869
      $region48: #{unet9_logsigmoid_forward.22} parent=43 // pred_fallthru
        _
    $region44: #{unet9_logsigmoid_forward.22} parent=5 // pred_fallthru
      _
  $region6: #{unet9_logsigmoid_forward.22} parent=0 // loop_footer
    %s14 = sadd.s32 1, %s10
  $region7: #{unet9_logsigmoid_forward.22} parent=0 // loop_footer_branch
    %9 = sbr.rel target = $region3
  $region8: #{unet9_logsigmoid_forward.22} parent=0 // loop_exit
    _

// kernel: unet9_logsigmoid_forward.23
$region0: #{unet9_logsigmoid_forward.23}
  #allocation0 [shape = 'u32[]', space=smem, size = 0x4, offset = 0x4, fixed_abs, tag = 'smem constant byte address 0x4 - core index']
  #allocation1 [shape = 'u32[72,128]{1,0:T(1,128)}', space=vmem, size = 0x9000, scoped, tag = 'internal scratch']
  %s0 = inlined_call_operand.vmem [shape: bf16[512,128], index: 0, kind: input, shape index: {}]
  %s1 = inlined_call_operand.vmem [shape: bf16[128,128], index: 1, kind: input, shape index: {}]
  %s2 = inlined_call_operand.vmem [shape: f32[512,128], index: 2, kind: output, shape index: {}]
  %s3 = sld [smem:[#allocation0]]
  $region41: #{unet9_logsigmoid_forward.23} parent=0
    _
  %s5 = ssub.s32 1, %s3
  %s6 = scalar_select 0, %s5, %s3
  loop: start=0, step=1, limit=4
  $region2: #{unet9_logsigmoid_forward.23} parent=0 // loop_pre_header
    _
  $region3: #{unet9_logsigmoid_forward.23} parent=0 // loop_header
    %s8 = sphi 0, %s12
    %p9 = scmp.ge.s32.totalorder %s8, 4
    %s18 = sphi 0, %s20
    %s21 = sphi 0, %s18
    %s22 = sphi 0, %s21
    %s38 = sphi 0, %s22
    %s42 = sphi 0, %s42
    %s44 = sphi 0, %s42
    %s45 = sphi 0, %s44
    %s59 = sphi 0, %s45
    %s65 = sphi 0, %s67
    %s68 = sphi 0, %s65
    %s69 = sphi 0, %s68
    %s85 = sphi 0, %s69
  $region4: #{unet9_logsigmoid_forward.23} parent=0 // loop_header_branch
    %11 = sbr.rel (%p9) target = $region8
  $region5: #{unet9_logsigmoid_forward.23} parent=0 // loop_body
    %s13 = ssub.s32 %s8, 1
    %s14 = ssub.s32 %s8, 2
    %s15 = sadd.s32 %s8, 1
    %s16 = ssub.s32 %s8, %s15
    %p17 = scmp.eq.s32.totalorder %s16, 0
    %s19 = sadd.s32 %s18, 1
    %s20 = scalar_select %p17, %s18, %s19
    %p23 = pneg %p17
    %p24 = scmp.eq.s32.totalorder %s8, 1
    %p25 = por %p23, %p24
    %p26 = scmp.ne.s32.totalorder %s18, %s21
    %p27 = scmp.eq.s32.totalorder %s8, 0
    %p28 = por %p26, %p27
    %p29 = scmp.ne.s32.totalorder %s18, %s21
    %p30 = scmp.eq.s32.totalorder %s13, 1
    %p31 = por %p29, %p30
    %p32 = scmp.ne.s32.totalorder %s21, %s22
    %p33 = scmp.eq.s32.totalorder %s13, 0
    %p34 = por %p32, %p33
    %p35 = scmp.ne.s32.totalorder %s21, %s22
    %p36 = scmp.eq.s32.totalorder %s14, 1
    %p37 = por %p35, %p36
    %p39 = scmp.ne.s32.totalorder %s22, %s38
    %p40 = scmp.eq.s32.totalorder %s14, 0
    %p41 = por %p39, %p40
    %s43 = sadd.s32 %s42, 1
    %p46 = scmp.eq.s32.totalorder %s8, 1
    %p47 = scmp.ne.s32.totalorder %s42, %s44
    %p48 = scmp.eq.s32.totalorder %s8, 0
    %p49 = por %p47, %p48
    %p50 = scmp.ne.s32.totalorder %s42, %s44
    %p51 = scmp.eq.s32.totalorder %s13, 1
    %p52 = por %p50, %p51
    %p53 = scmp.ne.s32.totalorder %s44, %s45
    %p54 = scmp.eq.s32.totalorder %s13, 0
    %p55 = por %p53, %p54
    %p56 = scmp.ne.s32.totalorder %s44, %s45
    %p57 = scmp.eq.s32.totalorder %s14, 1
    %p58 = por %p56, %p57
    %p60 = scmp.ne.s32.totalorder %s45, %s59
    %p61 = scmp.eq.s32.totalorder %s14, 0
    %p62 = por %p60, %p61
    %s63 = ssub.s32 %s8, %s15
    %p64 = scmp.eq.s32.totalorder %s63, 0
    %s66 = sadd.s32 %s65, 1
    %s67 = scalar_select %p64, %s65, %s66
    %p70 = pneg %p64
    %p71 = scmp.eq.s32.totalorder %s8, 1
    %p72 = por %p70, %p71
    %p73 = scmp.ne.s32.totalorder %s65, %s68
    %p74 = scmp.eq.s32.totalorder %s8, 0
    %p75 = por %p73, %p74
    %p76 = scmp.ne.s32.totalorder %s65, %s68
    %p77 = scmp.eq.s32.totalorder %s13, 1
    %p78 = por %p76, %p77
    %p79 = scmp.ne.s32.totalorder %s68, %s69
    %p80 = scmp.eq.s32.totalorder %s13, 0
    %p81 = por %p79, %p80
    %p82 = scmp.ne.s32.totalorder %s68, %s69
    %p83 = scmp.eq.s32.totalorder %s14, 1
    %p84 = por %p82, %p83
    %p86 = scmp.ne.s32.totalorder %s69, %s85
    %p87 = scmp.eq.s32.totalorder %s14, 0
    %p88 = por %p86, %p87
    %p89 = scmp.le.s32.totalorder 1, %s8
    %p90 = scmp.lt.s32.totalorder %s8, 3
    %p91 = pnand %p89, %p90
    %p92 = pneg %p91
    // Predicated region
    $region9: #{unet9_logsigmoid_forward.23} parent=5 // pred_check
      _
    $region10: #{unet9_logsigmoid_forward.23} parent=5 // pred_check_branch
      %94 = sbr.rel (%p91) target = $region12
    $region11: #{unet9_logsigmoid_forward.23} parent=5 // pred_region
      %s95 = ssub.s32 %s8, 1
      // Predicated region
      $region13: #{unet9_logsigmoid_forward.23} parent=11 // pred_check
        %p96 = pneg %p55
      $region14: #{unet9_logsigmoid_forward.23} parent=11 // pred_check_branch
        %98 = sbr.rel (%p96) target = $region16
      $region15: #{unet9_logsigmoid_forward.23} parent=11 // pred_region
        _
      $region16: #{unet9_logsigmoid_forward.23} parent=11 // pred_fallthru
        _
    $region12: #{unet9_logsigmoid_forward.23} parent=5 // pred_fallthru
      _
    %p99 = scmp.lt.s32.totalorder %s8, 2
    // Predicated region
    $region17: #{unet9_logsigmoid_forward.23} parent=5 // pred_check
      %p100 = pneg %p99
    $region18: #{unet9_logsigmoid_forward.23} parent=5 // pred_check_branch
      %102 = sbr.rel (%p100) target = $region20
    $region19: #{unet9_logsigmoid_forward.23} parent=5 // pred_region
      // Predicated region
      $region21: #{unet9_logsigmoid_forward.23} parent=19 // pred_check
        %p103 = pneg %p28
      $region22: #{unet9_logsigmoid_forward.23} parent=19 // pred_check_branch
        %105 = sbr.rel (%p103) target = $region24
      $region23: #{unet9_logsigmoid_forward.23} parent=19 // pred_region
        %s106 = smul.u32 32, %s8
        %p107 = scmp.lt.s32.totalorder %s106, 63
        %s108 = scalar_select %p107, %s106, 63
        %s109 = smul.addr %s108, 4
        %s110 = scalar_lea.vmem %s0, %s109
        %s111 = smul.u32 32, %s8
      $region24: #{unet9_logsigmoid_forward.23} parent=19 // pred_fallthru
        _
    $region20: #{unet9_logsigmoid_forward.23} parent=5 // pred_fallthru
      _
    %p112 = scmp.le.s32.totalorder 1, %s8
    %p113 = scmp.lt.s32.totalorder %s8, 3
    %p114 = pnand %p112, %p113
    %p115 = pneg %p114
    // Predicated region
    $region25: #{unet9_logsigmoid_forward.23} parent=5 // pred_check
      _
    $region26: #{unet9_logsigmoid_forward.23} parent=5 // pred_check_branch
      %117 = sbr.rel (%p114) target = $region28
    $region27: #{unet9_logsigmoid_forward.23} parent=5 // pred_region
      %s118 = ssub.s32 %s8, 1
      %s119 = smul.u32 32, %s13
      %p120 = scmp.lt.s32.totalorder %s119, 63
      %s121 = scalar_select %p120, %s119, 63
      %s122 = smul.addr %s121, 4
      %s123 = scalar_lea.vmem %s0, %s122
      %p124 = pneg %p34
      %p125 = pneg %p31
      %p126 = pneg %p55
      %p127 = pneg %p52
      %p128 = pneg %p81
      %p129 = pneg %p78
      %s130 = smul.u32 32, %s13
      %p131 = scmp.lt.s32.totalorder %s130, 63
      %s132 = scalar_select %p131, %s130, 63
      %s133 = smul.addr %s132, 8
      %s134 = scalar_lea.vmem %s2, %s133
      %s135 = smul.u32 32, %s13
      %p136 = scmp.lt.s32.totalorder %s135, 63
      %s137 = scalar_select %p136, %s135, 63
      %s138 = smul.addr %s137, 4
      %s139 = scalar_lea.vmem %s0, %s138
      %s140 = smul.u32 32, %s13
      %s141 = smul.u32 32, %s13
      %p142 = scmp.lt.s32.totalorder %s141, 63
      %s143 = scalar_select %p142, %s141, 63
      %s144 = smul.addr %s143, 8
      %s145 = scalar_lea.vmem %s2, %s144
      %s146 = smul.u32 32, %s13
      %v147 = vld [vmem:[%s139] sm:$0xf]
      %v148 = vld [vmem:[%s139 + $0x4] sm:$0xf]
      %v149 = vld [vmem:[%s139 + $0x8] sm:$0xf]
      %v150 = vld [vmem:[%s139 + $0xc] sm:$0xf]
      %v151 = vld [vmem:[%s139 + $0x10] sm:$0xf]
      %v152 = vld [vmem:[%s139 + $0x14] sm:$0xf]
      %v153 = vld [vmem:[%s139 + $0x18] sm:$0xf]
      %v154 = vld [vmem:[%s139 + $0x1c] sm:$0xf]
      %v155 = vld [vmem:[%s139 + $0x20] sm:$0xf]
      %v156 = vld [vmem:[%s139 + $0x24] sm:$0xf]
      %v157 = vld [vmem:[%s139 + $0x28] sm:$0xf]
      %v158 = vld [vmem:[%s139 + $0x2c] sm:$0xf]
      %v159 = vld [vmem:[%s139 + $0x30] sm:$0xf]
      %v160 = vld [vmem:[%s139 + $0x34] sm:$0xf]
      %v161 = vld [vmem:[%s139 + $0x38] sm:$0xf]
      %v162 = vld [vmem:[%s139 + $0x3c] sm:$0xf]
      %v163 = vld [vmem:[%s139 + $0x40] sm:$0xf]
      %v164 = vld [vmem:[%s139 + $0x44] sm:$0xf]
      %v165 = vld [vmem:[%s139 + $0x48] sm:$0xf]
      %v166 = vld [vmem:[%s139 + $0x4c] sm:$0xf]
      %v167 = vld [vmem:[%s139 + $0x50] sm:$0xf]
      %v168 = vld [vmem:[%s139 + $0x54] sm:$0xf]
      %v169 = vld [vmem:[%s139 + $0x58] sm:$0xf]
      %v170 = vld [vmem:[%s139 + $0x5c] sm:$0xf]
      %v171 = vld [vmem:[%s139 + $0x60] sm:$0xf]
      %v172 = vld [vmem:[%s139 + $0x64] sm:$0xf]
      %v173 = vld [vmem:[%s139 + $0x68] sm:$0xf]
      %v174 = vld [vmem:[%s139 + $0x6c] sm:$0xf]
      %v175 = vld [vmem:[%s139 + $0x70] sm:$0xf]
      %v176 = vld [vmem:[%s139 + $0x74] sm:$0xf]
      %v177 = vld [vmem:[%s139 + $0x78] sm:$0xf]
      %v178 = vld [vmem:[%s139 + $0x7c] sm:$0xf]
      %v179 = vld [vmem:[%s1] sm:$0xf]
      %v180 = vld [vmem:[%s1 + $0x4] sm:$0xf]
      %v181 = vld [vmem:[%s1 + $0x8] sm:$0xf]
      %v182 = vld [vmem:[%s1 + $0xc] sm:$0xf]
      %v183 = vld [vmem:[%s1 + $0x10] sm:$0xf]
      %v184 = vld [vmem:[%s1 + $0x14] sm:$0xf]
      %v185 = vld [vmem:[%s1 + $0x18] sm:$0xf]
      %v186 = vld [vmem:[%s1 + $0x1c] sm:$0xf]
      %v187 = vld [vmem:[%s1 + $0x20] sm:$0xf]
      %v188 = vld [vmem:[%s1 + $0x24] sm:$0xf]
      %v189 = vld [vmem:[%s1 + $0x28] sm:$0xf]
      %v190 = vld [vmem:[%s1 + $0x2c] sm:$0xf]
      %v191 = vld [vmem:[%s1 + $0x30] sm:$0xf]
      %v192 = vld [vmem:[%s1 + $0x34] sm:$0xf]
      %v193 = vld [vmem:[%s1 + $0x38] sm:$0xf]
      %v194 = vld [vmem:[%s1 + $0x3c] sm:$0xf]
      %v227 = vunpack.c.l.b16 %v147
      %v228 = vunpack.c.l.b16 %v148
      %v229 = vunpack.c.l.b16 %v149
      %v230 = vunpack.c.l.b16 %v150
      %v231 = vunpack.c.l.b16 %v151
      %v232 = vunpack.c.l.b16 %v152
      %v233 = vunpack.c.l.b16 %v153
      %v234 = vunpack.c.l.b16 %v154
      %v235 = vunpack.c.l.b16 %v155
      %v236 = vunpack.c.l.b16 %v156
      %v237 = vunpack.c.l.b16 %v157
      %v238 = vunpack.c.l.b16 %v158
      %v239 = vunpack.c.l.b16 %v159
      %v240 = vunpack.c.l.b16 %v160
      %v241 = vunpack.c.l.b16 %v161
      %v242 = vunpack.c.l.b16 %v162
      %v243 = vunpack.c.l.b16 %v163
      %v244 = vunpack.c.l.b16 %v164
      %v245 = vunpack.c.l.b16 %v165
      %v246 = vunpack.c.l.b16 %v166
      %v247 = vunpack.c.l.b16 %v167
      %v248 = vunpack.c.l.b16 %v168
      %v249 = vunpack.c.l.b16 %v169
      %v250 = vunpack.c.l.b16 %v170
      %v251 = vunpack.c.l.b16 %v171
      %v252 = vunpack.c.l.b16 %v172
      %v253 = vunpack.c.l.b16 %v173
      %v254 = vunpack.c.l.b16 %v174
      %v255 = vunpack.c.l.b16 %v175
      %v256 = vunpack.c.l.b16 %v176
      %v257 = vunpack.c.l.b16 %v177
      %v258 = vunpack.c.l.b16 %v178
      %v259 = vpack.c.b16 %v228, %v227
      %v260 = vpack.c.b16 %v230, %v229
      %v261 = vpack.c.b16 %v232, %v231
      %v262 = vpack.c.b16 %v234, %v233
      %v263 = vpack.c.b16 %v236, %v235
      %v264 = vpack.c.b16 %v238, %v237
      %v265 = vpack.c.b16 %v240, %v239
      %v266 = vpack.c.b16 %v242, %v241
      %v267 = vpack.c.b16 %v244, %v243
      %v268 = vpack.c.b16 %v246, %v245
      %v269 = vpack.c.b16 %v248, %v247
      %v270 = vpack.c.b16 %v250, %v249
      %v271 = vpack.c.b16 %v252, %v251
      %v272 = vpack.c.b16 %v254, %v253
      %v273 = vpack.c.b16 %v256, %v255
      %v274 = vpack.c.b16 %v258, %v257
      %v307 = vunpack.c.l.b16 %v179
      %v308 = vunpack.c.l.b16 %v180
      %v309 = vunpack.c.l.b16 %v181
      %v310 = vunpack.c.l.b16 %v182
      %v311 = vunpack.c.l.b16 %v183
      %v312 = vunpack.c.l.b16 %v184
      %v313 = vunpack.c.l.b16 %v185
      %v314 = vunpack.c.l.b16 %v186
      %v315 = vunpack.c.l.b16 %v187
      %v316 = vunpack.c.l.b16 %v188
      %v317 = vunpack.c.l.b16 %v189
      %v318 = vunpack.c.l.b16 %v190
      %v319 = vunpack.c.l.b16 %v191
      %v320 = vunpack.c.l.b16 %v192
      %v321 = vunpack.c.l.b16 %v193
      %v322 = vunpack.c.l.b16 %v194
      %v323 = vpack.c.b16 %v308, %v307
      %v324 = vpack.c.b16 %v310, %v309
      %v325 = vpack.c.b16 %v312, %v311
      %v326 = vpack.c.b16 %v314, %v313
      %v327 = vpack.c.b16 %v316, %v315
      %v328 = vpack.c.b16 %v318, %v317
      %v329 = vpack.c.b16 %v320, %v319
      %v330 = vpack.c.b16 %v322, %v321
      %339 = vmatpush.bf16.msra.mxu0 %v330
      %340 = vmatpush.bf16.msra.mxu0 %v329
      %341 = vmatpush.bf16.msra.mxu0 %v328
      %342 = vmatpush.bf16.msra.mxu0 %v327
      %343 = vmatpush.bf16.msra.mxu0 %v326
      %344 = vmatpush.bf16.msra.mxu0 %v325
      %345 = vmatpush.bf16.msra.mxu0 %v324
      %346 = vmatpush.bf16.msra.mxu0 %v323
      %347 = vmatmul.bf16.gmra.mxu0 %v259
      %v348 = vpop.f32.mrf.mxu0
      %v349 = vadd.f32 0.0, %v348
      %v350 = vpop.f32.mrf.mxu0
      %v351 = vadd.f32 0.0, %v350
      %352 = vmatmul.bf16.gmra.mxu0 %v260
      %v353 = vpop.f32.mrf.mxu0
      %v354 = vadd.f32 0.0, %v353
      %v355 = vpop.f32.mrf.mxu0
      %v356 = vadd.f32 0.0, %v355
      %357 = vmatmul.bf16.gmra.mxu0 %v261
      %v358 = vpop.f32.mrf.mxu0
      %v359 = vadd.f32 0.0, %v358
      %v360 = vpop.f32.mrf.mxu0
      %v361 = vadd.f32 0.0, %v360
      %362 = vmatmul.bf16.gmra.mxu0 %v262
      %v363 = vpop.f32.mrf.mxu0
      %v364 = vadd.f32 0.0, %v363
      %v365 = vpop.f32.mrf.mxu0
      %v366 = vadd.f32 0.0, %v365
      %367 = vmatmul.bf16.gmra.mxu0 %v263
      %v368 = vpop.f32.mrf.mxu0
      %v369 = vadd.f32 0.0, %v368
      %v370 = vpop.f32.mrf.mxu0
      %v371 = vadd.f32 0.0, %v370
      %372 = vmatmul.bf16.gmra.mxu0 %v264
      %v373 = vpop.f32.mrf.mxu0
      %v374 = vadd.f32 0.0, %v373
      %v375 = vpop.f32.mrf.mxu0
      %v376 = vadd.f32 0.0, %v375
      %377 = vmatmul.bf16.gmra.mxu0 %v265
      %v378 = vpop.f32.mrf.mxu0
      %v379 = vadd.f32 0.0, %v378
      %v380 = vpop.f32.mrf.mxu0
      %v381 = vadd.f32 0.0, %v380
      %382 = vmatmul.bf16.gmra.mxu0 %v266
      %v383 = vpop.f32.mrf.mxu0
      %v384 = vadd.f32 0.0, %v383
      %v385 = vpop.f32.mrf.mxu0
      %v386 = vadd.f32 0.0, %v385
      %387 = vmatmul.bf16.gmra.mxu0 %v267
      %v388 = vpop.f32.mrf.mxu0
      %v389 = vadd.f32 0.0, %v388
      %v390 = vpop.f32.mrf.mxu0
      %v391 = vadd.f32 0.0, %v390
      %392 = vmatmul.bf16.gmra.mxu0 %v268
      %v393 = vpop.f32.mrf.mxu0
      %v394 = vadd.f32 0.0, %v393
      %v395 = vpop.f32.mrf.mxu0
      %v396 = vadd.f32 0.0, %v395
      %397 = vmatmul.bf16.gmra.mxu0 %v269
      %v398 = vpop.f32.mrf.mxu0
      %v399 = vadd.f32 0.0, %v398
      %v400 = vpop.f32.mrf.mxu0
      %v401 = vadd.f32 0.0, %v400
      %402 = vmatmul.bf16.gmra.mxu0 %v270
      %v403 = vpop.f32.mrf.mxu0
      %v404 = vadd.f32 0.0, %v403
      %v405 = vpop.f32.mrf.mxu0
      %v406 = vadd.f32 0.0, %v405
      %407 = vmatmul.bf16.gmra.mxu0 %v271
      %v408 = vpop.f32.mrf.mxu0
      %v409 = vadd.f32 0.0, %v408
      %v410 = vpop.f32.mrf.mxu0
      %v411 = vadd.f32 0.0, %v410
      %412 = vmatmul.bf16.gmra.mxu0 %v272
      %v413 = vpop.f32.mrf.mxu0
      %v414 = vadd.f32 0.0, %v413
      %v415 = vpop.f32.mrf.mxu0
      %v416 = vadd.f32 0.0, %v415
      %417 = vmatmul.bf16.gmra.mxu0 %v273
      %v418 = vpop.f32.mrf.mxu0
      %v419 = vadd.f32 0.0, %v418
      %v420 = vpop.f32.mrf.mxu0
      %v421 = vadd.f32 0.0, %v420
      %422 = vmatmul.bf16.gmra.mxu0 %v274
      %v423 = vpop.f32.mrf.mxu0
      %v424 = vadd.f32 0.0, %v423
      %v425 = vpop.f32.mrf.mxu0
      %v426 = vadd.f32 0.0, %v425
      %427 = vdwg.mxu0
      %428 = vst [vmem:[%s145] sm:$0xff] %v349
      %429 = vst [vmem:[%s145 + $0x8] sm:$0xff] %v351
      %430 = vst [vmem:[%s145 + $0x10] sm:$0xff] %v354
      %431 = vst [vmem:[%s145 + $0x18] sm:$0xff] %v356
      %432 = vst [vmem:[%s145 + $0x20] sm:$0xff] %v359
      %433 = vst [vmem:[%s145 + $0x28] sm:$0xff] %v361
      %434 = vst [vmem:[%s145 + $0x30] sm:$0xff] %v364
      %435 = vst [vmem:[%s145 + $0x38] sm:$0xff] %v366
      %436 = vst [vmem:[%s145 + $0x40] sm:$0xff] %v369
      %437 = vst [vmem:[%s145 + $0x48] sm:$0xff] %v371
      %438 = vst [vmem:[%s145 + $0x50] sm:$0xff] %v374
      %439 = vst [vmem:[%s145 + $0x58] sm:$0xff] %v376
      %440 = vst [vmem:[%s145 + $0x60] sm:$0xff] %v379
      %441 = vst [vmem:[%s145 + $0x68] sm:$0xff] %v381
      %442 = vst [vmem:[%s145 + $0x70] sm:$0xff] %v384
      %443 = vst [vmem:[%s145 + $0x78] sm:$0xff] %v386
      %444 = vst [vmem:[%s145 + $0x80] sm:$0xff] %v389
      %445 = vst [vmem:[%s145 + $0x88] sm:$0xff] %v391
      %446 = vst [vmem:[%s145 + $0x90] sm:$0xff] %v394
      %447 = vst [vmem:[%s145 + $0x98] sm:$0xff] %v396
      %448 = vst [vmem:[%s145 + $0xa0] sm:$0xff] %v399
      %449 = vst [vmem:[%s145 + $0xa8] sm:$0xff] %v401
      %450 = vst [vmem:[%s145 + $0xb0] sm:$0xff] %v404
      %451 = vst [vmem:[%s145 + $0xb8] sm:$0xff] %v406
      %452 = vst [vmem:[%s145 + $0xc0] sm:$0xff] %v409
      %453 = vst [vmem:[%s145 + $0xc8] sm:$0xff] %v411
      %454 = vst [vmem:[%s145 + $0xd0] sm:$0xff] %v414
      %455 = vst [vmem:[%s145 + $0xd8] sm:$0xff] %v416
      %456 = vst [vmem:[%s145 + $0xe0] sm:$0xff] %v419
      %457 = vst [vmem:[%s145 + $0xe8] sm:$0xff] %v421
      %458 = vst [vmem:[%s145 + $0xf0] sm:$0xff] %v424
      %459 = vst [vmem:[%s145 + $0xf8] sm:$0xff] %v426
      %s460 = smul.u32 32, %s13
      %p461 = scmp.lt.s32.totalorder %s460, 63
      %s462 = scalar_select %p461, %s460, 63
      %s463 = smul.addr %s462, 8
      %s464 = scalar_lea.vmem %s2, %s463
      // Predicated region
      $region29: #{unet9_logsigmoid_forward.23} parent=27 // pred_check
        %p465 = pneg %p78
      $region30: #{unet9_logsigmoid_forward.23} parent=27 // pred_check_branch
        %467 = sbr.rel (%p465) target = $region32
      $region31: #{unet9_logsigmoid_forward.23} parent=27 // pred_region
        %s468 = smul.u32 32, %s13
      $region32: #{unet9_logsigmoid_forward.23} parent=27 // pred_fallthru
        _
    $region28: #{unet9_logsigmoid_forward.23} parent=5 // pred_fallthru
      _
    %p469 = scmp.le.s32.totalorder 2, %s8
    // Predicated region
    $region33: #{unet9_logsigmoid_forward.23} parent=5 // pred_check
      %p470 = pneg %p469
    $region34: #{unet9_logsigmoid_forward.23} parent=5 // pred_check_branch
      %472 = sbr.rel (%p470) target = $region36
    $region35: #{unet9_logsigmoid_forward.23} parent=5 // pred_region
      %s473 = ssub.s32 %s8, 2
      // Predicated region
      $region37: #{unet9_logsigmoid_forward.23} parent=35 // pred_check
        %p474 = pneg %p84
      $region38: #{unet9_logsigmoid_forward.23} parent=35 // pred_check_branch
        %476 = sbr.rel (%p474) target = $region40
      $region39: #{unet9_logsigmoid_forward.23} parent=35 // pred_region
        %s477 = smul.u32 32, %s14
        %p478 = scmp.lt.s32.totalorder %s477, 63
        %s479 = scalar_select %p478, %s477, 63
        %s480 = smul.addr %s479, 8
        %s481 = scalar_lea.vmem %s2, %s480
      $region40: #{unet9_logsigmoid_forward.23} parent=35 // pred_fallthru
        _
    $region36: #{unet9_logsigmoid_forward.23} parent=5 // pred_fallthru
      _
  $region6: #{unet9_logsigmoid_forward.23} parent=0 // loop_footer
    %s12 = sadd.s32 1, %s8
  $region7: #{unet9_logsigmoid_forward.23} parent=0 // loop_footer_branch
    %7 = sbr.rel target = $region3
  $region8: #{unet9_logsigmoid_forward.23} parent=0 // loop_exit
    _

</llo_original>
